<compile_context>
chip_gen: v7x
topology: tpu7x:2x2x1
jax: 0.10.0
libtpu: 0.0.40
codegen_flags: <defaults>
</compile_context>

<pallas_src>
import numpy as np

import jax
import jax.numpy as jnp
from jax.experimental import pallas as pl
from jax.experimental.pallas import tpu as pltpu


# --------------------------- trace-time helpers -----------------------------

def _layer_dims(h0, w0):
    """Per-conv-layer spatial sizes (2x2 max-pool after layers 0, 1, 2)."""
    dims, h, w = [], h0, w0
    for i in range(4):
        dims.append((h, w))
        if i < 3:
            h, w = h // 2, w // 2
    return dims


def _pool_repad_matrix(h, w):
    """0/1 matrix: max'd conv output (gutter-flat layout, valid pooled entries
    at p = 2r*(w+2)+2c) -> next layer's zero-padded row-flattened input of
    shape ((h//2+3)*(w//2+2)).  Zero rows produce the conv zero padding."""
    wp = w + 2
    lm = (h - 2) * wp + w - 1
    ho, wo = h // 2, w // 2
    wpn = wo + 2
    mat = np.zeros(((ho + 3) * wpn, lm), np.float32)
    for r in range(ho):
        for c in range(wo):
            mat[(r + 1) * wpn + (c + 1), 2 * r * wp + 2 * c] = 1.0
    return mat


def _pad_flat(x_nhwc):
    """Zero-pad spatially (top 1, bottom 2, left 1, right 1) and flatten rows
    so a 3x3 tap is a constant flat offset of dy*(W+2)+dx."""
    b, h, w, c = x_nhwc.shape
    xp = jnp.pad(x_nhwc, ((0, 0), (1, 2), (1, 1), (0, 0)))
    return xp.reshape(b, (h + 3) * (w + 2), c)


# ------------------------------ Pallas kernels ------------------------------

def _make_encoder_kernel(h0, w0, cins, couts):
    """One grid step = one image through conv1..conv4 (+fused pools) + avg-pool."""
    dims = _layer_dims(h0, w0)

    def kernel(xpf_ref, w1_ref, b1_ref, w2_ref, b2_ref, w3_ref, b3_ref,
               w4_ref, b4_ref, r1_ref, r2_ref, r3_ref, feat_ref):
        w_refs = (w1_ref, w2_ref, w3_ref, w4_ref)
        b_refs = (b1_ref, b2_ref, b3_ref, b4_ref)
        r_refs = (r1_ref, r2_ref, r3_ref)

        cur = xpf_ref[0]                     # ((h0+3)*(w0+2), cin0) f32, in VMEM
        for layer in range(4):
            h, w = dims[layer]
            cin, cout = cins[layer], couts[layer]
            wp = w + 2
            ly = h * wp

            if layer == 0:
                w_all = w_refs[0][...]       # tiny (9*cin0, 32) f32

            # 3x3 conv = 9 shifted-slab accumulations (in-kernel "im2col").
            acc = None
            for t in range(9):
                dy, dx = divmod(t, 3)
                off = dy * wp + dx
                lhs = cur[off:off + ly, :]               # static slab slice
                if layer == 0:
                    if cin == 1:
                        # direct VPU conv: broadcast FMA, no MXU pass
                        term = lhs * w_all[t:t + 1, :]
                    else:
                        term = jnp.dot(lhs, w_all[t * cin:(t + 1) * cin, :],
                                       preferred_element_type=jnp.float32)
                else:
                    term = jnp.dot(lhs.astype(jnp.bfloat16),
                                   w_refs[layer][t * cin:(t + 1) * cin, :],
                                   preferred_element_type=jnp.float32)
                acc = term if acc is None else acc + term

            y = jnp.maximum(acc + b_refs[layer][...], 0.0)   # bias+ReLU, f32

            if layer < 3:
                # Fused MaxPool2d(2): max of the four corner views, then one
                # selection matmul compacts + zero-repads for the next layer.
                lm = (h - 2) * wp + w - 1
                m = jnp.maximum(
                    jnp.maximum(y[0:lm, :], y[1:lm + 1, :]),
                    jnp.maximum(y[wp:wp + lm, :], y[wp + 1:wp + 1 + lm, :]))
                cur = jnp.dot(r_refs[layer][...], m.astype(jnp.bfloat16),
                              preferred_element_type=jnp.float32)
            else:
                # AdaptiveAvgPool2d(1): mean over the h*w valid positions.
                s = None
                for hh in range(h):
                    for ww in range(w):
                        row = y[hh * wp + ww:hh * wp + ww + 1, :]
                        s = row if s is None else s + row
                feat = s * (1.0 / float(h * w))              # (1, 256), lane-dense
                feat_ref[...] = feat.reshape(feat_ref.shape)

    return kernel


def _head_kernel(feat_ref, wf_ref, bf_ref, gamma_ref, beta_ref, o_ref):
    # Both branches stacked: one (2N,256)@(256,128) fc, LayerNorm, L2 distance.
    eps = 1e-5
    g = feat_ref[...]                                        # (2N, 256) f32
    e = jnp.dot(g, wf_ref[...], preferred_element_type=jnp.float32) + bf_ref[...]
    mu = jnp.mean(e, axis=-1, keepdims=True)
    var = jnp.mean((e - mu) ** 2, axis=-1, keepdims=True)    # biased, like torch
    e = (e - mu) * jax.lax.rsqrt(var + eps)
    e = e * gamma_ref[...] + beta_ref[...]
    n = e.shape[0] // 2
    diff = e[0:n, :] - e[n:2 * n, :]
    # TODO(synk): add an eps under the sqrt if this is ever differentiated.
    o_ref[...] = jnp.sqrt(jnp.sum(diff * diff, axis=-1, keepdims=True))


_VMEM = pl.BlockSpec(memory_space=pltpu.MemorySpace.VMEM)


# ------------------------------ forward wrapper ------------------------------

def siamese_forward(x1_nchw, x2_nchw, params):
    # Shared-weight Siamese: stack both branches on the batch axis.
    x = jnp.concatenate([x1_nchw, x2_nchw], axis=0)          # (2N, C, H, W)
    x = jnp.transpose(x, (0, 2, 3, 1)).astype(jnp.float32)   # NHWC
    nb, h0, w0, cin0 = x.shape
    n = nb // 2
    assert h0 % 8 == 0 and w0 % 8 == 0, "needs 3 clean 2x2 pools"

    cins = (cin0, 32, 64, 128)
    couts = (32, 64, 128, 256)
    dims = _layer_dims(h0, w0)

    # Conv weights: HWIO -> (9*Cin, Cout), tap-major / channel-minor.
    w1 = params["w1"].reshape(9 * cins[0], couts[0]).astype(jnp.float32)  # VPU
    w2 = params["w2"].reshape(9 * cins[1], couts[1]).astype(jnp.bfloat16)
    w3 = params["w3"].reshape(9 * cins[2], couts[2]).astype(jnp.bfloat16)
    w4 = params["w4"].reshape(9 * cins[3], couts[3]).astype(jnp.bfloat16)
    b1 = params["b1"].reshape(1, couts[0]).astype(jnp.float32)
    b2 = params["b2"].reshape(1, couts[1]).astype(jnp.float32)
    b3 = params["b3"].reshape(1, couts[2]).astype(jnp.float32)
    b4 = params["b4"].reshape(1, couts[3]).astype(jnp.float32)

    # Pool + zero-repad selection matrices (trace-time constants).
    r1 = jnp.asarray(_pool_repad_matrix(*dims[0]), jnp.bfloat16)
    r2 = jnp.asarray(_pool_repad_matrix(*dims[1]), jnp.bfloat16)
    r3 = jnp.asarray(_pool_repad_matrix(*dims[2]), jnp.bfloat16)

    xpf = _pad_flat(x)                                       # (2N, (H+3)(W+2), Cin)
    lp = xpf.shape[1]

    def _full(arr):
        nd = arr.ndim
        return pl.BlockSpec(tuple(arr.shape), lambda b, nd=nd: (0,) * nd)

    feats = pl.pallas_call(
        _make_encoder_kernel(h0, w0, cins, couts),
        out_shape=jax.ShapeDtypeStruct((nb, 1, couts[-1]), jnp.float32),
        grid=(nb,),
        in_specs=[
            pl.BlockSpec((1, lp, cin0), lambda b: (b, 0, 0)),
            _full(w1), _full(b1), _full(w2), _full(b2),
            _full(w3), _full(b3), _full(w4), _full(b4),
            _full(r1), _full(r2), _full(r3),
        ],
        out_specs=pl.BlockSpec((1, 1, couts[-1]), lambda b: (b, 0, 0)),
        compiler_params=pltpu.CompilerParams(
            dimension_semantics=("parallel",),
            vmem_limit_bytes=32 * 1024 * 1024),
    )(xpf, w1, b1, w2, b2, w3, b3, w4, b4, r1, r2, r3)

    feats = feats.reshape(nb, couts[-1])                     # (2N, 256)

    emb = params["w_fc"].shape[1]
    d = pl.pallas_call(
        _head_kernel,
        out_shape=jax.ShapeDtypeStruct((n, 1), jnp.float32),
        in_specs=[_VMEM] * 5,
        out_specs=_VMEM,
    )(feats, params["w_fc"].astype(jnp.float32),
      params["b_fc"].reshape(1, emb).astype(jnp.float32),
      params["gamma"].reshape(1, emb).astype(jnp.float32),
      params["beta"].reshape(1, emb).astype(jnp.float32))
    return d.reshape(n)                                      # (batch,)


# --------------------------------- params ------------------------------------

def init_params(key, in_ch=1, emb=128):
    ks = jax.random.split(key, 10)

    def conv_w(k, cin, cout):
        return (jax.random.normal(k, (3, 3, cin, cout), jnp.float32)
                / jnp.sqrt(9.0 * cin))

    return dict(
        w1=conv_w(ks[0], in_ch, 32), b1=0.01 * jax.random.normal(ks[1], (32,), jnp.float32),
        w2=conv_w(ks[2], 32, 64),    b2=0.01 * jax.random.normal(ks[3], (64,), jnp.float32),
        w3=conv_w(ks[4], 64, 128),   b3=0.01 * jax.random.normal(ks[5], (128,), jnp.float32),
        w4=conv_w(ks[6], 128, 256),  b4=0.01 * jax.random.normal(ks[7], (256,), jnp.float32),
        w_fc=jax.random.normal(ks[8], (256, emb), jnp.float32) / jnp.sqrt(256.0),
        b_fc=0.01 * jax.random.normal(ks[9], (emb,), jnp.float32),
        gamma=jnp.ones((emb,), jnp.float32),   # LayerNorm affine (torch default)
        beta=jnp.zeros((emb,), jnp.float32),
    )


# ---------------------------------- main --------------------------------------

if __name__ == "__main__":
    key = jax.random.PRNGKey(0)
    kp, kx1, kx2 = jax.random.split(key, 3)
    params = init_params(kp, in_ch=1, emb=128)

    # PyTorch-convention NCHW inputs: batch=2, channels=1, 16x16 spatial.
    x1 = jax.random.normal(kx1, (2, 1, 16, 16), jnp.float32)
    x2 = jax.random.normal(kx2, (2, 1, 16, 16), jnp.float32)

    fwd = jax.jit(siamese_forward)
    d = fwd(x1, x2, params)
    jax.block_until_ready(d)
    assert d.shape == (2,) and d.dtype == jnp.float32
    assert bool(jnp.all(jnp.isfinite(d)))
    print("KERNEL_OK")
</pallas_src>

<mosaic_0001>
module attributes {stable_mosaic.version = 11 : i64} {
  func.func @_head_kernel(%arg0: memref<4x256xf32, #tpu.memory_space<vmem>>, %arg1: memref<256x128xf32, #tpu.memory_space<vmem>>, %arg2: memref<1x128xf32, #tpu.memory_space<vmem>>, %arg3: memref<1x128xf32, #tpu.memory_space<vmem>>, %arg4: memref<1x128xf32, #tpu.memory_space<vmem>>, %arg5: memref<2x1xf32, #tpu.memory_space<vmem>>) attributes {dimension_semantics = [], scalar_prefetch = 0 : i64, scratch_operands = 0 : i64, tpu.core_type = #tpu.core_type<tc>} {
    %c0 = arith.constant 0 : index
    %c0_0 = arith.constant 0 : index
    %0 = vector.load %arg0[%c0, %c0_0] : memref<4x256xf32, #tpu.memory_space<vmem>>, vector<4x256xf32>
    %c0_1 = arith.constant 0 : index
    %c0_2 = arith.constant 0 : index
    %1 = vector.load %arg1[%c0_1, %c0_2] : memref<256x128xf32, #tpu.memory_space<vmem>>, vector<256x128xf32>
    %cst = arith.constant dense<0.000000e+00> : vector<4x128xf32>
    %2 = tpu.matmul %0, %1, %cst {dimension_numbers = #tpu.dot_dimension_numbers<[1], [0], [0], [1], [0, 0, 1, 1], [], []>} : vector<4x256xf32>, vector<256x128xf32>, vector<4x128xf32> -> vector<4x128xf32>
    %c0_3 = arith.constant 0 : index
    %c0_4 = arith.constant 0 : index
    %3 = vector.load %arg2[%c0_3, %c0_4] : memref<1x128xf32, #tpu.memory_space<vmem>>, vector<1x128xf32>
    %4 = vector.broadcast %3 : vector<1x128xf32> to vector<4x128xf32>
    %5 = arith.addf %2, %4 : vector<4x128xf32>
    %cst_5 = arith.constant dense<0.000000e+00> : vector<4xf32>
    %6 = vector.multi_reduction <add>, %5, %cst_5 [1] : vector<4x128xf32> to vector<4xf32>
    %7 = vector.shape_cast %6 : vector<4xf32> to vector<4x1xf32>
    %cst_6 = arith.constant 1.280000e+02 : f32
    %8 = vector.broadcast %cst_6 : f32 to vector<4x1xf32>
    %9 = arith.divf %7, %8 : vector<4x1xf32>
    %10 = vector.broadcast %9 : vector<4x1xf32> to vector<4x128xf32>
    %11 = arith.subf %5, %10 : vector<4x128xf32>
    %12 = arith.mulf %11, %11 : vector<4x128xf32>
    %cst_7 = arith.constant dense<0.000000e+00> : vector<4xf32>
    %13 = vector.multi_reduction <add>, %12, %cst_7 [1] : vector<4x128xf32> to vector<4xf32>
    %14 = vector.shape_cast %13 : vector<4xf32> to vector<4x1xf32>
    %cst_8 = arith.constant 1.280000e+02 : f32
    %15 = vector.broadcast %cst_8 : f32 to vector<4x1xf32>
    %16 = arith.divf %14, %15 : vector<4x1xf32>
    %17 = vector.broadcast %9 : vector<4x1xf32> to vector<4x128xf32>
    %18 = arith.subf %5, %17 : vector<4x128xf32>
    %cst_9 = arith.constant 9.99999974E-6 : f32
    %19 = vector.broadcast %cst_9 : f32 to vector<4x1xf32>
    %20 = arith.addf %16, %19 : vector<4x1xf32>
    %21 = math.rsqrt %20 : vector<4x1xf32>
    %22 = vector.broadcast %21 : vector<4x1xf32> to vector<4x128xf32>
    %23 = arith.mulf %18, %22 : vector<4x128xf32>
    %c0_10 = arith.constant 0 : index
    %c0_11 = arith.constant 0 : index
    %24 = vector.load %arg3[%c0_10, %c0_11] : memref<1x128xf32, #tpu.memory_space<vmem>>, vector<1x128xf32>
    %25 = vector.broadcast %24 : vector<1x128xf32> to vector<4x128xf32>
    %26 = arith.mulf %23, %25 : vector<4x128xf32>
    %c0_12 = arith.constant 0 : index
    %c0_13 = arith.constant 0 : index
    %27 = vector.load %arg4[%c0_12, %c0_13] : memref<1x128xf32, #tpu.memory_space<vmem>>, vector<1x128xf32>
    %28 = vector.broadcast %27 : vector<1x128xf32> to vector<4x128xf32>
    %29 = arith.addf %26, %28 : vector<4x128xf32>
    %30 = vector.extract_strided_slice %29 {offsets = [0, 0], sizes = [2, 128], strides = [1, 1]} : vector<4x128xf32> to vector<2x128xf32>
    %31 = vector.extract_strided_slice %29 {offsets = [2, 0], sizes = [2, 128], strides = [1, 1]} : vector<4x128xf32> to vector<2x128xf32>
    %32 = arith.subf %30, %31 : vector<2x128xf32>
    %33 = arith.mulf %32, %32 : vector<2x128xf32>
    %cst_14 = arith.constant dense<0.000000e+00> : vector<2xf32>
    %34 = vector.multi_reduction <add>, %33, %cst_14 [1] : vector<2x128xf32> to vector<2xf32>
    %35 = vector.shape_cast %34 : vector<2xf32> to vector<2x1xf32>
    %36 = math.sqrt %35 : vector<2x1xf32>
    %c0_15 = arith.constant 0 : index
    %c0_16 = arith.constant 0 : index
    %37 = vector.load %arg5[%c0_15, %c0_16] : memref<2x1xf32, #tpu.memory_space<vmem>>, vector<2x1xf32>
    tpu.vector_store %arg5[%c0_15, %c0_16], %36 {strides = array<i32>} : memref<2x1xf32, #tpu.memory_space<vmem>>, vector<2x1xf32>,
    return
  }
}

module attributes {stable_mosaic.version = 11 : i64} {
  func.func @kernel(%arg0: i32, %arg1: memref<1x342x1xf32, #tpu.memory_space<vmem>>, %arg2: memref<9x32xf32, #tpu.memory_space<vmem>>, %arg3: memref<1x32xf32, #tpu.memory_space<vmem>>, %arg4: memref<288x64xbf16, #tpu.memory_space<vmem>>, %arg5: memref<1x64xf32, #tpu.memory_space<vmem>>, %arg6: memref<576x128xbf16, #tpu.memory_space<vmem>>, %arg7: memref<1x128xf32, #tpu.memory_space<vmem>>, %arg8: memref<1152x256xbf16, #tpu.memory_space<vmem>>, %arg9: memref<1x256xf32, #tpu.memory_space<vmem>>, %arg10: memref<110x267xbf16, #tpu.memory_space<vmem>>, %arg11: memref<42x67xbf16, #tpu.memory_space<vmem>>, %arg12: memref<20x15xbf16, #tpu.memory_space<vmem>>, %arg13: memref<1x1x256xf32, #tpu.memory_space<vmem>>) attributes {dimension_semantics = [#tpu.dimension_semantics<parallel>], iteration_bounds = array<i64: 4>, scalar_prefetch = 0 : i64, scratch_operands = 0 : i64, tpu.core_type = #tpu.core_type<tc>, window_params = [{transform_indices = @transform_0, window_bounds = array<i64: 1, 342, 1>}, {pipeline_mode = #tpu.pipeline_mode<synchronous>, transform_indices = @transform_1, window_bounds = array<i64: 9, 32>}, {pipeline_mode = #tpu.pipeline_mode<synchronous>, transform_indices = @transform_2, window_bounds = array<i64: 1, 32>}, {pipeline_mode = #tpu.pipeline_mode<synchronous>, transform_indices = @transform_3, window_bounds = array<i64: 288, 64>}, {pipeline_mode = #tpu.pipeline_mode<synchronous>, transform_indices = @transform_4, window_bounds = array<i64: 1, 64>}, {pipeline_mode = #tpu.pipeline_mode<synchronous>, transform_indices = @transform_5, window_bounds = array<i64: 576, 128>}, {pipeline_mode = #tpu.pipeline_mode<synchronous>, transform_indices = @transform_6, window_bounds = array<i64: 1, 128>}, {pipeline_mode = #tpu.pipeline_mode<synchronous>, transform_indices = @transform_7, window_bounds = array<i64: 1152, 256>}, {pipeline_mode = #tpu.pipeline_mode<synchronous>, transform_indices = @transform_8, window_bounds = array<i64: 1, 256>}, {pipeline_mode = #tpu.pipeline_mode<synchronous>, transform_indices = @transform_9, window_bounds = array<i64: 110, 267>}, {pipeline_mode = #tpu.pipeline_mode<synchronous>, transform_indices = @transform_10, window_bounds = array<i64: 42, 67>}, {pipeline_mode = #tpu.pipeline_mode<synchronous>, transform_indices = @transform_11, window_bounds = array<i64: 20, 15>}, {transform_indices = @transform_12, window_bounds = array<i64: 1, 1, 256>}]} {
    %c0 = arith.constant 0 : index
    %c0_0 = arith.constant 0 : index
    %c0_1 = arith.constant 0 : index
    %0 = vector.load %arg1[%c0, %c0_0, %c0_1] : memref<1x342x1xf32, #tpu.memory_space<vmem>>, vector<1x342x1xf32>
    %1 = vector.shape_cast %0 : vector<1x342x1xf32> to vector<342x1xf32>
    %c0_2 = arith.constant 0 : index
    %c0_3 = arith.constant 0 : index
    %2 = vector.load %arg2[%c0_2, %c0_3] : memref<9x32xf32, #tpu.memory_space<vmem>>, vector<9x32xf32>
    %3 = vector.extract_strided_slice %1 {offsets = [0, 0], sizes = [288, 1], strides = [1, 1]} : vector<342x1xf32> to vector<288x1xf32>
    %4 = vector.extract_strided_slice %2 {offsets = [0, 0], sizes = [1, 32], strides = [1, 1]} : vector<9x32xf32> to vector<1x32xf32>
    %5 = vector.broadcast %3 : vector<288x1xf32> to vector<288x32xf32>
    %6 = vector.broadcast %4 : vector<1x32xf32> to vector<288x32xf32>
    %7 = arith.mulf %5, %6 : vector<288x32xf32>
    %8 = vector.extract_strided_slice %1 {offsets = [1, 0], sizes = [288, 1], strides = [1, 1]} : vector<342x1xf32> to vector<288x1xf32>
    %9 = vector.extract_strided_slice %2 {offsets = [1, 0], sizes = [1, 32], strides = [1, 1]} : vector<9x32xf32> to vector<1x32xf32>
    %10 = vector.broadcast %8 : vector<288x1xf32> to vector<288x32xf32>
    %11 = vector.broadcast %9 : vector<1x32xf32> to vector<288x32xf32>
    %12 = arith.mulf %10, %11 : vector<288x32xf32>
    %13 = arith.addf %7, %12 : vector<288x32xf32>
    %14 = vector.extract_strided_slice %1 {offsets = [2, 0], sizes = [288, 1], strides = [1, 1]} : vector<342x1xf32> to vector<288x1xf32>
    %15 = vector.extract_strided_slice %2 {offsets = [2, 0], sizes = [1, 32], strides = [1, 1]} : vector<9x32xf32> to vector<1x32xf32>
    %16 = vector.broadcast %14 : vector<288x1xf32> to vector<288x32xf32>
    %17 = vector.broadcast %15 : vector<1x32xf32> to vector<288x32xf32>
    %18 = arith.mulf %16, %17 : vector<288x32xf32>
    %19 = arith.addf %13, %18 : vector<288x32xf32>
    %20 = vector.extract_strided_slice %1 {offsets = [18, 0], sizes = [288, 1], strides = [1, 1]} : vector<342x1xf32> to vector<288x1xf32>
    %21 = vector.extract_strided_slice %2 {offsets = [3, 0], sizes = [1, 32], strides = [1, 1]} : vector<9x32xf32> to vector<1x32xf32>
    %22 = vector.broadcast %20 : vector<288x1xf32> to vector<288x32xf32>
    %23 = vector.broadcast %21 : vector<1x32xf32> to vector<288x32xf32>
    %24 = arith.mulf %22, %23 : vector<288x32xf32>
    %25 = arith.addf %19, %24 : vector<288x32xf32>
    %26 = vector.extract_strided_slice %1 {offsets = [19, 0], sizes = [288, 1], strides = [1, 1]} : vector<342x1xf32> to vector<288x1xf32>
    %27 = vector.extract_strided_slice %2 {offsets = [4, 0], sizes = [1, 32], strides = [1, 1]} : vector<9x32xf32> to vector<1x32xf32>
    %28 = vector.broadcast %26 : vector<288x1xf32> to vector<288x32xf32>
    %29 = vector.broadcast %27 : vector<1x32xf32> to vector<288x32xf32>
    %30 = arith.mulf %28, %29 : vector<288x32xf32>
    %31 = arith.addf %25, %30 : vector<288x32xf32>
    %32 = vector.extract_strided_slice %1 {offsets = [20, 0], sizes = [288, 1], strides = [1, 1]} : vector<342x1xf32> to vector<288x1xf32>
    %33 = vector.extract_strided_slice %2 {offsets = [5, 0], sizes = [1, 32], strides = [1, 1]} : vector<9x32xf32> to vector<1x32xf32>
    %34 = vector.broadcast %32 : vector<288x1xf32> to vector<288x32xf32>
    %35 = vector.broadcast %33 : vector<1x32xf32> to vector<288x32xf32>
    %36 = arith.mulf %34, %35 : vector<288x32xf32>
    %37 = arith.addf %31, %36 : vector<288x32xf32>
    %38 = vector.extract_strided_slice %1 {offsets = [36, 0], sizes = [288, 1], strides = [1, 1]} : vector<342x1xf32> to vector<288x1xf32>
    %39 = vector.extract_strided_slice %2 {offsets = [6, 0], sizes = [1, 32], strides = [1, 1]} : vector<9x32xf32> to vector<1x32xf32>
    %40 = vector.broadcast %38 : vector<288x1xf32> to vector<288x32xf32>
    %41 = vector.broadcast %39 : vector<1x32xf32> to vector<288x32xf32>
    %42 = arith.mulf %40, %41 : vector<288x32xf32>
    %43 = arith.addf %37, %42 : vector<288x32xf32>
    %44 = vector.extract_strided_slice %1 {offsets = [37, 0], sizes = [288, 1], strides = [1, 1]} : vector<342x1xf32> to vector<288x1xf32>
    %45 = vector.extract_strided_slice %2 {offsets = [7, 0], sizes = [1, 32], strides = [1, 1]} : vector<9x32xf32> to vector<1x32xf32>
    %46 = vector.broadcast %44 : vector<288x1xf32> to vector<288x32xf32>
    %47 = vector.broadcast %45 : vector<1x32xf32> to vector<288x32xf32>
    %48 = arith.mulf %46, %47 : vector<288x32xf32>
    %49 = arith.addf %43, %48 : vector<288x32xf32>
    %50 = vector.extract_strided_slice %1 {offsets = [38, 0], sizes = [288, 1], strides = [1, 1]} : vector<342x1xf32> to vector<288x1xf32>
    %51 = vector.extract_strided_slice %2 {offsets = [8, 0], sizes = [1, 32], strides = [1, 1]} : vector<9x32xf32> to vector<1x32xf32>
    %52 = vector.broadcast %50 : vector<288x1xf32> to vector<288x32xf32>
    %53 = vector.broadcast %51 : vector<1x32xf32> to vector<288x32xf32>
    %54 = arith.mulf %52, %53 : vector<288x32xf32>
    %55 = arith.addf %49, %54 : vector<288x32xf32>
    %c0_4 = arith.constant 0 : index
    %c0_5 = arith.constant 0 : index
    %56 = vector.load %arg3[%c0_4, %c0_5] : memref<1x32xf32, #tpu.memory_space<vmem>>, vector<1x32xf32>
    %57 = vector.broadcast %56 : vector<1x32xf32> to vector<288x32xf32>
    %58 = arith.addf %55, %57 : vector<288x32xf32>
    %cst = arith.constant 0.000000e+00 : f32
    %59 = vector.broadcast %cst : f32 to vector<288x32xf32>
    %60 = arith.maximumf %58, %59 : vector<288x32xf32>
    %61 = vector.extract_strided_slice %60 {offsets = [0, 0], sizes = [267, 32], strides = [1, 1]} : vector<288x32xf32> to vector<267x32xf32>
    %62 = vector.extract_strided_slice %60 {offsets = [1, 0], sizes = [267, 32], strides = [1, 1]} : vector<288x32xf32> to vector<267x32xf32>
    %63 = arith.maximumf %61, %62 : vector<267x32xf32>
    %64 = vector.extract_strided_slice %60 {offsets = [18, 0], sizes = [267, 32], strides = [1, 1]} : vector<288x32xf32> to vector<267x32xf32>
    %65 = vector.extract_strided_slice %60 {offsets = [19, 0], sizes = [267, 32], strides = [1, 1]} : vector<288x32xf32> to vector<267x32xf32>
    %66 = arith.maximumf %64, %65 : vector<267x32xf32>
    %67 = arith.maximumf %63, %66 : vector<267x32xf32>
    %c0_6 = arith.constant 0 : index
    %c0_7 = arith.constant 0 : index
    %68 = vector.load %arg10[%c0_6, %c0_7] : memref<110x267xbf16, #tpu.memory_space<vmem>>, vector<110x267xbf16>
    %69 = arith.truncf %67 : vector<267x32xf32> to vector<267x32xbf16>
    %cst_8 = arith.constant dense<0.000000e+00> : vector<110x32xf32>
    %70 = tpu.matmul %68, %69, %cst_8 {dimension_numbers = #tpu.dot_dimension_numbers<[1], [0], [0], [1], [0, 0, 1, 1], [], []>} : vector<110x267xbf16>, vector<267x32xbf16>, vector<110x32xf32> -> vector<110x32xf32>
    %71 = vector.extract_strided_slice %70 {offsets = [0, 0], sizes = [80, 32], strides = [1, 1]} : vector<110x32xf32> to vector<80x32xf32>
    %72 = arith.truncf %71 : vector<80x32xf32> to vector<80x32xbf16>
    %c0_9 = arith.constant 0 : index
    %c0_10 = arith.constant 0 : index
    %73 = vector.load %arg4[%c0_9, %c0_10] : memref<288x64xbf16, #tpu.memory_space<vmem>>, vector<32x64xbf16>
    %cst_11 = arith.constant dense<0.000000e+00> : vector<80x64xf32>
    %74 = tpu.matmul %72, %73, %cst_11 {dimension_numbers = #tpu.dot_dimension_numbers<[1], [0], [0], [1], [0, 0, 1, 1], [], []>} : vector<80x32xbf16>, vector<32x64xbf16>, vector<80x64xf32> -> vector<80x64xf32>
    %75 = vector.extract_strided_slice %70 {offsets = [1, 0], sizes = [80, 32], strides = [1, 1]} : vector<110x32xf32> to vector<80x32xf32>
    %76 = arith.truncf %75 : vector<80x32xf32> to vector<80x32xbf16>
    %c32 = arith.constant 32 : index
    %c0_12 = arith.constant 0 : index
    %77 = vector.load %arg4[%c32, %c0_12] : memref<288x64xbf16, #tpu.memory_space<vmem>>, vector<32x64xbf16>
    %cst_13 = arith.constant dense<0.000000e+00> : vector<80x64xf32>
    %78 = tpu.matmul %76, %77, %cst_13 {dimension_numbers = #tpu.dot_dimension_numbers<[1], [0], [0], [1], [0, 0, 1, 1], [], []>} : vector<80x32xbf16>, vector<32x64xbf16>, vector<80x64xf32> -> vector<80x64xf32>
    %79 = arith.addf %74, %78 : vector<80x64xf32>
    %80 = vector.extract_strided_slice %70 {offsets = [2, 0], sizes = [80, 32], strides = [1, 1]} : vector<110x32xf32> to vector<80x32xf32>
    %81 = arith.truncf %80 : vector<80x32xf32> to vector<80x32xbf16>
    %c64 = arith.constant 64 : index
    %c0_14 = arith.constant 0 : index
    %82 = vector.load %arg4[%c64, %c0_14] : memref<288x64xbf16, #tpu.memory_space<vmem>>, vector<32x64xbf16>
    %cst_15 = arith.constant dense<0.000000e+00> : vector<80x64xf32>
    %83 = tpu.matmul %81, %82, %cst_15 {dimension_numbers = #tpu.dot_dimension_numbers<[1], [0], [0], [1], [0, 0, 1, 1], [], []>} : vector<80x32xbf16>, vector<32x64xbf16>, vector<80x64xf32> -> vector<80x64xf32>
    %84 = arith.addf %79, %83 : vector<80x64xf32>
    %85 = vector.extract_strided_slice %70 {offsets = [10, 0], sizes = [80, 32], strides = [1, 1]} : vector<110x32xf32> to vector<80x32xf32>
    %86 = arith.truncf %85 : vector<80x32xf32> to vector<80x32xbf16>
    %c96 = arith.constant 96 : index
    %c0_16 = arith.constant 0 : index
    %87 = vector.load %arg4[%c96, %c0_16] : memref<288x64xbf16, #tpu.memory_space<vmem>>, vector<32x64xbf16>
    %cst_17 = arith.constant dense<0.000000e+00> : vector<80x64xf32>
    %88 = tpu.matmul %86, %87, %cst_17 {dimension_numbers = #tpu.dot_dimension_numbers<[1], [0], [0], [1], [0, 0, 1, 1], [], []>} : vector<80x32xbf16>, vector<32x64xbf16>, vector<80x64xf32> -> vector<80x64xf32>
    %89 = arith.addf %84, %88 : vector<80x64xf32>
    %90 = vector.extract_strided_slice %70 {offsets = [11, 0], sizes = [80, 32], strides = [1, 1]} : vector<110x32xf32> to vector<80x32xf32>
    %91 = arith.truncf %90 : vector<80x32xf32> to vector<80x32xbf16>
    %c128 = arith.constant 128 : index
    %c0_18 = arith.constant 0 : index
    %92 = vector.load %arg4[%c128, %c0_18] : memref<288x64xbf16, #tpu.memory_space<vmem>>, vector<32x64xbf16>
    %cst_19 = arith.constant dense<0.000000e+00> : vector<80x64xf32>
    %93 = tpu.matmul %91, %92, %cst_19 {dimension_numbers = #tpu.dot_dimension_numbers<[1], [0], [0], [1], [0, 0, 1, 1], [], []>} : vector<80x32xbf16>, vector<32x64xbf16>, vector<80x64xf32> -> vector<80x64xf32>
    %94 = arith.addf %89, %93 : vector<80x64xf32>
    %95 = vector.extract_strided_slice %70 {offsets = [12, 0], sizes = [80, 32], strides = [1, 1]} : vector<110x32xf32> to vector<80x32xf32>
    %96 = arith.truncf %95 : vector<80x32xf32> to vector<80x32xbf16>
    %c160 = arith.constant 160 : index
    %c0_20 = arith.constant 0 : index
    %97 = vector.load %arg4[%c160, %c0_20] : memref<288x64xbf16, #tpu.memory_space<vmem>>, vector<32x64xbf16>
    %cst_21 = arith.constant dense<0.000000e+00> : vector<80x64xf32>
    %98 = tpu.matmul %96, %97, %cst_21 {dimension_numbers = #tpu.dot_dimension_numbers<[1], [0], [0], [1], [0, 0, 1, 1], [], []>} : vector<80x32xbf16>, vector<32x64xbf16>, vector<80x64xf32> -> vector<80x64xf32>
    %99 = arith.addf %94, %98 : vector<80x64xf32>
    %100 = vector.extract_strided_slice %70 {offsets = [20, 0], sizes = [80, 32], strides = [1, 1]} : vector<110x32xf32> to vector<80x32xf32>
    %101 = arith.truncf %100 : vector<80x32xf32> to vector<80x32xbf16>
    %c192 = arith.constant 192 : index
    %c0_22 = arith.constant 0 : index
    %102 = vector.load %arg4[%c192, %c0_22] : memref<288x64xbf16, #tpu.memory_space<vmem>>, vector<32x64xbf16>
    %cst_23 = arith.constant dense<0.000000e+00> : vector<80x64xf32>
    %103 = tpu.matmul %101, %102, %cst_23 {dimension_numbers = #tpu.dot_dimension_numbers<[1], [0], [0], [1], [0, 0, 1, 1], [], []>} : vector<80x32xbf16>, vector<32x64xbf16>, vector<80x64xf32> -> vector<80x64xf32>
    %104 = arith.addf %99, %103 : vector<80x64xf32>
    %105 = vector.extract_strided_slice %70 {offsets = [21, 0], sizes = [80, 32], strides = [1, 1]} : vector<110x32xf32> to vector<80x32xf32>
    %106 = arith.truncf %105 : vector<80x32xf32> to vector<80x32xbf16>
    %c224 = arith.constant 224 : index
    %c0_24 = arith.constant 0 : index
    %107 = vector.load %arg4[%c224, %c0_24] : memref<288x64xbf16, #tpu.memory_space<vmem>>, vector<32x64xbf16>
    %cst_25 = arith.constant dense<0.000000e+00> : vector<80x64xf32>
    %108 = tpu.matmul %106, %107, %cst_25 {dimension_numbers = #tpu.dot_dimension_numbers<[1], [0], [0], [1], [0, 0, 1, 1], [], []>} : vector<80x32xbf16>, vector<32x64xbf16>, vector<80x64xf32> -> vector<80x64xf32>
    %109 = arith.addf %104, %108 : vector<80x64xf32>
    %110 = vector.extract_strided_slice %70 {offsets = [22, 0], sizes = [80, 32], strides = [1, 1]} : vector<110x32xf32> to vector<80x32xf32>
    %111 = arith.truncf %110 : vector<80x32xf32> to vector<80x32xbf16>
    %c256 = arith.constant 256 : index
    %c0_26 = arith.constant 0 : index
    %112 = vector.load %arg4[%c256, %c0_26] : memref<288x64xbf16, #tpu.memory_space<vmem>>, vector<32x64xbf16>
    %cst_27 = arith.constant dense<0.000000e+00> : vector<80x64xf32>
    %113 = tpu.matmul %111, %112, %cst_27 {dimension_numbers = #tpu.dot_dimension_numbers<[1], [0], [0], [1], [0, 0, 1, 1], [], []>} : vector<80x32xbf16>, vector<32x64xbf16>, vector<80x64xf32> -> vector<80x64xf32>
    %114 = arith.addf %109, %113 : vector<80x64xf32>
    %c0_28 = arith.constant 0 : index
    %c0_29 = arith.constant 0 : index
    %115 = vector.load %arg5[%c0_28, %c0_29] : memref<1x64xf32, #tpu.memory_space<vmem>>, vector<1x64xf32>
    %116 = vector.broadcast %115 : vector<1x64xf32> to vector<80x64xf32>
    %117 = arith.addf %114, %116 : vector<80x64xf32>
    %cst_30 = arith.constant 0.000000e+00 : f32
    %118 = vector.broadcast %cst_30 : f32 to vector<80x64xf32>
    %119 = arith.maximumf %117, %118 : vector<80x64xf32>
    %120 = vector.extract_strided_slice %119 {offsets = [0, 0], sizes = [67, 64], strides = [1, 1]} : vector<80x64xf32> to vector<67x64xf32>
    %121 = vector.extract_strided_slice %119 {offsets = [1, 0], sizes = [67, 64], strides = [1, 1]} : vector<80x64xf32> to vector<67x64xf32>
    %122 = arith.maximumf %120, %121 : vector<67x64xf32>
    %123 = vector.extract_strided_slice %119 {offsets = [10, 0], sizes = [67, 64], strides = [1, 1]} : vector<80x64xf32> to vector<67x64xf32>
    %124 = vector.extract_strided_slice %119 {offsets = [11, 0], sizes = [67, 64], strides = [1, 1]} : vector<80x64xf32> to vector<67x64xf32>
    %125 = arith.maximumf %123, %124 : vector<67x64xf32>
    %126 = arith.maximumf %122, %125 : vector<67x64xf32>
    %c0_31 = arith.constant 0 : index
    %c0_32 = arith.constant 0 : index
    %127 = vector.load %arg11[%c0_31, %c0_32] : memref<42x67xbf16, #tpu.memory_space<vmem>>, vector<42x67xbf16>
    %128 = arith.truncf %126 : vector<67x64xf32> to vector<67x64xbf16>
    %cst_33 = arith.constant dense<0.000000e+00> : vector<42x64xf32>
    %129 = tpu.matmul %127, %128, %cst_33 {dimension_numbers = #tpu.dot_dimension_numbers<[1], [0], [0], [1], [0, 0, 1, 1], [], []>} : vector<42x67xbf16>, vector<67x64xbf16>, vector<42x64xf32> -> vector<42x64xf32>
    %130 = vector.extract_strided_slice %129 {offsets = [0, 0], sizes = [24, 64], strides = [1, 1]} : vector<42x64xf32> to vector<24x64xf32>
    %131 = arith.truncf %130 : vector<24x64xf32> to vector<24x64xbf16>
    %c0_34 = arith.constant 0 : index
    %c0_35 = arith.constant 0 : index
    %132 = vector.load %arg6[%c0_34, %c0_35] : memref<576x128xbf16, #tpu.memory_space<vmem>>, vector<64x128xbf16>
    %cst_36 = arith.constant dense<0.000000e+00> : vector<24x128xf32>
    %133 = tpu.matmul %131, %132, %cst_36 {dimension_numbers = #tpu.dot_dimension_numbers<[1], [0], [0], [1], [0, 0, 1, 1], [], []>} : vector<24x64xbf16>, vector<64x128xbf16>, vector<24x128xf32> -> vector<24x128xf32>
    %134 = vector.extract_strided_slice %129 {offsets = [1, 0], sizes = [24, 64], strides = [1, 1]} : vector<42x64xf32> to vector<24x64xf32>
    %135 = arith.truncf %134 : vector<24x64xf32> to vector<24x64xbf16>
    %c64_37 = arith.constant 64 : index
    %c0_38 = arith.constant 0 : index
    %136 = vector.load %arg6[%c64_37, %c0_38] : memref<576x128xbf16, #tpu.memory_space<vmem>>, vector<64x128xbf16>
    %cst_39 = arith.constant dense<0.000000e+00> : vector<24x128xf32>
    %137 = tpu.matmul %135, %136, %cst_39 {dimension_numbers = #tpu.dot_dimension_numbers<[1], [0], [0], [1], [0, 0, 1, 1], [], []>} : vector<24x64xbf16>, vector<64x128xbf16>, vector<24x128xf32> -> vector<24x128xf32>
    %138 = arith.addf %133, %137 : vector<24x128xf32>
    %139 = vector.extract_strided_slice %129 {offsets = [2, 0], sizes = [24, 64], strides = [1, 1]} : vector<42x64xf32> to vector<24x64xf32>
    %140 = arith.truncf %139 : vector<24x64xf32> to vector<24x64xbf16>
    %c128_40 = arith.constant 128 : index
    %c0_41 = arith.constant 0 : index
    %141 = vector.load %arg6[%c128_40, %c0_41] : memref<576x128xbf16, #tpu.memory_space<vmem>>, vector<64x128xbf16>
    %cst_42 = arith.constant dense<0.000000e+00> : vector<24x128xf32>
    %142 = tpu.matmul %140, %141, %cst_42 {dimension_numbers = #tpu.dot_dimension_numbers<[1], [0], [0], [1], [0, 0, 1, 1], [], []>} : vector<24x64xbf16>, vector<64x128xbf16>, vector<24x128xf32> -> vector<24x128xf32>
    %143 = arith.addf %138, %142 : vector<24x128xf32>
    %144 = vector.extract_strided_slice %129 {offsets = [6, 0], sizes = [24, 64], strides = [1, 1]} : vector<42x64xf32> to vector<24x64xf32>
    %145 = arith.truncf %144 : vector<24x64xf32> to vector<24x64xbf16>
    %c192_43 = arith.constant 192 : index
    %c0_44 = arith.constant 0 : index
    %146 = vector.load %arg6[%c192_43, %c0_44] : memref<576x128xbf16, #tpu.memory_space<vmem>>, vector<64x128xbf16>
    %cst_45 = arith.constant dense<0.000000e+00> : vector<24x128xf32>
    %147 = tpu.matmul %145, %146, %cst_45 {dimension_numbers = #tpu.dot_dimension_numbers<[1], [0], [0], [1], [0, 0, 1, 1], [], []>} : vector<24x64xbf16>, vector<64x128xbf16>, vector<24x128xf32> -> vector<24x128xf32>
    %148 = arith.addf %143, %147 : vector<24x128xf32>
    %149 = vector.extract_strided_slice %129 {offsets = [7, 0], sizes = [24, 64], strides = [1, 1]} : vector<42x64xf32> to vector<24x64xf32>
    %150 = arith.truncf %149 : vector<24x64xf32> to vector<24x64xbf16>
    %c256_46 = arith.constant 256 : index
    %c0_47 = arith.constant 0 : index
    %151 = vector.load %arg6[%c256_46, %c0_47] : memref<576x128xbf16, #tpu.memory_space<vmem>>, vector<64x128xbf16>
    %cst_48 = arith.constant dense<0.000000e+00> : vector<24x128xf32>
    %152 = tpu.matmul %150, %151, %cst_48 {dimension_numbers = #tpu.dot_dimension_numbers<[1], [0], [0], [1], [0, 0, 1, 1], [], []>} : vector<24x64xbf16>, vector<64x128xbf16>, vector<24x128xf32> -> vector<24x128xf32>
    %153 = arith.addf %148, %152 : vector<24x128xf32>
    %154 = vector.extract_strided_slice %129 {offsets = [8, 0], sizes = [24, 64], strides = [1, 1]} : vector<42x64xf32> to vector<24x64xf32>
    %155 = arith.truncf %154 : vector<24x64xf32> to vector<24x64xbf16>
    %c320 = arith.constant 320 : index
    %c0_49 = arith.constant 0 : index
    %156 = vector.load %arg6[%c320, %c0_49] : memref<576x128xbf16, #tpu.memory_space<vmem>>, vector<64x128xbf16>
    %cst_50 = arith.constant dense<0.000000e+00> : vector<24x128xf32>
    %157 = tpu.matmul %155, %156, %cst_50 {dimension_numbers = #tpu.dot_dimension_numbers<[1], [0], [0], [1], [0, 0, 1, 1], [], []>} : vector<24x64xbf16>, vector<64x128xbf16>, vector<24x128xf32> -> vector<24x128xf32>
    %158 = arith.addf %153, %157 : vector<24x128xf32>
    %159 = vector.extract_strided_slice %129 {offsets = [12, 0], sizes = [24, 64], strides = [1, 1]} : vector<42x64xf32> to vector<24x64xf32>
    %160 = arith.truncf %159 : vector<24x64xf32> to vector<24x64xbf16>
    %c384 = arith.constant 384 : index
    %c0_51 = arith.constant 0 : index
    %161 = vector.load %arg6[%c384, %c0_51] : memref<576x128xbf16, #tpu.memory_space<vmem>>, vector<64x128xbf16>
    %cst_52 = arith.constant dense<0.000000e+00> : vector<24x128xf32>
    %162 = tpu.matmul %160, %161, %cst_52 {dimension_numbers = #tpu.dot_dimension_numbers<[1], [0], [0], [1], [0, 0, 1, 1], [], []>} : vector<24x64xbf16>, vector<64x128xbf16>, vector<24x128xf32> -> vector<24x128xf32>
    %163 = arith.addf %158, %162 : vector<24x128xf32>
    %164 = vector.extract_strided_slice %129 {offsets = [13, 0], sizes = [24, 64], strides = [1, 1]} : vector<42x64xf32> to vector<24x64xf32>
    %165 = arith.truncf %164 : vector<24x64xf32> to vector<24x64xbf16>
    %c448 = arith.constant 448 : index
    %c0_53 = arith.constant 0 : index
    %166 = vector.load %arg6[%c448, %c0_53] : memref<576x128xbf16, #tpu.memory_space<vmem>>, vector<64x128xbf16>
    %cst_54 = arith.constant dense<0.000000e+00> : vector<24x128xf32>
    %167 = tpu.matmul %165, %166, %cst_54 {dimension_numbers = #tpu.dot_dimension_numbers<[1], [0], [0], [1], [0, 0, 1, 1], [], []>} : vector<24x64xbf16>, vector<64x128xbf16>, vector<24x128xf32> -> vector<24x128xf32>
    %168 = arith.addf %163, %167 : vector<24x128xf32>
    %169 = vector.extract_strided_slice %129 {offsets = [14, 0], sizes = [24, 64], strides = [1, 1]} : vector<42x64xf32> to vector<24x64xf32>
    %170 = arith.truncf %169 : vector<24x64xf32> to vector<24x64xbf16>
    %c512 = arith.constant 512 : index
    %c0_55 = arith.constant 0 : index
    %171 = vector.load %arg6[%c512, %c0_55] : memref<576x128xbf16, #tpu.memory_space<vmem>>, vector<64x128xbf16>
    %cst_56 = arith.constant dense<0.000000e+00> : vector<24x128xf32>
    %172 = tpu.matmul %170, %171, %cst_56 {dimension_numbers = #tpu.dot_dimension_numbers<[1], [0], [0], [1], [0, 0, 1, 1], [], []>} : vector<24x64xbf16>, vector<64x128xbf16>, vector<24x128xf32> -> vector<24x128xf32>
    %173 = arith.addf %168, %172 : vector<24x128xf32>
    %c0_57 = arith.constant 0 : index
    %c0_58 = arith.constant 0 : index
    %174 = vector.load %arg7[%c0_57, %c0_58] : memref<1x128xf32, #tpu.memory_space<vmem>>, vector<1x128xf32>
    %175 = vector.broadcast %174 : vector<1x128xf32> to vector<24x128xf32>
    %176 = arith.addf %173, %175 : vector<24x128xf32>
    %cst_59 = arith.constant 0.000000e+00 : f32
    %177 = vector.broadcast %cst_59 : f32 to vector<24x128xf32>
    %178 = arith.maximumf %176, %177 : vector<24x128xf32>
    %179 = vector.extract_strided_slice %178 {offsets = [0, 0], sizes = [15, 128], strides = [1, 1]} : vector<24x128xf32> to vector<15x128xf32>
    %180 = vector.extract_strided_slice %178 {offsets = [1, 0], sizes = [15, 128], strides = [1, 1]} : vector<24x128xf32> to vector<15x128xf32>
    %181 = arith.maximumf %179, %180 : vector<15x128xf32>
    %182 = vector.extract_strided_slice %178 {offsets = [6, 0], sizes = [15, 128], strides = [1, 1]} : vector<24x128xf32> to vector<15x128xf32>
    %183 = vector.extract_strided_slice %178 {offsets = [7, 0], sizes = [15, 128], strides = [1, 1]} : vector<24x128xf32> to vector<15x128xf32>
    %184 = arith.maximumf %182, %183 : vector<15x128xf32>
    %185 = arith.maximumf %181, %184 : vector<15x128xf32>
    %c0_60 = arith.constant 0 : index
    %c0_61 = arith.constant 0 : index
    %186 = vector.load %arg12[%c0_60, %c0_61] : memref<20x15xbf16, #tpu.memory_space<vmem>>, vector<20x15xbf16>
    %187 = arith.truncf %185 : vector<15x128xf32> to vector<15x128xbf16>
    %cst_62 = arith.constant dense<0.000000e+00> : vector<20x128xf32>
    %188 = tpu.matmul %186, %187, %cst_62 {dimension_numbers = #tpu.dot_dimension_numbers<[1], [0], [0], [1], [0, 0, 1, 1], [], []>} : vector<20x15xbf16>, vector<15x128xbf16>, vector<20x128xf32> -> vector<20x128xf32>
    %189 = vector.extract_strided_slice %188 {offsets = [0, 0], sizes = [8, 128], strides = [1, 1]} : vector<20x128xf32> to vector<8x128xf32>
    %190 = arith.truncf %189 : vector<8x128xf32> to vector<8x128xbf16>
    %c0_63 = arith.constant 0 : index
    %c0_64 = arith.constant 0 : index
    %191 = vector.load %arg8[%c0_63, %c0_64] : memref<1152x256xbf16, #tpu.memory_space<vmem>>, vector<128x256xbf16>
    %cst_65 = arith.constant dense<0.000000e+00> : vector<8x256xf32>
    %192 = tpu.matmul %190, %191, %cst_65 {dimension_numbers = #tpu.dot_dimension_numbers<[1], [0], [0], [1], [0, 0, 1, 1], [], []>} : vector<8x128xbf16>, vector<128x256xbf16>, vector<8x256xf32> -> vector<8x256xf32>
    %193 = vector.extract_strided_slice %188 {offsets = [1, 0], sizes = [8, 128], strides = [1, 1]} : vector<20x128xf32> to vector<8x128xf32>
    %194 = arith.truncf %193 : vector<8x128xf32> to vector<8x128xbf16>
    %c128_66 = arith.constant 128 : index
    %c0_67 = arith.constant 0 : index
    %195 = vector.load %arg8[%c128_66, %c0_67] : memref<1152x256xbf16, #tpu.memory_space<vmem>>, vector<128x256xbf16>
    %cst_68 = arith.constant dense<0.000000e+00> : vector<8x256xf32>
    %196 = tpu.matmul %194, %195, %cst_68 {dimension_numbers = #tpu.dot_dimension_numbers<[1], [0], [0], [1], [0, 0, 1, 1], [], []>} : vector<8x128xbf16>, vector<128x256xbf16>, vector<8x256xf32> -> vector<8x256xf32>
    %197 = arith.addf %192, %196 : vector<8x256xf32>
    %198 = vector.extract_strided_slice %188 {offsets = [2, 0], sizes = [8, 128], strides = [1, 1]} : vector<20x128xf32> to vector<8x128xf32>
    %199 = arith.truncf %198 : vector<8x128xf32> to vector<8x128xbf16>
    %c256_69 = arith.constant 256 : index
    %c0_70 = arith.constant 0 : index
    %200 = vector.load %arg8[%c256_69, %c0_70] : memref<1152x256xbf16, #tpu.memory_space<vmem>>, vector<128x256xbf16>
    %cst_71 = arith.constant dense<0.000000e+00> : vector<8x256xf32>
    %201 = tpu.matmul %199, %200, %cst_71 {dimension_numbers = #tpu.dot_dimension_numbers<[1], [0], [0], [1], [0, 0, 1, 1], [], []>} : vector<8x128xbf16>, vector<128x256xbf16>, vector<8x256xf32> -> vector<8x256xf32>
    %202 = arith.addf %197, %201 : vector<8x256xf32>
    %203 = vector.extract_strided_slice %188 {offsets = [4, 0], sizes = [8, 128], strides = [1, 1]} : vector<20x128xf32> to vector<8x128xf32>
    %204 = arith.truncf %203 : vector<8x128xf32> to vector<8x128xbf16>
    %c384_72 = arith.constant 384 : index
    %c0_73 = arith.constant 0 : index
    %205 = vector.load %arg8[%c384_72, %c0_73] : memref<1152x256xbf16, #tpu.memory_space<vmem>>, vector<128x256xbf16>
    %cst_74 = arith.constant dense<0.000000e+00> : vector<8x256xf32>
    %206 = tpu.matmul %204, %205, %cst_74 {dimension_numbers = #tpu.dot_dimension_numbers<[1], [0], [0], [1], [0, 0, 1, 1], [], []>} : vector<8x128xbf16>, vector<128x256xbf16>, vector<8x256xf32> -> vector<8x256xf32>
    %207 = arith.addf %202, %206 : vector<8x256xf32>
    %208 = vector.extract_strided_slice %188 {offsets = [5, 0], sizes = [8, 128], strides = [1, 1]} : vector<20x128xf32> to vector<8x128xf32>
    %209 = arith.truncf %208 : vector<8x128xf32> to vector<8x128xbf16>
    %c512_75 = arith.constant 512 : index
    %c0_76 = arith.constant 0 : index
    %210 = vector.load %arg8[%c512_75, %c0_76] : memref<1152x256xbf16, #tpu.memory_space<vmem>>, vector<128x256xbf16>
    %cst_77 = arith.constant dense<0.000000e+00> : vector<8x256xf32>
    %211 = tpu.matmul %209, %210, %cst_77 {dimension_numbers = #tpu.dot_dimension_numbers<[1], [0], [0], [1], [0, 0, 1, 1], [], []>} : vector<8x128xbf16>, vector<128x256xbf16>, vector<8x256xf32> -> vector<8x256xf32>
    %212 = arith.addf %207, %211 : vector<8x256xf32>
    %213 = vector.extract_strided_slice %188 {offsets = [6, 0], sizes = [8, 128], strides = [1, 1]} : vector<20x128xf32> to vector<8x128xf32>
    %214 = arith.truncf %213 : vector<8x128xf32> to vector<8x128xbf16>
    %c640 = arith.constant 640 : index
    %c0_78 = arith.constant 0 : index
    %215 = vector.load %arg8[%c640, %c0_78] : memref<1152x256xbf16, #tpu.memory_space<vmem>>, vector<128x256xbf16>
    %cst_79 = arith.constant dense<0.000000e+00> : vector<8x256xf32>
    %216 = tpu.matmul %214, %215, %cst_79 {dimension_numbers = #tpu.dot_dimension_numbers<[1], [0], [0], [1], [0, 0, 1, 1], [], []>} : vector<8x128xbf16>, vector<128x256xbf16>, vector<8x256xf32> -> vector<8x256xf32>
    %217 = arith.addf %212, %216 : vector<8x256xf32>
    %218 = vector.extract_strided_slice %188 {offsets = [8, 0], sizes = [8, 128], strides = [1, 1]} : vector<20x128xf32> to vector<8x128xf32>
    %219 = arith.truncf %218 : vector<8x128xf32> to vector<8x128xbf16>
    %c768 = arith.constant 768 : index
    %c0_80 = arith.constant 0 : index
    %220 = vector.load %arg8[%c768, %c0_80] : memref<1152x256xbf16, #tpu.memory_space<vmem>>, vector<128x256xbf16>
    %cst_81 = arith.constant dense<0.000000e+00> : vector<8x256xf32>
    %221 = tpu.matmul %219, %220, %cst_81 {dimension_numbers = #tpu.dot_dimension_numbers<[1], [0], [0], [1], [0, 0, 1, 1], [], []>} : vector<8x128xbf16>, vector<128x256xbf16>, vector<8x256xf32> -> vector<8x256xf32>
    %222 = arith.addf %217, %221 : vector<8x256xf32>
    %223 = vector.extract_strided_slice %188 {offsets = [9, 0], sizes = [8, 128], strides = [1, 1]} : vector<20x128xf32> to vector<8x128xf32>
    %224 = arith.truncf %223 : vector<8x128xf32> to vector<8x128xbf16>
    %c896 = arith.constant 896 : index
    %c0_82 = arith.constant 0 : index
    %225 = vector.load %arg8[%c896, %c0_82] : memref<1152x256xbf16, #tpu.memory_space<vmem>>, vector<128x256xbf16>
    %cst_83 = arith.constant dense<0.000000e+00> : vector<8x256xf32>
    %226 = tpu.matmul %224, %225, %cst_83 {dimension_numbers = #tpu.dot_dimension_numbers<[1], [0], [0], [1], [0, 0, 1, 1], [], []>} : vector<8x128xbf16>, vector<128x256xbf16>, vector<8x256xf32> -> vector<8x256xf32>
    %227 = arith.addf %222, %226 : vector<8x256xf32>
    %228 = vector.extract_strided_slice %188 {offsets = [10, 0], sizes = [8, 128], strides = [1, 1]} : vector<20x128xf32> to vector<8x128xf32>
    %229 = arith.truncf %228 : vector<8x128xf32> to vector<8x128xbf16>
    %c1024 = arith.constant 1024 : index
    %c0_84 = arith.constant 0 : index
    %230 = vector.load %arg8[%c1024, %c0_84] : memref<1152x256xbf16, #tpu.memory_space<vmem>>, vector<128x256xbf16>
    %cst_85 = arith.constant dense<0.000000e+00> : vector<8x256xf32>
    %231 = tpu.matmul %229, %230, %cst_85 {dimension_numbers = #tpu.dot_dimension_numbers<[1], [0], [0], [1], [0, 0, 1, 1], [], []>} : vector<8x128xbf16>, vector<128x256xbf16>, vector<8x256xf32> -> vector<8x256xf32>
    %232 = arith.addf %227, %231 : vector<8x256xf32>
    %c0_86 = arith.constant 0 : index
    %c0_87 = arith.constant 0 : index
    %233 = vector.load %arg9[%c0_86, %c0_87] : memref<1x256xf32, #tpu.memory_space<vmem>>, vector<1x256xf32>
    %234 = vector.broadcast %233 : vector<1x256xf32> to vector<8x256xf32>
    %235 = arith.addf %232, %234 : vector<8x256xf32>
    %cst_88 = arith.constant 0.000000e+00 : f32
    %236 = vector.broadcast %cst_88 : f32 to vector<8x256xf32>
    %237 = arith.maximumf %235, %236 : vector<8x256xf32>
    %238 = vector.extract_strided_slice %237 {offsets = [0, 0], sizes = [1, 256], strides = [1, 1]} : vector<8x256xf32> to vector<1x256xf32>
    %239 = vector.extract_strided_slice %237 {offsets = [1, 0], sizes = [1, 256], strides = [1, 1]} : vector<8x256xf32> to vector<1x256xf32>
    %240 = arith.addf %238, %239 : vector<1x256xf32>
    %241 = vector.extract_strided_slice %237 {offsets = [4, 0], sizes = [1, 256], strides = [1, 1]} : vector<8x256xf32> to vector<1x256xf32>
    %242 = arith.addf %240, %241 : vector<1x256xf32>
    %243 = vector.extract_strided_slice %237 {offsets = [5, 0], sizes = [1, 256], strides = [1, 1]} : vector<8x256xf32> to vector<1x256xf32>
    %244 = arith.addf %242, %243 : vector<1x256xf32>
    %cst_89 = arith.constant 2.500000e-01 : f32
    %245 = vector.broadcast %cst_89 : f32 to vector<1x256xf32>
    %246 = arith.mulf %244, %245 : vector<1x256xf32>
    %247 = vector.shape_cast %246 : vector<1x256xf32> to vector<1x1x256xf32>
    %c0_90 = arith.constant 0 : index
    %c0_91 = arith.constant 0 : index
    %c0_92 = arith.constant 0 : index
    %248 = vector.load %arg13[%c0_90, %c0_91, %c0_92] : memref<1x1x256xf32, #tpu.memory_space<vmem>>, vector<1x1x256xf32>
    tpu.vector_store %arg13[%c0_90, %c0_91, %c0_92], %247 {strides = array<i32>} : memref<1x1x256xf32, #tpu.memory_space<vmem>>, vector<1x1x256xf32>,
    return
  }
  func.func @transform_0(%arg0: i32) -> (i32, i32, i32) {
    %c0_i32 = arith.constant 0 : i32
    %c0_i32_0 = arith.constant 0 : i32
    %c0_i32_1 = arith.constant 0 : i32
    return %arg0, %c0_i32, %c0_i32_0 : i32, i32, i32
  }
  func.func @transform_1(%arg0: i32) -> (i32, i32) {
    %c0_i32 = arith.constant 0 : i32
    %c0_i32_0 = arith.constant 0 : i32
    %c0_i32_1 = arith.constant 0 : i32
    return %c0_i32, %c0_i32_0 : i32, i32
  }
  func.func @transform_2(%arg0: i32) -> (i32, i32) {
    %c0_i32 = arith.constant 0 : i32
    %c0_i32_0 = arith.constant 0 : i32
    %c0_i32_1 = arith.constant 0 : i32
    return %c0_i32, %c0_i32_0 : i32, i32
  }
  func.func @transform_3(%arg0: i32) -> (i32, i32) {
    %c0_i32 = arith.constant 0 : i32
    %c0_i32_0 = arith.constant 0 : i32
    %c0_i32_1 = arith.constant 0 : i32
    return %c0_i32, %c0_i32_0 : i32, i32
  }
  func.func @transform_4(%arg0: i32) -> (i32, i32) {
    %c0_i32 = arith.constant 0 : i32
    %c0_i32_0 = arith.constant 0 : i32
    %c0_i32_1 = arith.constant 0 : i32
    return %c0_i32, %c0_i32_0 : i32, i32
  }
  func.func @transform_5(%arg0: i32) -> (i32, i32) {
    %c0_i32 = arith.constant 0 : i32
    %c0_i32_0 = arith.constant 0 : i32
    %c0_i32_1 = arith.constant 0 : i32
    return %c0_i32, %c0_i32_0 : i32, i32
  }
  func.func @transform_6(%arg0: i32) -> (i32, i32) {
    %c0_i32 = arith.constant 0 : i32
    %c0_i32_0 = arith.constant 0 : i32
    %c0_i32_1 = arith.constant 0 : i32
    return %c0_i32, %c0_i32_0 : i32, i32
  }
  func.func @transform_7(%arg0: i32) -> (i32, i32) {
    %c0_i32 = arith.constant 0 : i32
    %c0_i32_0 = arith.constant 0 : i32
    %c0_i32_1 = arith.constant 0 : i32
    return %c0_i32, %c0_i32_0 : i32, i32
  }
  func.func @transform_8(%arg0: i32) -> (i32, i32) {
    %c0_i32 = arith.constant 0 : i32
    %c0_i32_0 = arith.constant 0 : i32
    %c0_i32_1 = arith.constant 0 : i32
    return %c0_i32, %c0_i32_0 : i32, i32
  }
  func.func @transform_9(%arg0: i32) -> (i32, i32) {
    %c0_i32 = arith.constant 0 : i32
    %c0_i32_0 = arith.constant 0 : i32
    %c0_i32_1 = arith.constant 0 : i32
    return %c0_i32, %c0_i32_0 : i32, i32
  }
  func.func @transform_10(%arg0: i32) -> (i32, i32) {
    %c0_i32 = arith.constant 0 : i32
    %c0_i32_0 = arith.constant 0 : i32
    %c0_i32_1 = arith.constant 0 : i32
    return %c0_i32, %c0_i32_0 : i32, i32
  }
  func.func @transform_11(%arg0: i32) -> (i32, i32) {
    %c0_i32 = arith.constant 0 : i32
    %c0_i32_0 = arith.constant 0 : i32
    %c0_i32_1 = arith.constant 0 : i32
    return %c0_i32, %c0_i32_0 : i32, i32
  }
  func.func @transform_12(%arg0: i32) -> (i32, i32, i32) {
    %c0_i32 = arith.constant 0 : i32
    %c0_i32_0 = arith.constant 0 : i32
    %c0_i32_1 = arith.constant 0 : i32
    return %arg0, %c0_i32, %c0_i32_0 : i32, i32, i32
  }
}

</mosaic_0001>

<llo_original>
// kernel: siamese_forward.3
$region0: #{siamese_forward.3}
  #allocation0 [shape = 'u32[]', space=smem, size = 0x4, offset = 0x4, fixed_abs, tag = 'smem constant byte address 0x4 - core index']
  #allocation1 [shape = 'u32[144,128]{1,0:T(1,128)}', space=vmem, size = 0x12000, scoped, tag = 'internal scratch']
  %s0 = inlined_call_operand.vmem [shape: f32[4,256], index: 0, kind: input, shape index: {}]
  %s1 = inlined_call_operand.vmem [shape: f32[256,128], index: 1, kind: input, shape index: {}]
  %s2 = inlined_call_operand.vmem [shape: f32[1,128], index: 2, kind: input, shape index: {}]
  %s3 = inlined_call_operand.vmem [shape: f32[1,128], index: 3, kind: input, shape index: {}]
  %s4 = inlined_call_operand.vmem [shape: f32[1,128], index: 4, kind: input, shape index: {}]
  %s5 = inlined_call_operand.vmem [shape: f32[2,1], index: 5, kind: output, shape index: {}]
  %s6 = sld [smem:[#allocation0]]
  $region30: #{siamese_forward.3} parent=0
    _
  %s8 = ssub.s32 1, %s6
  %s9 = scalar_select 0, %s8, %s6
  // Predicated region
  $region2: #{siamese_forward.3} parent=0 // pred_check
    _
  $region3: #{siamese_forward.3} parent=0 // pred_check_branch
    %11 = sbr.rel (0) target = $region5
  $region4: #{siamese_forward.3} parent=0 // pred_region
    _
  $region5: #{siamese_forward.3} parent=0 // pred_fallthru
    _
  // Predicated region
  $region6: #{siamese_forward.3} parent=0 // pred_check
    _
  $region7: #{siamese_forward.3} parent=0 // pred_check_branch
    %13 = sbr.rel (0) target = $region9
  $region8: #{siamese_forward.3} parent=0 // pred_region
    _
  $region9: #{siamese_forward.3} parent=0 // pred_fallthru
    _
  // Predicated region
  $region10: #{siamese_forward.3} parent=0 // pred_check
    _
  $region11: #{siamese_forward.3} parent=0 // pred_check_branch
    %15 = sbr.rel (0) target = $region13
  $region12: #{siamese_forward.3} parent=0 // pred_region
    _
  $region13: #{siamese_forward.3} parent=0 // pred_fallthru
    _
  // Predicated region
  $region14: #{siamese_forward.3} parent=0 // pred_check
    _
  $region15: #{siamese_forward.3} parent=0 // pred_check_branch
    %17 = sbr.rel (0) target = $region17
  $region16: #{siamese_forward.3} parent=0 // pred_region
    _
  $region17: #{siamese_forward.3} parent=0 // pred_fallthru
    _
  // Predicated region
  $region18: #{siamese_forward.3} parent=0 // pred_check
    _
  $region19: #{siamese_forward.3} parent=0 // pred_check_branch
    %19 = sbr.rel (0) target = $region21
  $region20: #{siamese_forward.3} parent=0 // pred_region
    _
  $region21: #{siamese_forward.3} parent=0 // pred_fallthru
    _
  %v20 = vld [vmem:[%s0] sm:$0xff]
  %v21 = vld [vmem:[%s1] sm:$0xff]
  %v22 = vld [vmem:[%s1 + $0x8] sm:$0xff]
  %v23 = vld [vmem:[%s1 + $0x10] sm:$0xff]
  %v24 = vld [vmem:[%s1 + $0x18] sm:$0xff]
  %v25 = vld [vmem:[%s1 + $0x20] sm:$0xff]
  %v26 = vld [vmem:[%s1 + $0x28] sm:$0xff]
  %v27 = vld [vmem:[%s1 + $0x30] sm:$0xff]
  %v28 = vld [vmem:[%s1 + $0x38] sm:$0xff]
  %v29 = vld [vmem:[%s1 + $0x40] sm:$0xff]
  %v30 = vld [vmem:[%s1 + $0x48] sm:$0xff]
  %v31 = vld [vmem:[%s1 + $0x50] sm:$0xff]
  %v32 = vld [vmem:[%s1 + $0x58] sm:$0xff]
  %v33 = vld [vmem:[%s1 + $0x60] sm:$0xff]
  %v34 = vld [vmem:[%s1 + $0x68] sm:$0xff]
  %v35 = vld [vmem:[%s1 + $0x70] sm:$0xff]
  %v36 = vld [vmem:[%s1 + $0x78] sm:$0xff]
  %v37 = vld [vmem:[%s1 + $0x80] sm:$0xff]
  %v38 = vld [vmem:[%s1 + $0x88] sm:$0xff]
  %v39 = vld [vmem:[%s1 + $0x90] sm:$0xff]
  %v40 = vld [vmem:[%s1 + $0x98] sm:$0xff]
  %v41 = vld [vmem:[%s1 + $0xa0] sm:$0xff]
  %v42 = vld [vmem:[%s1 + $0xa8] sm:$0xff]
  %v43 = vld [vmem:[%s1 + $0xb0] sm:$0xff]
  %v44 = vld [vmem:[%s1 + $0xb8] sm:$0xff]
  %v45 = vld [vmem:[%s1 + $0xc0] sm:$0xff]
  %v46 = vld [vmem:[%s1 + $0xc8] sm:$0xff]
  %v47 = vld [vmem:[%s1 + $0xd0] sm:$0xff]
  %v48 = vld [vmem:[%s1 + $0xd8] sm:$0xff]
  %v49 = vld [vmem:[%s1 + $0xe0] sm:$0xff]
  %v50 = vld [vmem:[%s1 + $0xe8] sm:$0xff]
  %v51 = vld [vmem:[%s1 + $0xf0] sm:$0xff]
  %v52 = vld [vmem:[%s1 + $0xf8] sm:$0xff]
  %v53 = vld [vmem:[%s2] sm:$0x1]
  %v55 = vlaneseq
  %v56 = vshrl.u32 %v55, 7
  %v57 = vsub.s32 0, %v56
  %v58 = vrot.slane %v53, %v57
  %v61 = vcombine.high %v20, %v20
  %63 = vmatprep.subr.mxu0 0.0
  %64 = vmatpush1.msra.mxu0 %v21
  %65 = vmatprep.subr.mxu0 0.0
  %66 = vmatpush1.msra.mxu0 %v22
  %67 = vmatprep.subr.mxu0 0.0
  %68 = vmatpush1.msra.mxu0 %v23
  %69 = vmatprep.subr.mxu0 0.0
  %70 = vmatpush1.msra.mxu0 %v24
  %71 = vmatprep.subr.mxu0 0.0
  %72 = vmatpush1.msra.mxu0 %v25
  %73 = vmatprep.subr.mxu0 0.0
  %74 = vmatpush1.msra.mxu0 %v26
  %75 = vmatprep.subr.mxu0 0.0
  %76 = vmatpush1.msra.mxu0 %v27
  %77 = vmatprep.subr.mxu0 0.0
  %78 = vmatpush1.msra.mxu0 %v28
  %79 = vmatprep.subr.mxu0 0.0
  %80 = vmatpush1.msra.mxu0 %v29
  %81 = vmatprep.subr.mxu0 0.0
  %82 = vmatpush1.msra.mxu0 %v30
  %83 = vmatprep.subr.mxu0 0.0
  %84 = vmatpush1.msra.mxu0 %v31
  %85 = vmatprep.subr.mxu0 0.0
  %86 = vmatpush1.msra.mxu0 %v32
  %87 = vmatprep.subr.mxu0 0.0
  %88 = vmatpush1.msra.mxu0 %v33
  %89 = vmatprep.subr.mxu0 0.0
  %90 = vmatpush1.msra.mxu0 %v34
  %91 = vmatprep.subr.mxu0 0.0
  %92 = vmatpush1.msra.mxu0 %v35
  %93 = vmatprep.subr.mxu0 0.0
  %94 = vmatpush1.msra.mxu0 %v36
  %95 = vmatprep.subr.mxu0 0.0
  %96 = vmatpush1.msra.mxu0 %v37
  %97 = vmatprep.subr.mxu0 0.0
  %98 = vmatpush1.msra.mxu0 %v38
  %99 = vmatprep.subr.mxu0 0.0
  %100 = vmatpush1.msra.mxu0 %v39
  %101 = vmatprep.subr.mxu0 0.0
  %102 = vmatpush1.msra.mxu0 %v40
  %103 = vmatprep.subr.mxu0 0.0
  %104 = vmatpush1.msra.mxu0 %v41
  %105 = vmatprep.subr.mxu0 0.0
  %106 = vmatpush1.msra.mxu0 %v42
  %107 = vmatprep.subr.mxu0 0.0
  %108 = vmatpush1.msra.mxu0 %v43
  %109 = vmatprep.subr.mxu0 0.0
  %110 = vmatpush1.msra.mxu0 %v44
  %111 = vmatprep.subr.mxu0 0.0
  %112 = vmatpush1.msra.mxu0 %v45
  %113 = vmatprep.subr.mxu0 0.0
  %114 = vmatpush1.msra.mxu0 %v46
  %115 = vmatprep.subr.mxu0 0.0
  %116 = vmatpush1.msra.mxu0 %v47
  %117 = vmatprep.subr.mxu0 0.0
  %118 = vmatpush1.msra.mxu0 %v48
  %119 = vmatprep.subr.mxu0 0.0
  %120 = vmatpush1.msra.mxu0 %v49
  %121 = vmatprep.subr.mxu0 0.0
  %122 = vmatpush1.msra.mxu0 %v50
  %123 = vmatprep.subr.mxu0 0.0
  %124 = vmatpush1.msra.mxu0 %v51
  %125 = vmatprep.subr.mxu0 0.0
  %126 = vmatpush1.msra.mxu0 %v52
  %127 = vmatprep.mubr.f32.mxu0 %v61
  %128 = vmatmul.mubr.f32.gmra.mrb[0].mxu0 %v20
  %v129 = vpop.f32.mrb[0].mxu0
  %v130 = vadd.f32 %v58, %v129
  %v131 = vpop.f32.mrb[0].mxu0
  %132 = vdwg.mxu0
  %vm133 = vcmask 1043456
  %v134 = vsel %vm133, %v130, 0.0
  %135 = vadd.xlane.f32.xlu0 %v134
  %v136 = vpop.xlane.xlu0 %135
  %v137 = vrcp.pop 128.0
  %v138 = vmul.f32 %v136, %v137
  %v139 = vsub.f32 %v130, %v138
  %v140 = vmul.f32 %v139, %v139
  %v141 = vsel %vm133, %v140, 0.0
  %142 = vadd.xlane.f32.xlu0 %v141
  %v143 = vpop.xlane.xlu0 %142
  %v144 = vmul.f32 %v143, %v137
  %v145 = vadd.f32 %v144, 1e-05
  %v146 = vrsqrt.pop %v145
  %v147 = vmul.f32 %v139, %v146
  %v148 = vld [vmem:[%s3] sm:$0x1]
  %v150 = vlaneseq
  %v151 = vshrl.u32 %v150, 7
  %v152 = vsub.s32 0, %v151
  %v153 = vrot.slane %v148, %v152
  %v155 = vmul.f32 %v147, %v153
  %v156 = vld [vmem:[%s4] sm:$0x1]
  %v158 = vlaneseq
  %v159 = vshrl.u32 %v158, 7
  %v160 = vsub.s32 0, %v159
  %v161 = vrot.slane %v156, %v160
  %v163 = vadd.f32 %v155, %v161
  %v165 = vrot.slane %v163, 2
  %v167 = vsub.f32 %v163, %v165
  %v168 = vmul.f32 %v167, %v167
  %vm169 = vcmask 1041408
  %v170 = vsel %vm169, %v168, 0.0
  %171 = vadd.xlane.f32.xlu0 %v170
  %v172 = vpop.xlane.xlu0 %171
  %v173 = vrsqrt.pop %v172
  %v174 = vmul.f32 %v172, %v173
  %vm175 = vcmp.eq.f32.partialorder %v172, inf
  %v176 = vsel %vm175, %v172, %v174
  %vm177 = vcmp.eq.f32.partialorder %v172, 0.0
  %v178 = vand.u32 %v172, 2147483648
  %v179 = vsel %vm177, %v178, %v176
  %vm180 = vcmask 1024
  %181 = vst.msk [vmem:[%s5] sm:$0x3] %vm180, %v179
  // Predicated region
  $region22: #{siamese_forward.3} parent=0 // pred_check
    _
  $region23: #{siamese_forward.3} parent=0 // pred_check_branch
    %183 = sbr.rel (0) target = $region25
  $region24: #{siamese_forward.3} parent=0 // pred_region
    _
  $region25: #{siamese_forward.3} parent=0 // pred_fallthru
    _
  // Predicated region
  $region26: #{siamese_forward.3} parent=0 // pred_check
    _
  $region27: #{siamese_forward.3} parent=0 // pred_check_branch
    %185 = sbr.rel (0) target = $region29
  $region28: #{siamese_forward.3} parent=0 // pred_region
    _
  $region29: #{siamese_forward.3} parent=0 // pred_fallthru
    _

// kernel: siamese_forward.2
$region0: #{siamese_forward.2}
  #allocation0 [shape = 'u32[]', space=smem, size = 0x4, offset = 0x4, fixed_abs, tag = 'smem constant byte address 0x4 - core index']
  #allocation1 [shape = 'u32[144,128]{1,0:T(1,128)}', space=vmem, size = 0x12000, scoped, tag = 'internal scratch']
  %s0 = inlined_call_operand.vmem [shape: f32[4,342,1], index: 0, kind: input, shape index: {}]
  %s1 = inlined_call_operand.vmem [shape: f32[9,32], index: 1, kind: input, shape index: {}]
  %s2 = inlined_call_operand.vmem [shape: f32[1,32], index: 2, kind: input, shape index: {}]
  %s3 = inlined_call_operand.vmem [shape: bf16[288,64], index: 3, kind: input, shape index: {}]
  %s4 = inlined_call_operand.vmem [shape: f32[1,64], index: 4, kind: input, shape index: {}]
  %s5 = inlined_call_operand.vmem [shape: bf16[576,128], index: 5, kind: input, shape index: {}]
  %s6 = inlined_call_operand.vmem [shape: f32[1,128], index: 6, kind: input, shape index: {}]
  %s7 = inlined_call_operand.vmem [shape: bf16[1152,256], index: 7, kind: input, shape index: {}]
  %s8 = inlined_call_operand.vmem [shape: f32[1,256], index: 8, kind: input, shape index: {}]
  %s9 = inlined_call_operand.vmem [shape: bf16[110,267], index: 9, kind: input, shape index: {}]
  %s10 = inlined_call_operand.vmem [shape: bf16[42,67], index: 10, kind: input, shape index: {}]
  %s11 = inlined_call_operand.vmem [shape: bf16[20,15], index: 11, kind: input, shape index: {}]
  %s12 = inlined_call_operand.vmem [shape: f32[4,1,256], index: 12, kind: output, shape index: {}]
  %s13 = sld [smem:[#allocation0]]
  $region81: #{siamese_forward.2} parent=0
    _
  %s15 = ssub.s32 1, %s13
  %s16 = scalar_select 0, %s15, %s13
  loop: start=0, step=1, limit=6
  $region2: #{siamese_forward.2} parent=0 // loop_pre_header
    _
  $region3: #{siamese_forward.2} parent=0 // loop_header
    %s18 = sphi 0, %s22
    %p19 = scmp.ge.s32.totalorder %s18, 6
    %s28 = sphi 0, %s30
    %s31 = sphi 0, %s28
    %s32 = sphi 0, %s31
    %s48 = sphi 0, %s32
    %s52 = sphi 0, %s52
    %s54 = sphi 0, %s52
    %s55 = sphi 0, %s54
    %s69 = sphi 0, %s55
    %s73 = sphi 0, %s73
    %s75 = sphi 0, %s73
    %s76 = sphi 0, %s75
    %s90 = sphi 0, %s76
    %s94 = sphi 0, %s94
    %s96 = sphi 0, %s94
    %s97 = sphi 0, %s96
    %s111 = sphi 0, %s97
    %s115 = sphi 0, %s115
    %s117 = sphi 0, %s115
    %s118 = sphi 0, %s117
    %s132 = sphi 0, %s118
    %s136 = sphi 0, %s136
    %s138 = sphi 0, %s136
    %s139 = sphi 0, %s138
    %s153 = sphi 0, %s139
    %s157 = sphi 0, %s157
    %s159 = sphi 0, %s157
    %s160 = sphi 0, %s159
    %s174 = sphi 0, %s160
    %s178 = sphi 0, %s178
    %s180 = sphi 0, %s178
    %s181 = sphi 0, %s180
    %s195 = sphi 0, %s181
    %s199 = sphi 0, %s199
    %s201 = sphi 0, %s199
    %s202 = sphi 0, %s201
    %s216 = sphi 0, %s202
    %s220 = sphi 0, %s220
    %s222 = sphi 0, %s220
    %s223 = sphi 0, %s222
    %s237 = sphi 0, %s223
    %s241 = sphi 0, %s241
    %s243 = sphi 0, %s241
    %s244 = sphi 0, %s243
    %s258 = sphi 0, %s244
    %s262 = sphi 0, %s262
    %s264 = sphi 0, %s262
    %s265 = sphi 0, %s264
    %s279 = sphi 0, %s265
    %s285 = sphi 0, %s287
    %s288 = sphi 0, %s285
    %s289 = sphi 0, %s288
    %s305 = sphi 0, %s289
  $region4: #{siamese_forward.2} parent=0 // loop_header_branch
    %21 = sbr.rel (%p19) target = $region8
  $region5: #{siamese_forward.2} parent=0 // loop_body
    %s23 = ssub.s32 %s18, 1
    %s24 = ssub.s32 %s18, 2
    %s25 = sadd.s32 %s18, 1
    %s26 = ssub.s32 %s18, %s25
    %p27 = scmp.eq.s32.totalorder %s26, 0
    %s29 = sadd.s32 %s28, 1
    %s30 = scalar_select %p27, %s28, %s29
    %p33 = pneg %p27
    %p34 = scmp.eq.s32.totalorder %s18, 3
    %p35 = por %p33, %p34
    %p36 = scmp.ne.s32.totalorder %s28, %s31
    %p37 = scmp.eq.s32.totalorder %s18, 0
    %p38 = por %p36, %p37
    %p39 = scmp.ne.s32.totalorder %s28, %s31
    %p40 = scmp.eq.s32.totalorder %s23, 3
    %p41 = por %p39, %p40
    %p42 = scmp.ne.s32.totalorder %s31, %s32
    %p43 = scmp.eq.s32.totalorder %s23, 0
    %p44 = por %p42, %p43
    %p45 = scmp.ne.s32.totalorder %s31, %s32
    %p46 = scmp.eq.s32.totalorder %s24, 3
    %p47 = por %p45, %p46
    %p49 = scmp.ne.s32.totalorder %s32, %s48
    %p50 = scmp.eq.s32.totalorder %s24, 0
    %p51 = por %p49, %p50
    %s53 = sadd.s32 %s52, 1
    %p56 = scmp.eq.s32.totalorder %s18, 3
    %p57 = scmp.ne.s32.totalorder %s52, %s54
    %p58 = scmp.eq.s32.totalorder %s18, 0
    %p59 = por %p57, %p58
    %p60 = scmp.ne.s32.totalorder %s52, %s54
    %p61 = scmp.eq.s32.totalorder %s23, 3
    %p62 = por %p60, %p61
    %p63 = scmp.ne.s32.totalorder %s54, %s55
    %p64 = scmp.eq.s32.totalorder %s23, 0
    %p65 = por %p63, %p64
    %p66 = scmp.ne.s32.totalorder %s54, %s55
    %p67 = scmp.eq.s32.totalorder %s24, 3
    %p68 = por %p66, %p67
    %p70 = scmp.ne.s32.totalorder %s55, %s69
    %p71 = scmp.eq.s32.totalorder %s24, 0
    %p72 = por %p70, %p71
    %s74 = sadd.s32 %s73, 1
    %p77 = scmp.eq.s32.totalorder %s18, 3
    %p78 = scmp.ne.s32.totalorder %s73, %s75
    %p79 = scmp.eq.s32.totalorder %s18, 0
    %p80 = por %p78, %p79
    %p81 = scmp.ne.s32.totalorder %s73, %s75
    %p82 = scmp.eq.s32.totalorder %s23, 3
    %p83 = por %p81, %p82
    %p84 = scmp.ne.s32.totalorder %s75, %s76
    %p85 = scmp.eq.s32.totalorder %s23, 0
    %p86 = por %p84, %p85
    %p87 = scmp.ne.s32.totalorder %s75, %s76
    %p88 = scmp.eq.s32.totalorder %s24, 3
    %p89 = por %p87, %p88
    %p91 = scmp.ne.s32.totalorder %s76, %s90
    %p92 = scmp.eq.s32.totalorder %s24, 0
    %p93 = por %p91, %p92
    %s95 = sadd.s32 %s94, 1
    %p98 = scmp.eq.s32.totalorder %s18, 3
    %p99 = scmp.ne.s32.totalorder %s94, %s96
    %p100 = scmp.eq.s32.totalorder %s18, 0
    %p101 = por %p99, %p100
    %p102 = scmp.ne.s32.totalorder %s94, %s96
    %p103 = scmp.eq.s32.totalorder %s23, 3
    %p104 = por %p102, %p103
    %p105 = scmp.ne.s32.totalorder %s96, %s97
    %p106 = scmp.eq.s32.totalorder %s23, 0
    %p107 = por %p105, %p106
    %p108 = scmp.ne.s32.totalorder %s96, %s97
    %p109 = scmp.eq.s32.totalorder %s24, 3
    %p110 = por %p108, %p109
    %p112 = scmp.ne.s32.totalorder %s97, %s111
    %p113 = scmp.eq.s32.totalorder %s24, 0
    %p114 = por %p112, %p113
    %s116 = sadd.s32 %s115, 1
    %p119 = scmp.eq.s32.totalorder %s18, 3
    %p120 = scmp.ne.s32.totalorder %s115, %s117
    %p121 = scmp.eq.s32.totalorder %s18, 0
    %p122 = por %p120, %p121
    %p123 = scmp.ne.s32.totalorder %s115, %s117
    %p124 = scmp.eq.s32.totalorder %s23, 3
    %p125 = por %p123, %p124
    %p126 = scmp.ne.s32.totalorder %s117, %s118
    %p127 = scmp.eq.s32.totalorder %s23, 0
    %p128 = por %p126, %p127
    %p129 = scmp.ne.s32.totalorder %s117, %s118
    %p130 = scmp.eq.s32.totalorder %s24, 3
    %p131 = por %p129, %p130
    %p133 = scmp.ne.s32.totalorder %s118, %s132
    %p134 = scmp.eq.s32.totalorder %s24, 0
    %p135 = por %p133, %p134
    %s137 = sadd.s32 %s136, 1
    %p140 = scmp.eq.s32.totalorder %s18, 3
    %p141 = scmp.ne.s32.totalorder %s136, %s138
    %p142 = scmp.eq.s32.totalorder %s18, 0
    %p143 = por %p141, %p142
    %p144 = scmp.ne.s32.totalorder %s136, %s138
    %p145 = scmp.eq.s32.totalorder %s23, 3
    %p146 = por %p144, %p145
    %p147 = scmp.ne.s32.totalorder %s138, %s139
    %p148 = scmp.eq.s32.totalorder %s23, 0
    %p149 = por %p147, %p148
    %p150 = scmp.ne.s32.totalorder %s138, %s139
    %p151 = scmp.eq.s32.totalorder %s24, 3
    %p152 = por %p150, %p151
    %p154 = scmp.ne.s32.totalorder %s139, %s153
    %p155 = scmp.eq.s32.totalorder %s24, 0
    %p156 = por %p154, %p155
    %s158 = sadd.s32 %s157, 1
    %p161 = scmp.eq.s32.totalorder %s18, 3
    %p162 = scmp.ne.s32.totalorder %s157, %s159
    %p163 = scmp.eq.s32.totalorder %s18, 0
    %p164 = por %p162, %p163
    %p165 = scmp.ne.s32.totalorder %s157, %s159
    %p166 = scmp.eq.s32.totalorder %s23, 3
    %p167 = por %p165, %p166
    %p168 = scmp.ne.s32.totalorder %s159, %s160
    %p169 = scmp.eq.s32.totalorder %s23, 0
    %p170 = por %p168, %p169
    %p171 = scmp.ne.s32.totalorder %s159, %s160
    %p172 = scmp.eq.s32.totalorder %s24, 3
    %p173 = por %p171, %p172
    %p175 = scmp.ne.s32.totalorder %s160, %s174
    %p176 = scmp.eq.s32.totalorder %s24, 0
    %p177 = por %p175, %p176
    %s179 = sadd.s32 %s178, 1
    %p182 = scmp.eq.s32.totalorder %s18, 3
    %p183 = scmp.ne.s32.totalorder %s178, %s180
    %p184 = scmp.eq.s32.totalorder %s18, 0
    %p185 = por %p183, %p184
    %p186 = scmp.ne.s32.totalorder %s178, %s180
    %p187 = scmp.eq.s32.totalorder %s23, 3
    %p188 = por %p186, %p187
    %p189 = scmp.ne.s32.totalorder %s180, %s181
    %p190 = scmp.eq.s32.totalorder %s23, 0
    %p191 = por %p189, %p190
    %p192 = scmp.ne.s32.totalorder %s180, %s181
    %p193 = scmp.eq.s32.totalorder %s24, 3
    %p194 = por %p192, %p193
    %p196 = scmp.ne.s32.totalorder %s181, %s195
    %p197 = scmp.eq.s32.totalorder %s24, 0
    %p198 = por %p196, %p197
    %s200 = sadd.s32 %s199, 1
    %p203 = scmp.eq.s32.totalorder %s18, 3
    %p204 = scmp.ne.s32.totalorder %s199, %s201
    %p205 = scmp.eq.s32.totalorder %s18, 0
    %p206 = por %p204, %p205
    %p207 = scmp.ne.s32.totalorder %s199, %s201
    %p208 = scmp.eq.s32.totalorder %s23, 3
    %p209 = por %p207, %p208
    %p210 = scmp.ne.s32.totalorder %s201, %s202
    %p211 = scmp.eq.s32.totalorder %s23, 0
    %p212 = por %p210, %p211
    %p213 = scmp.ne.s32.totalorder %s201, %s202
    %p214 = scmp.eq.s32.totalorder %s24, 3
    %p215 = por %p213, %p214
    %p217 = scmp.ne.s32.totalorder %s202, %s216
    %p218 = scmp.eq.s32.totalorder %s24, 0
    %p219 = por %p217, %p218
    %s221 = sadd.s32 %s220, 1
    %p224 = scmp.eq.s32.totalorder %s18, 3
    %p225 = scmp.ne.s32.totalorder %s220, %s222
    %p226 = scmp.eq.s32.totalorder %s18, 0
    %p227 = por %p225, %p226
    %p228 = scmp.ne.s32.totalorder %s220, %s222
    %p229 = scmp.eq.s32.totalorder %s23, 3
    %p230 = por %p228, %p229
    %p231 = scmp.ne.s32.totalorder %s222, %s223
    %p232 = scmp.eq.s32.totalorder %s23, 0
    %p233 = por %p231, %p232
    %p234 = scmp.ne.s32.totalorder %s222, %s223
    %p235 = scmp.eq.s32.totalorder %s24, 3
    %p236 = por %p234, %p235
    %p238 = scmp.ne.s32.totalorder %s223, %s237
    %p239 = scmp.eq.s32.totalorder %s24, 0
    %p240 = por %p238, %p239
    %s242 = sadd.s32 %s241, 1
    %p245 = scmp.eq.s32.totalorder %s18, 3
    %p246 = scmp.ne.s32.totalorder %s241, %s243
    %p247 = scmp.eq.s32.totalorder %s18, 0
    %p248 = por %p246, %p247
    %p249 = scmp.ne.s32.totalorder %s241, %s243
    %p250 = scmp.eq.s32.totalorder %s23, 3
    %p251 = por %p249, %p250
    %p252 = scmp.ne.s32.totalorder %s243, %s244
    %p253 = scmp.eq.s32.totalorder %s23, 0
    %p254 = por %p252, %p253
    %p255 = scmp.ne.s32.totalorder %s243, %s244
    %p256 = scmp.eq.s32.totalorder %s24, 3
    %p257 = por %p255, %p256
    %p259 = scmp.ne.s32.totalorder %s244, %s258
    %p260 = scmp.eq.s32.totalorder %s24, 0
    %p261 = por %p259, %p260
    %s263 = sadd.s32 %s262, 1
    %p266 = scmp.eq.s32.totalorder %s18, 3
    %p267 = scmp.ne.s32.totalorder %s262, %s264
    %p268 = scmp.eq.s32.totalorder %s18, 0
    %p269 = por %p267, %p268
    %p270 = scmp.ne.s32.totalorder %s262, %s264
    %p271 = scmp.eq.s32.totalorder %s23, 3
    %p272 = por %p270, %p271
    %p273 = scmp.ne.s32.totalorder %s264, %s265
    %p274 = scmp.eq.s32.totalorder %s23, 0
    %p275 = por %p273, %p274
    %p276 = scmp.ne.s32.totalorder %s264, %s265
    %p277 = scmp.eq.s32.totalorder %s24, 3
    %p278 = por %p276, %p277
    %p280 = scmp.ne.s32.totalorder %s265, %s279
    %p281 = scmp.eq.s32.totalorder %s24, 0
    %p282 = por %p280, %p281
    %s283 = ssub.s32 %s18, %s25
    %p284 = scmp.eq.s32.totalorder %s283, 0
    %s286 = sadd.s32 %s285, 1
    %s287 = scalar_select %p284, %s285, %s286
    %p290 = pneg %p284
    %p291 = scmp.eq.s32.totalorder %s18, 3
    %p292 = por %p290, %p291
    %p293 = scmp.ne.s32.totalorder %s285, %s288
    %p294 = scmp.eq.s32.totalorder %s18, 0
    %p295 = por %p293, %p294
    %p296 = scmp.ne.s32.totalorder %s285, %s288
    %p297 = scmp.eq.s32.totalorder %s23, 3
    %p298 = por %p296, %p297
    %p299 = scmp.ne.s32.totalorder %s288, %s289
    %p300 = scmp.eq.s32.totalorder %s23, 0
    %p301 = por %p299, %p300
    %p302 = scmp.ne.s32.totalorder %s288, %s289
    %p303 = scmp.eq.s32.totalorder %s24, 3
    %p304 = por %p302, %p303
    %p306 = scmp.ne.s32.totalorder %s289, %s305
    %p307 = scmp.eq.s32.totalorder %s24, 0
    %p308 = por %p306, %p307
    %p309 = scmp.le.s32.totalorder 1, %s18
    %p310 = scmp.lt.s32.totalorder %s18, 5
    %p311 = pnand %p309, %p310
    %p312 = pneg %p311
    // Predicated region
    $region9: #{siamese_forward.2} parent=5 // pred_check
      _
    $region10: #{siamese_forward.2} parent=5 // pred_check_branch
      %314 = sbr.rel (%p311) target = $region12
    $region11: #{siamese_forward.2} parent=5 // pred_region
      %s315 = ssub.s32 %s18, 1
      // Predicated region
      $region13: #{siamese_forward.2} parent=11 // pred_check
        %p316 = pneg %p65
      $region14: #{siamese_forward.2} parent=11 // pred_check_branch
        %318 = sbr.rel (%p316) target = $region16
      $region15: #{siamese_forward.2} parent=11 // pred_region
        _
      $region16: #{siamese_forward.2} parent=11 // pred_fallthru
        _
      // Predicated region
      $region17: #{siamese_forward.2} parent=11 // pred_check
        %p319 = pneg %p86
      $region18: #{siamese_forward.2} parent=11 // pred_check_branch
        %321 = sbr.rel (%p319) target = $region20
      $region19: #{siamese_forward.2} parent=11 // pred_region
        _
      $region20: #{siamese_forward.2} parent=11 // pred_fallthru
        _
      // Predicated region
      $region21: #{siamese_forward.2} parent=11 // pred_check
        %p322 = pneg %p107
      $region22: #{siamese_forward.2} parent=11 // pred_check_branch
        %324 = sbr.rel (%p322) target = $region24
      $region23: #{siamese_forward.2} parent=11 // pred_region
        _
      $region24: #{siamese_forward.2} parent=11 // pred_fallthru
        _
      // Predicated region
      $region25: #{siamese_forward.2} parent=11 // pred_check
        %p325 = pneg %p128
      $region26: #{siamese_forward.2} parent=11 // pred_check_branch
        %327 = sbr.rel (%p325) target = $region28
      $region27: #{siamese_forward.2} parent=11 // pred_region
        _
      $region28: #{siamese_forward.2} parent=11 // pred_fallthru
        _
      // Predicated region
      $region29: #{siamese_forward.2} parent=11 // pred_check
        %p328 = pneg %p149
      $region30: #{siamese_forward.2} parent=11 // pred_check_branch
        %330 = sbr.rel (%p328) target = $region32
      $region31: #{siamese_forward.2} parent=11 // pred_region
        _
      $region32: #{siamese_forward.2} parent=11 // pred_fallthru
        _
      // Predicated region
      $region33: #{siamese_forward.2} parent=11 // pred_check
        %p331 = pneg %p170
      $region34: #{siamese_forward.2} parent=11 // pred_check_branch
        %333 = sbr.rel (%p331) target = $region36
      $region35: #{siamese_forward.2} parent=11 // pred_region
        _
      $region36: #{siamese_forward.2} parent=11 // pred_fallthru
        _
      // Predicated region
      $region37: #{siamese_forward.2} parent=11 // pred_check
        %p334 = pneg %p191
      $region38: #{siamese_forward.2} parent=11 // pred_check_branch
        %336 = sbr.rel (%p334) target = $region40
      $region39: #{siamese_forward.2} parent=11 // pred_region
        _
      $region40: #{siamese_forward.2} parent=11 // pred_fallthru
        _
      // Predicated region
      $region41: #{siamese_forward.2} parent=11 // pred_check
        %p337 = pneg %p212
      $region42: #{siamese_forward.2} parent=11 // pred_check_branch
        %339 = sbr.rel (%p337) target = $region44
      $region43: #{siamese_forward.2} parent=11 // pred_region
        _
      $region44: #{siamese_forward.2} parent=11 // pred_fallthru
        _
      // Predicated region
      $region45: #{siamese_forward.2} parent=11 // pred_check
        %p340 = pneg %p233
      $region46: #{siamese_forward.2} parent=11 // pred_check_branch
        %342 = sbr.rel (%p340) target = $region48
      $region47: #{siamese_forward.2} parent=11 // pred_region
        _
      $region48: #{siamese_forward.2} parent=11 // pred_fallthru
        _
      // Predicated region
      $region49: #{siamese_forward.2} parent=11 // pred_check
        %p343 = pneg %p254
      $region50: #{siamese_forward.2} parent=11 // pred_check_branch
        %345 = sbr.rel (%p343) target = $region52
      $region51: #{siamese_forward.2} parent=11 // pred_region
        _
      $region52: #{siamese_forward.2} parent=11 // pred_fallthru
        _
      // Predicated region
      $region53: #{siamese_forward.2} parent=11 // pred_check
        %p346 = pneg %p275
      $region54: #{siamese_forward.2} parent=11 // pred_check_branch
        %348 = sbr.rel (%p346) target = $region56
      $region55: #{siamese_forward.2} parent=11 // pred_region
        _
      $region56: #{siamese_forward.2} parent=11 // pred_fallthru
        _
    $region12: #{siamese_forward.2} parent=5 // pred_fallthru
      _
    %p349 = scmp.lt.s32.totalorder %s18, 4
    // Predicated region
    $region57: #{siamese_forward.2} parent=5 // pred_check
      %p350 = pneg %p349
    $region58: #{siamese_forward.2} parent=5 // pred_check_branch
      %352 = sbr.rel (%p350) target = $region60
    $region59: #{siamese_forward.2} parent=5 // pred_region
      // Predicated region
      $region61: #{siamese_forward.2} parent=59 // pred_check
        %p353 = pneg %p38
      $region62: #{siamese_forward.2} parent=59 // pred_check_branch
        %355 = sbr.rel (%p353) target = $region64
      $region63: #{siamese_forward.2} parent=59 // pred_region
        %p356 = scmp.lt.s32.totalorder %s18, 3
        %s357 = scalar_select %p356, %s18, 3
        %s358 = smul.addr %s357, 43
        %s359 = smul.addr %s358, 8
        %s360 = scalar_lea.vmem %s0, %s359
      $region64: #{siamese_forward.2} parent=59 // pred_fallthru
        _
    $region60: #{siamese_forward.2} parent=5 // pred_fallthru
      _
    %p361 = scmp.le.s32.totalorder 1, %s18
    %p362 = scmp.lt.s32.totalorder %s18, 5
    %p363 = pnand %p361, %p362
    %p364 = pneg %p363
    // Predicated region
    $region65: #{siamese_forward.2} parent=5 // pred_check
      _
    $region66: #{siamese_forward.2} parent=5 // pred_check_branch
      %366 = sbr.rel (%p363) target = $region68
    $region67: #{siamese_forward.2} parent=5 // pred_region
      %s367 = ssub.s32 %s18, 1
      %p368 = scmp.lt.s32.totalorder %s23, 3
      %s369 = scalar_select %p368, %s23, 3
      %s370 = smul.addr %s369, 43
      %s371 = smul.addr %s370, 8
      %s372 = scalar_lea.vmem %s0, %s371
      %p373 = pneg %p44
      %p374 = pneg %p41
      %p375 = pneg %p65
      %p376 = pneg %p62
      %p377 = pneg %p86
      %p378 = pneg %p83
      %p379 = pneg %p107
      %p380 = pneg %p104
      %p381 = pneg %p128
      %p382 = pneg %p125
      %p383 = pneg %p149
      %p384 = pneg %p146
      %p385 = pneg %p170
      %p386 = pneg %p167
      %p387 = pneg %p191
      %p388 = pneg %p188
      %p389 = pneg %p212
      %p390 = pneg %p209
      %p391 = pneg %p233
      %p392 = pneg %p230
      %p393 = pneg %p254
      %p394 = pneg %p251
      %p395 = pneg %p275
      %p396 = pneg %p272
      %p397 = pneg %p301
      %p398 = pneg %p298
      %p399 = scmp.lt.s32.totalorder %s23, 3
      %s400 = scalar_select %p399, %s23, 3
      %s401 = smul.addr %s400, 2
      %s402 = scalar_lea.vmem %s12, %s401
      %p403 = scmp.lt.s32.totalorder %s23, 3
      %s404 = scalar_select %p403, %s23, 3
      %s405 = smul.addr %s404, 43
      %s406 = smul.addr %s405, 8
      %s407 = scalar_lea.vmem %s0, %s406
      %p408 = scmp.lt.s32.totalorder %s23, 3
      %s409 = scalar_select %p408, %s23, 3
      %s410 = smul.addr %s409, 2
      %s411 = scalar_lea.vmem %s12, %s410
      %v413 = vld [vmem:[%s407] sm:$0xff]
      %v414 = vld [vmem:[%s407 + $0x8] sm:$0xff]
      %v415 = vld [vmem:[%s407 + $0x10] sm:$0xff]
      %v416 = vld [vmem:[%s407 + $0x18] sm:$0xff]
      %v417 = vld [vmem:[%s407 + $0x20] sm:$0xff]
      %v418 = vld [vmem:[%s407 + $0x28] sm:$0xff]
      %v419 = vld [vmem:[%s407 + $0x30] sm:$0xff]
      %v420 = vld [vmem:[%s407 + $0x38] sm:$0xff]
      %v421 = vld [vmem:[%s407 + $0x40] sm:$0xff]
      %v422 = vld [vmem:[%s407 + $0x48] sm:$0xff]
      %v423 = vld [vmem:[%s407 + $0x50] sm:$0xff]
      %v424 = vld [vmem:[%s407 + $0x58] sm:$0xff]
      %v425 = vld [vmem:[%s407 + $0x60] sm:$0xff]
      %v426 = vld [vmem:[%s407 + $0x68] sm:$0xff]
      %v427 = vld [vmem:[%s407 + $0x70] sm:$0xff]
      %v428 = vld [vmem:[%s407 + $0x78] sm:$0xff]
      %v429 = vld [vmem:[%s407 + $0x80] sm:$0xff]
      %v430 = vld [vmem:[%s407 + $0x88] sm:$0xff]
      %v431 = vld [vmem:[%s407 + $0x90] sm:$0xff]
      %v432 = vld [vmem:[%s407 + $0x98] sm:$0xff]
      %v433 = vld [vmem:[%s407 + $0xa0] sm:$0xff]
      %v434 = vld [vmem:[%s407 + $0xa8] sm:$0xff]
      %v435 = vld [vmem:[%s407 + $0xb0] sm:$0xff]
      %v436 = vld [vmem:[%s407 + $0xb8] sm:$0xff]
      %v437 = vld [vmem:[%s407 + $0xc0] sm:$0xff]
      %v438 = vld [vmem:[%s407 + $0xc8] sm:$0xff]
      %v439 = vld [vmem:[%s407 + $0xd0] sm:$0xff]
      %v440 = vld [vmem:[%s407 + $0xd8] sm:$0xff]
      %v441 = vld [vmem:[%s407 + $0xe0] sm:$0xff]
      %v442 = vld [vmem:[%s407 + $0xe8] sm:$0xff]
      %v443 = vld [vmem:[%s407 + $0xf0] sm:$0xff]
      %v444 = vld [vmem:[%s407 + $0xf8] sm:$0xff]
      %v445 = vld [vmem:[%s407 + $0x100] sm:$0xff]
      %v446 = vld [vmem:[%s407 + $0x108] sm:$0xff]
      %v447 = vld [vmem:[%s407 + $0x110] sm:$0xff]
      %v448 = vld [vmem:[%s407 + $0x118] sm:$0xff]
      %v449 = vld [vmem:[%s407 + $0x120] sm:$0xff]
      %v450 = vld [vmem:[%s407 + $0x128] sm:$0xff]
      %v451 = vld [vmem:[%s407 + $0x130] sm:$0xff]
      %v452 = vld [vmem:[%s407 + $0x138] sm:$0xff]
      %v453 = vld [vmem:[%s407 + $0x140] sm:$0xff]
      %v454 = vld [vmem:[%s1] sm:$0xff]
      %v455 = vld [vmem:[%s1 + $0x8] sm:$0x1]
      %457 = vset.pattern.permute.xlu0 0
      %458 = vperm.xlu0 %457, %v413
      %v459 = vpop.permute.xlu0 %458
      %462 = vset.pattern.permute.xlu0 0
      %463 = vperm.xlu0 %462, %v414
      %v464 = vpop.permute.xlu0 %463
      %467 = vset.pattern.permute.xlu0 0
      %468 = vperm.xlu0 %467, %v415
      %v469 = vpop.permute.xlu0 %468
      %472 = vset.pattern.permute.xlu0 0
      %473 = vperm.xlu0 %472, %v416
      %v474 = vpop.permute.xlu0 %473
      %477 = vset.pattern.permute.xlu0 0
      %478 = vperm.xlu0 %477, %v417
      %v479 = vpop.permute.xlu0 %478
      %482 = vset.pattern.permute.xlu0 0
      %483 = vperm.xlu0 %482, %v418
      %v484 = vpop.permute.xlu0 %483
      %487 = vset.pattern.permute.xlu0 0
      %488 = vperm.xlu0 %487, %v419
      %v489 = vpop.permute.xlu0 %488
      %492 = vset.pattern.permute.xlu0 0
      %493 = vperm.xlu0 %492, %v420
      %v494 = vpop.permute.xlu0 %493
      %497 = vset.pattern.permute.xlu0 0
      %498 = vperm.xlu0 %497, %v421
      %v499 = vpop.permute.xlu0 %498
      %502 = vset.pattern.permute.xlu0 0
      %503 = vperm.xlu0 %502, %v422
      %v504 = vpop.permute.xlu0 %503
      %507 = vset.pattern.permute.xlu0 0
      %508 = vperm.xlu0 %507, %v423
      %v509 = vpop.permute.xlu0 %508
      %512 = vset.pattern.permute.xlu0 0
      %513 = vperm.xlu0 %512, %v424
      %v514 = vpop.permute.xlu0 %513
      %517 = vset.pattern.permute.xlu0 0
      %518 = vperm.xlu0 %517, %v425
      %v519 = vpop.permute.xlu0 %518
      %522 = vset.pattern.permute.xlu0 0
      %523 = vperm.xlu0 %522, %v426
      %v524 = vpop.permute.xlu0 %523
      %527 = vset.pattern.permute.xlu0 0
      %528 = vperm.xlu0 %527, %v427
      %v529 = vpop.permute.xlu0 %528
      %532 = vset.pattern.permute.xlu0 0
      %533 = vperm.xlu0 %532, %v428
      %v534 = vpop.permute.xlu0 %533
      %537 = vset.pattern.permute.xlu0 0
      %538 = vperm.xlu0 %537, %v429
      %v539 = vpop.permute.xlu0 %538
      %542 = vset.pattern.permute.xlu0 0
      %543 = vperm.xlu0 %542, %v430
      %v544 = vpop.permute.xlu0 %543
      %547 = vset.pattern.permute.xlu0 0
      %548 = vperm.xlu0 %547, %v431
      %v549 = vpop.permute.xlu0 %548
      %552 = vset.pattern.permute.xlu0 0
      %553 = vperm.xlu0 %552, %v432
      %v554 = vpop.permute.xlu0 %553
      %557 = vset.pattern.permute.xlu0 0
      %558 = vperm.xlu0 %557, %v433
      %v559 = vpop.permute.xlu0 %558
      %562 = vset.pattern.permute.xlu0 0
      %563 = vperm.xlu0 %562, %v434
      %v564 = vpop.permute.xlu0 %563
      %567 = vset.pattern.permute.xlu0 0
      %568 = vperm.xlu0 %567, %v435
      %v569 = vpop.permute.xlu0 %568
      %572 = vset.pattern.permute.xlu0 0
      %573 = vperm.xlu0 %572, %v436
      %v574 = vpop.permute.xlu0 %573
      %577 = vset.pattern.permute.xlu0 0
      %578 = vperm.xlu0 %577, %v437
      %v579 = vpop.permute.xlu0 %578
      %582 = vset.pattern.permute.xlu0 0
      %583 = vperm.xlu0 %582, %v438
      %v584 = vpop.permute.xlu0 %583
      %587 = vset.pattern.permute.xlu0 0
      %588 = vperm.xlu0 %587, %v439
      %v589 = vpop.permute.xlu0 %588
      %592 = vset.pattern.permute.xlu0 0
      %593 = vperm.xlu0 %592, %v440
      %v594 = vpop.permute.xlu0 %593
      %597 = vset.pattern.permute.xlu0 0
      %598 = vperm.xlu0 %597, %v441
      %v599 = vpop.permute.xlu0 %598
      %602 = vset.pattern.permute.xlu0 0
      %603 = vperm.xlu0 %602, %v442
      %v604 = vpop.permute.xlu0 %603
      %607 = vset.pattern.permute.xlu0 0
      %608 = vperm.xlu0 %607, %v443
      %v609 = vpop.permute.xlu0 %608
      %612 = vset.pattern.permute.xlu0 0
      %613 = vperm.xlu0 %612, %v444
      %v614 = vpop.permute.xlu0 %613
      %617 = vset.pattern.permute.xlu0 0
      %618 = vperm.xlu0 %617, %v445
      %v619 = vpop.permute.xlu0 %618
      %622 = vset.pattern.permute.xlu0 0
      %623 = vperm.xlu0 %622, %v446
      %v624 = vpop.permute.xlu0 %623
      %627 = vset.pattern.permute.xlu0 0
      %628 = vperm.xlu0 %627, %v447
      %v629 = vpop.permute.xlu0 %628
      %632 = vset.pattern.permute.xlu0 0
      %633 = vperm.xlu0 %632, %v448
      %v634 = vpop.permute.xlu0 %633
      %v636 = vlaneseq
      %v637 = vshrl.u32 %v636, 7
      %v638 = vsub.s32 0, %v637
      %v639 = vrot.slane %v454, %v638
      %v640 = vmul.f32 %v459, %v639
      %v641 = vmul.f32 %v464, %v639
      %v642 = vmul.f32 %v469, %v639
      %v643 = vmul.f32 %v474, %v639
      %v644 = vmul.f32 %v479, %v639
      %v645 = vmul.f32 %v484, %v639
      %v646 = vmul.f32 %v489, %v639
      %v647 = vmul.f32 %v494, %v639
      %v648 = vmul.f32 %v499, %v639
      %v649 = vmul.f32 %v504, %v639
      %v650 = vmul.f32 %v509, %v639
      %v651 = vmul.f32 %v514, %v639
      %v652 = vmul.f32 %v519, %v639
      %v653 = vmul.f32 %v524, %v639
      %v654 = vmul.f32 %v529, %v639
      %v655 = vmul.f32 %v534, %v639
      %v656 = vmul.f32 %v539, %v639
      %v657 = vmul.f32 %v544, %v639
      %v658 = vmul.f32 %v549, %v639
      %v659 = vmul.f32 %v554, %v639
      %v660 = vmul.f32 %v559, %v639
      %v661 = vmul.f32 %v564, %v639
      %v662 = vmul.f32 %v569, %v639
      %v663 = vmul.f32 %v574, %v639
      %v664 = vmul.f32 %v579, %v639
      %v665 = vmul.f32 %v584, %v639
      %v666 = vmul.f32 %v589, %v639
      %v667 = vmul.f32 %v594, %v639
      %v668 = vmul.f32 %v599, %v639
      %v669 = vmul.f32 %v604, %v639
      %v670 = vmul.f32 %v609, %v639
      %v671 = vmul.f32 %v614, %v639
      %v672 = vmul.f32 %v619, %v639
      %v673 = vmul.f32 %v624, %v639
      %v674 = vmul.f32 %v629, %v639
      %v675 = vmul.f32 %v634, %v639
      %677 = vset.pattern.permute.xlu0 0
      %678 = vperm.xlu0 %677, %v449
      %v679 = vpop.permute.xlu0 %678
      %v681 = vlaneseq
      %v682 = vshrl.u32 %v681, 7
      %v683 = vsub.s32 1, %v682
      %v684 = vrot.slane %v454, %v683
      %v685 = vmul.f32 %v459, %v684
      %v686 = vmul.f32 %v464, %v684
      %v687 = vmul.f32 %v469, %v684
      %v688 = vmul.f32 %v474, %v684
      %v689 = vmul.f32 %v479, %v684
      %v690 = vmul.f32 %v484, %v684
      %v691 = vmul.f32 %v489, %v684
      %v692 = vmul.f32 %v494, %v684
      %v693 = vmul.f32 %v499, %v684
      %v694 = vmul.f32 %v504, %v684
      %v695 = vmul.f32 %v509, %v684
      %v696 = vmul.f32 %v514, %v684
      %v697 = vmul.f32 %v519, %v684
      %v698 = vmul.f32 %v524, %v684
      %v699 = vmul.f32 %v529, %v684
      %v700 = vmul.f32 %v534, %v684
      %v701 = vmul.f32 %v539, %v684
      %v702 = vmul.f32 %v544, %v684
      %v703 = vmul.f32 %v549, %v684
      %v704 = vmul.f32 %v554, %v684
      %v705 = vmul.f32 %v559, %v684
      %v706 = vmul.f32 %v564, %v684
      %v707 = vmul.f32 %v569, %v684
      %v708 = vmul.f32 %v574, %v684
      %v709 = vmul.f32 %v579, %v684
      %v710 = vmul.f32 %v584, %v684
      %v711 = vmul.f32 %v589, %v684
      %v712 = vmul.f32 %v594, %v684
      %v713 = vmul.f32 %v599, %v684
      %v714 = vmul.f32 %v604, %v684
      %v715 = vmul.f32 %v609, %v684
      %v716 = vmul.f32 %v614, %v684
      %v717 = vmul.f32 %v619, %v684
      %v718 = vmul.f32 %v624, %v684
      %v719 = vmul.f32 %v629, %v684
      %v720 = vmul.f32 %v634, %v684
      %v721 = vmul.f32 %v679, %v684
      %vm759 = vcmask 1046528
      %v760 = vrot.slane %v685, 1
      %v761 = vrot.slane %v686, 1
      %v762 = vsel %vm759, %v760, %v761
      %v763 = vrot.slane %v687, 1
      %v764 = vsel %vm759, %v761, %v763
      %v765 = vrot.slane %v688, 1
      %v766 = vsel %vm759, %v763, %v765
      %v767 = vrot.slane %v689, 1
      %v768 = vsel %vm759, %v765, %v767
      %v769 = vrot.slane %v690, 1
      %v770 = vsel %vm759, %v767, %v769
      %v771 = vrot.slane %v691, 1
      %v772 = vsel %vm759, %v769, %v771
      %v773 = vrot.slane %v692, 1
      %v774 = vsel %vm759, %v771, %v773
      %v775 = vrot.slane %v693, 1
      %v776 = vsel %vm759, %v773, %v775
      %v777 = vrot.slane %v694, 1
      %v778 = vsel %vm759, %v775, %v777
      %v779 = vrot.slane %v695, 1
      %v780 = vsel %vm759, %v777, %v779
      %v781 = vrot.slane %v696, 1
      %v782 = vsel %vm759, %v779, %v781
      %v783 = vrot.slane %v697, 1
      %v784 = vsel %vm759, %v781, %v783
      %v785 = vrot.slane %v698, 1
      %v786 = vsel %vm759, %v783, %v785
      %v787 = vrot.slane %v699, 1
      %v788 = vsel %vm759, %v785, %v787
      %v789 = vrot.slane %v700, 1
      %v790 = vsel %vm759, %v787, %v789
      %v791 = vrot.slane %v701, 1
      %v792 = vsel %vm759, %v789, %v791
      %v793 = vrot.slane %v702, 1
      %v794 = vsel %vm759, %v791, %v793
      %v795 = vrot.slane %v703, 1
      %v796 = vsel %vm759, %v793, %v795
      %v797 = vrot.slane %v704, 1
      %v798 = vsel %vm759, %v795, %v797
      %v799 = vrot.slane %v705, 1
      %v800 = vsel %vm759, %v797, %v799
      %v801 = vrot.slane %v706, 1
      %v802 = vsel %vm759, %v799, %v801
      %v803 = vrot.slane %v707, 1
      %v804 = vsel %vm759, %v801, %v803
      %v805 = vrot.slane %v708, 1
      %v806 = vsel %vm759, %v803, %v805
      %v807 = vrot.slane %v709, 1
      %v808 = vsel %vm759, %v805, %v807
      %v809 = vrot.slane %v710, 1
      %v810 = vsel %vm759, %v807, %v809
      %v811 = vrot.slane %v711, 1
      %v812 = vsel %vm759, %v809, %v811
      %v813 = vrot.slane %v712, 1
      %v814 = vsel %vm759, %v811, %v813
      %v815 = vrot.slane %v713, 1
      %v816 = vsel %vm759, %v813, %v815
      %v817 = vrot.slane %v714, 1
      %v818 = vsel %vm759, %v815, %v817
      %v819 = vrot.slane %v715, 1
      %v820 = vsel %vm759, %v817, %v819
      %v821 = vrot.slane %v716, 1
      %v822 = vsel %vm759, %v819, %v821
      %v823 = vrot.slane %v717, 1
      %v824 = vsel %vm759, %v821, %v823
      %v825 = vrot.slane %v718, 1
      %v826 = vsel %vm759, %v823, %v825
      %v827 = vrot.slane %v719, 1
      %v828 = vsel %vm759, %v825, %v827
      %v829 = vrot.slane %v720, 1
      %v830 = vsel %vm759, %v827, %v829
      %v831 = vrot.slane %v721, 1
      %v832 = vsel %vm759, %v829, %v831
      %v869 = vadd.f32 %v640, %v762
      %v870 = vadd.f32 %v641, %v764
      %v871 = vadd.f32 %v642, %v766
      %v872 = vadd.f32 %v643, %v768
      %v873 = vadd.f32 %v644, %v770
      %v874 = vadd.f32 %v645, %v772
      %v875 = vadd.f32 %v646, %v774
      %v876 = vadd.f32 %v647, %v776
      %v877 = vadd.f32 %v648, %v778
      %v878 = vadd.f32 %v649, %v780
      %v879 = vadd.f32 %v650, %v782
      %v880 = vadd.f32 %v651, %v784
      %v881 = vadd.f32 %v652, %v786
      %v882 = vadd.f32 %v653, %v788
      %v883 = vadd.f32 %v654, %v790
      %v884 = vadd.f32 %v655, %v792
      %v885 = vadd.f32 %v656, %v794
      %v886 = vadd.f32 %v657, %v796
      %v887 = vadd.f32 %v658, %v798
      %v888 = vadd.f32 %v659, %v800
      %v889 = vadd.f32 %v660, %v802
      %v890 = vadd.f32 %v661, %v804
      %v891 = vadd.f32 %v662, %v806
      %v892 = vadd.f32 %v663, %v808
      %v893 = vadd.f32 %v664, %v810
      %v894 = vadd.f32 %v665, %v812
      %v895 = vadd.f32 %v666, %v814
      %v896 = vadd.f32 %v667, %v816
      %v897 = vadd.f32 %v668, %v818
      %v898 = vadd.f32 %v669, %v820
      %v899 = vadd.f32 %v670, %v822
      %v900 = vadd.f32 %v671, %v824
      %v901 = vadd.f32 %v672, %v826
      %v902 = vadd.f32 %v673, %v828
      %v903 = vadd.f32 %v674, %v830
      %v904 = vadd.f32 %v675, %v832
      %v905 = vlaneseq
      %v906 = vshrl.u32 %v905, 7
      %v907 = vsub.s32 2, %v906
      %v908 = vrot.slane %v454, %v907
      %v909 = vmul.f32 %v459, %v908
      %v910 = vmul.f32 %v464, %v908
      %v911 = vmul.f32 %v469, %v908
      %v912 = vmul.f32 %v474, %v908
      %v913 = vmul.f32 %v479, %v908
      %v914 = vmul.f32 %v484, %v908
      %v915 = vmul.f32 %v489, %v908
      %v916 = vmul.f32 %v494, %v908
      %v917 = vmul.f32 %v499, %v908
      %v918 = vmul.f32 %v504, %v908
      %v919 = vmul.f32 %v509, %v908
      %v920 = vmul.f32 %v514, %v908
      %v921 = vmul.f32 %v519, %v908
      %v922 = vmul.f32 %v524, %v908
      %v923 = vmul.f32 %v529, %v908
      %v924 = vmul.f32 %v534, %v908
      %v925 = vmul.f32 %v539, %v908
      %v926 = vmul.f32 %v544, %v908
      %v927 = vmul.f32 %v549, %v908
      %v928 = vmul.f32 %v554, %v908
      %v929 = vmul.f32 %v559, %v908
      %v930 = vmul.f32 %v564, %v908
      %v931 = vmul.f32 %v569, %v908
      %v932 = vmul.f32 %v574, %v908
      %v933 = vmul.f32 %v579, %v908
      %v934 = vmul.f32 %v584, %v908
      %v935 = vmul.f32 %v589, %v908
      %v936 = vmul.f32 %v594, %v908
      %v937 = vmul.f32 %v599, %v908
      %v938 = vmul.f32 %v604, %v908
      %v939 = vmul.f32 %v609, %v908
      %v940 = vmul.f32 %v614, %v908
      %v941 = vmul.f32 %v619, %v908
      %v942 = vmul.f32 %v624, %v908
      %v943 = vmul.f32 %v629, %v908
      %v944 = vmul.f32 %v634, %v908
      %v945 = vmul.f32 %v679, %v908
      %vm983 = vcmask 1045504
      %v984 = vrot.slane %v909, 2
      %v985 = vrot.slane %v910, 2
      %v986 = vsel %vm983, %v984, %v985
      %v987 = vrot.slane %v911, 2
      %v988 = vsel %vm983, %v985, %v987
      %v989 = vrot.slane %v912, 2
      %v990 = vsel %vm983, %v987, %v989
      %v991 = vrot.slane %v913, 2
      %v992 = vsel %vm983, %v989, %v991
      %v993 = vrot.slane %v914, 2
      %v994 = vsel %vm983, %v991, %v993
      %v995 = vrot.slane %v915, 2
      %v996 = vsel %vm983, %v993, %v995
      %v997 = vrot.slane %v916, 2
      %v998 = vsel %vm983, %v995, %v997
      %v999 = vrot.slane %v917, 2
      %v1000 = vsel %vm983, %v997, %v999
      %v1001 = vrot.slane %v918, 2
      %v1002 = vsel %vm983, %v999, %v1001
      %v1003 = vrot.slane %v919, 2
      %v1004 = vsel %vm983, %v1001, %v1003
      %v1005 = vrot.slane %v920, 2
      %v1006 = vsel %vm983, %v1003, %v1005
      %v1007 = vrot.slane %v921, 2
      %v1008 = vsel %vm983, %v1005, %v1007
      %v1009 = vrot.slane %v922, 2
      %v1010 = vsel %vm983, %v1007, %v1009
      %v1011 = vrot.slane %v923, 2
      %v1012 = vsel %vm983, %v1009, %v1011
      %v1013 = vrot.slane %v924, 2
      %v1014 = vsel %vm983, %v1011, %v1013
      %v1015 = vrot.slane %v925, 2
      %v1016 = vsel %vm983, %v1013, %v1015
      %v1017 = vrot.slane %v926, 2
      %v1018 = vsel %vm983, %v1015, %v1017
      %v1019 = vrot.slane %v927, 2
      %v1020 = vsel %vm983, %v1017, %v1019
      %v1021 = vrot.slane %v928, 2
      %v1022 = vsel %vm983, %v1019, %v1021
      %v1023 = vrot.slane %v929, 2
      %v1024 = vsel %vm983, %v1021, %v1023
      %v1025 = vrot.slane %v930, 2
      %v1026 = vsel %vm983, %v1023, %v1025
      %v1027 = vrot.slane %v931, 2
      %v1028 = vsel %vm983, %v1025, %v1027
      %v1029 = vrot.slane %v932, 2
      %v1030 = vsel %vm983, %v1027, %v1029
      %v1031 = vrot.slane %v933, 2
      %v1032 = vsel %vm983, %v1029, %v1031
      %v1033 = vrot.slane %v934, 2
      %v1034 = vsel %vm983, %v1031, %v1033
      %v1035 = vrot.slane %v935, 2
      %v1036 = vsel %vm983, %v1033, %v1035
      %v1037 = vrot.slane %v936, 2
      %v1038 = vsel %vm983, %v1035, %v1037
      %v1039 = vrot.slane %v937, 2
      %v1040 = vsel %vm983, %v1037, %v1039
      %v1041 = vrot.slane %v938, 2
      %v1042 = vsel %vm983, %v1039, %v1041
      %v1043 = vrot.slane %v939, 2
      %v1044 = vsel %vm983, %v1041, %v1043
      %v1045 = vrot.slane %v940, 2
      %v1046 = vsel %vm983, %v1043, %v1045
      %v1047 = vrot.slane %v941, 2
      %v1048 = vsel %vm983, %v1045, %v1047
      %v1049 = vrot.slane %v942, 2
      %v1050 = vsel %vm983, %v1047, %v1049
      %v1051 = vrot.slane %v943, 2
      %v1052 = vsel %vm983, %v1049, %v1051
      %v1053 = vrot.slane %v944, 2
      %v1054 = vsel %vm983, %v1051, %v1053
      %v1055 = vrot.slane %v945, 2
      %v1056 = vsel %vm983, %v1053, %v1055
      %v1093 = vadd.f32 %v869, %v986
      %v1094 = vadd.f32 %v870, %v988
      %v1095 = vadd.f32 %v871, %v990
      %v1096 = vadd.f32 %v872, %v992
      %v1097 = vadd.f32 %v873, %v994
      %v1098 = vadd.f32 %v874, %v996
      %v1099 = vadd.f32 %v875, %v998
      %v1100 = vadd.f32 %v876, %v1000
      %v1101 = vadd.f32 %v877, %v1002
      %v1102 = vadd.f32 %v878, %v1004
      %v1103 = vadd.f32 %v879, %v1006
      %v1104 = vadd.f32 %v880, %v1008
      %v1105 = vadd.f32 %v881, %v1010
      %v1106 = vadd.f32 %v882, %v1012
      %v1107 = vadd.f32 %v883, %v1014
      %v1108 = vadd.f32 %v884, %v1016
      %v1109 = vadd.f32 %v885, %v1018
      %v1110 = vadd.f32 %v886, %v1020
      %v1111 = vadd.f32 %v887, %v1022
      %v1112 = vadd.f32 %v888, %v1024
      %v1113 = vadd.f32 %v889, %v1026
      %v1114 = vadd.f32 %v890, %v1028
      %v1115 = vadd.f32 %v891, %v1030
      %v1116 = vadd.f32 %v892, %v1032
      %v1117 = vadd.f32 %v893, %v1034
      %v1118 = vadd.f32 %v894, %v1036
      %v1119 = vadd.f32 %v895, %v1038
      %v1120 = vadd.f32 %v896, %v1040
      %v1121 = vadd.f32 %v897, %v1042
      %v1122 = vadd.f32 %v898, %v1044
      %v1123 = vadd.f32 %v899, %v1046
      %v1124 = vadd.f32 %v900, %v1048
      %v1125 = vadd.f32 %v901, %v1050
      %v1126 = vadd.f32 %v902, %v1052
      %v1127 = vadd.f32 %v903, %v1054
      %v1128 = vadd.f32 %v904, %v1056
      %1130 = vset.pattern.permute.xlu0 0
      %1131 = vperm.xlu0 %1130, %v450
      %v1132 = vpop.permute.xlu0 %1131
      %1135 = vset.pattern.permute.xlu0 0
      %1136 = vperm.xlu0 %1135, %v451
      %v1137 = vpop.permute.xlu0 %1136
      %v1139 = vlaneseq
      %v1140 = vshrl.u32 %v1139, 7
      %v1141 = vsub.s32 3, %v1140
      %v1142 = vrot.slane %v454, %v1141
      %v1143 = vmul.f32 %v469, %v1142
      %v1144 = vmul.f32 %v474, %v1142
      %v1145 = vmul.f32 %v479, %v1142
      %v1146 = vmul.f32 %v484, %v1142
      %v1147 = vmul.f32 %v489, %v1142
      %v1148 = vmul.f32 %v494, %v1142
      %v1149 = vmul.f32 %v499, %v1142
      %v1150 = vmul.f32 %v504, %v1142
      %v1151 = vmul.f32 %v509, %v1142
      %v1152 = vmul.f32 %v514, %v1142
      %v1153 = vmul.f32 %v519, %v1142
      %v1154 = vmul.f32 %v524, %v1142
      %v1155 = vmul.f32 %v529, %v1142
      %v1156 = vmul.f32 %v534, %v1142
      %v1157 = vmul.f32 %v539, %v1142
      %v1158 = vmul.f32 %v544, %v1142
      %v1159 = vmul.f32 %v549, %v1142
      %v1160 = vmul.f32 %v554, %v1142
      %v1161 = vmul.f32 %v559, %v1142
      %v1162 = vmul.f32 %v564, %v1142
      %v1163 = vmul.f32 %v569, %v1142
      %v1164 = vmul.f32 %v574, %v1142
      %v1165 = vmul.f32 %v579, %v1142
      %v1166 = vmul.f32 %v584, %v1142
      %v1167 = vmul.f32 %v589, %v1142
      %v1168 = vmul.f32 %v594, %v1142
      %v1169 = vmul.f32 %v599, %v1142
      %v1170 = vmul.f32 %v604, %v1142
      %v1171 = vmul.f32 %v609, %v1142
      %v1172 = vmul.f32 %v614, %v1142
      %v1173 = vmul.f32 %v619, %v1142
      %v1174 = vmul.f32 %v624, %v1142
      %v1175 = vmul.f32 %v629, %v1142
      %v1176 = vmul.f32 %v634, %v1142
      %v1177 = vmul.f32 %v679, %v1142
      %v1178 = vmul.f32 %v1132, %v1142
      %v1179 = vmul.f32 %v1137, %v1142
      %v1217 = vrot.slane %v1143, 2
      %v1218 = vrot.slane %v1144, 2
      %v1219 = vsel %vm983, %v1217, %v1218
      %v1220 = vrot.slane %v1145, 2
      %v1221 = vsel %vm983, %v1218, %v1220
      %v1222 = vrot.slane %v1146, 2
      %v1223 = vsel %vm983, %v1220, %v1222
      %v1224 = vrot.slane %v1147, 2
      %v1225 = vsel %vm983, %v1222, %v1224
      %v1226 = vrot.slane %v1148, 2
      %v1227 = vsel %vm983, %v1224, %v1226
      %v1228 = vrot.slane %v1149, 2
      %v1229 = vsel %vm983, %v1226, %v1228
      %v1230 = vrot.slane %v1150, 2
      %v1231 = vsel %vm983, %v1228, %v1230
      %v1232 = vrot.slane %v1151, 2
      %v1233 = vsel %vm983, %v1230, %v1232
      %v1234 = vrot.slane %v1152, 2
      %v1235 = vsel %vm983, %v1232, %v1234
      %v1236 = vrot.slane %v1153, 2
      %v1237 = vsel %vm983, %v1234, %v1236
      %v1238 = vrot.slane %v1154, 2
      %v1239 = vsel %vm983, %v1236, %v1238
      %v1240 = vrot.slane %v1155, 2
      %v1241 = vsel %vm983, %v1238, %v1240
      %v1242 = vrot.slane %v1156, 2
      %v1243 = vsel %vm983, %v1240, %v1242
      %v1244 = vrot.slane %v1157, 2
      %v1245 = vsel %vm983, %v1242, %v1244
      %v1246 = vrot.slane %v1158, 2
      %v1247 = vsel %vm983, %v1244, %v1246
      %v1248 = vrot.slane %v1159, 2
      %v1249 = vsel %vm983, %v1246, %v1248
      %v1250 = vrot.slane %v1160, 2
      %v1251 = vsel %vm983, %v1248, %v1250
      %v1252 = vrot.slane %v1161, 2
      %v1253 = vsel %vm983, %v1250, %v1252
      %v1254 = vrot.slane %v1162, 2
      %v1255 = vsel %vm983, %v1252, %v1254
      %v1256 = vrot.slane %v1163, 2
      %v1257 = vsel %vm983, %v1254, %v1256
      %v1258 = vrot.slane %v1164, 2
      %v1259 = vsel %vm983, %v1256, %v1258
      %v1260 = vrot.slane %v1165, 2
      %v1261 = vsel %vm983, %v1258, %v1260
      %v1262 = vrot.slane %v1166, 2
      %v1263 = vsel %vm983, %v1260, %v1262
      %v1264 = vrot.slane %v1167, 2
      %v1265 = vsel %vm983, %v1262, %v1264
      %v1266 = vrot.slane %v1168, 2
      %v1267 = vsel %vm983, %v1264, %v1266
      %v1268 = vrot.slane %v1169, 2
      %v1269 = vsel %vm983, %v1266, %v1268
      %v1270 = vrot.slane %v1170, 2
      %v1271 = vsel %vm983, %v1268, %v1270
      %v1272 = vrot.slane %v1171, 2
      %v1273 = vsel %vm983, %v1270, %v1272
      %v1274 = vrot.slane %v1172, 2
      %v1275 = vsel %vm983, %v1272, %v1274
      %v1276 = vrot.slane %v1173, 2
      %v1277 = vsel %vm983, %v1274, %v1276
      %v1278 = vrot.slane %v1174, 2
      %v1279 = vsel %vm983, %v1276, %v1278
      %v1280 = vrot.slane %v1175, 2
      %v1281 = vsel %vm983, %v1278, %v1280
      %v1282 = vrot.slane %v1176, 2
      %v1283 = vsel %vm983, %v1280, %v1282
      %v1284 = vrot.slane %v1177, 2
      %v1285 = vsel %vm983, %v1282, %v1284
      %v1286 = vrot.slane %v1178, 2
      %v1287 = vsel %vm983, %v1284, %v1286
      %v1288 = vrot.slane %v1179, 2
      %v1289 = vsel %vm983, %v1286, %v1288
      %v1326 = vadd.f32 %v1093, %v1219
      %v1327 = vadd.f32 %v1094, %v1221
      %v1328 = vadd.f32 %v1095, %v1223
      %v1329 = vadd.f32 %v1096, %v1225
      %v1330 = vadd.f32 %v1097, %v1227
      %v1331 = vadd.f32 %v1098, %v1229
      %v1332 = vadd.f32 %v1099, %v1231
      %v1333 = vadd.f32 %v1100, %v1233
      %v1334 = vadd.f32 %v1101, %v1235
      %v1335 = vadd.f32 %v1102, %v1237
      %v1336 = vadd.f32 %v1103, %v1239
      %v1337 = vadd.f32 %v1104, %v1241
      %v1338 = vadd.f32 %v1105, %v1243
      %v1339 = vadd.f32 %v1106, %v1245
      %v1340 = vadd.f32 %v1107, %v1247
      %v1341 = vadd.f32 %v1108, %v1249
      %v1342 = vadd.f32 %v1109, %v1251
      %v1343 = vadd.f32 %v1110, %v1253
      %v1344 = vadd.f32 %v1111, %v1255
      %v1345 = vadd.f32 %v1112, %v1257
      %v1346 = vadd.f32 %v1113, %v1259
      %v1347 = vadd.f32 %v1114, %v1261
      %v1348 = vadd.f32 %v1115, %v1263
      %v1349 = vadd.f32 %v1116, %v1265
      %v1350 = vadd.f32 %v1117, %v1267
      %v1351 = vadd.f32 %v1118, %v1269
      %v1352 = vadd.f32 %v1119, %v1271
      %v1353 = vadd.f32 %v1120, %v1273
      %v1354 = vadd.f32 %v1121, %v1275
      %v1355 = vadd.f32 %v1122, %v1277
      %v1356 = vadd.f32 %v1123, %v1279
      %v1357 = vadd.f32 %v1124, %v1281
      %v1358 = vadd.f32 %v1125, %v1283
      %v1359 = vadd.f32 %v1126, %v1285
      %v1360 = vadd.f32 %v1127, %v1287
      %v1361 = vadd.f32 %v1128, %v1289
      %v1362 = vlaneseq
      %v1363 = vshrl.u32 %v1362, 7
      %v1364 = vsub.s32 4, %v1363
      %v1365 = vrot.slane %v454, %v1364
      %v1366 = vmul.f32 %v469, %v1365
      %v1367 = vmul.f32 %v474, %v1365
      %v1368 = vmul.f32 %v479, %v1365
      %v1369 = vmul.f32 %v484, %v1365
      %v1370 = vmul.f32 %v489, %v1365
      %v1371 = vmul.f32 %v494, %v1365
      %v1372 = vmul.f32 %v499, %v1365
      %v1373 = vmul.f32 %v504, %v1365
      %v1374 = vmul.f32 %v509, %v1365
      %v1375 = vmul.f32 %v514, %v1365
      %v1376 = vmul.f32 %v519, %v1365
      %v1377 = vmul.f32 %v524, %v1365
      %v1378 = vmul.f32 %v529, %v1365
      %v1379 = vmul.f32 %v534, %v1365
      %v1380 = vmul.f32 %v539, %v1365
      %v1381 = vmul.f32 %v544, %v1365
      %v1382 = vmul.f32 %v549, %v1365
      %v1383 = vmul.f32 %v554, %v1365
      %v1384 = vmul.f32 %v559, %v1365
      %v1385 = vmul.f32 %v564, %v1365
      %v1386 = vmul.f32 %v569, %v1365
      %v1387 = vmul.f32 %v574, %v1365
      %v1388 = vmul.f32 %v579, %v1365
      %v1389 = vmul.f32 %v584, %v1365
      %v1390 = vmul.f32 %v589, %v1365
      %v1391 = vmul.f32 %v594, %v1365
      %v1392 = vmul.f32 %v599, %v1365
      %v1393 = vmul.f32 %v604, %v1365
      %v1394 = vmul.f32 %v609, %v1365
      %v1395 = vmul.f32 %v614, %v1365
      %v1396 = vmul.f32 %v619, %v1365
      %v1397 = vmul.f32 %v624, %v1365
      %v1398 = vmul.f32 %v629, %v1365
      %v1399 = vmul.f32 %v634, %v1365
      %v1400 = vmul.f32 %v679, %v1365
      %v1401 = vmul.f32 %v1132, %v1365
      %v1402 = vmul.f32 %v1137, %v1365
      %vm1440 = vcmask 1044480
      %v1441 = vrot.slane %v1366, 3
      %v1442 = vrot.slane %v1367, 3
      %v1443 = vsel %vm1440, %v1441, %v1442
      %v1444 = vrot.slane %v1368, 3
      %v1445 = vsel %vm1440, %v1442, %v1444
      %v1446 = vrot.slane %v1369, 3
      %v1447 = vsel %vm1440, %v1444, %v1446
      %v1448 = vrot.slane %v1370, 3
      %v1449 = vsel %vm1440, %v1446, %v1448
      %v1450 = vrot.slane %v1371, 3
      %v1451 = vsel %vm1440, %v1448, %v1450
      %v1452 = vrot.slane %v1372, 3
      %v1453 = vsel %vm1440, %v1450, %v1452
      %v1454 = vrot.slane %v1373, 3
      %v1455 = vsel %vm1440, %v1452, %v1454
      %v1456 = vrot.slane %v1374, 3
      %v1457 = vsel %vm1440, %v1454, %v1456
      %v1458 = vrot.slane %v1375, 3
      %v1459 = vsel %vm1440, %v1456, %v1458
      %v1460 = vrot.slane %v1376, 3
      %v1461 = vsel %vm1440, %v1458, %v1460
      %v1462 = vrot.slane %v1377, 3
      %v1463 = vsel %vm1440, %v1460, %v1462
      %v1464 = vrot.slane %v1378, 3
      %v1465 = vsel %vm1440, %v1462, %v1464
      %v1466 = vrot.slane %v1379, 3
      %v1467 = vsel %vm1440, %v1464, %v1466
      %v1468 = vrot.slane %v1380, 3
      %v1469 = vsel %vm1440, %v1466, %v1468
      %v1470 = vrot.slane %v1381, 3
      %v1471 = vsel %vm1440, %v1468, %v1470
      %v1472 = vrot.slane %v1382, 3
      %v1473 = vsel %vm1440, %v1470, %v1472
      %v1474 = vrot.slane %v1383, 3
      %v1475 = vsel %vm1440, %v1472, %v1474
      %v1476 = vrot.slane %v1384, 3
      %v1477 = vsel %vm1440, %v1474, %v1476
      %v1478 = vrot.slane %v1385, 3
      %v1479 = vsel %vm1440, %v1476, %v1478
      %v1480 = vrot.slane %v1386, 3
      %v1481 = vsel %vm1440, %v1478, %v1480
      %v1482 = vrot.slane %v1387, 3
      %v1483 = vsel %vm1440, %v1480, %v1482
      %v1484 = vrot.slane %v1388, 3
      %v1485 = vsel %vm1440, %v1482, %v1484
      %v1486 = vrot.slane %v1389, 3
      %v1487 = vsel %vm1440, %v1484, %v1486
      %v1488 = vrot.slane %v1390, 3
      %v1489 = vsel %vm1440, %v1486, %v1488
      %v1490 = vrot.slane %v1391, 3
      %v1491 = vsel %vm1440, %v1488, %v1490
      %v1492 = vrot.slane %v1392, 3
      %v1493 = vsel %vm1440, %v1490, %v1492
      %v1494 = vrot.slane %v1393, 3
      %v1495 = vsel %vm1440, %v1492, %v1494
      %v1496 = vrot.slane %v1394, 3
      %v1497 = vsel %vm1440, %v1494, %v1496
      %v1498 = vrot.slane %v1395, 3
      %v1499 = vsel %vm1440, %v1496, %v1498
      %v1500 = vrot.slane %v1396, 3
      %v1501 = vsel %vm1440, %v1498, %v1500
      %v1502 = vrot.slane %v1397, 3
      %v1503 = vsel %vm1440, %v1500, %v1502
      %v1504 = vrot.slane %v1398, 3
      %v1505 = vsel %vm1440, %v1502, %v1504
      %v1506 = vrot.slane %v1399, 3
      %v1507 = vsel %vm1440, %v1504, %v1506
      %v1508 = vrot.slane %v1400, 3
      %v1509 = vsel %vm1440, %v1506, %v1508
      %v1510 = vrot.slane %v1401, 3
      %v1511 = vsel %vm1440, %v1508, %v1510
      %v1512 = vrot.slane %v1402, 3
      %v1513 = vsel %vm1440, %v1510, %v1512
      %v1550 = vadd.f32 %v1326, %v1443
      %v1551 = vadd.f32 %v1327, %v1445
      %v1552 = vadd.f32 %v1328, %v1447
      %v1553 = vadd.f32 %v1329, %v1449
      %v1554 = vadd.f32 %v1330, %v1451
      %v1555 = vadd.f32 %v1331, %v1453
      %v1556 = vadd.f32 %v1332, %v1455
      %v1557 = vadd.f32 %v1333, %v1457
      %v1558 = vadd.f32 %v1334, %v1459
      %v1559 = vadd.f32 %v1335, %v1461
      %v1560 = vadd.f32 %v1336, %v1463
      %v1561 = vadd.f32 %v1337, %v1465
      %v1562 = vadd.f32 %v1338, %v1467
      %v1563 = vadd.f32 %v1339, %v1469
      %v1564 = vadd.f32 %v1340, %v1471
      %v1565 = vadd.f32 %v1341, %v1473
      %v1566 = vadd.f32 %v1342, %v1475
      %v1567 = vadd.f32 %v1343, %v1477
      %v1568 = vadd.f32 %v1344, %v1479
      %v1569 = vadd.f32 %v1345, %v1481
      %v1570 = vadd.f32 %v1346, %v1483
      %v1571 = vadd.f32 %v1347, %v1485
      %v1572 = vadd.f32 %v1348, %v1487
      %v1573 = vadd.f32 %v1349, %v1489
      %v1574 = vadd.f32 %v1350, %v1491
      %v1575 = vadd.f32 %v1351, %v1493
      %v1576 = vadd.f32 %v1352, %v1495
      %v1577 = vadd.f32 %v1353, %v1497
      %v1578 = vadd.f32 %v1354, %v1499
      %v1579 = vadd.f32 %v1355, %v1501
      %v1580 = vadd.f32 %v1356, %v1503
      %v1581 = vadd.f32 %v1357, %v1505
      %v1582 = vadd.f32 %v1358, %v1507
      %v1583 = vadd.f32 %v1359, %v1509
      %v1584 = vadd.f32 %v1360, %v1511
      %v1585 = vadd.f32 %v1361, %v1513
      %v1586 = vlaneseq
      %v1587 = vshrl.u32 %v1586, 7
      %v1588 = vsub.s32 5, %v1587
      %v1589 = vrot.slane %v454, %v1588
      %v1590 = vmul.f32 %v469, %v1589
      %v1591 = vmul.f32 %v474, %v1589
      %v1592 = vmul.f32 %v479, %v1589
      %v1593 = vmul.f32 %v484, %v1589
      %v1594 = vmul.f32 %v489, %v1589
      %v1595 = vmul.f32 %v494, %v1589
      %v1596 = vmul.f32 %v499, %v1589
      %v1597 = vmul.f32 %v504, %v1589
      %v1598 = vmul.f32 %v509, %v1589
      %v1599 = vmul.f32 %v514, %v1589
      %v1600 = vmul.f32 %v519, %v1589
      %v1601 = vmul.f32 %v524, %v1589
      %v1602 = vmul.f32 %v529, %v1589
      %v1603 = vmul.f32 %v534, %v1589
      %v1604 = vmul.f32 %v539, %v1589
      %v1605 = vmul.f32 %v544, %v1589
      %v1606 = vmul.f32 %v549, %v1589
      %v1607 = vmul.f32 %v554, %v1589
      %v1608 = vmul.f32 %v559, %v1589
      %v1609 = vmul.f32 %v564, %v1589
      %v1610 = vmul.f32 %v569, %v1589
      %v1611 = vmul.f32 %v574, %v1589
      %v1612 = vmul.f32 %v579, %v1589
      %v1613 = vmul.f32 %v584, %v1589
      %v1614 = vmul.f32 %v589, %v1589
      %v1615 = vmul.f32 %v594, %v1589
      %v1616 = vmul.f32 %v599, %v1589
      %v1617 = vmul.f32 %v604, %v1589
      %v1618 = vmul.f32 %v609, %v1589
      %v1619 = vmul.f32 %v614, %v1589
      %v1620 = vmul.f32 %v619, %v1589
      %v1621 = vmul.f32 %v624, %v1589
      %v1622 = vmul.f32 %v629, %v1589
      %v1623 = vmul.f32 %v634, %v1589
      %v1624 = vmul.f32 %v679, %v1589
      %v1625 = vmul.f32 %v1132, %v1589
      %v1626 = vmul.f32 %v1137, %v1589
      %vm1664 = vcmask 1043456
      %v1665 = vrot.slane %v1590, 4
      %v1666 = vrot.slane %v1591, 4
      %v1667 = vsel %vm1664, %v1665, %v1666
      %v1668 = vrot.slane %v1592, 4
      %v1669 = vsel %vm1664, %v1666, %v1668
      %v1670 = vrot.slane %v1593, 4
      %v1671 = vsel %vm1664, %v1668, %v1670
      %v1672 = vrot.slane %v1594, 4
      %v1673 = vsel %vm1664, %v1670, %v1672
      %v1674 = vrot.slane %v1595, 4
      %v1675 = vsel %vm1664, %v1672, %v1674
      %v1676 = vrot.slane %v1596, 4
      %v1677 = vsel %vm1664, %v1674, %v1676
      %v1678 = vrot.slane %v1597, 4
      %v1679 = vsel %vm1664, %v1676, %v1678
      %v1680 = vrot.slane %v1598, 4
      %v1681 = vsel %vm1664, %v1678, %v1680
      %v1682 = vrot.slane %v1599, 4
      %v1683 = vsel %vm1664, %v1680, %v1682
      %v1684 = vrot.slane %v1600, 4
      %v1685 = vsel %vm1664, %v1682, %v1684
      %v1686 = vrot.slane %v1601, 4
      %v1687 = vsel %vm1664, %v1684, %v1686
      %v1688 = vrot.slane %v1602, 4
      %v1689 = vsel %vm1664, %v1686, %v1688
      %v1690 = vrot.slane %v1603, 4
      %v1691 = vsel %vm1664, %v1688, %v1690
      %v1692 = vrot.slane %v1604, 4
      %v1693 = vsel %vm1664, %v1690, %v1692
      %v1694 = vrot.slane %v1605, 4
      %v1695 = vsel %vm1664, %v1692, %v1694
      %v1696 = vrot.slane %v1606, 4
      %v1697 = vsel %vm1664, %v1694, %v1696
      %v1698 = vrot.slane %v1607, 4
      %v1699 = vsel %vm1664, %v1696, %v1698
      %v1700 = vrot.slane %v1608, 4
      %v1701 = vsel %vm1664, %v1698, %v1700
      %v1702 = vrot.slane %v1609, 4
      %v1703 = vsel %vm1664, %v1700, %v1702
      %v1704 = vrot.slane %v1610, 4
      %v1705 = vsel %vm1664, %v1702, %v1704
      %v1706 = vrot.slane %v1611, 4
      %v1707 = vsel %vm1664, %v1704, %v1706
      %v1708 = vrot.slane %v1612, 4
      %v1709 = vsel %vm1664, %v1706, %v1708
      %v1710 = vrot.slane %v1613, 4
      %v1711 = vsel %vm1664, %v1708, %v1710
      %v1712 = vrot.slane %v1614, 4
      %v1713 = vsel %vm1664, %v1710, %v1712
      %v1714 = vrot.slane %v1615, 4
      %v1715 = vsel %vm1664, %v1712, %v1714
      %v1716 = vrot.slane %v1616, 4
      %v1717 = vsel %vm1664, %v1714, %v1716
      %v1718 = vrot.slane %v1617, 4
      %v1719 = vsel %vm1664, %v1716, %v1718
      %v1720 = vrot.slane %v1618, 4
      %v1721 = vsel %vm1664, %v1718, %v1720
      %v1722 = vrot.slane %v1619, 4
      %v1723 = vsel %vm1664, %v1720, %v1722
      %v1724 = vrot.slane %v1620, 4
      %v1725 = vsel %vm1664, %v1722, %v1724
      %v1726 = vrot.slane %v1621, 4
      %v1727 = vsel %vm1664, %v1724, %v1726
      %v1728 = vrot.slane %v1622, 4
      %v1729 = vsel %vm1664, %v1726, %v1728
      %v1730 = vrot.slane %v1623, 4
      %v1731 = vsel %vm1664, %v1728, %v1730
      %v1732 = vrot.slane %v1624, 4
      %v1733 = vsel %vm1664, %v1730, %v1732
      %v1734 = vrot.slane %v1625, 4
      %v1735 = vsel %vm1664, %v1732, %v1734
      %v1736 = vrot.slane %v1626, 4
      %v1737 = vsel %vm1664, %v1734, %v1736
      %v1774 = vadd.f32 %v1550, %v1667
      %v1775 = vadd.f32 %v1551, %v1669
      %v1776 = vadd.f32 %v1552, %v1671
      %v1777 = vadd.f32 %v1553, %v1673
      %v1778 = vadd.f32 %v1554, %v1675
      %v1779 = vadd.f32 %v1555, %v1677
      %v1780 = vadd.f32 %v1556, %v1679
      %v1781 = vadd.f32 %v1557, %v1681
      %v1782 = vadd.f32 %v1558, %v1683
      %v1783 = vadd.f32 %v1559, %v1685
      %v1784 = vadd.f32 %v1560, %v1687
      %v1785 = vadd.f32 %v1561, %v1689
      %v1786 = vadd.f32 %v1562, %v1691
      %v1787 = vadd.f32 %v1563, %v1693
      %v1788 = vadd.f32 %v1564, %v1695
      %v1789 = vadd.f32 %v1565, %v1697
      %v1790 = vadd.f32 %v1566, %v1699
      %v1791 = vadd.f32 %v1567, %v1701
      %v1792 = vadd.f32 %v1568, %v1703
      %v1793 = vadd.f32 %v1569, %v1705
      %v1794 = vadd.f32 %v1570, %v1707
      %v1795 = vadd.f32 %v1571, %v1709
      %v1796 = vadd.f32 %v1572, %v1711
      %v1797 = vadd.f32 %v1573, %v1713
      %v1798 = vadd.f32 %v1574, %v1715
      %v1799 = vadd.f32 %v1575, %v1717
      %v1800 = vadd.f32 %v1576, %v1719
      %v1801 = vadd.f32 %v1577, %v1721
      %v1802 = vadd.f32 %v1578, %v1723
      %v1803 = vadd.f32 %v1579, %v1725
      %v1804 = vadd.f32 %v1580, %v1727
      %v1805 = vadd.f32 %v1581, %v1729
      %v1806 = vadd.f32 %v1582, %v1731
      %v1807 = vadd.f32 %v1583, %v1733
      %v1808 = vadd.f32 %v1584, %v1735
      %v1809 = vadd.f32 %v1585, %v1737
      %1811 = vset.pattern.permute.xlu0 0
      %1812 = vperm.xlu0 %1811, %v452
      %v1813 = vpop.permute.xlu0 %1812
      %1816 = vset.pattern.permute.xlu0 0
      %1817 = vperm.xlu0 %1816, %v453
      %v1818 = vpop.permute.xlu0 %1817
      %v1820 = vlaneseq
      %v1821 = vshrl.u32 %v1820, 7
      %v1822 = vsub.s32 6, %v1821
      %v1823 = vrot.slane %v454, %v1822
      %v1824 = vmul.f32 %v479, %v1823
      %v1825 = vmul.f32 %v484, %v1823
      %v1826 = vmul.f32 %v489, %v1823
      %v1827 = vmul.f32 %v494, %v1823
      %v1828 = vmul.f32 %v499, %v1823
      %v1829 = vmul.f32 %v504, %v1823
      %v1830 = vmul.f32 %v509, %v1823
      %v1831 = vmul.f32 %v514, %v1823
      %v1832 = vmul.f32 %v519, %v1823
      %v1833 = vmul.f32 %v524, %v1823
      %v1834 = vmul.f32 %v529, %v1823
      %v1835 = vmul.f32 %v534, %v1823
      %v1836 = vmul.f32 %v539, %v1823
      %v1837 = vmul.f32 %v544, %v1823
      %v1838 = vmul.f32 %v549, %v1823
      %v1839 = vmul.f32 %v554, %v1823
      %v1840 = vmul.f32 %v559, %v1823
      %v1841 = vmul.f32 %v564, %v1823
      %v1842 = vmul.f32 %v569, %v1823
      %v1843 = vmul.f32 %v574, %v1823
      %v1844 = vmul.f32 %v579, %v1823
      %v1845 = vmul.f32 %v584, %v1823
      %v1846 = vmul.f32 %v589, %v1823
      %v1847 = vmul.f32 %v594, %v1823
      %v1848 = vmul.f32 %v599, %v1823
      %v1849 = vmul.f32 %v604, %v1823
      %v1850 = vmul.f32 %v609, %v1823
      %v1851 = vmul.f32 %v614, %v1823
      %v1852 = vmul.f32 %v619, %v1823
      %v1853 = vmul.f32 %v624, %v1823
      %v1854 = vmul.f32 %v629, %v1823
      %v1855 = vmul.f32 %v634, %v1823
      %v1856 = vmul.f32 %v679, %v1823
      %v1857 = vmul.f32 %v1132, %v1823
      %v1858 = vmul.f32 %v1137, %v1823
      %v1859 = vmul.f32 %v1813, %v1823
      %v1860 = vmul.f32 %v1818, %v1823
      %v1898 = vrot.slane %v1824, 4
      %v1899 = vrot.slane %v1825, 4
      %v1900 = vsel %vm1664, %v1898, %v1899
      %v1901 = vrot.slane %v1826, 4
      %v1902 = vsel %vm1664, %v1899, %v1901
      %v1903 = vrot.slane %v1827, 4
      %v1904 = vsel %vm1664, %v1901, %v1903
      %v1905 = vrot.slane %v1828, 4
      %v1906 = vsel %vm1664, %v1903, %v1905
      %v1907 = vrot.slane %v1829, 4
      %v1908 = vsel %vm1664, %v1905, %v1907
      %v1909 = vrot.slane %v1830, 4
      %v1910 = vsel %vm1664, %v1907, %v1909
      %v1911 = vrot.slane %v1831, 4
      %v1912 = vsel %vm1664, %v1909, %v1911
      %v1913 = vrot.slane %v1832, 4
      %v1914 = vsel %vm1664, %v1911, %v1913
      %v1915 = vrot.slane %v1833, 4
      %v1916 = vsel %vm1664, %v1913, %v1915
      %v1917 = vrot.slane %v1834, 4
      %v1918 = vsel %vm1664, %v1915, %v1917
      %v1919 = vrot.slane %v1835, 4
      %v1920 = vsel %vm1664, %v1917, %v1919
      %v1921 = vrot.slane %v1836, 4
      %v1922 = vsel %vm1664, %v1919, %v1921
      %v1923 = vrot.slane %v1837, 4
      %v1924 = vsel %vm1664, %v1921, %v1923
      %v1925 = vrot.slane %v1838, 4
      %v1926 = vsel %vm1664, %v1923, %v1925
      %v1927 = vrot.slane %v1839, 4
      %v1928 = vsel %vm1664, %v1925, %v1927
      %v1929 = vrot.slane %v1840, 4
      %v1930 = vsel %vm1664, %v1927, %v1929
      %v1931 = vrot.slane %v1841, 4
      %v1932 = vsel %vm1664, %v1929, %v1931
      %v1933 = vrot.slane %v1842, 4
      %v1934 = vsel %vm1664, %v1931, %v1933
      %v1935 = vrot.slane %v1843, 4
      %v1936 = vsel %vm1664, %v1933, %v1935
      %v1937 = vrot.slane %v1844, 4
      %v1938 = vsel %vm1664, %v1935, %v1937
      %v1939 = vrot.slane %v1845, 4
      %v1940 = vsel %vm1664, %v1937, %v1939
      %v1941 = vrot.slane %v1846, 4
      %v1942 = vsel %vm1664, %v1939, %v1941
      %v1943 = vrot.slane %v1847, 4
      %v1944 = vsel %vm1664, %v1941, %v1943
      %v1945 = vrot.slane %v1848, 4
      %v1946 = vsel %vm1664, %v1943, %v1945
      %v1947 = vrot.slane %v1849, 4
      %v1948 = vsel %vm1664, %v1945, %v1947
      %v1949 = vrot.slane %v1850, 4
      %v1950 = vsel %vm1664, %v1947, %v1949
      %v1951 = vrot.slane %v1851, 4
      %v1952 = vsel %vm1664, %v1949, %v1951
      %v1953 = vrot.slane %v1852, 4
      %v1954 = vsel %vm1664, %v1951, %v1953
      %v1955 = vrot.slane %v1853, 4
      %v1956 = vsel %vm1664, %v1953, %v1955
      %v1957 = vrot.slane %v1854, 4
      %v1958 = vsel %vm1664, %v1955, %v1957
      %v1959 = vrot.slane %v1855, 4
      %v1960 = vsel %vm1664, %v1957, %v1959
      %v1961 = vrot.slane %v1856, 4
      %v1962 = vsel %vm1664, %v1959, %v1961
      %v1963 = vrot.slane %v1857, 4
      %v1964 = vsel %vm1664, %v1961, %v1963
      %v1965 = vrot.slane %v1858, 4
      %v1966 = vsel %vm1664, %v1963, %v1965
      %v1967 = vrot.slane %v1859, 4
      %v1968 = vsel %vm1664, %v1965, %v1967
      %v1969 = vrot.slane %v1860, 4
      %v1970 = vsel %vm1664, %v1967, %v1969
      %v2007 = vadd.f32 %v1774, %v1900
      %v2008 = vadd.f32 %v1775, %v1902
      %v2009 = vadd.f32 %v1776, %v1904
      %v2010 = vadd.f32 %v1777, %v1906
      %v2011 = vadd.f32 %v1778, %v1908
      %v2012 = vadd.f32 %v1779, %v1910
      %v2013 = vadd.f32 %v1780, %v1912
      %v2014 = vadd.f32 %v1781, %v1914
      %v2015 = vadd.f32 %v1782, %v1916
      %v2016 = vadd.f32 %v1783, %v1918
      %v2017 = vadd.f32 %v1784, %v1920
      %v2018 = vadd.f32 %v1785, %v1922
      %v2019 = vadd.f32 %v1786, %v1924
      %v2020 = vadd.f32 %v1787, %v1926
      %v2021 = vadd.f32 %v1788, %v1928
      %v2022 = vadd.f32 %v1789, %v1930
      %v2023 = vadd.f32 %v1790, %v1932
      %v2024 = vadd.f32 %v1791, %v1934
      %v2025 = vadd.f32 %v1792, %v1936
      %v2026 = vadd.f32 %v1793, %v1938
      %v2027 = vadd.f32 %v1794, %v1940
      %v2028 = vadd.f32 %v1795, %v1942
      %v2029 = vadd.f32 %v1796, %v1944
      %v2030 = vadd.f32 %v1797, %v1946
      %v2031 = vadd.f32 %v1798, %v1948
      %v2032 = vadd.f32 %v1799, %v1950
      %v2033 = vadd.f32 %v1800, %v1952
      %v2034 = vadd.f32 %v1801, %v1954
      %v2035 = vadd.f32 %v1802, %v1956
      %v2036 = vadd.f32 %v1803, %v1958
      %v2037 = vadd.f32 %v1804, %v1960
      %v2038 = vadd.f32 %v1805, %v1962
      %v2039 = vadd.f32 %v1806, %v1964
      %v2040 = vadd.f32 %v1807, %v1966
      %v2041 = vadd.f32 %v1808, %v1968
      %v2042 = vadd.f32 %v1809, %v1970
      %v2043 = vlaneseq
      %v2044 = vshrl.u32 %v2043, 7
      %v2045 = vsub.s32 7, %v2044
      %v2046 = vrot.slane %v454, %v2045
      %v2047 = vmul.f32 %v479, %v2046
      %v2048 = vmul.f32 %v484, %v2046
      %v2049 = vmul.f32 %v489, %v2046
      %v2050 = vmul.f32 %v494, %v2046
      %v2051 = vmul.f32 %v499, %v2046
      %v2052 = vmul.f32 %v504, %v2046
      %v2053 = vmul.f32 %v509, %v2046
      %v2054 = vmul.f32 %v514, %v2046
      %v2055 = vmul.f32 %v519, %v2046
      %v2056 = vmul.f32 %v524, %v2046
      %v2057 = vmul.f32 %v529, %v2046
      %v2058 = vmul.f32 %v534, %v2046
      %v2059 = vmul.f32 %v539, %v2046
      %v2060 = vmul.f32 %v544, %v2046
      %v2061 = vmul.f32 %v549, %v2046
      %v2062 = vmul.f32 %v554, %v2046
      %v2063 = vmul.f32 %v559, %v2046
      %v2064 = vmul.f32 %v564, %v2046
      %v2065 = vmul.f32 %v569, %v2046
      %v2066 = vmul.f32 %v574, %v2046
      %v2067 = vmul.f32 %v579, %v2046
      %v2068 = vmul.f32 %v584, %v2046
      %v2069 = vmul.f32 %v589, %v2046
      %v2070 = vmul.f32 %v594, %v2046
      %v2071 = vmul.f32 %v599, %v2046
      %v2072 = vmul.f32 %v604, %v2046
      %v2073 = vmul.f32 %v609, %v2046
      %v2074 = vmul.f32 %v614, %v2046
      %v2075 = vmul.f32 %v619, %v2046
      %v2076 = vmul.f32 %v624, %v2046
      %v2077 = vmul.f32 %v629, %v2046
      %v2078 = vmul.f32 %v634, %v2046
      %v2079 = vmul.f32 %v679, %v2046
      %v2080 = vmul.f32 %v1132, %v2046
      %v2081 = vmul.f32 %v1137, %v2046
      %v2082 = vmul.f32 %v1813, %v2046
      %v2083 = vmul.f32 %v1818, %v2046
      %vm2121 = vcmask 1042432
      %v2122 = vrot.slane %v2047, 5
      %v2123 = vrot.slane %v2048, 5
      %v2124 = vsel %vm2121, %v2122, %v2123
      %v2125 = vrot.slane %v2049, 5
      %v2126 = vsel %vm2121, %v2123, %v2125
      %v2127 = vrot.slane %v2050, 5
      %v2128 = vsel %vm2121, %v2125, %v2127
      %v2129 = vrot.slane %v2051, 5
      %v2130 = vsel %vm2121, %v2127, %v2129
      %v2131 = vrot.slane %v2052, 5
      %v2132 = vsel %vm2121, %v2129, %v2131
      %v2133 = vrot.slane %v2053, 5
      %v2134 = vsel %vm2121, %v2131, %v2133
      %v2135 = vrot.slane %v2054, 5
      %v2136 = vsel %vm2121, %v2133, %v2135
      %v2137 = vrot.slane %v2055, 5
      %v2138 = vsel %vm2121, %v2135, %v2137
      %v2139 = vrot.slane %v2056, 5
      %v2140 = vsel %vm2121, %v2137, %v2139
      %v2141 = vrot.slane %v2057, 5
      %v2142 = vsel %vm2121, %v2139, %v2141
      %v2143 = vrot.slane %v2058, 5
      %v2144 = vsel %vm2121, %v2141, %v2143
      %v2145 = vrot.slane %v2059, 5
      %v2146 = vsel %vm2121, %v2143, %v2145
      %v2147 = vrot.slane %v2060, 5
      %v2148 = vsel %vm2121, %v2145, %v2147
      %v2149 = vrot.slane %v2061, 5
      %v2150 = vsel %vm2121, %v2147, %v2149
      %v2151 = vrot.slane %v2062, 5
      %v2152 = vsel %vm2121, %v2149, %v2151
      %v2153 = vrot.slane %v2063, 5
      %v2154 = vsel %vm2121, %v2151, %v2153
      %v2155 = vrot.slane %v2064, 5
      %v2156 = vsel %vm2121, %v2153, %v2155
      %v2157 = vrot.slane %v2065, 5
      %v2158 = vsel %vm2121, %v2155, %v2157
      %v2159 = vrot.slane %v2066, 5
      %v2160 = vsel %vm2121, %v2157, %v2159
      %v2161 = vrot.slane %v2067, 5
      %v2162 = vsel %vm2121, %v2159, %v2161
      %v2163 = vrot.slane %v2068, 5
      %v2164 = vsel %vm2121, %v2161, %v2163
      %v2165 = vrot.slane %v2069, 5
      %v2166 = vsel %vm2121, %v2163, %v2165
      %v2167 = vrot.slane %v2070, 5
      %v2168 = vsel %vm2121, %v2165, %v2167
      %v2169 = vrot.slane %v2071, 5
      %v2170 = vsel %vm2121, %v2167, %v2169
      %v2171 = vrot.slane %v2072, 5
      %v2172 = vsel %vm2121, %v2169, %v2171
      %v2173 = vrot.slane %v2073, 5
      %v2174 = vsel %vm2121, %v2171, %v2173
      %v2175 = vrot.slane %v2074, 5
      %v2176 = vsel %vm2121, %v2173, %v2175
      %v2177 = vrot.slane %v2075, 5
      %v2178 = vsel %vm2121, %v2175, %v2177
      %v2179 = vrot.slane %v2076, 5
      %v2180 = vsel %vm2121, %v2177, %v2179
      %v2181 = vrot.slane %v2077, 5
      %v2182 = vsel %vm2121, %v2179, %v2181
      %v2183 = vrot.slane %v2078, 5
      %v2184 = vsel %vm2121, %v2181, %v2183
      %v2185 = vrot.slane %v2079, 5
      %v2186 = vsel %vm2121, %v2183, %v2185
      %v2187 = vrot.slane %v2080, 5
      %v2188 = vsel %vm2121, %v2185, %v2187
      %v2189 = vrot.slane %v2081, 5
      %v2190 = vsel %vm2121, %v2187, %v2189
      %v2191 = vrot.slane %v2082, 5
      %v2192 = vsel %vm2121, %v2189, %v2191
      %v2193 = vrot.slane %v2083, 5
      %v2194 = vsel %vm2121, %v2191, %v2193
      %v2231 = vadd.f32 %v2007, %v2124
      %v2232 = vadd.f32 %v2008, %v2126
      %v2233 = vadd.f32 %v2009, %v2128
      %v2234 = vadd.f32 %v2010, %v2130
      %v2235 = vadd.f32 %v2011, %v2132
      %v2236 = vadd.f32 %v2012, %v2134
      %v2237 = vadd.f32 %v2013, %v2136
      %v2238 = vadd.f32 %v2014, %v2138
      %v2239 = vadd.f32 %v2015, %v2140
      %v2240 = vadd.f32 %v2016, %v2142
      %v2241 = vadd.f32 %v2017, %v2144
      %v2242 = vadd.f32 %v2018, %v2146
      %v2243 = vadd.f32 %v2019, %v2148
      %v2244 = vadd.f32 %v2020, %v2150
      %v2245 = vadd.f32 %v2021, %v2152
      %v2246 = vadd.f32 %v2022, %v2154
      %v2247 = vadd.f32 %v2023, %v2156
      %v2248 = vadd.f32 %v2024, %v2158
      %v2249 = vadd.f32 %v2025, %v2160
      %v2250 = vadd.f32 %v2026, %v2162
      %v2251 = vadd.f32 %v2027, %v2164
      %v2252 = vadd.f32 %v2028, %v2166
      %v2253 = vadd.f32 %v2029, %v2168
      %v2254 = vadd.f32 %v2030, %v2170
      %v2255 = vadd.f32 %v2031, %v2172
      %v2256 = vadd.f32 %v2032, %v2174
      %v2257 = vadd.f32 %v2033, %v2176
      %v2258 = vadd.f32 %v2034, %v2178
      %v2259 = vadd.f32 %v2035, %v2180
      %v2260 = vadd.f32 %v2036, %v2182
      %v2261 = vadd.f32 %v2037, %v2184
      %v2262 = vadd.f32 %v2038, %v2186
      %v2263 = vadd.f32 %v2039, %v2188
      %v2264 = vadd.f32 %v2040, %v2190
      %v2265 = vadd.f32 %v2041, %v2192
      %v2266 = vadd.f32 %v2042, %v2194
      %v2267 = vlaneseq
      %v2268 = vshrl.u32 %v2267, 7
      %v2269 = vsub.s32 0, %v2268
      %v2270 = vrot.slane %v455, %v2269
      %v2271 = vmul.f32 %v479, %v2270
      %v2272 = vmul.f32 %v484, %v2270
      %v2273 = vmul.f32 %v489, %v2270
      %v2274 = vmul.f32 %v494, %v2270
      %v2275 = vmul.f32 %v499, %v2270
      %v2276 = vmul.f32 %v504, %v2270
      %v2277 = vmul.f32 %v509, %v2270
      %v2278 = vmul.f32 %v514, %v2270
      %v2279 = vmul.f32 %v519, %v2270
      %v2280 = vmul.f32 %v524, %v2270
      %v2281 = vmul.f32 %v529, %v2270
      %v2282 = vmul.f32 %v534, %v2270
      %v2283 = vmul.f32 %v539, %v2270
      %v2284 = vmul.f32 %v544, %v2270
      %v2285 = vmul.f32 %v549, %v2270
      %v2286 = vmul.f32 %v554, %v2270
      %v2287 = vmul.f32 %v559, %v2270
      %v2288 = vmul.f32 %v564, %v2270
      %v2289 = vmul.f32 %v569, %v2270
      %v2290 = vmul.f32 %v574, %v2270
      %v2291 = vmul.f32 %v579, %v2270
      %v2292 = vmul.f32 %v584, %v2270
      %v2293 = vmul.f32 %v589, %v2270
      %v2294 = vmul.f32 %v594, %v2270
      %v2295 = vmul.f32 %v599, %v2270
      %v2296 = vmul.f32 %v604, %v2270
      %v2297 = vmul.f32 %v609, %v2270
      %v2298 = vmul.f32 %v614, %v2270
      %v2299 = vmul.f32 %v619, %v2270
      %v2300 = vmul.f32 %v624, %v2270
      %v2301 = vmul.f32 %v629, %v2270
      %v2302 = vmul.f32 %v634, %v2270
      %v2303 = vmul.f32 %v679, %v2270
      %v2304 = vmul.f32 %v1132, %v2270
      %v2305 = vmul.f32 %v1137, %v2270
      %v2306 = vmul.f32 %v1813, %v2270
      %v2307 = vmul.f32 %v1818, %v2270
      %vm2345 = vcmask 1041408
      %v2346 = vrot.slane %v2271, 6
      %v2347 = vrot.slane %v2272, 6
      %v2348 = vsel %vm2345, %v2346, %v2347
      %v2349 = vrot.slane %v2273, 6
      %v2350 = vsel %vm2345, %v2347, %v2349
      %v2351 = vrot.slane %v2274, 6
      %v2352 = vsel %vm2345, %v2349, %v2351
      %v2353 = vrot.slane %v2275, 6
      %v2354 = vsel %vm2345, %v2351, %v2353
      %v2355 = vrot.slane %v2276, 6
      %v2356 = vsel %vm2345, %v2353, %v2355
      %v2357 = vrot.slane %v2277, 6
      %v2358 = vsel %vm2345, %v2355, %v2357
      %v2359 = vrot.slane %v2278, 6
      %v2360 = vsel %vm2345, %v2357, %v2359
      %v2361 = vrot.slane %v2279, 6
      %v2362 = vsel %vm2345, %v2359, %v2361
      %v2363 = vrot.slane %v2280, 6
      %v2364 = vsel %vm2345, %v2361, %v2363
      %v2365 = vrot.slane %v2281, 6
      %v2366 = vsel %vm2345, %v2363, %v2365
      %v2367 = vrot.slane %v2282, 6
      %v2368 = vsel %vm2345, %v2365, %v2367
      %v2369 = vrot.slane %v2283, 6
      %v2370 = vsel %vm2345, %v2367, %v2369
      %v2371 = vrot.slane %v2284, 6
      %v2372 = vsel %vm2345, %v2369, %v2371
      %v2373 = vrot.slane %v2285, 6
      %v2374 = vsel %vm2345, %v2371, %v2373
      %v2375 = vrot.slane %v2286, 6
      %v2376 = vsel %vm2345, %v2373, %v2375
      %v2377 = vrot.slane %v2287, 6
      %v2378 = vsel %vm2345, %v2375, %v2377
      %v2379 = vrot.slane %v2288, 6
      %v2380 = vsel %vm2345, %v2377, %v2379
      %v2381 = vrot.slane %v2289, 6
      %v2382 = vsel %vm2345, %v2379, %v2381
      %v2383 = vrot.slane %v2290, 6
      %v2384 = vsel %vm2345, %v2381, %v2383
      %v2385 = vrot.slane %v2291, 6
      %v2386 = vsel %vm2345, %v2383, %v2385
      %v2387 = vrot.slane %v2292, 6
      %v2388 = vsel %vm2345, %v2385, %v2387
      %v2389 = vrot.slane %v2293, 6
      %v2390 = vsel %vm2345, %v2387, %v2389
      %v2391 = vrot.slane %v2294, 6
      %v2392 = vsel %vm2345, %v2389, %v2391
      %v2393 = vrot.slane %v2295, 6
      %v2394 = vsel %vm2345, %v2391, %v2393
      %v2395 = vrot.slane %v2296, 6
      %v2396 = vsel %vm2345, %v2393, %v2395
      %v2397 = vrot.slane %v2297, 6
      %v2398 = vsel %vm2345, %v2395, %v2397
      %v2399 = vrot.slane %v2298, 6
      %v2400 = vsel %vm2345, %v2397, %v2399
      %v2401 = vrot.slane %v2299, 6
      %v2402 = vsel %vm2345, %v2399, %v2401
      %v2403 = vrot.slane %v2300, 6
      %v2404 = vsel %vm2345, %v2401, %v2403
      %v2405 = vrot.slane %v2301, 6
      %v2406 = vsel %vm2345, %v2403, %v2405
      %v2407 = vrot.slane %v2302, 6
      %v2408 = vsel %vm2345, %v2405, %v2407
      %v2409 = vrot.slane %v2303, 6
      %v2410 = vsel %vm2345, %v2407, %v2409
      %v2411 = vrot.slane %v2304, 6
      %v2412 = vsel %vm2345, %v2409, %v2411
      %v2413 = vrot.slane %v2305, 6
      %v2414 = vsel %vm2345, %v2411, %v2413
      %v2415 = vrot.slane %v2306, 6
      %v2416 = vsel %vm2345, %v2413, %v2415
      %v2417 = vrot.slane %v2307, 6
      %v2418 = vsel %vm2345, %v2415, %v2417
      %v2455 = vadd.f32 %v2231, %v2348
      %v2456 = vadd.f32 %v2232, %v2350
      %v2457 = vadd.f32 %v2233, %v2352
      %v2458 = vadd.f32 %v2234, %v2354
      %v2459 = vadd.f32 %v2235, %v2356
      %v2460 = vadd.f32 %v2236, %v2358
      %v2461 = vadd.f32 %v2237, %v2360
      %v2462 = vadd.f32 %v2238, %v2362
      %v2463 = vadd.f32 %v2239, %v2364
      %v2464 = vadd.f32 %v2240, %v2366
      %v2465 = vadd.f32 %v2241, %v2368
      %v2466 = vadd.f32 %v2242, %v2370
      %v2467 = vadd.f32 %v2243, %v2372
      %v2468 = vadd.f32 %v2244, %v2374
      %v2469 = vadd.f32 %v2245, %v2376
      %v2470 = vadd.f32 %v2246, %v2378
      %v2471 = vadd.f32 %v2247, %v2380
      %v2472 = vadd.f32 %v2248, %v2382
      %v2473 = vadd.f32 %v2249, %v2384
      %v2474 = vadd.f32 %v2250, %v2386
      %v2475 = vadd.f32 %v2251, %v2388
      %v2476 = vadd.f32 %v2252, %v2390
      %v2477 = vadd.f32 %v2253, %v2392
      %v2478 = vadd.f32 %v2254, %v2394
      %v2479 = vadd.f32 %v2255, %v2396
      %v2480 = vadd.f32 %v2256, %v2398
      %v2481 = vadd.f32 %v2257, %v2400
      %v2482 = vadd.f32 %v2258, %v2402
      %v2483 = vadd.f32 %v2259, %v2404
      %v2484 = vadd.f32 %v2260, %v2406
      %v2485 = vadd.f32 %v2261, %v2408
      %v2486 = vadd.f32 %v2262, %v2410
      %v2487 = vadd.f32 %v2263, %v2412
      %v2488 = vadd.f32 %v2264, %v2414
      %v2489 = vadd.f32 %v2265, %v2416
      %v2490 = vadd.f32 %v2266, %v2418
      %v2491 = vld [vmem:[%s2] sm:$0x1]
      %v2493 = vlaneseq
      %v2494 = vshrl.u32 %v2493, 7
      %v2495 = vsub.s32 0, %v2494
      %v2496 = vrot.slane %v2491, %v2495
      %v2498 = vadd.f32 %v2455, %v2496
      %v2499 = vadd.f32 %v2456, %v2496
      %v2500 = vadd.f32 %v2457, %v2496
      %v2501 = vadd.f32 %v2458, %v2496
      %v2502 = vadd.f32 %v2459, %v2496
      %v2503 = vadd.f32 %v2460, %v2496
      %v2504 = vadd.f32 %v2461, %v2496
      %v2505 = vadd.f32 %v2462, %v2496
      %v2506 = vadd.f32 %v2463, %v2496
      %v2507 = vadd.f32 %v2464, %v2496
      %v2508 = vadd.f32 %v2465, %v2496
      %v2509 = vadd.f32 %v2466, %v2496
      %v2510 = vadd.f32 %v2467, %v2496
      %v2511 = vadd.f32 %v2468, %v2496
      %v2512 = vadd.f32 %v2469, %v2496
      %v2513 = vadd.f32 %v2470, %v2496
      %v2514 = vadd.f32 %v2471, %v2496
      %v2515 = vadd.f32 %v2472, %v2496
      %v2516 = vadd.f32 %v2473, %v2496
      %v2517 = vadd.f32 %v2474, %v2496
      %v2518 = vadd.f32 %v2475, %v2496
      %v2519 = vadd.f32 %v2476, %v2496
      %v2520 = vadd.f32 %v2477, %v2496
      %v2521 = vadd.f32 %v2478, %v2496
      %v2522 = vadd.f32 %v2479, %v2496
      %v2523 = vadd.f32 %v2480, %v2496
      %v2524 = vadd.f32 %v2481, %v2496
      %v2525 = vadd.f32 %v2482, %v2496
      %v2526 = vadd.f32 %v2483, %v2496
      %v2527 = vadd.f32 %v2484, %v2496
      %v2528 = vadd.f32 %v2485, %v2496
      %v2529 = vadd.f32 %v2486, %v2496
      %v2530 = vadd.f32 %v2487, %v2496
      %v2531 = vadd.f32 %v2488, %v2496
      %v2532 = vadd.f32 %v2489, %v2496
      %v2533 = vadd.f32 %v2490, %v2496
      %v2534 = vmax.f32 %v2498, 0.0
      %v2535 = vmax.f32 %v2499, 0.0
      %v2536 = vmax.f32 %v2500, 0.0
      %v2537 = vmax.f32 %v2501, 0.0
      %v2538 = vmax.f32 %v2502, 0.0
      %v2539 = vmax.f32 %v2503, 0.0
      %v2540 = vmax.f32 %v2504, 0.0
      %v2541 = vmax.f32 %v2505, 0.0
      %v2542 = vmax.f32 %v2506, 0.0
      %v2543 = vmax.f32 %v2507, 0.0
      %v2544 = vmax.f32 %v2508, 0.0
      %v2545 = vmax.f32 %v2509, 0.0
      %v2546 = vmax.f32 %v2510, 0.0
      %v2547 = vmax.f32 %v2511, 0.0
      %v2548 = vmax.f32 %v2512, 0.0
      %v2549 = vmax.f32 %v2513, 0.0
      %v2550 = vmax.f32 %v2514, 0.0
      %v2551 = vmax.f32 %v2515, 0.0
      %v2552 = vmax.f32 %v2516, 0.0
      %v2553 = vmax.f32 %v2517, 0.0
      %v2554 = vmax.f32 %v2518, 0.0
      %v2555 = vmax.f32 %v2519, 0.0
      %v2556 = vmax.f32 %v2520, 0.0
      %v2557 = vmax.f32 %v2521, 0.0
      %v2558 = vmax.f32 %v2522, 0.0
      %v2559 = vmax.f32 %v2523, 0.0
      %v2560 = vmax.f32 %v2524, 0.0
      %v2561 = vmax.f32 %v2525, 0.0
      %v2562 = vmax.f32 %v2526, 0.0
      %v2563 = vmax.f32 %v2527, 0.0
      %v2564 = vmax.f32 %v2528, 0.0
      %v2565 = vmax.f32 %v2529, 0.0
      %v2566 = vmax.f32 %v2530, 0.0
      %v2567 = vmax.f32 %v2531, 0.0
      %v2568 = vmax.f32 %v2532, 0.0
      %v2569 = vmax.f32 %v2533, 0.0
      %v2604 = vrot.slane %v2534, 1
      %v2605 = vrot.slane %v2535, 1
      %v2606 = vsel %vm759, %v2604, %v2605
      %v2607 = vrot.slane %v2536, 1
      %v2608 = vsel %vm759, %v2605, %v2607
      %v2609 = vrot.slane %v2537, 1
      %v2610 = vsel %vm759, %v2607, %v2609
      %v2611 = vrot.slane %v2538, 1
      %v2612 = vsel %vm759, %v2609, %v2611
      %v2613 = vrot.slane %v2539, 1
      %v2614 = vsel %vm759, %v2611, %v2613
      %v2615 = vrot.slane %v2540, 1
      %v2616 = vsel %vm759, %v2613, %v2615
      %v2617 = vrot.slane %v2541, 1
      %v2618 = vsel %vm759, %v2615, %v2617
      %v2619 = vrot.slane %v2542, 1
      %v2620 = vsel %vm759, %v2617, %v2619
      %v2621 = vrot.slane %v2543, 1
      %v2622 = vsel %vm759, %v2619, %v2621
      %v2623 = vrot.slane %v2544, 1
      %v2624 = vsel %vm759, %v2621, %v2623
      %v2625 = vrot.slane %v2545, 1
      %v2626 = vsel %vm759, %v2623, %v2625
      %v2627 = vrot.slane %v2546, 1
      %v2628 = vsel %vm759, %v2625, %v2627
      %v2629 = vrot.slane %v2547, 1
      %v2630 = vsel %vm759, %v2627, %v2629
      %v2631 = vrot.slane %v2548, 1
      %v2632 = vsel %vm759, %v2629, %v2631
      %v2633 = vrot.slane %v2549, 1
      %v2634 = vsel %vm759, %v2631, %v2633
      %v2635 = vrot.slane %v2550, 1
      %v2636 = vsel %vm759, %v2633, %v2635
      %v2637 = vrot.slane %v2551, 1
      %v2638 = vsel %vm759, %v2635, %v2637
      %v2639 = vrot.slane %v2552, 1
      %v2640 = vsel %vm759, %v2637, %v2639
      %v2641 = vrot.slane %v2553, 1
      %v2642 = vsel %vm759, %v2639, %v2641
      %v2643 = vrot.slane %v2554, 1
      %v2644 = vsel %vm759, %v2641, %v2643
      %v2645 = vrot.slane %v2555, 1
      %v2646 = vsel %vm759, %v2643, %v2645
      %v2647 = vrot.slane %v2556, 1
      %v2648 = vsel %vm759, %v2645, %v2647
      %v2649 = vrot.slane %v2557, 1
      %v2650 = vsel %vm759, %v2647, %v2649
      %v2651 = vrot.slane %v2558, 1
      %v2652 = vsel %vm759, %v2649, %v2651
      %v2653 = vrot.slane %v2559, 1
      %v2654 = vsel %vm759, %v2651, %v2653
      %v2655 = vrot.slane %v2560, 1
      %v2656 = vsel %vm759, %v2653, %v2655
      %v2657 = vrot.slane %v2561, 1
      %v2658 = vsel %vm759, %v2655, %v2657
      %v2659 = vrot.slane %v2562, 1
      %v2660 = vsel %vm759, %v2657, %v2659
      %v2661 = vrot.slane %v2563, 1
      %v2662 = vsel %vm759, %v2659, %v2661
      %v2663 = vrot.slane %v2564, 1
      %v2664 = vsel %vm759, %v2661, %v2663
      %v2665 = vrot.slane %v2565, 1
      %v2666 = vsel %vm759, %v2663, %v2665
      %v2667 = vrot.slane %v2566, 1
      %v2668 = vsel %vm759, %v2665, %v2667
      %v2669 = vrot.slane %v2567, 1
      %v2670 = vsel %vm759, %v2667, %v2669
      %v2705 = vmax.f32 %v2534, %v2606
      %v2706 = vmax.f32 %v2535, %v2608
      %v2707 = vmax.f32 %v2536, %v2610
      %v2708 = vmax.f32 %v2537, %v2612
      %v2709 = vmax.f32 %v2538, %v2614
      %v2710 = vmax.f32 %v2539, %v2616
      %v2711 = vmax.f32 %v2540, %v2618
      %v2712 = vmax.f32 %v2541, %v2620
      %v2713 = vmax.f32 %v2542, %v2622
      %v2714 = vmax.f32 %v2543, %v2624
      %v2715 = vmax.f32 %v2544, %v2626
      %v2716 = vmax.f32 %v2545, %v2628
      %v2717 = vmax.f32 %v2546, %v2630
      %v2718 = vmax.f32 %v2547, %v2632
      %v2719 = vmax.f32 %v2548, %v2634
      %v2720 = vmax.f32 %v2549, %v2636
      %v2721 = vmax.f32 %v2550, %v2638
      %v2722 = vmax.f32 %v2551, %v2640
      %v2723 = vmax.f32 %v2552, %v2642
      %v2724 = vmax.f32 %v2553, %v2644
      %v2725 = vmax.f32 %v2554, %v2646
      %v2726 = vmax.f32 %v2555, %v2648
      %v2727 = vmax.f32 %v2556, %v2650
      %v2728 = vmax.f32 %v2557, %v2652
      %v2729 = vmax.f32 %v2558, %v2654
      %v2730 = vmax.f32 %v2559, %v2656
      %v2731 = vmax.f32 %v2560, %v2658
      %v2732 = vmax.f32 %v2561, %v2660
      %v2733 = vmax.f32 %v2562, %v2662
      %v2734 = vmax.f32 %v2563, %v2664
      %v2735 = vmax.f32 %v2564, %v2666
      %v2736 = vmax.f32 %v2565, %v2668
      %v2737 = vmax.f32 %v2566, %v2670
      %v2738 = vmax.f32 %v2567, %v2669
      %v2741 = vrot.slane %v2568, 1
      %v2742 = vsel %vm759, %v2669, %v2741
      %v2743 = vrot.slane %v2569, 1
      %v2744 = vsel %vm759, %v2741, %v2743
      %v2748 = vmax.f32 %v2567, %v2742
      %v2749 = vmax.f32 %v2568, %v2744
      %v2750 = vmax.f32 %v2569, %v2743
      %v2785 = vrot.slane %v2707, 2
      %v2786 = vrot.slane %v2708, 2
      %v2787 = vsel %vm983, %v2785, %v2786
      %v2788 = vrot.slane %v2709, 2
      %v2789 = vsel %vm983, %v2786, %v2788
      %v2790 = vrot.slane %v2710, 2
      %v2791 = vsel %vm983, %v2788, %v2790
      %v2792 = vrot.slane %v2711, 2
      %v2793 = vsel %vm983, %v2790, %v2792
      %v2794 = vrot.slane %v2712, 2
      %v2795 = vsel %vm983, %v2792, %v2794
      %v2796 = vrot.slane %v2713, 2
      %v2797 = vsel %vm983, %v2794, %v2796
      %v2798 = vrot.slane %v2714, 2
      %v2799 = vsel %vm983, %v2796, %v2798
      %v2800 = vrot.slane %v2715, 2
      %v2801 = vsel %vm983, %v2798, %v2800
      %v2802 = vrot.slane %v2716, 2
      %v2803 = vsel %vm983, %v2800, %v2802
      %v2804 = vrot.slane %v2717, 2
      %v2805 = vsel %vm983, %v2802, %v2804
      %v2806 = vrot.slane %v2718, 2
      %v2807 = vsel %vm983, %v2804, %v2806
      %v2808 = vrot.slane %v2719, 2
      %v2809 = vsel %vm983, %v2806, %v2808
      %v2810 = vrot.slane %v2720, 2
      %v2811 = vsel %vm983, %v2808, %v2810
      %v2812 = vrot.slane %v2721, 2
      %v2813 = vsel %vm983, %v2810, %v2812
      %v2814 = vrot.slane %v2722, 2
      %v2815 = vsel %vm983, %v2812, %v2814
      %v2816 = vrot.slane %v2723, 2
      %v2817 = vsel %vm983, %v2814, %v2816
      %v2818 = vrot.slane %v2724, 2
      %v2819 = vsel %vm983, %v2816, %v2818
      %v2820 = vrot.slane %v2725, 2
      %v2821 = vsel %vm983, %v2818, %v2820
      %v2822 = vrot.slane %v2726, 2
      %v2823 = vsel %vm983, %v2820, %v2822
      %v2824 = vrot.slane %v2727, 2
      %v2825 = vsel %vm983, %v2822, %v2824
      %v2826 = vrot.slane %v2728, 2
      %v2827 = vsel %vm983, %v2824, %v2826
      %v2828 = vrot.slane %v2729, 2
      %v2829 = vsel %vm983, %v2826, %v2828
      %v2830 = vrot.slane %v2730, 2
      %v2831 = vsel %vm983, %v2828, %v2830
      %v2832 = vrot.slane %v2731, 2
      %v2833 = vsel %vm983, %v2830, %v2832
      %v2834 = vrot.slane %v2732, 2
      %v2835 = vsel %vm983, %v2832, %v2834
      %v2836 = vrot.slane %v2733, 2
      %v2837 = vsel %vm983, %v2834, %v2836
      %v2838 = vrot.slane %v2734, 2
      %v2839 = vsel %vm983, %v2836, %v2838
      %v2840 = vrot.slane %v2735, 2
      %v2841 = vsel %vm983, %v2838, %v2840
      %v2842 = vrot.slane %v2736, 2
      %v2843 = vsel %vm983, %v2840, %v2842
      %v2844 = vrot.slane %v2737, 2
      %v2845 = vsel %vm983, %v2842, %v2844
      %v2846 = vrot.slane %v2748, 2
      %v2847 = vsel %vm983, %v2844, %v2846
      %v2848 = vrot.slane %v2749, 2
      %v2849 = vsel %vm983, %v2846, %v2848
      %v2850 = vrot.slane %v2750, 2
      %v2851 = vsel %vm983, %v2848, %v2850
      %v2886 = vmax.f32 %v2705, %v2787
      %v2887 = vmax.f32 %v2706, %v2789
      %v2888 = vmax.f32 %v2707, %v2791
      %v2889 = vmax.f32 %v2708, %v2793
      %v2890 = vmax.f32 %v2709, %v2795
      %v2891 = vmax.f32 %v2710, %v2797
      %v2892 = vmax.f32 %v2711, %v2799
      %v2893 = vmax.f32 %v2712, %v2801
      %v2894 = vmax.f32 %v2713, %v2803
      %v2895 = vmax.f32 %v2714, %v2805
      %v2896 = vmax.f32 %v2715, %v2807
      %v2897 = vmax.f32 %v2716, %v2809
      %v2898 = vmax.f32 %v2717, %v2811
      %v2899 = vmax.f32 %v2718, %v2813
      %v2900 = vmax.f32 %v2719, %v2815
      %v2901 = vmax.f32 %v2720, %v2817
      %v2902 = vmax.f32 %v2721, %v2819
      %v2903 = vmax.f32 %v2722, %v2821
      %v2904 = vmax.f32 %v2723, %v2823
      %v2905 = vmax.f32 %v2724, %v2825
      %v2906 = vmax.f32 %v2725, %v2827
      %v2907 = vmax.f32 %v2726, %v2829
      %v2908 = vmax.f32 %v2727, %v2831
      %v2909 = vmax.f32 %v2728, %v2833
      %v2910 = vmax.f32 %v2729, %v2835
      %v2911 = vmax.f32 %v2730, %v2837
      %v2912 = vmax.f32 %v2731, %v2839
      %v2913 = vmax.f32 %v2732, %v2841
      %v2914 = vmax.f32 %v2733, %v2843
      %v2915 = vmax.f32 %v2734, %v2845
      %v2916 = vmax.f32 %v2735, %v2847
      %v2917 = vmax.f32 %v2736, %v2849
      %v2918 = vmax.f32 %v2737, %v2851
      %v2919 = vmax.f32 %v2738, %v2850
      %v2920 = vld [vmem:[%s9] sm:$0xff]
      %v2921 = vld [vmem:[%s9 + $0x8] sm:$0xf]
      %v2922 = vld [vmem:[%s9 + $0xc] sm:$0xff]
      %v2923 = vld [vmem:[%s9 + $0x14] sm:$0xf]
      %v2924 = vld [vmem:[%s9 + $0x18] sm:$0xff]
      %v2925 = vld [vmem:[%s9 + $0x20] sm:$0xf]
      %v2926 = vld [vmem:[%s9 + $0x24] sm:$0xff]
      %v2927 = vld [vmem:[%s9 + $0x2c] sm:$0xf]
      %v2928 = vld [vmem:[%s9 + $0x30] sm:$0xff]
      %v2929 = vld [vmem:[%s9 + $0x38] sm:$0xf]
      %v2930 = vld [vmem:[%s9 + $0x3c] sm:$0xff]
      %v2931 = vld [vmem:[%s9 + $0x44] sm:$0xf]
      %v2932 = vld [vmem:[%s9 + $0x48] sm:$0xff]
      %v2933 = vld [vmem:[%s9 + $0x50] sm:$0xf]
      %v2934 = vld [vmem:[%s9 + $0x54] sm:$0xff]
      %v2935 = vld [vmem:[%s9 + $0x5c] sm:$0xf]
      %v2936 = vld [vmem:[%s9 + $0x60] sm:$0xff]
      %v2937 = vld [vmem:[%s9 + $0x68] sm:$0xf]
      %v2938 = vld [vmem:[%s9 + $0x6c] sm:$0xff]
      %v2939 = vld [vmem:[%s9 + $0x74] sm:$0xf]
      %v2940 = vld [vmem:[%s9 + $0x78] sm:$0xff]
      %v2941 = vld [vmem:[%s9 + $0x80] sm:$0xf]
      %v2942 = vld [vmem:[%s9 + $0x84] sm:$0xff]
      %v2943 = vld [vmem:[%s9 + $0x8c] sm:$0xf]
      %v2944 = vld [vmem:[%s9 + $0x90] sm:$0xff]
      %v2945 = vld [vmem:[%s9 + $0x98] sm:$0xf]
      %v2946 = vld [vmem:[%s9 + $0x9c] sm:$0x77]
      %v2947 = vld [vmem:[%s9 + $0xa4] sm:$0x7]
      %v2948 = vpack.c.bf16 %v2887, %v2886
      %v2949 = vpack.c.bf16 %v2889, %v2888
      %v2950 = vpack.c.bf16 %v2891, %v2890
      %v2951 = vpack.c.bf16 %v2893, %v2892
      %v2952 = vpack.c.bf16 %v2895, %v2894
      %v2953 = vpack.c.bf16 %v2897, %v2896
      %v2954 = vpack.c.bf16 %v2899, %v2898
      %v2955 = vpack.c.bf16 %v2901, %v2900
      %v2956 = vpack.c.bf16 %v2903, %v2902
      %v2957 = vpack.c.bf16 %v2905, %v2904
      %v2958 = vpack.c.bf16 %v2907, %v2906
      %v2959 = vpack.c.bf16 %v2909, %v2908
      %v2960 = vpack.c.bf16 %v2911, %v2910
      %v2961 = vpack.c.bf16 %v2913, %v2912
      %v2962 = vpack.c.bf16 %v2915, %v2914
      %v2963 = vpack.c.bf16 %v2917, %v2916
      %v2964 = vpack.c.bf16 %v2919, %v2918
      %v2993 = vunpack.c.l.b16 %v2920
      %v2994 = vunpack.c.h.b16 %v2920
      %v2995 = vunpack.c.l.b16 %v2921
      %v2996 = vunpack.c.l.b16 %v2922
      %v2997 = vunpack.c.h.b16 %v2922
      %v2998 = vunpack.c.l.b16 %v2923
      %v2999 = vunpack.c.l.b16 %v2924
      %v3000 = vunpack.c.h.b16 %v2924
      %v3001 = vunpack.c.l.b16 %v2925
      %v3002 = vunpack.c.l.b16 %v2926
      %v3003 = vunpack.c.h.b16 %v2926
      %v3004 = vunpack.c.l.b16 %v2927
      %v3005 = vunpack.c.l.b16 %v2928
      %v3006 = vunpack.c.h.b16 %v2928
      %v3007 = vunpack.c.l.b16 %v2929
      %v3008 = vunpack.c.l.b16 %v2930
      %v3009 = vunpack.c.h.b16 %v2930
      %v3010 = vunpack.c.l.b16 %v2931
      %v3011 = vunpack.c.l.b16 %v2932
      %v3012 = vunpack.c.h.b16 %v2932
      %v3013 = vunpack.c.l.b16 %v2933
      %v3014 = vunpack.c.l.b16 %v2934
      %v3015 = vunpack.c.h.b16 %v2934
      %v3016 = vunpack.c.l.b16 %v2935
      %v3017 = vunpack.c.l.b16 %v2936
      %v3018 = vunpack.c.h.b16 %v2936
      %v3019 = vunpack.c.l.b16 %v2937
      %v3020 = vunpack.c.l.b16 %v2938
      %v3021 = vunpack.c.h.b16 %v2938
      %v3022 = vunpack.c.l.b16 %v2939
      %v3023 = vunpack.c.l.b16 %v2940
      %v3024 = vunpack.c.h.b16 %v2940
      %v3025 = vunpack.c.l.b16 %v2941
      %v3026 = vunpack.c.l.b16 %v2942
      %v3027 = vunpack.c.h.b16 %v2942
      %v3028 = vunpack.c.l.b16 %v2943
      %v3029 = vunpack.c.l.b16 %v2944
      %v3030 = vunpack.c.h.b16 %v2944
      %v3031 = vunpack.c.l.b16 %v2945
      %v3032 = vunpack.c.l.b16 %v2946
      %v3033 = vunpack.c.h.b16 %v2946
      %v3034 = vunpack.c.l.b16 %v2947
      %v3035 = vpack.c.b16 %v2996, %v2993
      %v3036 = vpack.c.b16 %v2997, %v2994
      %v3037 = vpack.c.b16 %v2998, %v2995
      %v3038 = vpack.c.b16 %v3002, %v2999
      %v3039 = vpack.c.b16 %v3003, %v3000
      %v3040 = vpack.c.b16 %v3004, %v3001
      %v3041 = vpack.c.b16 %v3008, %v3005
      %v3042 = vpack.c.b16 %v3009, %v3006
      %v3043 = vpack.c.b16 %v3010, %v3007
      %v3044 = vpack.c.b16 %v3014, %v3011
      %v3045 = vpack.c.b16 %v3015, %v3012
      %v3046 = vpack.c.b16 %v3016, %v3013
      %v3047 = vpack.c.b16 %v3020, %v3017
      %v3048 = vpack.c.b16 %v3021, %v3018
      %v3049 = vpack.c.b16 %v3022, %v3019
      %v3050 = vpack.c.b16 %v3026, %v3023
      %v3051 = vpack.c.b16 %v3027, %v3024
      %v3052 = vpack.c.b16 %v3028, %v3025
      %v3053 = vpack.c.b16 %v3032, %v3029
      %v3054 = vpack.c.b16 %v3033, %v3030
      %v3055 = vpack.c.b16 %v3034, %v3031
      %vm3070 = vcmask 89088
      %v3072 = vsel %vm3070, %v3037, 0
      %v3075 = vsel %vm3070, %v3040, 0
      %v3078 = vsel %vm3070, %v3043, 0
      %v3081 = vsel %vm3070, %v3046, 0
      %v3084 = vsel %vm3070, %v3049, 0
      %v3087 = vsel %vm3070, %v3052, 0
      %v3090 = vsel %vm3070, %v3055, 0
      %v3092 = vsel %vm1440, 4294967295, 65535
      %v3093 = vsel %vm983, %v3092, 0
      %v3095 = vand.u32 %v2964, %v3093
      %3097 = vmatprep.subr.bf16.mxu0 0
      %3098 = vmatpush1.bf16.msra.mxu0 %v2948
      %3099 = vmatprep.subr.bf16.mxu0 0
      %3100 = vmatpush1.bf16.msra.mxu0 %v2949
      %3101 = vmatprep.subr.bf16.mxu0 0
      %3102 = vmatpush1.bf16.msra.mxu0 %v2950
      %3103 = vmatprep.subr.bf16.mxu0 0
      %3104 = vmatpush1.bf16.msra.mxu0 %v2951
      %3105 = vmatprep.subr.bf16.mxu0 0
      %3106 = vmatpush1.bf16.msra.mxu0 %v2952
      %3107 = vmatprep.subr.bf16.mxu0 0
      %3108 = vmatpush1.bf16.msra.mxu0 %v2953
      %3109 = vmatprep.subr.bf16.mxu0 0
      %3110 = vmatpush1.bf16.msra.mxu0 %v2954
      %3111 = vmatprep.subr.bf16.mxu0 0
      %3112 = vmatpush1.bf16.msra.mxu0 %v2955
      %3113 = vmatprep.subr.bf16.mxu0 0
      %3114 = vmatpush1.bf16.msra.mxu0 %v2956
      %3115 = vmatprep.subr.bf16.mxu0 0
      %3116 = vmatpush1.bf16.msra.mxu0 %v2957
      %3117 = vmatprep.subr.bf16.mxu0 0
      %3118 = vmatpush1.bf16.msra.mxu0 %v2958
      %3119 = vmatprep.subr.bf16.mxu0 0
      %3120 = vmatpush1.bf16.msra.mxu0 %v2959
      %3121 = vmatprep.subr.bf16.mxu0 0
      %3122 = vmatpush1.bf16.msra.mxu0 %v2960
      %3123 = vmatprep.subr.bf16.mxu0 0
      %3124 = vmatpush1.bf16.msra.mxu0 %v2961
      %3125 = vmatprep.subr.bf16.mxu0 0
      %3126 = vmatpush1.bf16.msra.mxu0 %v2962
      %3127 = vmatprep.subr.bf16.mxu0 0
      %3128 = vmatpush1.bf16.msra.mxu0 %v2963
      %3129 = vmatprep.mubr.bf16.mxu0 %v3036
      %3130 = vmatmul.mubr.bf16.gmra.mrb[0].mxu0 %v3035
      %v3131 = vpop.f32.mrb[0].mxu0
      %v3132 = vadd.f32 0.0, %v3131
      %v3133 = vpop.f32.mrb[0].mxu0
      %v3134 = vpop.f32.mrb[0].mxu0
      %v3135 = vadd.f32 0.0, %v3134
      %v3136 = vpop.f32.mrb[0].mxu0
      %3137 = vmatprep.mubr.bf16.mxu0 %v3039
      %3138 = vmatmul.mubr.bf16.gmra.mrb[0].mxu0 %v3038
      %v3139 = vpop.f32.mrb[0].mxu0
      %v3140 = vadd.f32 0.0, %v3139
      %v3141 = vpop.f32.mrb[0].mxu0
      %v3142 = vpop.f32.mrb[0].mxu0
      %v3143 = vadd.f32 0.0, %v3142
      %v3144 = vpop.f32.mrb[0].mxu0
      %3145 = vmatprep.mubr.bf16.mxu0 %v3042
      %3146 = vmatmul.mubr.bf16.gmra.mrb[0].mxu0 %v3041
      %v3147 = vpop.f32.mrb[0].mxu0
      %v3148 = vadd.f32 0.0, %v3147
      %v3149 = vpop.f32.mrb[0].mxu0
      %v3150 = vpop.f32.mrb[0].mxu0
      %v3151 = vadd.f32 0.0, %v3150
      %v3152 = vpop.f32.mrb[0].mxu0
      %3153 = vmatprep.mubr.bf16.mxu0 %v3045
      %3154 = vmatmul.mubr.bf16.gmra.mrb[0].mxu0 %v3044
      %v3155 = vpop.f32.mrb[0].mxu0
      %v3156 = vadd.f32 0.0, %v3155
      %v3157 = vpop.f32.mrb[0].mxu0
      %v3158 = vpop.f32.mrb[0].mxu0
      %v3159 = vadd.f32 0.0, %v3158
      %v3160 = vpop.f32.mrb[0].mxu0
      %3161 = vmatprep.mubr.bf16.mxu0 %v3048
      %3162 = vmatmul.mubr.bf16.gmra.mrb[0].mxu0 %v3047
      %v3163 = vpop.f32.mrb[0].mxu0
      %v3164 = vadd.f32 0.0, %v3163
      %v3165 = vpop.f32.mrb[0].mxu0
      %v3166 = vpop.f32.mrb[0].mxu0
      %v3167 = vadd.f32 0.0, %v3166
      %v3168 = vpop.f32.mrb[0].mxu0
      %3169 = vmatprep.mubr.bf16.mxu0 %v3051
      %3170 = vmatmul.mubr.bf16.gmra.mrb[0].mxu0 %v3050
      %v3171 = vpop.f32.mrb[0].mxu0
      %v3172 = vadd.f32 0.0, %v3171
      %v3173 = vpop.f32.mrb[0].mxu0
      %v3174 = vpop.f32.mrb[0].mxu0
      %v3175 = vadd.f32 0.0, %v3174
      %v3176 = vpop.f32.mrb[0].mxu0
      %3177 = vmatprep.mubr.bf16.mxu0 %v3054
      %3178 = vmatmul.mubr.bf16.gmra.mrb[0].mxu0 %v3053
      %v3179 = vpop.f32.mrb[0].mxu0
      %v3180 = vadd.f32 0.0, %v3179
      %v3181 = vpop.f32.mrb[0].mxu0
      %v3182 = vpop.f32.mrb[0].mxu0
      %v3183 = vpop.f32.mrb[0].mxu0
      %3184 = vdwg.mxu0
      %3185 = vmatprep.subr.bf16.mxu0 0
      %3186 = vmatpush1.bf16.msra.mxu0 %v3095
      %3187 = vmatprep.subr.bf16.mxu0 0
      %3188 = vmatpush1.bf16.msra.mxu0 0
      %3189 = vmatprep.subr.bf16.mxu0 0
      %3190 = vmatpush1.bf16.msra.mxu0 0
      %3191 = vmatprep.subr.bf16.mxu0 0
      %3192 = vmatpush1.bf16.msra.mxu0 0
      %3193 = vmatprep.subr.bf16.mxu0 0
      %3194 = vmatpush1.bf16.msra.mxu0 0
      %3195 = vmatprep.subr.bf16.mxu0 0
      %3196 = vmatpush1.bf16.msra.mxu0 0
      %3197 = vmatprep.subr.bf16.mxu0 0
      %3198 = vmatpush1.bf16.msra.mxu0 0
      %3199 = vmatprep.subr.bf16.mxu0 0
      %3200 = vmatpush1.bf16.msra.mxu0 0
      %3201 = vmatprep.subr.bf16.mxu0 0
      %3202 = vmatpush1.bf16.msra.mxu0 0
      %3203 = vmatprep.subr.bf16.mxu0 0
      %3204 = vmatpush1.bf16.msra.mxu0 0
      %3205 = vmatprep.subr.bf16.mxu0 0
      %3206 = vmatpush1.bf16.msra.mxu0 0
      %3207 = vmatprep.subr.bf16.mxu0 0
      %3208 = vmatpush1.bf16.msra.mxu0 0
      %3209 = vmatprep.subr.bf16.mxu0 0
      %3210 = vmatpush1.bf16.msra.mxu0 0
      %3211 = vmatprep.subr.bf16.mxu0 0
      %3212 = vmatpush1.bf16.msra.mxu0 0
      %3213 = vmatprep.subr.bf16.mxu0 0
      %3214 = vmatpush1.bf16.msra.mxu0 0
      %3215 = vmatprep.subr.bf16.mxu0 0
      %3216 = vmatpush1.bf16.msra.mxu0 0
      %3217 = vmatprep.mubr.bf16.mxu0 0
      %3218 = vmatmul.mubr.bf16.gmra.mrb[0].mxu0 %v3072
      %v3219 = vpop.f32.mrb[0].mxu0
      %v3220 = vadd.f32 %v3132, %v3219
      %v3221 = vpop.f32.mrb[0].mxu0
      %v3222 = vpop.f32.mrb[0].mxu0
      %v3223 = vadd.f32 %v3135, %v3222
      %v3224 = vpop.f32.mrb[0].mxu0
      %3225 = vmatprep.mubr.bf16.mxu0 0
      %3226 = vmatmul.mubr.bf16.gmra.mrb[0].mxu0 %v3075
      %v3227 = vpop.f32.mrb[0].mxu0
      %v3228 = vadd.f32 %v3140, %v3227
      %v3229 = vpop.f32.mrb[0].mxu0
      %v3230 = vpop.f32.mrb[0].mxu0
      %v3231 = vadd.f32 %v3143, %v3230
      %v3232 = vpop.f32.mrb[0].mxu0
      %3233 = vmatprep.mubr.bf16.mxu0 0
      %3234 = vmatmul.mubr.bf16.gmra.mrb[0].mxu0 %v3078
      %v3235 = vpop.f32.mrb[0].mxu0
      %v3236 = vadd.f32 %v3148, %v3235
      %v3237 = vpop.f32.mrb[0].mxu0
      %v3238 = vpop.f32.mrb[0].mxu0
      %v3239 = vadd.f32 %v3151, %v3238
      %v3240 = vpop.f32.mrb[0].mxu0
      %3241 = vmatprep.mubr.bf16.mxu0 0
      %3242 = vmatmul.mubr.bf16.gmra.mrb[0].mxu0 %v3081
      %v3243 = vpop.f32.mrb[0].mxu0
      %v3244 = vadd.f32 %v3156, %v3243
      %v3245 = vpop.f32.mrb[0].mxu0
      %v3246 = vpop.f32.mrb[0].mxu0
      %v3247 = vadd.f32 %v3159, %v3246
      %v3248 = vpop.f32.mrb[0].mxu0
      %3249 = vmatprep.mubr.bf16.mxu0 0
      %3250 = vmatmul.mubr.bf16.gmra.mrb[0].mxu0 %v3084
      %v3251 = vpop.f32.mrb[0].mxu0
      %v3252 = vadd.f32 %v3164, %v3251
      %v3253 = vpop.f32.mrb[0].mxu0
      %v3254 = vpop.f32.mrb[0].mxu0
      %v3255 = vadd.f32 %v3167, %v3254
      %v3256 = vpop.f32.mrb[0].mxu0
      %3257 = vmatprep.mubr.bf16.mxu0 0
      %3258 = vmatmul.mubr.bf16.gmra.mrb[0].mxu0 %v3087
      %v3259 = vpop.f32.mrb[0].mxu0
      %v3260 = vadd.f32 %v3172, %v3259
      %v3261 = vpop.f32.mrb[0].mxu0
      %v3262 = vpop.f32.mrb[0].mxu0
      %v3263 = vadd.f32 %v3175, %v3262
      %v3264 = vpop.f32.mrb[0].mxu0
      %3265 = vmatprep.mubr.bf16.mxu0 0
      %3266 = vmatmul.mubr.bf16.gmra.mrb[0].mxu0 %v3090
      %v3267 = vpop.f32.mrb[0].mxu0
      %v3268 = vadd.f32 %v3180, %v3267
      %v3269 = vpop.f32.mrb[0].mxu0
      %v3270 = vpop.f32.mrb[0].mxu0
      %v3271 = vpop.f32.mrb[0].mxu0
      %3272 = vdwg.mxu0
      %v3273 = vpack.c.bf16 %v3223, %v3220
      %v3274 = vpack.c.bf16 %v3231, %v3228
      %v3275 = vpack.c.bf16 %v3239, %v3236
      %v3276 = vpack.c.bf16 %v3247, %v3244
      %v3277 = vpack.c.bf16 %v3255, %v3252
      %v3278 = vld [vmem:[%s3] sm:$0xf]
      %v3279 = vld [vmem:[%s3 + $0x4] sm:$0xf]
      %v3280 = vld [vmem:[%s3 + $0x8] sm:$0xf]
      %v3281 = vld [vmem:[%s3 + $0xc] sm:$0xf]
      %v3282 = vpack.c.bf16 %v3260, %v3260
      %v3283 = vld [vmem:[%s3 + $0x10] sm:$0xf]
      %v3284 = vld [vmem:[%s3 + $0x14] sm:$0xf]
      %v3285 = vld [vmem:[%s3 + $0x18] sm:$0xf]
      %v3286 = vld [vmem:[%s3 + $0x1c] sm:$0xf]
      %vm3287 = vsmask.f32 7424
      %v3289 = vshrl.u32 %v3273, 16
      %v3291 = vshll.u32 %v3273, 16
      %v3293 = vrot.slane %v3291, 1
      %v3294 = vor.u32 %v3289, %v3293
      %v3296 = vshll.u32 %v3274, 16
      %v3298 = vrot.slane %v3296, 1
      %v3299 = vsel %vm3287, %v3294, %v3298
      %v3300 = vshrl.u32 %v3274, 16
      %v3302 = vor.u32 %v3300, %v3298
      %v3304 = vshll.u32 %v3275, 16
      %v3306 = vrot.slane %v3304, 1
      %v3307 = vsel %vm3287, %v3302, %v3306
      %v3308 = vshrl.u32 %v3275, 16
      %v3310 = vor.u32 %v3308, %v3306
      %v3312 = vshll.u32 %v3276, 16
      %v3314 = vrot.slane %v3312, 1
      %v3315 = vsel %vm3287, %v3310, %v3314
      %v3316 = vshrl.u32 %v3276, 16
      %v3318 = vor.u32 %v3316, %v3314
      %v3320 = vshll.u32 %v3277, 16
      %v3322 = vrot.slane %v3320, 1
      %v3323 = vsel %vm3287, %v3318, %v3322
      %v3324 = vshrl.u32 %v3277, 16
      %v3326 = vor.u32 %v3324, %v3322
      %v3328 = vshll.u32 %v3282, 16
      %v3330 = vrot.slane %v3328, 1
      %v3331 = vsel %vm3287, %v3326, %v3330
      %v3336 = vunpack.c.l.b16 %v3283
      %v3337 = vunpack.c.l.b16 %v3284
      %v3338 = vunpack.c.l.b16 %v3285
      %v3339 = vunpack.c.l.b16 %v3286
      %v3340 = vpack.c.b16 %v3337, %v3336
      %v3341 = vpack.c.b16 %v3339, %v3338
      %vm3344 = vcmask 261120
      %v3346 = vsel %vm3344, %v3299, 0
      %v3349 = vsel %vm3344, %v3307, 0
      %v3352 = vsel %vm3344, %v3315, 0
      %v3355 = vsel %vm3344, %v3323, 0
      %v3358 = vsel %vm3344, %v3331, 0
      %3360 = vmatprep.subr.bf16.mxu0 0
      %3361 = vmatpush1.bf16.msra.mxu0 %v3340
      %3362 = vmatprep.subr.bf16.mxu0 0
      %3363 = vmatpush1.bf16.msra.mxu0 %v3341
      %3364 = vmatprep.subr.bf16.mxu0 0
      %3365 = vmatpush1.bf16.msra.mxu0 0
      %3366 = vmatprep.subr.bf16.mxu0 0
      %3367 = vmatpush1.bf16.msra.mxu0 0
      %3368 = vmatprep.subr.bf16.mxu0 0
      %3369 = vmatpush1.bf16.msra.mxu0 0
      %3370 = vmatprep.subr.bf16.mxu0 0
      %3371 = vmatpush1.bf16.msra.mxu0 0
      %3372 = vmatprep.subr.bf16.mxu0 0
      %3373 = vmatpush1.bf16.msra.mxu0 0
      %3374 = vmatprep.subr.bf16.mxu0 0
      %3375 = vmatpush1.bf16.msra.mxu0 0
      %3376 = vmatprep.subr.bf16.mxu0 0
      %3377 = vmatpush1.bf16.msra.mxu0 0
      %3378 = vmatprep.subr.bf16.mxu0 0
      %3379 = vmatpush1.bf16.msra.mxu0 0
      %3380 = vmatprep.subr.bf16.mxu0 0
      %3381 = vmatpush1.bf16.msra.mxu0 0
      %3382 = vmatprep.subr.bf16.mxu0 0
      %3383 = vmatpush1.bf16.msra.mxu0 0
      %3384 = vmatprep.subr.bf16.mxu0 0
      %3385 = vmatpush1.bf16.msra.mxu0 0
      %3386 = vmatprep.subr.bf16.mxu0 0
      %3387 = vmatpush1.bf16.msra.mxu0 0
      %3388 = vmatprep.subr.bf16.mxu0 0
      %3389 = vmatpush1.bf16.msra.mxu0 0
      %3390 = vmatprep.subr.bf16.mxu0 0
      %3391 = vmatpush1.bf16.msra.mxu0 0
      %3392 = vmatprep.mubr.bf16.mxu0 0
      %3393 = vmatmul.mubr.bf16.gmra.mrb[0].mxu0 %v3346
      %v3394 = vpop.f32.mrb[0].mxu0
      %v3395 = vadd.f32 0.0, %v3394
      %v3396 = vpop.f32.mrb[0].mxu0
      %v3397 = vpop.f32.mrb[0].mxu0
      %v3398 = vadd.f32 0.0, %v3397
      %v3399 = vpop.f32.mrb[0].mxu0
      %3400 = vmatprep.mubr.bf16.mxu0 0
      %3401 = vmatmul.mubr.bf16.gmra.mrb[0].mxu0 %v3349
      %v3402 = vpop.f32.mrb[0].mxu0
      %v3403 = vadd.f32 0.0, %v3402
      %v3404 = vpop.f32.mrb[0].mxu0
      %v3405 = vpop.f32.mrb[0].mxu0
      %v3406 = vadd.f32 0.0, %v3405
      %v3407 = vpop.f32.mrb[0].mxu0
      %3408 = vmatprep.mubr.bf16.mxu0 0
      %3409 = vmatmul.mubr.bf16.gmra.mrb[0].mxu0 %v3352
      %v3410 = vpop.f32.mrb[0].mxu0
      %v3411 = vadd.f32 0.0, %v3410
      %v3412 = vpop.f32.mrb[0].mxu0
      %v3413 = vpop.f32.mrb[0].mxu0
      %v3414 = vadd.f32 0.0, %v3413
      %v3415 = vpop.f32.mrb[0].mxu0
      %3416 = vmatprep.mubr.bf16.mxu0 0
      %3417 = vmatmul.mubr.bf16.gmra.mrb[0].mxu0 %v3355
      %v3418 = vpop.f32.mrb[0].mxu0
      %v3419 = vadd.f32 0.0, %v3418
      %v3420 = vpop.f32.mrb[0].mxu0
      %v3421 = vpop.f32.mrb[0].mxu0
      %v3422 = vadd.f32 0.0, %v3421
      %v3423 = vpop.f32.mrb[0].mxu0
      %3424 = vmatprep.mubr.bf16.mxu0 0
      %3425 = vmatmul.mubr.bf16.gmra.mrb[0].mxu0 %v3358
      %v3426 = vpop.f32.mrb[0].mxu0
      %v3427 = vadd.f32 0.0, %v3426
      %v3428 = vpop.f32.mrb[0].mxu0
      %v3429 = vpop.f32.mrb[0].mxu0
      %v3430 = vadd.f32 0.0, %v3429
      %v3431 = vpop.f32.mrb[0].mxu0
      %3432 = vdwg.mxu0
      %v3437 = vunpack.c.l.b16 %v3278
      %v3438 = vunpack.c.l.b16 %v3279
      %v3439 = vunpack.c.l.b16 %v3280
      %v3440 = vunpack.c.l.b16 %v3281
      %v3441 = vpack.c.b16 %v3438, %v3437
      %v3442 = vpack.c.b16 %v3440, %v3439
      %v3445 = vsel %vm3344, %v3273, 0
      %v3447 = vsel %vm3344, %v3274, 0
      %v3449 = vsel %vm3344, %v3275, 0
      %v3451 = vsel %vm3344, %v3276, 0
      %v3453 = vsel %vm3344, %v3277, 0
      %3455 = vmatprep.subr.bf16.mxu0 0
      %3456 = vmatpush1.bf16.msra.mxu0 %v3441
      %3457 = vmatprep.subr.bf16.mxu0 0
      %3458 = vmatpush1.bf16.msra.mxu0 %v3442
      %3459 = vmatprep.subr.bf16.mxu0 0
      %3460 = vmatpush1.bf16.msra.mxu0 0
      %3461 = vmatprep.subr.bf16.mxu0 0
      %3462 = vmatpush1.bf16.msra.mxu0 0
      %3463 = vmatprep.subr.bf16.mxu0 0
      %3464 = vmatpush1.bf16.msra.mxu0 0
      %3465 = vmatprep.subr.bf16.mxu0 0
      %3466 = vmatpush1.bf16.msra.mxu0 0
      %3467 = vmatprep.subr.bf16.mxu0 0
      %3468 = vmatpush1.bf16.msra.mxu0 0
      %3469 = vmatprep.subr.bf16.mxu0 0
      %3470 = vmatpush1.bf16.msra.mxu0 0
      %3471 = vmatprep.subr.bf16.mxu0 0
      %3472 = vmatpush1.bf16.msra.mxu0 0
      %3473 = vmatprep.subr.bf16.mxu0 0
      %3474 = vmatpush1.bf16.msra.mxu0 0
      %3475 = vmatprep.subr.bf16.mxu0 0
      %3476 = vmatpush1.bf16.msra.mxu0 0
      %3477 = vmatprep.subr.bf16.mxu0 0
      %3478 = vmatpush1.bf16.msra.mxu0 0
      %3479 = vmatprep.subr.bf16.mxu0 0
      %3480 = vmatpush1.bf16.msra.mxu0 0
      %3481 = vmatprep.subr.bf16.mxu0 0
      %3482 = vmatpush1.bf16.msra.mxu0 0
      %3483 = vmatprep.subr.bf16.mxu0 0
      %3484 = vmatpush1.bf16.msra.mxu0 0
      %3485 = vmatprep.subr.bf16.mxu0 0
      %3486 = vmatpush1.bf16.msra.mxu0 0
      %3487 = vmatprep.mubr.bf16.mxu0 0
      %3488 = vmatmul.mubr.bf16.gmra.mrb[0].mxu0 %v3445
      %v3489 = vpop.f32.mrb[0].mxu0
      %v3490 = vadd.f32 %v3395, %v3489
      %v3491 = vpop.f32.mrb[0].mxu0
      %v3492 = vpop.f32.mrb[0].mxu0
      %v3493 = vadd.f32 %v3398, %v3492
      %v3494 = vpop.f32.mrb[0].mxu0
      %3495 = vmatprep.mubr.bf16.mxu0 0
      %3496 = vmatmul.mubr.bf16.gmra.mrb[0].mxu0 %v3447
      %v3497 = vpop.f32.mrb[0].mxu0
      %v3498 = vadd.f32 %v3403, %v3497
      %v3499 = vpop.f32.mrb[0].mxu0
      %v3500 = vpop.f32.mrb[0].mxu0
      %v3501 = vadd.f32 %v3406, %v3500
      %v3502 = vpop.f32.mrb[0].mxu0
      %3503 = vmatprep.mubr.bf16.mxu0 0
      %3504 = vmatmul.mubr.bf16.gmra.mrb[0].mxu0 %v3449
      %v3505 = vpop.f32.mrb[0].mxu0
      %v3506 = vadd.f32 %v3411, %v3505
      %v3507 = vpop.f32.mrb[0].mxu0
      %v3508 = vpop.f32.mrb[0].mxu0
      %v3509 = vadd.f32 %v3414, %v3508
      %v3510 = vpop.f32.mrb[0].mxu0
      %3511 = vmatprep.mubr.bf16.mxu0 0
      %3512 = vmatmul.mubr.bf16.gmra.mrb[0].mxu0 %v3451
      %v3513 = vpop.f32.mrb[0].mxu0
      %v3514 = vadd.f32 %v3419, %v3513
      %v3515 = vpop.f32.mrb[0].mxu0
      %v3516 = vpop.f32.mrb[0].mxu0
      %v3517 = vadd.f32 %v3422, %v3516
      %v3518 = vpop.f32.mrb[0].mxu0
      %3519 = vmatprep.mubr.bf16.mxu0 0
      %3520 = vmatmul.mubr.bf16.gmra.mrb[0].mxu0 %v3453
      %v3521 = vpop.f32.mrb[0].mxu0
      %v3522 = vadd.f32 %v3427, %v3521
      %v3523 = vpop.f32.mrb[0].mxu0
      %v3524 = vpop.f32.mrb[0].mxu0
      %v3525 = vadd.f32 %v3430, %v3524
      %v3526 = vpop.f32.mrb[0].mxu0
      %3527 = vdwg.mxu0
      %v3528 = vld [vmem:[%s3 + $0x20] sm:$0xf]
      %v3529 = vld [vmem:[%s3 + $0x24] sm:$0xf]
      %v3530 = vld [vmem:[%s3 + $0x28] sm:$0xf]
      %v3531 = vld [vmem:[%s3 + $0x2c] sm:$0xf]
      %vm3538 = vcmask 1046528
      %v3539 = vrot.slane %v3273, 1
      %v3540 = vrot.slane %v3274, 1
      %v3541 = vsel %vm3538, %v3539, %v3540
      %v3542 = vrot.slane %v3275, 1
      %v3543 = vsel %vm3538, %v3540, %v3542
      %v3544 = vrot.slane %v3276, 1
      %v3545 = vsel %vm3538, %v3542, %v3544
      %v3546 = vrot.slane %v3277, 1
      %v3547 = vsel %vm3538, %v3544, %v3546
      %v3548 = vrot.slane %v3282, 1
      %v3549 = vsel %vm3538, %v3546, %v3548
      %v3554 = vunpack.c.l.b16 %v3528
      %v3555 = vunpack.c.l.b16 %v3529
      %v3556 = vunpack.c.l.b16 %v3530
      %v3557 = vunpack.c.l.b16 %v3531
      %v3558 = vpack.c.b16 %v3555, %v3554
      %v3559 = vpack.c.b16 %v3557, %v3556
      %v3563 = vsel %vm3344, %v3541, 0
      %v3566 = vsel %vm3344, %v3543, 0
      %v3569 = vsel %vm3344, %v3545, 0
      %v3572 = vsel %vm3344, %v3547, 0
      %v3575 = vsel %vm3344, %v3549, 0
      %3577 = vmatprep.subr.bf16.mxu0 0
      %3578 = vmatpush1.bf16.msra.mxu0 %v3558
      %3579 = vmatprep.subr.bf16.mxu0 0
      %3580 = vmatpush1.bf16.msra.mxu0 %v3559
      %3581 = vmatprep.subr.bf16.mxu0 0
      %3582 = vmatpush1.bf16.msra.mxu0 0
      %3583 = vmatprep.subr.bf16.mxu0 0
      %3584 = vmatpush1.bf16.msra.mxu0 0
      %3585 = vmatprep.subr.bf16.mxu0 0
      %3586 = vmatpush1.bf16.msra.mxu0 0
      %3587 = vmatprep.subr.bf16.mxu0 0
      %3588 = vmatpush1.bf16.msra.mxu0 0
      %3589 = vmatprep.subr.bf16.mxu0 0
      %3590 = vmatpush1.bf16.msra.mxu0 0
      %3591 = vmatprep.subr.bf16.mxu0 0
      %3592 = vmatpush1.bf16.msra.mxu0 0
      %3593 = vmatprep.subr.bf16.mxu0 0
      %3594 = vmatpush1.bf16.msra.mxu0 0
      %3595 = vmatprep.subr.bf16.mxu0 0
      %3596 = vmatpush1.bf16.msra.mxu0 0
      %3597 = vmatprep.subr.bf16.mxu0 0
      %3598 = vmatpush1.bf16.msra.mxu0 0
      %3599 = vmatprep.subr.bf16.mxu0 0
      %3600 = vmatpush1.bf16.msra.mxu0 0
      %3601 = vmatprep.subr.bf16.mxu0 0
      %3602 = vmatpush1.bf16.msra.mxu0 0
      %3603 = vmatprep.subr.bf16.mxu0 0
      %3604 = vmatpush1.bf16.msra.mxu0 0
      %3605 = vmatprep.subr.bf16.mxu0 0
      %3606 = vmatpush1.bf16.msra.mxu0 0
      %3607 = vmatprep.subr.bf16.mxu0 0
      %3608 = vmatpush1.bf16.msra.mxu0 0
      %3609 = vmatprep.mubr.bf16.mxu0 0
      %3610 = vmatmul.mubr.bf16.gmra.mrb[0].mxu0 %v3563
      %v3611 = vpop.f32.mrb[0].mxu0
      %v3612 = vadd.f32 0.0, %v3611
      %v3613 = vpop.f32.mrb[0].mxu0
      %v3614 = vpop.f32.mrb[0].mxu0
      %v3615 = vadd.f32 0.0, %v3614
      %v3616 = vpop.f32.mrb[0].mxu0
      %3617 = vmatprep.mubr.bf16.mxu0 0
      %3618 = vmatmul.mubr.bf16.gmra.mrb[0].mxu0 %v3566
      %v3619 = vpop.f32.mrb[0].mxu0
      %v3620 = vadd.f32 0.0, %v3619
      %v3621 = vpop.f32.mrb[0].mxu0
      %v3622 = vpop.f32.mrb[0].mxu0
      %v3623 = vadd.f32 0.0, %v3622
      %v3624 = vpop.f32.mrb[0].mxu0
      %3625 = vmatprep.mubr.bf16.mxu0 0
      %3626 = vmatmul.mubr.bf16.gmra.mrb[0].mxu0 %v3569
      %v3627 = vpop.f32.mrb[0].mxu0
      %v3628 = vadd.f32 0.0, %v3627
      %v3629 = vpop.f32.mrb[0].mxu0
      %v3630 = vpop.f32.mrb[0].mxu0
      %v3631 = vadd.f32 0.0, %v3630
      %v3632 = vpop.f32.mrb[0].mxu0
      %3633 = vmatprep.mubr.bf16.mxu0 0
      %3634 = vmatmul.mubr.bf16.gmra.mrb[0].mxu0 %v3572
      %v3635 = vpop.f32.mrb[0].mxu0
      %v3636 = vadd.f32 0.0, %v3635
      %v3637 = vpop.f32.mrb[0].mxu0
      %v3638 = vpop.f32.mrb[0].mxu0
      %v3639 = vadd.f32 0.0, %v3638
      %v3640 = vpop.f32.mrb[0].mxu0
      %3641 = vmatprep.mubr.bf16.mxu0 0
      %3642 = vmatmul.mubr.bf16.gmra.mrb[0].mxu0 %v3575
      %v3643 = vpop.f32.mrb[0].mxu0
      %v3644 = vadd.f32 0.0, %v3643
      %v3645 = vpop.f32.mrb[0].mxu0
      %v3646 = vpop.f32.mrb[0].mxu0
      %v3647 = vadd.f32 0.0, %v3646
      %v3648 = vpop.f32.mrb[0].mxu0
      %3649 = vdwg.mxu0
      %v3650 = vadd.f32 %v3490, %v3612
      %v3651 = vadd.f32 %v3493, %v3615
      %v3652 = vadd.f32 %v3498, %v3620
      %v3653 = vadd.f32 %v3501, %v3623
      %v3654 = vadd.f32 %v3506, %v3628
      %v3655 = vadd.f32 %v3509, %v3631
      %v3656 = vadd.f32 %v3514, %v3636
      %v3657 = vadd.f32 %v3517, %v3639
      %v3658 = vadd.f32 %v3522, %v3644
      %v3659 = vadd.f32 %v3525, %v3647
      %v3660 = vpack.c.bf16 %v3228, %v3223
      %v3661 = vpack.c.bf16 %v3236, %v3231
      %v3662 = vpack.c.bf16 %v3244, %v3239
      %v3663 = vpack.c.bf16 %v3252, %v3247
      %v3664 = vpack.c.bf16 %v3260, %v3255
      %v3665 = vpack.c.bf16 %v3263, %v3263
      %v3666 = vld [vmem:[%s3 + $0x30] sm:$0xf]
      %v3667 = vld [vmem:[%s3 + $0x34] sm:$0xf]
      %v3668 = vld [vmem:[%s3 + $0x38] sm:$0xf]
      %v3669 = vld [vmem:[%s3 + $0x3c] sm:$0xf]
      %v3676 = vrot.slane %v3660, 1
      %v3677 = vrot.slane %v3661, 1
      %v3678 = vsel %vm3538, %v3676, %v3677
      %v3679 = vrot.slane %v3662, 1
      %v3680 = vsel %vm3538, %v3677, %v3679
      %v3681 = vrot.slane %v3663, 1
      %v3682 = vsel %vm3538, %v3679, %v3681
      %v3683 = vrot.slane %v3664, 1
      %v3684 = vsel %vm3538, %v3681, %v3683
      %v3685 = vrot.slane %v3665, 1
      %v3686 = vsel %vm3538, %v3683, %v3685
      %v3691 = vunpack.c.l.b16 %v3666
      %v3692 = vunpack.c.l.b16 %v3667
      %v3693 = vunpack.c.l.b16 %v3668
      %v3694 = vunpack.c.l.b16 %v3669
      %v3695 = vpack.c.b16 %v3692, %v3691
      %v3696 = vpack.c.b16 %v3694, %v3693
      %v3700 = vsel %vm3344, %v3678, 0
      %v3703 = vsel %vm3344, %v3680, 0
      %v3706 = vsel %vm3344, %v3682, 0
      %v3709 = vsel %vm3344, %v3684, 0
      %v3712 = vsel %vm3344, %v3686, 0
      %3714 = vmatprep.subr.bf16.mxu0 0
      %3715 = vmatpush1.bf16.msra.mxu0 %v3695
      %3716 = vmatprep.subr.bf16.mxu0 0
      %3717 = vmatpush1.bf16.msra.mxu0 %v3696
      %3718 = vmatprep.subr.bf16.mxu0 0
      %3719 = vmatpush1.bf16.msra.mxu0 0
      %3720 = vmatprep.subr.bf16.mxu0 0
      %3721 = vmatpush1.bf16.msra.mxu0 0
      %3722 = vmatprep.subr.bf16.mxu0 0
      %3723 = vmatpush1.bf16.msra.mxu0 0
      %3724 = vmatprep.subr.bf16.mxu0 0
      %3725 = vmatpush1.bf16.msra.mxu0 0
      %3726 = vmatprep.subr.bf16.mxu0 0
      %3727 = vmatpush1.bf16.msra.mxu0 0
      %3728 = vmatprep.subr.bf16.mxu0 0
      %3729 = vmatpush1.bf16.msra.mxu0 0
      %3730 = vmatprep.subr.bf16.mxu0 0
      %3731 = vmatpush1.bf16.msra.mxu0 0
      %3732 = vmatprep.subr.bf16.mxu0 0
      %3733 = vmatpush1.bf16.msra.mxu0 0
      %3734 = vmatprep.subr.bf16.mxu0 0
      %3735 = vmatpush1.bf16.msra.mxu0 0
      %3736 = vmatprep.subr.bf16.mxu0 0
      %3737 = vmatpush1.bf16.msra.mxu0 0
      %3738 = vmatprep.subr.bf16.mxu0 0
      %3739 = vmatpush1.bf16.msra.mxu0 0
      %3740 = vmatprep.subr.bf16.mxu0 0
      %3741 = vmatpush1.bf16.msra.mxu0 0
      %3742 = vmatprep.subr.bf16.mxu0 0
      %3743 = vmatpush1.bf16.msra.mxu0 0
      %3744 = vmatprep.subr.bf16.mxu0 0
      %3745 = vmatpush1.bf16.msra.mxu0 0
      %3746 = vmatprep.mubr.bf16.mxu0 0
      %3747 = vmatmul.mubr.bf16.gmra.mrb[0].mxu0 %v3700
      %v3748 = vpop.f32.mrb[0].mxu0
      %v3749 = vadd.f32 0.0, %v3748
      %v3750 = vpop.f32.mrb[0].mxu0
      %v3751 = vpop.f32.mrb[0].mxu0
      %v3752 = vadd.f32 0.0, %v3751
      %v3753 = vpop.f32.mrb[0].mxu0
      %3754 = vmatprep.mubr.bf16.mxu0 0
      %3755 = vmatmul.mubr.bf16.gmra.mrb[0].mxu0 %v3703
      %v3756 = vpop.f32.mrb[0].mxu0
      %v3757 = vadd.f32 0.0, %v3756
      %v3758 = vpop.f32.mrb[0].mxu0
      %v3759 = vpop.f32.mrb[0].mxu0
      %v3760 = vadd.f32 0.0, %v3759
      %v3761 = vpop.f32.mrb[0].mxu0
      %3762 = vmatprep.mubr.bf16.mxu0 0
      %3763 = vmatmul.mubr.bf16.gmra.mrb[0].mxu0 %v3706
      %v3764 = vpop.f32.mrb[0].mxu0
      %v3765 = vadd.f32 0.0, %v3764
      %v3766 = vpop.f32.mrb[0].mxu0
      %v3767 = vpop.f32.mrb[0].mxu0
      %v3768 = vadd.f32 0.0, %v3767
      %v3769 = vpop.f32.mrb[0].mxu0
      %3770 = vmatprep.mubr.bf16.mxu0 0
      %3771 = vmatmul.mubr.bf16.gmra.mrb[0].mxu0 %v3709
      %v3772 = vpop.f32.mrb[0].mxu0
      %v3773 = vadd.f32 0.0, %v3772
      %v3774 = vpop.f32.mrb[0].mxu0
      %v3775 = vpop.f32.mrb[0].mxu0
      %v3776 = vadd.f32 0.0, %v3775
      %v3777 = vpop.f32.mrb[0].mxu0
      %3778 = vmatprep.mubr.bf16.mxu0 0
      %3779 = vmatmul.mubr.bf16.gmra.mrb[0].mxu0 %v3712
      %v3780 = vpop.f32.mrb[0].mxu0
      %v3781 = vadd.f32 0.0, %v3780
      %v3782 = vpop.f32.mrb[0].mxu0
      %v3783 = vpop.f32.mrb[0].mxu0
      %v3784 = vadd.f32 0.0, %v3783
      %v3785 = vpop.f32.mrb[0].mxu0
      %3786 = vdwg.mxu0
      %v3787 = vadd.f32 %v3650, %v3749
      %v3788 = vadd.f32 %v3651, %v3752
      %v3789 = vadd.f32 %v3652, %v3757
      %v3790 = vadd.f32 %v3653, %v3760
      %v3791 = vadd.f32 %v3654, %v3765
      %v3792 = vadd.f32 %v3655, %v3768
      %v3793 = vadd.f32 %v3656, %v3773
      %v3794 = vadd.f32 %v3657, %v3776
      %v3795 = vadd.f32 %v3658, %v3781
      %v3796 = vadd.f32 %v3659, %v3784
      %v3797 = vld [vmem:[%s3 + $0x40] sm:$0xf]
      %v3798 = vld [vmem:[%s3 + $0x44] sm:$0xf]
      %v3799 = vld [vmem:[%s3 + $0x48] sm:$0xf]
      %v3800 = vld [vmem:[%s3 + $0x4c] sm:$0xf]
      %vm3801 = vsmask.f32 6400
      %v3803 = vshrl.u32 %v3660, 16
      %v3805 = vrot.slane %v3803, 1
      %v3806 = vshll.u32 %v3660, 16
      %v3808 = vrot.slane %v3806, 2
      %v3809 = vor.u32 %v3805, %v3808
      %v3811 = vshrl.u32 %v3661, 16
      %v3813 = vrot.slane %v3811, 1
      %v3814 = vshll.u32 %v3661, 16
      %v3816 = vrot.slane %v3814, 2
      %v3817 = vor.u32 %v3813, %v3816
      %v3818 = vsel %vm3801, %v3809, %v3817
      %v3820 = vshrl.u32 %v3662, 16
      %v3822 = vrot.slane %v3820, 1
      %v3823 = vshll.u32 %v3662, 16
      %v3825 = vrot.slane %v3823, 2
      %v3826 = vor.u32 %v3822, %v3825
      %v3827 = vsel %vm3801, %v3817, %v3826
      %v3829 = vshrl.u32 %v3663, 16
      %v3831 = vrot.slane %v3829, 1
      %v3832 = vshll.u32 %v3663, 16
      %v3834 = vrot.slane %v3832, 2
      %v3835 = vor.u32 %v3831, %v3834
      %v3836 = vsel %vm3801, %v3826, %v3835
      %v3838 = vshrl.u32 %v3664, 16
      %v3840 = vrot.slane %v3838, 1
      %v3841 = vshll.u32 %v3664, 16
      %v3843 = vrot.slane %v3841, 2
      %v3844 = vor.u32 %v3840, %v3843
      %v3845 = vsel %vm3801, %v3835, %v3844
      %v3847 = vshrl.u32 %v3665, 16
      %v3849 = vrot.slane %v3847, 1
      %v3850 = vshll.u32 %v3665, 16
      %v3852 = vrot.slane %v3850, 2
      %v3853 = vor.u32 %v3849, %v3852
      %v3854 = vsel %vm3801, %v3844, %v3853
      %v3859 = vunpack.c.l.b16 %v3797
      %v3860 = vunpack.c.l.b16 %v3798
      %v3861 = vunpack.c.l.b16 %v3799
      %v3862 = vunpack.c.l.b16 %v3800
      %v3863 = vpack.c.b16 %v3860, %v3859
      %v3864 = vpack.c.b16 %v3862, %v3861
      %v3868 = vsel %vm3344, %v3818, 0
      %v3871 = vsel %vm3344, %v3827, 0
      %v3874 = vsel %vm3344, %v3836, 0
      %v3877 = vsel %vm3344, %v3845, 0
      %v3880 = vsel %vm3344, %v3854, 0
      %3882 = vmatprep.subr.bf16.mxu0 0
      %3883 = vmatpush1.bf16.msra.mxu0 %v3863
      %3884 = vmatprep.subr.bf16.mxu0 0
      %3885 = vmatpush1.bf16.msra.mxu0 %v3864
      %3886 = vmatprep.subr.bf16.mxu0 0
      %3887 = vmatpush1.bf16.msra.mxu0 0
      %3888 = vmatprep.subr.bf16.mxu0 0
      %3889 = vmatpush1.bf16.msra.mxu0 0
      %3890 = vmatprep.subr.bf16.mxu0 0
      %3891 = vmatpush1.bf16.msra.mxu0 0
      %3892 = vmatprep.subr.bf16.mxu0 0
      %3893 = vmatpush1.bf16.msra.mxu0 0
      %3894 = vmatprep.subr.bf16.mxu0 0
      %3895 = vmatpush1.bf16.msra.mxu0 0
      %3896 = vmatprep.subr.bf16.mxu0 0
      %3897 = vmatpush1.bf16.msra.mxu0 0
      %3898 = vmatprep.subr.bf16.mxu0 0
      %3899 = vmatpush1.bf16.msra.mxu0 0
      %3900 = vmatprep.subr.bf16.mxu0 0
      %3901 = vmatpush1.bf16.msra.mxu0 0
      %3902 = vmatprep.subr.bf16.mxu0 0
      %3903 = vmatpush1.bf16.msra.mxu0 0
      %3904 = vmatprep.subr.bf16.mxu0 0
      %3905 = vmatpush1.bf16.msra.mxu0 0
      %3906 = vmatprep.subr.bf16.mxu0 0
      %3907 = vmatpush1.bf16.msra.mxu0 0
      %3908 = vmatprep.subr.bf16.mxu0 0
      %3909 = vmatpush1.bf16.msra.mxu0 0
      %3910 = vmatprep.subr.bf16.mxu0 0
      %3911 = vmatpush1.bf16.msra.mxu0 0
      %3912 = vmatprep.subr.bf16.mxu0 0
      %3913 = vmatpush1.bf16.msra.mxu0 0
      %3914 = vmatprep.mubr.bf16.mxu0 0
      %3915 = vmatmul.mubr.bf16.gmra.mrb[0].mxu0 %v3868
      %v3916 = vpop.f32.mrb[0].mxu0
      %v3917 = vadd.f32 0.0, %v3916
      %v3918 = vpop.f32.mrb[0].mxu0
      %v3919 = vpop.f32.mrb[0].mxu0
      %v3920 = vadd.f32 0.0, %v3919
      %v3921 = vpop.f32.mrb[0].mxu0
      %3922 = vmatprep.mubr.bf16.mxu0 0
      %3923 = vmatmul.mubr.bf16.gmra.mrb[0].mxu0 %v3871
      %v3924 = vpop.f32.mrb[0].mxu0
      %v3925 = vadd.f32 0.0, %v3924
      %v3926 = vpop.f32.mrb[0].mxu0
      %v3927 = vpop.f32.mrb[0].mxu0
      %v3928 = vadd.f32 0.0, %v3927
      %v3929 = vpop.f32.mrb[0].mxu0
      %3930 = vmatprep.mubr.bf16.mxu0 0
      %3931 = vmatmul.mubr.bf16.gmra.mrb[0].mxu0 %v3874
      %v3932 = vpop.f32.mrb[0].mxu0
      %v3933 = vadd.f32 0.0, %v3932
      %v3934 = vpop.f32.mrb[0].mxu0
      %v3935 = vpop.f32.mrb[0].mxu0
      %v3936 = vadd.f32 0.0, %v3935
      %v3937 = vpop.f32.mrb[0].mxu0
      %3938 = vmatprep.mubr.bf16.mxu0 0
      %3939 = vmatmul.mubr.bf16.gmra.mrb[0].mxu0 %v3877
      %v3940 = vpop.f32.mrb[0].mxu0
      %v3941 = vadd.f32 0.0, %v3940
      %v3942 = vpop.f32.mrb[0].mxu0
      %v3943 = vpop.f32.mrb[0].mxu0
      %v3944 = vadd.f32 0.0, %v3943
      %v3945 = vpop.f32.mrb[0].mxu0
      %3946 = vmatprep.mubr.bf16.mxu0 0
      %3947 = vmatmul.mubr.bf16.gmra.mrb[0].mxu0 %v3880
      %v3948 = vpop.f32.mrb[0].mxu0
      %v3949 = vadd.f32 0.0, %v3948
      %v3950 = vpop.f32.mrb[0].mxu0
      %v3951 = vpop.f32.mrb[0].mxu0
      %v3952 = vadd.f32 0.0, %v3951
      %v3953 = vpop.f32.mrb[0].mxu0
      %3954 = vdwg.mxu0
      %v3955 = vadd.f32 %v3787, %v3917
      %v3956 = vadd.f32 %v3788, %v3920
      %v3957 = vadd.f32 %v3789, %v3925
      %v3958 = vadd.f32 %v3790, %v3928
      %v3959 = vadd.f32 %v3791, %v3933
      %v3960 = vadd.f32 %v3792, %v3936
      %v3961 = vadd.f32 %v3793, %v3941
      %v3962 = vadd.f32 %v3794, %v3944
      %v3963 = vadd.f32 %v3795, %v3949
      %v3964 = vadd.f32 %v3796, %v3952
      %v3965 = vld [vmem:[%s3 + $0x50] sm:$0xf]
      %v3966 = vld [vmem:[%s3 + $0x54] sm:$0xf]
      %v3967 = vld [vmem:[%s3 + $0x58] sm:$0xf]
      %v3968 = vld [vmem:[%s3 + $0x5c] sm:$0xf]
      %vm3969 = vcmask 1045504
      %v3970 = vrot.slane %v3660, 2
      %v3971 = vrot.slane %v3661, 2
      %v3972 = vsel %vm3969, %v3970, %v3971
      %v3973 = vrot.slane %v3662, 2
      %v3974 = vsel %vm3969, %v3971, %v3973
      %v3975 = vrot.slane %v3663, 2
      %v3976 = vsel %vm3969, %v3973, %v3975
      %v3977 = vrot.slane %v3664, 2
      %v3978 = vsel %vm3969, %v3975, %v3977
      %v3979 = vrot.slane %v3665, 2
      %v3980 = vsel %vm3969, %v3977, %v3979
      %v3985 = vunpack.c.l.b16 %v3965
      %v3986 = vunpack.c.l.b16 %v3966
      %v3987 = vunpack.c.l.b16 %v3967
      %v3988 = vunpack.c.l.b16 %v3968
      %v3989 = vpack.c.b16 %v3986, %v3985
      %v3990 = vpack.c.b16 %v3988, %v3987
      %v3994 = vsel %vm3344, %v3972, 0
      %v3997 = vsel %vm3344, %v3974, 0
      %v4000 = vsel %vm3344, %v3976, 0
      %v4003 = vsel %vm3344, %v3978, 0
      %v4006 = vsel %vm3344, %v3980, 0
      %4008 = vmatprep.subr.bf16.mxu0 0
      %4009 = vmatpush1.bf16.msra.mxu0 %v3989
      %4010 = vmatprep.subr.bf16.mxu0 0
      %4011 = vmatpush1.bf16.msra.mxu0 %v3990
      %4012 = vmatprep.subr.bf16.mxu0 0
      %4013 = vmatpush1.bf16.msra.mxu0 0
      %4014 = vmatprep.subr.bf16.mxu0 0
      %4015 = vmatpush1.bf16.msra.mxu0 0
      %4016 = vmatprep.subr.bf16.mxu0 0
      %4017 = vmatpush1.bf16.msra.mxu0 0
      %4018 = vmatprep.subr.bf16.mxu0 0
      %4019 = vmatpush1.bf16.msra.mxu0 0
      %4020 = vmatprep.subr.bf16.mxu0 0
      %4021 = vmatpush1.bf16.msra.mxu0 0
      %4022 = vmatprep.subr.bf16.mxu0 0
      %4023 = vmatpush1.bf16.msra.mxu0 0
      %4024 = vmatprep.subr.bf16.mxu0 0
      %4025 = vmatpush1.bf16.msra.mxu0 0
      %4026 = vmatprep.subr.bf16.mxu0 0
      %4027 = vmatpush1.bf16.msra.mxu0 0
      %4028 = vmatprep.subr.bf16.mxu0 0
      %4029 = vmatpush1.bf16.msra.mxu0 0
      %4030 = vmatprep.subr.bf16.mxu0 0
      %4031 = vmatpush1.bf16.msra.mxu0 0
      %4032 = vmatprep.subr.bf16.mxu0 0
      %4033 = vmatpush1.bf16.msra.mxu0 0
      %4034 = vmatprep.subr.bf16.mxu0 0
      %4035 = vmatpush1.bf16.msra.mxu0 0
      %4036 = vmatprep.subr.bf16.mxu0 0
      %4037 = vmatpush1.bf16.msra.mxu0 0
      %4038 = vmatprep.subr.bf16.mxu0 0
      %4039 = vmatpush1.bf16.msra.mxu0 0
      %4040 = vmatprep.mubr.bf16.mxu0 0
      %4041 = vmatmul.mubr.bf16.gmra.mrb[0].mxu0 %v3994
      %v4042 = vpop.f32.mrb[0].mxu0
      %v4043 = vadd.f32 0.0, %v4042
      %v4044 = vpop.f32.mrb[0].mxu0
      %v4045 = vpop.f32.mrb[0].mxu0
      %v4046 = vadd.f32 0.0, %v4045
      %v4047 = vpop.f32.mrb[0].mxu0
      %4048 = vmatprep.mubr.bf16.mxu0 0
      %4049 = vmatmul.mubr.bf16.gmra.mrb[0].mxu0 %v3997
      %v4050 = vpop.f32.mrb[0].mxu0
      %v4051 = vadd.f32 0.0, %v4050
      %v4052 = vpop.f32.mrb[0].mxu0
      %v4053 = vpop.f32.mrb[0].mxu0
      %v4054 = vadd.f32 0.0, %v4053
      %v4055 = vpop.f32.mrb[0].mxu0
      %4056 = vmatprep.mubr.bf16.mxu0 0
      %4057 = vmatmul.mubr.bf16.gmra.mrb[0].mxu0 %v4000
      %v4058 = vpop.f32.mrb[0].mxu0
      %v4059 = vadd.f32 0.0, %v4058
      %v4060 = vpop.f32.mrb[0].mxu0
      %v4061 = vpop.f32.mrb[0].mxu0
      %v4062 = vadd.f32 0.0, %v4061
      %v4063 = vpop.f32.mrb[0].mxu0
      %4064 = vmatprep.mubr.bf16.mxu0 0
      %4065 = vmatmul.mubr.bf16.gmra.mrb[0].mxu0 %v4003
      %v4066 = vpop.f32.mrb[0].mxu0
      %v4067 = vadd.f32 0.0, %v4066
      %v4068 = vpop.f32.mrb[0].mxu0
      %v4069 = vpop.f32.mrb[0].mxu0
      %v4070 = vadd.f32 0.0, %v4069
      %v4071 = vpop.f32.mrb[0].mxu0
      %4072 = vmatprep.mubr.bf16.mxu0 0
      %4073 = vmatmul.mubr.bf16.gmra.mrb[0].mxu0 %v4006
      %v4074 = vpop.f32.mrb[0].mxu0
      %v4075 = vadd.f32 0.0, %v4074
      %v4076 = vpop.f32.mrb[0].mxu0
      %v4077 = vpop.f32.mrb[0].mxu0
      %v4078 = vadd.f32 0.0, %v4077
      %v4079 = vpop.f32.mrb[0].mxu0
      %4080 = vdwg.mxu0
      %v4081 = vadd.f32 %v3955, %v4043
      %v4082 = vadd.f32 %v3956, %v4046
      %v4083 = vadd.f32 %v3957, %v4051
      %v4084 = vadd.f32 %v3958, %v4054
      %v4085 = vadd.f32 %v3959, %v4059
      %v4086 = vadd.f32 %v3960, %v4062
      %v4087 = vadd.f32 %v3961, %v4067
      %v4088 = vadd.f32 %v3962, %v4070
      %v4089 = vadd.f32 %v3963, %v4075
      %v4090 = vadd.f32 %v3964, %v4078
      %v4091 = vpack.c.bf16 %v3263, %v3260
      %v4092 = vpack.c.bf16 %v3268, %v3268
      %v4093 = vld [vmem:[%s3 + $0x60] sm:$0xf]
      %v4094 = vld [vmem:[%s3 + $0x64] sm:$0xf]
      %v4095 = vld [vmem:[%s3 + $0x68] sm:$0xf]
      %v4096 = vld [vmem:[%s3 + $0x6c] sm:$0xf]
      %v4099 = vrot.slane %v3274, 2
      %v4100 = vrot.slane %v3275, 2
      %v4101 = vsel %vm3969, %v4099, %v4100
      %v4102 = vrot.slane %v3276, 2
      %v4103 = vsel %vm3969, %v4100, %v4102
      %v4104 = vrot.slane %v3277, 2
      %v4105 = vsel %vm3969, %v4102, %v4104
      %v4106 = vrot.slane %v4091, 2
      %v4107 = vsel %vm3969, %v4104, %v4106
      %v4108 = vrot.slane %v4092, 2
      %v4109 = vsel %vm3969, %v4106, %v4108
      %v4114 = vunpack.c.l.b16 %v4093
      %v4115 = vunpack.c.l.b16 %v4094
      %v4116 = vunpack.c.l.b16 %v4095
      %v4117 = vunpack.c.l.b16 %v4096
      %v4118 = vpack.c.b16 %v4115, %v4114
      %v4119 = vpack.c.b16 %v4117, %v4116
      %v4123 = vsel %vm3344, %v4101, 0
      %v4126 = vsel %vm3344, %v4103, 0
      %v4129 = vsel %vm3344, %v4105, 0
      %v4132 = vsel %vm3344, %v4107, 0
      %v4135 = vsel %vm3344, %v4109, 0
      %4137 = vmatprep.subr.bf16.mxu0 0
      %4138 = vmatpush1.bf16.msra.mxu0 %v4118
      %4139 = vmatprep.subr.bf16.mxu0 0
      %4140 = vmatpush1.bf16.msra.mxu0 %v4119
      %4141 = vmatprep.subr.bf16.mxu0 0
      %4142 = vmatpush1.bf16.msra.mxu0 0
      %4143 = vmatprep.subr.bf16.mxu0 0
      %4144 = vmatpush1.bf16.msra.mxu0 0
      %4145 = vmatprep.subr.bf16.mxu0 0
      %4146 = vmatpush1.bf16.msra.mxu0 0
      %4147 = vmatprep.subr.bf16.mxu0 0
      %4148 = vmatpush1.bf16.msra.mxu0 0
      %4149 = vmatprep.subr.bf16.mxu0 0
      %4150 = vmatpush1.bf16.msra.mxu0 0
      %4151 = vmatprep.subr.bf16.mxu0 0
      %4152 = vmatpush1.bf16.msra.mxu0 0
      %4153 = vmatprep.subr.bf16.mxu0 0
      %4154 = vmatpush1.bf16.msra.mxu0 0
      %4155 = vmatprep.subr.bf16.mxu0 0
      %4156 = vmatpush1.bf16.msra.mxu0 0
      %4157 = vmatprep.subr.bf16.mxu0 0
      %4158 = vmatpush1.bf16.msra.mxu0 0
      %4159 = vmatprep.subr.bf16.mxu0 0
      %4160 = vmatpush1.bf16.msra.mxu0 0
      %4161 = vmatprep.subr.bf16.mxu0 0
      %4162 = vmatpush1.bf16.msra.mxu0 0
      %4163 = vmatprep.subr.bf16.mxu0 0
      %4164 = vmatpush1.bf16.msra.mxu0 0
      %4165 = vmatprep.subr.bf16.mxu0 0
      %4166 = vmatpush1.bf16.msra.mxu0 0
      %4167 = vmatprep.subr.bf16.mxu0 0
      %4168 = vmatpush1.bf16.msra.mxu0 0
      %4169 = vmatprep.mubr.bf16.mxu0 0
      %4170 = vmatmul.mubr.bf16.gmra.mrb[0].mxu0 %v4123
      %v4171 = vpop.f32.mrb[0].mxu0
      %v4172 = vadd.f32 0.0, %v4171
      %v4173 = vpop.f32.mrb[0].mxu0
      %v4174 = vpop.f32.mrb[0].mxu0
      %v4175 = vadd.f32 0.0, %v4174
      %v4176 = vpop.f32.mrb[0].mxu0
      %4177 = vmatprep.mubr.bf16.mxu0 0
      %4178 = vmatmul.mubr.bf16.gmra.mrb[0].mxu0 %v4126
      %v4179 = vpop.f32.mrb[0].mxu0
      %v4180 = vadd.f32 0.0, %v4179
      %v4181 = vpop.f32.mrb[0].mxu0
      %v4182 = vpop.f32.mrb[0].mxu0
      %v4183 = vadd.f32 0.0, %v4182
      %v4184 = vpop.f32.mrb[0].mxu0
      %4185 = vmatprep.mubr.bf16.mxu0 0
      %4186 = vmatmul.mubr.bf16.gmra.mrb[0].mxu0 %v4129
      %v4187 = vpop.f32.mrb[0].mxu0
      %v4188 = vadd.f32 0.0, %v4187
      %v4189 = vpop.f32.mrb[0].mxu0
      %v4190 = vpop.f32.mrb[0].mxu0
      %v4191 = vadd.f32 0.0, %v4190
      %v4192 = vpop.f32.mrb[0].mxu0
      %4193 = vmatprep.mubr.bf16.mxu0 0
      %4194 = vmatmul.mubr.bf16.gmra.mrb[0].mxu0 %v4132
      %v4195 = vpop.f32.mrb[0].mxu0
      %v4196 = vadd.f32 0.0, %v4195
      %v4197 = vpop.f32.mrb[0].mxu0
      %v4198 = vpop.f32.mrb[0].mxu0
      %v4199 = vadd.f32 0.0, %v4198
      %v4200 = vpop.f32.mrb[0].mxu0
      %4201 = vmatprep.mubr.bf16.mxu0 0
      %4202 = vmatmul.mubr.bf16.gmra.mrb[0].mxu0 %v4135
      %v4203 = vpop.f32.mrb[0].mxu0
      %v4204 = vadd.f32 0.0, %v4203
      %v4205 = vpop.f32.mrb[0].mxu0
      %v4206 = vpop.f32.mrb[0].mxu0
      %v4207 = vadd.f32 0.0, %v4206
      %v4208 = vpop.f32.mrb[0].mxu0
      %4209 = vdwg.mxu0
      %v4210 = vadd.f32 %v4081, %v4172
      %v4211 = vadd.f32 %v4082, %v4175
      %v4212 = vadd.f32 %v4083, %v4180
      %v4213 = vadd.f32 %v4084, %v4183
      %v4214 = vadd.f32 %v4085, %v4188
      %v4215 = vadd.f32 %v4086, %v4191
      %v4216 = vadd.f32 %v4087, %v4196
      %v4217 = vadd.f32 %v4088, %v4199
      %v4218 = vadd.f32 %v4089, %v4204
      %v4219 = vadd.f32 %v4090, %v4207
      %v4220 = vld [vmem:[%s3 + $0x70] sm:$0xf]
      %v4221 = vld [vmem:[%s3 + $0x74] sm:$0xf]
      %v4222 = vld [vmem:[%s3 + $0x78] sm:$0xf]
      %v4223 = vld [vmem:[%s3 + $0x7c] sm:$0xf]
      %vm4224 = vsmask.f32 5376
      %v4225 = vrot.slane %v3300, 2
      %v4226 = vrot.slane %v3296, 3
      %v4227 = vor.u32 %v4225, %v4226
      %v4228 = vrot.slane %v3308, 2
      %v4229 = vrot.slane %v3304, 3
      %v4230 = vor.u32 %v4228, %v4229
      %v4231 = vsel %vm4224, %v4227, %v4230
      %v4232 = vrot.slane %v3316, 2
      %v4233 = vrot.slane %v3312, 3
      %v4234 = vor.u32 %v4232, %v4233
      %v4235 = vsel %vm4224, %v4230, %v4234
      %v4236 = vrot.slane %v3324, 2
      %v4237 = vrot.slane %v3320, 3
      %v4238 = vor.u32 %v4236, %v4237
      %v4239 = vsel %vm4224, %v4234, %v4238
      %v4241 = vshrl.u32 %v4091, 16
      %v4243 = vrot.slane %v4241, 2
      %v4244 = vshll.u32 %v4091, 16
      %v4246 = vrot.slane %v4244, 3
      %v4247 = vor.u32 %v4243, %v4246
      %v4248 = vsel %vm4224, %v4238, %v4247
      %v4250 = vshrl.u32 %v4092, 16
      %v4252 = vrot.slane %v4250, 2
      %v4253 = vshll.u32 %v4092, 16
      %v4255 = vrot.slane %v4253, 3
      %v4256 = vor.u32 %v4252, %v4255
      %v4257 = vsel %vm4224, %v4247, %v4256
      %v4262 = vunpack.c.l.b16 %v4220
      %v4263 = vunpack.c.l.b16 %v4221
      %v4264 = vunpack.c.l.b16 %v4222
      %v4265 = vunpack.c.l.b16 %v4223
      %v4266 = vpack.c.b16 %v4263, %v4262
      %v4267 = vpack.c.b16 %v4265, %v4264
      %v4271 = vsel %vm3344, %v4231, 0
      %v4274 = vsel %vm3344, %v4235, 0
      %v4277 = vsel %vm3344, %v4239, 0
      %v4280 = vsel %vm3344, %v4248, 0
      %v4283 = vsel %vm3344, %v4257, 0
      %4285 = vmatprep.subr.bf16.mxu0 0
      %4286 = vmatpush1.bf16.msra.mxu0 %v4266
      %4287 = vmatprep.subr.bf16.mxu0 0
      %4288 = vmatpush1.bf16.msra.mxu0 %v4267
      %4289 = vmatprep.subr.bf16.mxu0 0
      %4290 = vmatpush1.bf16.msra.mxu0 0
      %4291 = vmatprep.subr.bf16.mxu0 0
      %4292 = vmatpush1.bf16.msra.mxu0 0
      %4293 = vmatprep.subr.bf16.mxu0 0
      %4294 = vmatpush1.bf16.msra.mxu0 0
      %4295 = vmatprep.subr.bf16.mxu0 0
      %4296 = vmatpush1.bf16.msra.mxu0 0
      %4297 = vmatprep.subr.bf16.mxu0 0
      %4298 = vmatpush1.bf16.msra.mxu0 0
      %4299 = vmatprep.subr.bf16.mxu0 0
      %4300 = vmatpush1.bf16.msra.mxu0 0
      %4301 = vmatprep.subr.bf16.mxu0 0
      %4302 = vmatpush1.bf16.msra.mxu0 0
      %4303 = vmatprep.subr.bf16.mxu0 0
      %4304 = vmatpush1.bf16.msra.mxu0 0
      %4305 = vmatprep.subr.bf16.mxu0 0
      %4306 = vmatpush1.bf16.msra.mxu0 0
      %4307 = vmatprep.subr.bf16.mxu0 0
      %4308 = vmatpush1.bf16.msra.mxu0 0
      %4309 = vmatprep.subr.bf16.mxu0 0
      %4310 = vmatpush1.bf16.msra.mxu0 0
      %4311 = vmatprep.subr.bf16.mxu0 0
      %4312 = vmatpush1.bf16.msra.mxu0 0
      %4313 = vmatprep.subr.bf16.mxu0 0
      %4314 = vmatpush1.bf16.msra.mxu0 0
      %4315 = vmatprep.subr.bf16.mxu0 0
      %4316 = vmatpush1.bf16.msra.mxu0 0
      %4317 = vmatprep.mubr.bf16.mxu0 0
      %4318 = vmatmul.mubr.bf16.gmra.mrb[0].mxu0 %v4271
      %v4319 = vpop.f32.mrb[0].mxu0
      %v4320 = vadd.f32 0.0, %v4319
      %v4321 = vpop.f32.mrb[0].mxu0
      %v4322 = vpop.f32.mrb[0].mxu0
      %v4323 = vadd.f32 0.0, %v4322
      %v4324 = vpop.f32.mrb[0].mxu0
      %4325 = vmatprep.mubr.bf16.mxu0 0
      %4326 = vmatmul.mubr.bf16.gmra.mrb[0].mxu0 %v4274
      %v4327 = vpop.f32.mrb[0].mxu0
      %v4328 = vadd.f32 0.0, %v4327
      %v4329 = vpop.f32.mrb[0].mxu0
      %v4330 = vpop.f32.mrb[0].mxu0
      %v4331 = vadd.f32 0.0, %v4330
      %v4332 = vpop.f32.mrb[0].mxu0
      %4333 = vmatprep.mubr.bf16.mxu0 0
      %4334 = vmatmul.mubr.bf16.gmra.mrb[0].mxu0 %v4277
      %v4335 = vpop.f32.mrb[0].mxu0
      %v4336 = vadd.f32 0.0, %v4335
      %v4337 = vpop.f32.mrb[0].mxu0
      %v4338 = vpop.f32.mrb[0].mxu0
      %v4339 = vadd.f32 0.0, %v4338
      %v4340 = vpop.f32.mrb[0].mxu0
      %4341 = vmatprep.mubr.bf16.mxu0 0
      %4342 = vmatmul.mubr.bf16.gmra.mrb[0].mxu0 %v4280
      %v4343 = vpop.f32.mrb[0].mxu0
      %v4344 = vadd.f32 0.0, %v4343
      %v4345 = vpop.f32.mrb[0].mxu0
      %v4346 = vpop.f32.mrb[0].mxu0
      %v4347 = vadd.f32 0.0, %v4346
      %v4348 = vpop.f32.mrb[0].mxu0
      %4349 = vmatprep.mubr.bf16.mxu0 0
      %4350 = vmatmul.mubr.bf16.gmra.mrb[0].mxu0 %v4283
      %v4351 = vpop.f32.mrb[0].mxu0
      %v4352 = vadd.f32 0.0, %v4351
      %v4353 = vpop.f32.mrb[0].mxu0
      %v4354 = vpop.f32.mrb[0].mxu0
      %v4355 = vadd.f32 0.0, %v4354
      %v4356 = vpop.f32.mrb[0].mxu0
      %4357 = vdwg.mxu0
      %v4358 = vadd.f32 %v4210, %v4320
      %v4359 = vadd.f32 %v4211, %v4323
      %v4360 = vadd.f32 %v4212, %v4328
      %v4361 = vadd.f32 %v4213, %v4331
      %v4362 = vadd.f32 %v4214, %v4336
      %v4363 = vadd.f32 %v4215, %v4339
      %v4364 = vadd.f32 %v4216, %v4344
      %v4365 = vadd.f32 %v4217, %v4347
      %v4366 = vadd.f32 %v4218, %v4352
      %v4367 = vadd.f32 %v4219, %v4355
      %v4368 = vld [vmem:[%s3 + $0x80] sm:$0xf]
      %v4369 = vld [vmem:[%s3 + $0x84] sm:$0xf]
      %v4370 = vld [vmem:[%s3 + $0x88] sm:$0xf]
      %v4371 = vld [vmem:[%s3 + $0x8c] sm:$0xf]
      %vm4372 = vcmask 1044480
      %v4373 = vrot.slane %v3274, 3
      %v4374 = vrot.slane %v3275, 3
      %v4375 = vsel %vm4372, %v4373, %v4374
      %v4376 = vrot.slane %v3276, 3
      %v4377 = vsel %vm4372, %v4374, %v4376
      %v4378 = vrot.slane %v3277, 3
      %v4379 = vsel %vm4372, %v4376, %v4378
      %v4380 = vrot.slane %v4091, 3
      %v4381 = vsel %vm4372, %v4378, %v4380
      %v4382 = vrot.slane %v4092, 3
      %v4383 = vsel %vm4372, %v4380, %v4382
      %v4388 = vunpack.c.l.b16 %v4368
      %v4389 = vunpack.c.l.b16 %v4369
      %v4390 = vunpack.c.l.b16 %v4370
      %v4391 = vunpack.c.l.b16 %v4371
      %v4392 = vpack.c.b16 %v4389, %v4388
      %v4393 = vpack.c.b16 %v4391, %v4390
      %v4397 = vsel %vm3344, %v4375, 0
      %v4400 = vsel %vm3344, %v4377, 0
      %v4403 = vsel %vm3344, %v4379, 0
      %v4406 = vsel %vm3344, %v4381, 0
      %v4409 = vsel %vm3344, %v4383, 0
      %4411 = vmatprep.subr.bf16.mxu0 0
      %4412 = vmatpush1.bf16.msra.mxu0 %v4392
      %4413 = vmatprep.subr.bf16.mxu0 0
      %4414 = vmatpush1.bf16.msra.mxu0 %v4393
      %4415 = vmatprep.subr.bf16.mxu0 0
      %4416 = vmatpush1.bf16.msra.mxu0 0
      %4417 = vmatprep.subr.bf16.mxu0 0
      %4418 = vmatpush1.bf16.msra.mxu0 0
      %4419 = vmatprep.subr.bf16.mxu0 0
      %4420 = vmatpush1.bf16.msra.mxu0 0
      %4421 = vmatprep.subr.bf16.mxu0 0
      %4422 = vmatpush1.bf16.msra.mxu0 0
      %4423 = vmatprep.subr.bf16.mxu0 0
      %4424 = vmatpush1.bf16.msra.mxu0 0
      %4425 = vmatprep.subr.bf16.mxu0 0
      %4426 = vmatpush1.bf16.msra.mxu0 0
      %4427 = vmatprep.subr.bf16.mxu0 0
      %4428 = vmatpush1.bf16.msra.mxu0 0
      %4429 = vmatprep.subr.bf16.mxu0 0
      %4430 = vmatpush1.bf16.msra.mxu0 0
      %4431 = vmatprep.subr.bf16.mxu0 0
      %4432 = vmatpush1.bf16.msra.mxu0 0
      %4433 = vmatprep.subr.bf16.mxu0 0
      %4434 = vmatpush1.bf16.msra.mxu0 0
      %4435 = vmatprep.subr.bf16.mxu0 0
      %4436 = vmatpush1.bf16.msra.mxu0 0
      %4437 = vmatprep.subr.bf16.mxu0 0
      %4438 = vmatpush1.bf16.msra.mxu0 0
      %4439 = vmatprep.subr.bf16.mxu0 0
      %4440 = vmatpush1.bf16.msra.mxu0 0
      %4441 = vmatprep.subr.bf16.mxu0 0
      %4442 = vmatpush1.bf16.msra.mxu0 0
      %4443 = vmatprep.mubr.bf16.mxu0 0
      %4444 = vmatmul.mubr.bf16.gmra.mrb[0].mxu0 %v4397
      %v4445 = vpop.f32.mrb[0].mxu0
      %v4446 = vadd.f32 0.0, %v4445
      %v4447 = vpop.f32.mrb[0].mxu0
      %v4448 = vpop.f32.mrb[0].mxu0
      %v4449 = vadd.f32 0.0, %v4448
      %v4450 = vpop.f32.mrb[0].mxu0
      %4451 = vmatprep.mubr.bf16.mxu0 0
      %4452 = vmatmul.mubr.bf16.gmra.mrb[0].mxu0 %v4400
      %v4453 = vpop.f32.mrb[0].mxu0
      %v4454 = vadd.f32 0.0, %v4453
      %v4455 = vpop.f32.mrb[0].mxu0
      %v4456 = vpop.f32.mrb[0].mxu0
      %v4457 = vadd.f32 0.0, %v4456
      %v4458 = vpop.f32.mrb[0].mxu0
      %4459 = vmatprep.mubr.bf16.mxu0 0
      %4460 = vmatmul.mubr.bf16.gmra.mrb[0].mxu0 %v4403
      %v4461 = vpop.f32.mrb[0].mxu0
      %v4462 = vadd.f32 0.0, %v4461
      %v4463 = vpop.f32.mrb[0].mxu0
      %v4464 = vpop.f32.mrb[0].mxu0
      %v4465 = vadd.f32 0.0, %v4464
      %v4466 = vpop.f32.mrb[0].mxu0
      %4467 = vmatprep.mubr.bf16.mxu0 0
      %4468 = vmatmul.mubr.bf16.gmra.mrb[0].mxu0 %v4406
      %v4469 = vpop.f32.mrb[0].mxu0
      %v4470 = vadd.f32 0.0, %v4469
      %v4471 = vpop.f32.mrb[0].mxu0
      %v4472 = vpop.f32.mrb[0].mxu0
      %v4473 = vadd.f32 0.0, %v4472
      %v4474 = vpop.f32.mrb[0].mxu0
      %4475 = vmatprep.mubr.bf16.mxu0 0
      %4476 = vmatmul.mubr.bf16.gmra.mrb[0].mxu0 %v4409
      %v4477 = vpop.f32.mrb[0].mxu0
      %v4478 = vadd.f32 0.0, %v4477
      %v4479 = vpop.f32.mrb[0].mxu0
      %v4480 = vpop.f32.mrb[0].mxu0
      %v4481 = vadd.f32 0.0, %v4480
      %v4482 = vpop.f32.mrb[0].mxu0
      %4483 = vdwg.mxu0
      %v4484 = vadd.f32 %v4358, %v4446
      %v4485 = vadd.f32 %v4359, %v4449
      %v4486 = vadd.f32 %v4360, %v4454
      %v4487 = vadd.f32 %v4361, %v4457
      %v4488 = vadd.f32 %v4362, %v4462
      %v4489 = vadd.f32 %v4363, %v4465
      %v4490 = vadd.f32 %v4364, %v4470
      %v4491 = vadd.f32 %v4365, %v4473
      %v4492 = vadd.f32 %v4366, %v4478
      %v4493 = vadd.f32 %v4367, %v4481
      %v4494 = vld [vmem:[%s4] sm:$0x1]
      %v4496 = vlaneseq
      %v4497 = vshrl.u32 %v4496, 7
      %v4498 = vsub.s32 0, %v4497
      %v4499 = vrot.slane %v4494, %v4498
      %v4501 = vadd.f32 %v4484, %v4499
      %v4502 = vadd.f32 %v4485, %v4499
      %v4503 = vadd.f32 %v4486, %v4499
      %v4504 = vadd.f32 %v4487, %v4499
      %v4505 = vadd.f32 %v4488, %v4499
      %v4506 = vadd.f32 %v4489, %v4499
      %v4507 = vadd.f32 %v4490, %v4499
      %v4508 = vadd.f32 %v4491, %v4499
      %v4509 = vadd.f32 %v4492, %v4499
      %v4510 = vadd.f32 %v4493, %v4499
      %v4511 = vmax.f32 %v4501, 0.0
      %v4512 = vmax.f32 %v4502, 0.0
      %v4513 = vmax.f32 %v4503, 0.0
      %v4514 = vmax.f32 %v4504, 0.0
      %v4515 = vmax.f32 %v4505, 0.0
      %v4516 = vmax.f32 %v4506, 0.0
      %v4517 = vmax.f32 %v4507, 0.0
      %v4518 = vmax.f32 %v4508, 0.0
      %v4519 = vmax.f32 %v4509, 0.0
      %v4520 = vmax.f32 %v4510, 0.0
      %v4530 = vrot.slane %v4511, 1
      %v4531 = vrot.slane %v4512, 1
      %v4532 = vsel %vm759, %v4530, %v4531
      %v4533 = vrot.slane %v4513, 1
      %v4534 = vsel %vm759, %v4531, %v4533
      %v4535 = vrot.slane %v4514, 1
      %v4536 = vsel %vm759, %v4533, %v4535
      %v4537 = vrot.slane %v4515, 1
      %v4538 = vsel %vm759, %v4535, %v4537
      %v4539 = vrot.slane %v4516, 1
      %v4540 = vsel %vm759, %v4537, %v4539
      %v4541 = vrot.slane %v4517, 1
      %v4542 = vsel %vm759, %v4539, %v4541
      %v4543 = vrot.slane %v4518, 1
      %v4544 = vsel %vm759, %v4541, %v4543
      %v4545 = vrot.slane %v4519, 1
      %v4546 = vsel %vm759, %v4543, %v4545
      %v4556 = vmax.f32 %v4511, %v4532
      %v4557 = vmax.f32 %v4512, %v4534
      %v4558 = vmax.f32 %v4513, %v4536
      %v4559 = vmax.f32 %v4514, %v4538
      %v4560 = vmax.f32 %v4515, %v4540
      %v4561 = vmax.f32 %v4516, %v4542
      %v4562 = vmax.f32 %v4517, %v4544
      %v4563 = vmax.f32 %v4518, %v4546
      %v4564 = vmax.f32 %v4519, %v4545
      %v4566 = vrot.slane %v4520, 1
      %v4567 = vsel %vm759, %v4545, %v4566
      %v4570 = vmax.f32 %v4519, %v4567
      %v4571 = vmax.f32 %v4520, %v4566
      %v4581 = vrot.slane %v4557, 2
      %v4582 = vrot.slane %v4558, 2
      %v4583 = vsel %vm983, %v4581, %v4582
      %v4584 = vrot.slane %v4559, 2
      %v4585 = vsel %vm983, %v4582, %v4584
      %v4586 = vrot.slane %v4560, 2
      %v4587 = vsel %vm983, %v4584, %v4586
      %v4588 = vrot.slane %v4561, 2
      %v4589 = vsel %vm983, %v4586, %v4588
      %v4590 = vrot.slane %v4562, 2
      %v4591 = vsel %vm983, %v4588, %v4590
      %v4592 = vrot.slane %v4563, 2
      %v4593 = vsel %vm983, %v4590, %v4592
      %v4594 = vrot.slane %v4570, 2
      %v4595 = vsel %vm983, %v4592, %v4594
      %v4596 = vrot.slane %v4571, 2
      %v4597 = vsel %vm983, %v4594, %v4596
      %v4607 = vmax.f32 %v4556, %v4583
      %v4608 = vmax.f32 %v4557, %v4585
      %v4609 = vmax.f32 %v4558, %v4587
      %v4610 = vmax.f32 %v4559, %v4589
      %v4611 = vmax.f32 %v4560, %v4591
      %v4612 = vmax.f32 %v4561, %v4593
      %v4613 = vmax.f32 %v4562, %v4595
      %v4614 = vmax.f32 %v4563, %v4597
      %v4615 = vmax.f32 %v4564, %v4596
      %v4616 = vld [vmem:[%s10] sm:$0xf]
      %v4617 = vld [vmem:[%s10 + $0x4] sm:$0xf]
      %v4618 = vld [vmem:[%s10 + $0x8] sm:$0xf]
      %v4619 = vld [vmem:[%s10 + $0xc] sm:$0xf]
      %v4620 = vld [vmem:[%s10 + $0x10] sm:$0xf]
      %v4621 = vld [vmem:[%s10 + $0x14] sm:$0x1]
      %v4622 = vpack.c.bf16 %v4608, %v4607
      %v4623 = vpack.c.bf16 %v4610, %v4609
      %v4624 = vpack.c.bf16 %v4612, %v4611
      %v4625 = vpack.c.bf16 %v4614, %v4613
      %v4626 = vpack.c.bf16 %v4615, %v4615
      %v4633 = vunpack.c.l.b16 %v4616
      %v4634 = vunpack.c.l.b16 %v4617
      %v4635 = vunpack.c.l.b16 %v4618
      %v4636 = vunpack.c.l.b16 %v4619
      %v4637 = vunpack.c.l.b16 %v4620
      %v4638 = vunpack.c.l.b16 %v4621
      %v4639 = vpack.c.b16 %v4634, %v4633
      %v4640 = vpack.c.b16 %v4636, %v4635
      %v4641 = vpack.c.b16 %v4638, %v4637
      %vm4642 = vcmask 547840
      %v4644 = vsel %vm4642, %v4639, 0
      %v4647 = vsel %vm4642, %v4640, 0
      %v4650 = vsel %vm4642, %v4641, 0
      %vm4652 = vcmask 1040384
      %v4653 = vsel %vm4652, 4294967295, 65535
      %v4654 = vsel %vm2345, %v4653, 0
      %v4656 = vand.u32 %v4626, %v4654
      %4658 = vmatprep.subr.bf16.mxu0 0
      %4659 = vmatpush1.bf16.msra.mxu0 %v4622
      %4660 = vmatprep.subr.bf16.mxu0 0
      %4661 = vmatpush1.bf16.msra.mxu0 %v4623
      %4662 = vmatprep.subr.bf16.mxu0 0
      %4663 = vmatpush1.bf16.msra.mxu0 %v4624
      %4664 = vmatprep.subr.bf16.mxu0 0
      %4665 = vmatpush1.bf16.msra.mxu0 %v4625
      %4666 = vmatprep.subr.bf16.mxu0 0
      %4667 = vmatpush1.bf16.msra.mxu0 %v4656
      %4668 = vmatprep.subr.bf16.mxu0 0
      %4669 = vmatpush1.bf16.msra.mxu0 0
      %4670 = vmatprep.subr.bf16.mxu0 0
      %4671 = vmatpush1.bf16.msra.mxu0 0
      %4672 = vmatprep.subr.bf16.mxu0 0
      %4673 = vmatpush1.bf16.msra.mxu0 0
      %4674 = vmatprep.subr.bf16.mxu0 0
      %4675 = vmatpush1.bf16.msra.mxu0 0
      %4676 = vmatprep.subr.bf16.mxu0 0
      %4677 = vmatpush1.bf16.msra.mxu0 0
      %4678 = vmatprep.subr.bf16.mxu0 0
      %4679 = vmatpush1.bf16.msra.mxu0 0
      %4680 = vmatprep.subr.bf16.mxu0 0
      %4681 = vmatpush1.bf16.msra.mxu0 0
      %4682 = vmatprep.subr.bf16.mxu0 0
      %4683 = vmatpush1.bf16.msra.mxu0 0
      %4684 = vmatprep.subr.bf16.mxu0 0
      %4685 = vmatpush1.bf16.msra.mxu0 0
      %4686 = vmatprep.subr.bf16.mxu0 0
      %4687 = vmatpush1.bf16.msra.mxu0 0
      %4688 = vmatprep.subr.bf16.mxu0 0
      %4689 = vmatpush1.bf16.msra.mxu0 0
      %4690 = vmatprep.mubr.bf16.mxu0 0
      %4691 = vmatmul.mubr.bf16.gmra.mrb[0].mxu0 %v4644
      %v4692 = vpop.f32.mrb[0].mxu0
      %v4693 = vadd.f32 0.0, %v4692
      %v4694 = vpop.f32.mrb[0].mxu0
      %v4695 = vpop.f32.mrb[0].mxu0
      %v4696 = vadd.f32 0.0, %v4695
      %v4697 = vpop.f32.mrb[0].mxu0
      %4698 = vmatprep.mubr.bf16.mxu0 0
      %4699 = vmatmul.mubr.bf16.gmra.mrb[0].mxu0 %v4647
      %v4700 = vpop.f32.mrb[0].mxu0
      %v4701 = vadd.f32 0.0, %v4700
      %v4702 = vpop.f32.mrb[0].mxu0
      %v4703 = vpop.f32.mrb[0].mxu0
      %v4704 = vadd.f32 0.0, %v4703
      %v4705 = vpop.f32.mrb[0].mxu0
      %4706 = vmatprep.mubr.bf16.mxu0 0
      %4707 = vmatmul.mubr.bf16.gmra.mrb[0].mxu0 %v4650
      %v4708 = vpop.f32.mrb[0].mxu0
      %v4709 = vadd.f32 0.0, %v4708
      %v4710 = vpop.f32.mrb[0].mxu0
      %v4711 = vpop.f32.mrb[0].mxu0
      %v4712 = vpop.f32.mrb[0].mxu0
      %4713 = vdwg.mxu0
      %v4714 = vpack.c.bf16 %v4696, %v4693
      %v4715 = vpack.c.bf16 %v4701, %v4701
      %v4716 = vld [vmem:[%s5] sm:$0xf]
      %v4717 = vld [vmem:[%s5 + $0x4] sm:$0xf]
      %v4718 = vld [vmem:[%s5 + $0x8] sm:$0xf]
      %v4719 = vld [vmem:[%s5 + $0xc] sm:$0xf]
      %v4720 = vld [vmem:[%s5 + $0x10] sm:$0xf]
      %v4721 = vld [vmem:[%s5 + $0x14] sm:$0xf]
      %v4722 = vld [vmem:[%s5 + $0x18] sm:$0xf]
      %v4723 = vld [vmem:[%s5 + $0x1c] sm:$0xf]
      %v4724 = vpack.c.bf16 %v4704, %v4701
      %v4725 = vld [vmem:[%s5 + $0x20] sm:$0xf]
      %v4726 = vld [vmem:[%s5 + $0x24] sm:$0xf]
      %v4727 = vld [vmem:[%s5 + $0x28] sm:$0xf]
      %v4728 = vld [vmem:[%s5 + $0x2c] sm:$0xf]
      %v4729 = vld [vmem:[%s5 + $0x30] sm:$0xf]
      %v4730 = vld [vmem:[%s5 + $0x34] sm:$0xf]
      %v4731 = vld [vmem:[%s5 + $0x38] sm:$0xf]
      %v4732 = vld [vmem:[%s5 + $0x3c] sm:$0xf]
      %v4734 = vshrl.u32 %v4714, 16
      %v4736 = vshll.u32 %v4714, 16
      %v4738 = vrot.slane %v4736, 1
      %v4739 = vor.u32 %v4734, %v4738
      %v4741 = vshll.u32 %v4724, 16
      %v4743 = vrot.slane %v4741, 1
      %v4744 = vsel %vm3287, %v4739, %v4743
      %v4745 = vshrl.u32 %v4724, 16
      %v4747 = vor.u32 %v4745, %v4743
      %v4756 = vunpack.c.l.b16 %v4725
      %v4757 = vunpack.c.l.b16 %v4726
      %v4758 = vunpack.c.l.b16 %v4727
      %v4759 = vunpack.c.l.b16 %v4728
      %v4760 = vunpack.c.l.b16 %v4729
      %v4761 = vunpack.c.l.b16 %v4730
      %v4762 = vunpack.c.l.b16 %v4731
      %v4763 = vunpack.c.l.b16 %v4732
      %v4764 = vpack.c.b16 %v4757, %v4756
      %v4765 = vpack.c.b16 %v4759, %v4758
      %v4766 = vpack.c.b16 %v4761, %v4760
      %v4767 = vpack.c.b16 %v4763, %v4762
      %vm4772 = vcmask 523264
      %v4774 = vsel %vm4772, %v4744, 0
      %v4777 = vsel %vm4772, %v4747, 0
      %4779 = vmatprep.subr.bf16.mxu0 0
      %4780 = vmatpush1.bf16.msra.mxu0 %v4764
      %4781 = vmatprep.subr.bf16.mxu0 0
      %4782 = vmatpush1.bf16.msra.mxu0 %v4765
      %4783 = vmatprep.subr.bf16.mxu0 0
      %4784 = vmatpush1.bf16.msra.mxu0 %v4766
      %4785 = vmatprep.subr.bf16.mxu0 0
      %4786 = vmatpush1.bf16.msra.mxu0 %v4767
      %4787 = vmatprep.subr.bf16.mxu0 0
      %4788 = vmatpush1.bf16.msra.mxu0 0
      %4789 = vmatprep.subr.bf16.mxu0 0
      %4790 = vmatpush1.bf16.msra.mxu0 0
      %4791 = vmatprep.subr.bf16.mxu0 0
      %4792 = vmatpush1.bf16.msra.mxu0 0
      %4793 = vmatprep.subr.bf16.mxu0 0
      %4794 = vmatpush1.bf16.msra.mxu0 0
      %4795 = vmatprep.subr.bf16.mxu0 0
      %4796 = vmatpush1.bf16.msra.mxu0 0
      %4797 = vmatprep.subr.bf16.mxu0 0
      %4798 = vmatpush1.bf16.msra.mxu0 0
      %4799 = vmatprep.subr.bf16.mxu0 0
      %4800 = vmatpush1.bf16.msra.mxu0 0
      %4801 = vmatprep.subr.bf16.mxu0 0
      %4802 = vmatpush1.bf16.msra.mxu0 0
      %4803 = vmatprep.subr.bf16.mxu0 0
      %4804 = vmatpush1.bf16.msra.mxu0 0
      %4805 = vmatprep.subr.bf16.mxu0 0
      %4806 = vmatpush1.bf16.msra.mxu0 0
      %4807 = vmatprep.subr.bf16.mxu0 0
      %4808 = vmatpush1.bf16.msra.mxu0 0
      %4809 = vmatprep.subr.bf16.mxu0 0
      %4810 = vmatpush1.bf16.msra.mxu0 0
      %4811 = vmatprep.mubr.bf16.mxu0 0
      %4812 = vmatmul.mubr.bf16.gmra.mrb[0].mxu0 %v4774
      %v4813 = vpop.f32.mrb[0].mxu0
      %v4814 = vadd.f32 0.0, %v4813
      %v4815 = vpop.f32.mrb[0].mxu0
      %v4816 = vpop.f32.mrb[0].mxu0
      %v4817 = vadd.f32 0.0, %v4816
      %v4818 = vpop.f32.mrb[0].mxu0
      %4819 = vmatprep.mubr.bf16.mxu0 0
      %4820 = vmatmul.mubr.bf16.gmra.mrb[0].mxu0 %v4777
      %v4821 = vpop.f32.mrb[0].mxu0
      %v4822 = vadd.f32 0.0, %v4821
      %v4823 = vpop.f32.mrb[0].mxu0
      %v4824 = vpop.f32.mrb[0].mxu0
      %v4825 = vpop.f32.mrb[0].mxu0
      %4826 = vdwg.mxu0
      %v4835 = vunpack.c.l.b16 %v4716
      %v4836 = vunpack.c.l.b16 %v4717
      %v4837 = vunpack.c.l.b16 %v4718
      %v4838 = vunpack.c.l.b16 %v4719
      %v4839 = vunpack.c.l.b16 %v4720
      %v4840 = vunpack.c.l.b16 %v4721
      %v4841 = vunpack.c.l.b16 %v4722
      %v4842 = vunpack.c.l.b16 %v4723
      %v4843 = vpack.c.b16 %v4836, %v4835
      %v4844 = vpack.c.b16 %v4838, %v4837
      %v4845 = vpack.c.b16 %v4840, %v4839
      %v4846 = vpack.c.b16 %v4842, %v4841
      %v4851 = vsel %vm4772, %v4714, 0
      %v4854 = vsel %vm4772, %v4715, 0
      %4856 = vmatprep.subr.bf16.mxu0 0
      %4857 = vmatpush1.bf16.msra.mxu0 %v4843
      %4858 = vmatprep.subr.bf16.mxu0 0
      %4859 = vmatpush1.bf16.msra.mxu0 %v4844
      %4860 = vmatprep.subr.bf16.mxu0 0
      %4861 = vmatpush1.bf16.msra.mxu0 %v4845
      %4862 = vmatprep.subr.bf16.mxu0 0
      %4863 = vmatpush1.bf16.msra.mxu0 %v4846
      %4864 = vmatprep.subr.bf16.mxu0 0
      %4865 = vmatpush1.bf16.msra.mxu0 0
      %4866 = vmatprep.subr.bf16.mxu0 0
      %4867 = vmatpush1.bf16.msra.mxu0 0
      %4868 = vmatprep.subr.bf16.mxu0 0
      %4869 = vmatpush1.bf16.msra.mxu0 0
      %4870 = vmatprep.subr.bf16.mxu0 0
      %4871 = vmatpush1.bf16.msra.mxu0 0
      %4872 = vmatprep.subr.bf16.mxu0 0
      %4873 = vmatpush1.bf16.msra.mxu0 0
      %4874 = vmatprep.subr.bf16.mxu0 0
      %4875 = vmatpush1.bf16.msra.mxu0 0
      %4876 = vmatprep.subr.bf16.mxu0 0
      %4877 = vmatpush1.bf16.msra.mxu0 0
      %4878 = vmatprep.subr.bf16.mxu0 0
      %4879 = vmatpush1.bf16.msra.mxu0 0
      %4880 = vmatprep.subr.bf16.mxu0 0
      %4881 = vmatpush1.bf16.msra.mxu0 0
      %4882 = vmatprep.subr.bf16.mxu0 0
      %4883 = vmatpush1.bf16.msra.mxu0 0
      %4884 = vmatprep.subr.bf16.mxu0 0
      %4885 = vmatpush1.bf16.msra.mxu0 0
      %4886 = vmatprep.subr.bf16.mxu0 0
      %4887 = vmatpush1.bf16.msra.mxu0 0
      %4888 = vmatprep.mubr.bf16.mxu0 0
      %4889 = vmatmul.mubr.bf16.gmra.mrb[0].mxu0 %v4851
      %v4890 = vpop.f32.mrb[0].mxu0
      %v4891 = vadd.f32 %v4814, %v4890
      %v4892 = vpop.f32.mrb[0].mxu0
      %v4893 = vpop.f32.mrb[0].mxu0
      %v4894 = vadd.f32 %v4817, %v4893
      %v4895 = vpop.f32.mrb[0].mxu0
      %4896 = vmatprep.mubr.bf16.mxu0 0
      %4897 = vmatmul.mubr.bf16.gmra.mrb[0].mxu0 %v4854
      %v4898 = vpop.f32.mrb[0].mxu0
      %v4899 = vadd.f32 %v4822, %v4898
      %v4900 = vpop.f32.mrb[0].mxu0
      %v4901 = vpop.f32.mrb[0].mxu0
      %v4902 = vpop.f32.mrb[0].mxu0
      %4903 = vdwg.mxu0
      %v4904 = vld [vmem:[%s5 + $0x40] sm:$0xf]
      %v4905 = vld [vmem:[%s5 + $0x44] sm:$0xf]
      %v4906 = vld [vmem:[%s5 + $0x48] sm:$0xf]
      %v4907 = vld [vmem:[%s5 + $0x4c] sm:$0xf]
      %v4908 = vld [vmem:[%s5 + $0x50] sm:$0xf]
      %v4909 = vld [vmem:[%s5 + $0x54] sm:$0xf]
      %v4910 = vld [vmem:[%s5 + $0x58] sm:$0xf]
      %v4911 = vld [vmem:[%s5 + $0x5c] sm:$0xf]
      %v4914 = vrot.slane %v4714, 1
      %v4915 = vrot.slane %v4724, 1
      %v4916 = vsel %vm3538, %v4914, %v4915
      %v4925 = vunpack.c.l.b16 %v4904
      %v4926 = vunpack.c.l.b16 %v4905
      %v4927 = vunpack.c.l.b16 %v4906
      %v4928 = vunpack.c.l.b16 %v4907
      %v4929 = vunpack.c.l.b16 %v4908
      %v4930 = vunpack.c.l.b16 %v4909
      %v4931 = vunpack.c.l.b16 %v4910
      %v4932 = vunpack.c.l.b16 %v4911
      %v4933 = vpack.c.b16 %v4926, %v4925
      %v4934 = vpack.c.b16 %v4928, %v4927
      %v4935 = vpack.c.b16 %v4930, %v4929
      %v4936 = vpack.c.b16 %v4932, %v4931
      %v4942 = vsel %vm4772, %v4916, 0
      %v4945 = vsel %vm4772, %v4915, 0
      %4947 = vmatprep.subr.bf16.mxu0 0
      %4948 = vmatpush1.bf16.msra.mxu0 %v4933
      %4949 = vmatprep.subr.bf16.mxu0 0
      %4950 = vmatpush1.bf16.msra.mxu0 %v4934
      %4951 = vmatprep.subr.bf16.mxu0 0
      %4952 = vmatpush1.bf16.msra.mxu0 %v4935
      %4953 = vmatprep.subr.bf16.mxu0 0
      %4954 = vmatpush1.bf16.msra.mxu0 %v4936
      %4955 = vmatprep.subr.bf16.mxu0 0
      %4956 = vmatpush1.bf16.msra.mxu0 0
      %4957 = vmatprep.subr.bf16.mxu0 0
      %4958 = vmatpush1.bf16.msra.mxu0 0
      %4959 = vmatprep.subr.bf16.mxu0 0
      %4960 = vmatpush1.bf16.msra.mxu0 0
      %4961 = vmatprep.subr.bf16.mxu0 0
      %4962 = vmatpush1.bf16.msra.mxu0 0
      %4963 = vmatprep.subr.bf16.mxu0 0
      %4964 = vmatpush1.bf16.msra.mxu0 0
      %4965 = vmatprep.subr.bf16.mxu0 0
      %4966 = vmatpush1.bf16.msra.mxu0 0
      %4967 = vmatprep.subr.bf16.mxu0 0
      %4968 = vmatpush1.bf16.msra.mxu0 0
      %4969 = vmatprep.subr.bf16.mxu0 0
      %4970 = vmatpush1.bf16.msra.mxu0 0
      %4971 = vmatprep.subr.bf16.mxu0 0
      %4972 = vmatpush1.bf16.msra.mxu0 0
      %4973 = vmatprep.subr.bf16.mxu0 0
      %4974 = vmatpush1.bf16.msra.mxu0 0
      %4975 = vmatprep.subr.bf16.mxu0 0
      %4976 = vmatpush1.bf16.msra.mxu0 0
      %4977 = vmatprep.subr.bf16.mxu0 0
      %4978 = vmatpush1.bf16.msra.mxu0 0
      %4979 = vmatprep.mubr.bf16.mxu0 0
      %4980 = vmatmul.mubr.bf16.gmra.mrb[0].mxu0 %v4942
      %v4981 = vpop.f32.mrb[0].mxu0
      %v4982 = vadd.f32 0.0, %v4981
      %v4983 = vpop.f32.mrb[0].mxu0
      %v4984 = vpop.f32.mrb[0].mxu0
      %v4985 = vadd.f32 0.0, %v4984
      %v4986 = vpop.f32.mrb[0].mxu0
      %4987 = vmatprep.mubr.bf16.mxu0 0
      %4988 = vmatmul.mubr.bf16.gmra.mrb[0].mxu0 %v4945
      %v4989 = vpop.f32.mrb[0].mxu0
      %v4990 = vadd.f32 0.0, %v4989
      %v4991 = vpop.f32.mrb[0].mxu0
      %v4992 = vpop.f32.mrb[0].mxu0
      %v4993 = vpop.f32.mrb[0].mxu0
      %4994 = vdwg.mxu0
      %v4995 = vadd.f32 %v4891, %v4982
      %v4996 = vadd.f32 %v4894, %v4985
      %v4997 = vadd.f32 %v4899, %v4990
      %v4998 = vld [vmem:[%s5 + $0x60] sm:$0xf]
      %v4999 = vld [vmem:[%s5 + $0x64] sm:$0xf]
      %v5000 = vld [vmem:[%s5 + $0x68] sm:$0xf]
      %v5001 = vld [vmem:[%s5 + $0x6c] sm:$0xf]
      %v5002 = vld [vmem:[%s5 + $0x70] sm:$0xf]
      %v5003 = vld [vmem:[%s5 + $0x74] sm:$0xf]
      %v5004 = vld [vmem:[%s5 + $0x78] sm:$0xf]
      %v5005 = vld [vmem:[%s5 + $0x7c] sm:$0xf]
      %v5006 = vrot.slane %v4714, 3
      %v5007 = vrot.slane %v4724, 3
      %v5008 = vsel %vm4372, %v5006, %v5007
      %v5017 = vunpack.c.l.b16 %v4998
      %v5018 = vunpack.c.l.b16 %v4999
      %v5019 = vunpack.c.l.b16 %v5000
      %v5020 = vunpack.c.l.b16 %v5001
      %v5021 = vunpack.c.l.b16 %v5002
      %v5022 = vunpack.c.l.b16 %v5003
      %v5023 = vunpack.c.l.b16 %v5004
      %v5024 = vunpack.c.l.b16 %v5005
      %v5025 = vpack.c.b16 %v5018, %v5017
      %v5026 = vpack.c.b16 %v5020, %v5019
      %v5027 = vpack.c.b16 %v5022, %v5021
      %v5028 = vpack.c.b16 %v5024, %v5023
      %v5034 = vsel %vm4772, %v5008, 0
      %v5037 = vsel %vm4772, %v5007, 0
      %5039 = vmatprep.subr.bf16.mxu0 0
      %5040 = vmatpush1.bf16.msra.mxu0 %v5025
      %5041 = vmatprep.subr.bf16.mxu0 0
      %5042 = vmatpush1.bf16.msra.mxu0 %v5026
      %5043 = vmatprep.subr.bf16.mxu0 0
      %5044 = vmatpush1.bf16.msra.mxu0 %v5027
      %5045 = vmatprep.subr.bf16.mxu0 0
      %5046 = vmatpush1.bf16.msra.mxu0 %v5028
      %5047 = vmatprep.subr.bf16.mxu0 0
      %5048 = vmatpush1.bf16.msra.mxu0 0
      %5049 = vmatprep.subr.bf16.mxu0 0
      %5050 = vmatpush1.bf16.msra.mxu0 0
      %5051 = vmatprep.subr.bf16.mxu0 0
      %5052 = vmatpush1.bf16.msra.mxu0 0
      %5053 = vmatprep.subr.bf16.mxu0 0
      %5054 = vmatpush1.bf16.msra.mxu0 0
      %5055 = vmatprep.subr.bf16.mxu0 0
      %5056 = vmatpush1.bf16.msra.mxu0 0
      %5057 = vmatprep.subr.bf16.mxu0 0
      %5058 = vmatpush1.bf16.msra.mxu0 0
      %5059 = vmatprep.subr.bf16.mxu0 0
      %5060 = vmatpush1.bf16.msra.mxu0 0
      %5061 = vmatprep.subr.bf16.mxu0 0
      %5062 = vmatpush1.bf16.msra.mxu0 0
      %5063 = vmatprep.subr.bf16.mxu0 0
      %5064 = vmatpush1.bf16.msra.mxu0 0
      %5065 = vmatprep.subr.bf16.mxu0 0
      %5066 = vmatpush1.bf16.msra.mxu0 0
      %5067 = vmatprep.subr.bf16.mxu0 0
      %5068 = vmatpush1.bf16.msra.mxu0 0
      %5069 = vmatprep.subr.bf16.mxu0 0
      %5070 = vmatpush1.bf16.msra.mxu0 0
      %5071 = vmatprep.mubr.bf16.mxu0 0
      %5072 = vmatmul.mubr.bf16.gmra.mrb[0].mxu0 %v5034
      %v5073 = vpop.f32.mrb[0].mxu0
      %v5074 = vadd.f32 0.0, %v5073
      %v5075 = vpop.f32.mrb[0].mxu0
      %v5076 = vpop.f32.mrb[0].mxu0
      %v5077 = vadd.f32 0.0, %v5076
      %v5078 = vpop.f32.mrb[0].mxu0
      %5079 = vmatprep.mubr.bf16.mxu0 0
      %5080 = vmatmul.mubr.bf16.gmra.mrb[0].mxu0 %v5037
      %v5081 = vpop.f32.mrb[0].mxu0
      %v5082 = vadd.f32 0.0, %v5081
      %v5083 = vpop.f32.mrb[0].mxu0
      %v5084 = vpop.f32.mrb[0].mxu0
      %v5085 = vpop.f32.mrb[0].mxu0
      %5086 = vdwg.mxu0
      %v5087 = vadd.f32 %v4995, %v5074
      %v5088 = vadd.f32 %v4996, %v5077
      %v5089 = vadd.f32 %v4997, %v5082
      %v5090 = vld [vmem:[%s5 + $0x80] sm:$0xf]
      %v5091 = vld [vmem:[%s5 + $0x84] sm:$0xf]
      %v5092 = vld [vmem:[%s5 + $0x88] sm:$0xf]
      %v5093 = vld [vmem:[%s5 + $0x8c] sm:$0xf]
      %v5094 = vld [vmem:[%s5 + $0x90] sm:$0xf]
      %v5095 = vld [vmem:[%s5 + $0x94] sm:$0xf]
      %v5096 = vld [vmem:[%s5 + $0x98] sm:$0xf]
      %v5097 = vld [vmem:[%s5 + $0x9c] sm:$0xf]
      %vm5098 = vsmask.f32 4352
      %v5099 = vrot.slane %v4734, 3
      %v5100 = vrot.slane %v4736, 4
      %v5101 = vor.u32 %v5099, %v5100
      %v5102 = vrot.slane %v4745, 3
      %v5103 = vrot.slane %v4741, 4
      %v5104 = vor.u32 %v5102, %v5103
      %v5105 = vsel %vm5098, %v5101, %v5104
      %v5114 = vunpack.c.l.b16 %v5090
      %v5115 = vunpack.c.l.b16 %v5091
      %v5116 = vunpack.c.l.b16 %v5092
      %v5117 = vunpack.c.l.b16 %v5093
      %v5118 = vunpack.c.l.b16 %v5094
      %v5119 = vunpack.c.l.b16 %v5095
      %v5120 = vunpack.c.l.b16 %v5096
      %v5121 = vunpack.c.l.b16 %v5097
      %v5122 = vpack.c.b16 %v5115, %v5114
      %v5123 = vpack.c.b16 %v5117, %v5116
      %v5124 = vpack.c.b16 %v5119, %v5118
      %v5125 = vpack.c.b16 %v5121, %v5120
      %v5131 = vsel %vm4772, %v5105, 0
      %v5134 = vsel %vm4772, %v5104, 0
      %5136 = vmatprep.subr.bf16.mxu0 0
      %5137 = vmatpush1.bf16.msra.mxu0 %v5122
      %5138 = vmatprep.subr.bf16.mxu0 0
      %5139 = vmatpush1.bf16.msra.mxu0 %v5123
      %5140 = vmatprep.subr.bf16.mxu0 0
      %5141 = vmatpush1.bf16.msra.mxu0 %v5124
      %5142 = vmatprep.subr.bf16.mxu0 0
      %5143 = vmatpush1.bf16.msra.mxu0 %v5125
      %5144 = vmatprep.subr.bf16.mxu0 0
      %5145 = vmatpush1.bf16.msra.mxu0 0
      %5146 = vmatprep.subr.bf16.mxu0 0
      %5147 = vmatpush1.bf16.msra.mxu0 0
      %5148 = vmatprep.subr.bf16.mxu0 0
      %5149 = vmatpush1.bf16.msra.mxu0 0
      %5150 = vmatprep.subr.bf16.mxu0 0
      %5151 = vmatpush1.bf16.msra.mxu0 0
      %5152 = vmatprep.subr.bf16.mxu0 0
      %5153 = vmatpush1.bf16.msra.mxu0 0
      %5154 = vmatprep.subr.bf16.mxu0 0
      %5155 = vmatpush1.bf16.msra.mxu0 0
      %5156 = vmatprep.subr.bf16.mxu0 0
      %5157 = vmatpush1.bf16.msra.mxu0 0
      %5158 = vmatprep.subr.bf16.mxu0 0
      %5159 = vmatpush1.bf16.msra.mxu0 0
      %5160 = vmatprep.subr.bf16.mxu0 0
      %5161 = vmatpush1.bf16.msra.mxu0 0
      %5162 = vmatprep.subr.bf16.mxu0 0
      %5163 = vmatpush1.bf16.msra.mxu0 0
      %5164 = vmatprep.subr.bf16.mxu0 0
      %5165 = vmatpush1.bf16.msra.mxu0 0
      %5166 = vmatprep.subr.bf16.mxu0 0
      %5167 = vmatpush1.bf16.msra.mxu0 0
      %5168 = vmatprep.mubr.bf16.mxu0 0
      %5169 = vmatmul.mubr.bf16.gmra.mrb[0].mxu0 %v5131
      %v5170 = vpop.f32.mrb[0].mxu0
      %v5171 = vadd.f32 0.0, %v5170
      %v5172 = vpop.f32.mrb[0].mxu0
      %v5173 = vpop.f32.mrb[0].mxu0
      %v5174 = vadd.f32 0.0, %v5173
      %v5175 = vpop.f32.mrb[0].mxu0
      %5176 = vmatprep.mubr.bf16.mxu0 0
      %5177 = vmatmul.mubr.bf16.gmra.mrb[0].mxu0 %v5134
      %v5178 = vpop.f32.mrb[0].mxu0
      %v5179 = vadd.f32 0.0, %v5178
      %v5180 = vpop.f32.mrb[0].mxu0
      %v5181 = vpop.f32.mrb[0].mxu0
      %v5182 = vpop.f32.mrb[0].mxu0
      %5183 = vdwg.mxu0
      %v5184 = vadd.f32 %v5087, %v5171
      %v5185 = vadd.f32 %v5088, %v5174
      %v5186 = vadd.f32 %v5089, %v5179
      %v5187 = vpack.c.bf16 %v4701, %v4696
      %v5188 = vpack.c.bf16 %v4704, %v4704
      %v5189 = vld [vmem:[%s5 + $0xa0] sm:$0xf]
      %v5190 = vld [vmem:[%s5 + $0xa4] sm:$0xf]
      %v5191 = vld [vmem:[%s5 + $0xa8] sm:$0xf]
      %v5192 = vld [vmem:[%s5 + $0xac] sm:$0xf]
      %v5193 = vld [vmem:[%s5 + $0xb0] sm:$0xf]
      %v5194 = vld [vmem:[%s5 + $0xb4] sm:$0xf]
      %v5195 = vld [vmem:[%s5 + $0xb8] sm:$0xf]
      %v5196 = vld [vmem:[%s5 + $0xbc] sm:$0xf]
      %v5205 = vunpack.c.l.b16 %v5189
      %v5206 = vunpack.c.l.b16 %v5190
      %v5207 = vunpack.c.l.b16 %v5191
      %v5208 = vunpack.c.l.b16 %v5192
      %v5209 = vunpack.c.l.b16 %v5193
      %v5210 = vunpack.c.l.b16 %v5194
      %v5211 = vunpack.c.l.b16 %v5195
      %v5212 = vunpack.c.l.b16 %v5196
      %v5213 = vpack.c.b16 %v5206, %v5205
      %v5214 = vpack.c.b16 %v5208, %v5207
      %v5215 = vpack.c.b16 %v5210, %v5209
      %v5216 = vpack.c.b16 %v5212, %v5211
      %v5222 = vsel %vm4772, %v5187, 0
      %v5225 = vsel %vm4772, %v5188, 0
      %5227 = vmatprep.subr.bf16.mxu0 0
      %5228 = vmatpush1.bf16.msra.mxu0 %v5213
      %5229 = vmatprep.subr.bf16.mxu0 0
      %5230 = vmatpush1.bf16.msra.mxu0 %v5214
      %5231 = vmatprep.subr.bf16.mxu0 0
      %5232 = vmatpush1.bf16.msra.mxu0 %v5215
      %5233 = vmatprep.subr.bf16.mxu0 0
      %5234 = vmatpush1.bf16.msra.mxu0 %v5216
      %5235 = vmatprep.subr.bf16.mxu0 0
      %5236 = vmatpush1.bf16.msra.mxu0 0
      %5237 = vmatprep.subr.bf16.mxu0 0
      %5238 = vmatpush1.bf16.msra.mxu0 0
      %5239 = vmatprep.subr.bf16.mxu0 0
      %5240 = vmatpush1.bf16.msra.mxu0 0
      %5241 = vmatprep.subr.bf16.mxu0 0
      %5242 = vmatpush1.bf16.msra.mxu0 0
      %5243 = vmatprep.subr.bf16.mxu0 0
      %5244 = vmatpush1.bf16.msra.mxu0 0
      %5245 = vmatprep.subr.bf16.mxu0 0
      %5246 = vmatpush1.bf16.msra.mxu0 0
      %5247 = vmatprep.subr.bf16.mxu0 0
      %5248 = vmatpush1.bf16.msra.mxu0 0
      %5249 = vmatprep.subr.bf16.mxu0 0
      %5250 = vmatpush1.bf16.msra.mxu0 0
      %5251 = vmatprep.subr.bf16.mxu0 0
      %5252 = vmatpush1.bf16.msra.mxu0 0
      %5253 = vmatprep.subr.bf16.mxu0 0
      %5254 = vmatpush1.bf16.msra.mxu0 0
      %5255 = vmatprep.subr.bf16.mxu0 0
      %5256 = vmatpush1.bf16.msra.mxu0 0
      %5257 = vmatprep.subr.bf16.mxu0 0
      %5258 = vmatpush1.bf16.msra.mxu0 0
      %5259 = vmatprep.mubr.bf16.mxu0 0
      %5260 = vmatmul.mubr.bf16.gmra.mrb[0].mxu0 %v5222
      %v5261 = vpop.f32.mrb[0].mxu0
      %v5262 = vadd.f32 0.0, %v5261
      %v5263 = vpop.f32.mrb[0].mxu0
      %v5264 = vpop.f32.mrb[0].mxu0
      %v5265 = vadd.f32 0.0, %v5264
      %v5266 = vpop.f32.mrb[0].mxu0
      %5267 = vmatprep.mubr.bf16.mxu0 0
      %5268 = vmatmul.mubr.bf16.gmra.mrb[0].mxu0 %v5225
      %v5269 = vpop.f32.mrb[0].mxu0
      %v5270 = vadd.f32 0.0, %v5269
      %v5271 = vpop.f32.mrb[0].mxu0
      %v5272 = vpop.f32.mrb[0].mxu0
      %v5273 = vpop.f32.mrb[0].mxu0
      %5274 = vdwg.mxu0
      %v5275 = vadd.f32 %v5184, %v5262
      %v5276 = vadd.f32 %v5185, %v5265
      %v5277 = vadd.f32 %v5186, %v5270
      %v5278 = vpack.c.bf16 %v4709, %v4704
      %v5279 = vld [vmem:[%s5 + $0xc0] sm:$0xf]
      %v5280 = vld [vmem:[%s5 + $0xc4] sm:$0xf]
      %v5281 = vld [vmem:[%s5 + $0xc8] sm:$0xf]
      %v5282 = vld [vmem:[%s5 + $0xcc] sm:$0xf]
      %v5283 = vld [vmem:[%s5 + $0xd0] sm:$0xf]
      %v5284 = vld [vmem:[%s5 + $0xd4] sm:$0xf]
      %v5285 = vld [vmem:[%s5 + $0xd8] sm:$0xf]
      %v5286 = vld [vmem:[%s5 + $0xdc] sm:$0xf]
      %v5289 = vrot.slane %v5187, 2
      %v5290 = vrot.slane %v5278, 2
      %v5291 = vsel %vm3969, %v5289, %v5290
      %v5300 = vunpack.c.l.b16 %v5279
      %v5301 = vunpack.c.l.b16 %v5280
      %v5302 = vunpack.c.l.b16 %v5281
      %v5303 = vunpack.c.l.b16 %v5282
      %v5304 = vunpack.c.l.b16 %v5283
      %v5305 = vunpack.c.l.b16 %v5284
      %v5306 = vunpack.c.l.b16 %v5285
      %v5307 = vunpack.c.l.b16 %v5286
      %v5308 = vpack.c.b16 %v5301, %v5300
      %v5309 = vpack.c.b16 %v5303, %v5302
      %v5310 = vpack.c.b16 %v5305, %v5304
      %v5311 = vpack.c.b16 %v5307, %v5306
      %v5317 = vsel %vm4772, %v5291, 0
      %v5320 = vsel %vm4772, %v5290, 0
      %5322 = vmatprep.subr.bf16.mxu0 0
      %5323 = vmatpush1.bf16.msra.mxu0 %v5308
      %5324 = vmatprep.subr.bf16.mxu0 0
      %5325 = vmatpush1.bf16.msra.mxu0 %v5309
      %5326 = vmatprep.subr.bf16.mxu0 0
      %5327 = vmatpush1.bf16.msra.mxu0 %v5310
      %5328 = vmatprep.subr.bf16.mxu0 0
      %5329 = vmatpush1.bf16.msra.mxu0 %v5311
      %5330 = vmatprep.subr.bf16.mxu0 0
      %5331 = vmatpush1.bf16.msra.mxu0 0
      %5332 = vmatprep.subr.bf16.mxu0 0
      %5333 = vmatpush1.bf16.msra.mxu0 0
      %5334 = vmatprep.subr.bf16.mxu0 0
      %5335 = vmatpush1.bf16.msra.mxu0 0
      %5336 = vmatprep.subr.bf16.mxu0 0
      %5337 = vmatpush1.bf16.msra.mxu0 0
      %5338 = vmatprep.subr.bf16.mxu0 0
      %5339 = vmatpush1.bf16.msra.mxu0 0
      %5340 = vmatprep.subr.bf16.mxu0 0
      %5341 = vmatpush1.bf16.msra.mxu0 0
      %5342 = vmatprep.subr.bf16.mxu0 0
      %5343 = vmatpush1.bf16.msra.mxu0 0
      %5344 = vmatprep.subr.bf16.mxu0 0
      %5345 = vmatpush1.bf16.msra.mxu0 0
      %5346 = vmatprep.subr.bf16.mxu0 0
      %5347 = vmatpush1.bf16.msra.mxu0 0
      %5348 = vmatprep.subr.bf16.mxu0 0
      %5349 = vmatpush1.bf16.msra.mxu0 0
      %5350 = vmatprep.subr.bf16.mxu0 0
      %5351 = vmatpush1.bf16.msra.mxu0 0
      %5352 = vmatprep.subr.bf16.mxu0 0
      %5353 = vmatpush1.bf16.msra.mxu0 0
      %5354 = vmatprep.mubr.bf16.mxu0 0
      %5355 = vmatmul.mubr.bf16.gmra.mrb[0].mxu0 %v5317
      %v5356 = vpop.f32.mrb[0].mxu0
      %v5357 = vadd.f32 0.0, %v5356
      %v5358 = vpop.f32.mrb[0].mxu0
      %v5359 = vpop.f32.mrb[0].mxu0
      %v5360 = vadd.f32 0.0, %v5359
      %v5361 = vpop.f32.mrb[0].mxu0
      %5362 = vmatprep.mubr.bf16.mxu0 0
      %5363 = vmatmul.mubr.bf16.gmra.mrb[0].mxu0 %v5320
      %v5364 = vpop.f32.mrb[0].mxu0
      %v5365 = vadd.f32 0.0, %v5364
      %v5366 = vpop.f32.mrb[0].mxu0
      %v5367 = vpop.f32.mrb[0].mxu0
      %v5368 = vpop.f32.mrb[0].mxu0
      %5369 = vdwg.mxu0
      %v5370 = vadd.f32 %v5275, %v5357
      %v5371 = vadd.f32 %v5276, %v5360
      %v5372 = vadd.f32 %v5277, %v5365
      %v5373 = vld [vmem:[%s5 + $0xe0] sm:$0xf]
      %v5374 = vld [vmem:[%s5 + $0xe4] sm:$0xf]
      %v5375 = vld [vmem:[%s5 + $0xe8] sm:$0xf]
      %v5376 = vld [vmem:[%s5 + $0xec] sm:$0xf]
      %v5377 = vld [vmem:[%s5 + $0xf0] sm:$0xf]
      %v5378 = vld [vmem:[%s5 + $0xf4] sm:$0xf]
      %v5379 = vld [vmem:[%s5 + $0xf8] sm:$0xf]
      %v5380 = vld [vmem:[%s5 + $0xfc] sm:$0xf]
      %v5381 = vshrl.u32 %v5187, 16
      %v5383 = vrot.slane %v5381, 2
      %v5384 = vshll.u32 %v5187, 16
      %v5386 = vrot.slane %v5384, 3
      %v5387 = vor.u32 %v5383, %v5386
      %v5389 = vshrl.u32 %v5278, 16
      %v5391 = vrot.slane %v5389, 2
      %v5392 = vshll.u32 %v5278, 16
      %v5394 = vrot.slane %v5392, 3
      %v5395 = vor.u32 %v5391, %v5394
      %v5396 = vsel %vm4224, %v5387, %v5395
      %v5405 = vunpack.c.l.b16 %v5373
      %v5406 = vunpack.c.l.b16 %v5374
      %v5407 = vunpack.c.l.b16 %v5375
      %v5408 = vunpack.c.l.b16 %v5376
      %v5409 = vunpack.c.l.b16 %v5377
      %v5410 = vunpack.c.l.b16 %v5378
      %v5411 = vunpack.c.l.b16 %v5379
      %v5412 = vunpack.c.l.b16 %v5380
      %v5413 = vpack.c.b16 %v5406, %v5405
      %v5414 = vpack.c.b16 %v5408, %v5407
      %v5415 = vpack.c.b16 %v5410, %v5409
      %v5416 = vpack.c.b16 %v5412, %v5411
      %v5422 = vsel %vm4772, %v5396, 0
      %v5425 = vsel %vm4772, %v5395, 0
      %5427 = vmatprep.subr.bf16.mxu0 0
      %5428 = vmatpush1.bf16.msra.mxu0 %v5413
      %5429 = vmatprep.subr.bf16.mxu0 0
      %5430 = vmatpush1.bf16.msra.mxu0 %v5414
      %5431 = vmatprep.subr.bf16.mxu0 0
      %5432 = vmatpush1.bf16.msra.mxu0 %v5415
      %5433 = vmatprep.subr.bf16.mxu0 0
      %5434 = vmatpush1.bf16.msra.mxu0 %v5416
      %5435 = vmatprep.subr.bf16.mxu0 0
      %5436 = vmatpush1.bf16.msra.mxu0 0
      %5437 = vmatprep.subr.bf16.mxu0 0
      %5438 = vmatpush1.bf16.msra.mxu0 0
      %5439 = vmatprep.subr.bf16.mxu0 0
      %5440 = vmatpush1.bf16.msra.mxu0 0
      %5441 = vmatprep.subr.bf16.mxu0 0
      %5442 = vmatpush1.bf16.msra.mxu0 0
      %5443 = vmatprep.subr.bf16.mxu0 0
      %5444 = vmatpush1.bf16.msra.mxu0 0
      %5445 = vmatprep.subr.bf16.mxu0 0
      %5446 = vmatpush1.bf16.msra.mxu0 0
      %5447 = vmatprep.subr.bf16.mxu0 0
      %5448 = vmatpush1.bf16.msra.mxu0 0
      %5449 = vmatprep.subr.bf16.mxu0 0
      %5450 = vmatpush1.bf16.msra.mxu0 0
      %5451 = vmatprep.subr.bf16.mxu0 0
      %5452 = vmatpush1.bf16.msra.mxu0 0
      %5453 = vmatprep.subr.bf16.mxu0 0
      %5454 = vmatpush1.bf16.msra.mxu0 0
      %5455 = vmatprep.subr.bf16.mxu0 0
      %5456 = vmatpush1.bf16.msra.mxu0 0
      %5457 = vmatprep.subr.bf16.mxu0 0
      %5458 = vmatpush1.bf16.msra.mxu0 0
      %5459 = vmatprep.mubr.bf16.mxu0 0
      %5460 = vmatmul.mubr.bf16.gmra.mrb[0].mxu0 %v5422
      %v5461 = vpop.f32.mrb[0].mxu0
      %v5462 = vadd.f32 0.0, %v5461
      %v5463 = vpop.f32.mrb[0].mxu0
      %v5464 = vpop.f32.mrb[0].mxu0
      %v5465 = vadd.f32 0.0, %v5464
      %v5466 = vpop.f32.mrb[0].mxu0
      %5467 = vmatprep.mubr.bf16.mxu0 0
      %5468 = vmatmul.mubr.bf16.gmra.mrb[0].mxu0 %v5425
      %v5469 = vpop.f32.mrb[0].mxu0
      %v5470 = vadd.f32 0.0, %v5469
      %v5471 = vpop.f32.mrb[0].mxu0
      %v5472 = vpop.f32.mrb[0].mxu0
      %v5473 = vpop.f32.mrb[0].mxu0
      %5474 = vdwg.mxu0
      %v5475 = vadd.f32 %v5370, %v5462
      %v5476 = vadd.f32 %v5371, %v5465
      %v5477 = vadd.f32 %v5372, %v5470
      %v5478 = vld [vmem:[%s5 + $0x100] sm:$0xf]
      %v5479 = vld [vmem:[%s5 + $0x104] sm:$0xf]
      %v5480 = vld [vmem:[%s5 + $0x108] sm:$0xf]
      %v5481 = vld [vmem:[%s5 + $0x10c] sm:$0xf]
      %v5482 = vld [vmem:[%s5 + $0x110] sm:$0xf]
      %v5483 = vld [vmem:[%s5 + $0x114] sm:$0xf]
      %v5484 = vld [vmem:[%s5 + $0x118] sm:$0xf]
      %v5485 = vld [vmem:[%s5 + $0x11c] sm:$0xf]
      %v5486 = vrot.slane %v5187, 3
      %v5487 = vrot.slane %v5278, 3
      %v5488 = vsel %vm4372, %v5486, %v5487
      %v5497 = vunpack.c.l.b16 %v5478
      %v5498 = vunpack.c.l.b16 %v5479
      %v5499 = vunpack.c.l.b16 %v5480
      %v5500 = vunpack.c.l.b16 %v5481
      %v5501 = vunpack.c.l.b16 %v5482
      %v5502 = vunpack.c.l.b16 %v5483
      %v5503 = vunpack.c.l.b16 %v5484
      %v5504 = vunpack.c.l.b16 %v5485
      %v5505 = vpack.c.b16 %v5498, %v5497
      %v5506 = vpack.c.b16 %v5500, %v5499
      %v5507 = vpack.c.b16 %v5502, %v5501
      %v5508 = vpack.c.b16 %v5504, %v5503
      %v5514 = vsel %vm4772, %v5488, 0
      %v5517 = vsel %vm4772, %v5487, 0
      %5519 = vmatprep.subr.bf16.mxu0 0
      %5520 = vmatpush1.bf16.msra.mxu0 %v5505
      %5521 = vmatprep.subr.bf16.mxu0 0
      %5522 = vmatpush1.bf16.msra.mxu0 %v5506
      %5523 = vmatprep.subr.bf16.mxu0 0
      %5524 = vmatpush1.bf16.msra.mxu0 %v5507
      %5525 = vmatprep.subr.bf16.mxu0 0
      %5526 = vmatpush1.bf16.msra.mxu0 %v5508
      %5527 = vmatprep.subr.bf16.mxu0 0
      %5528 = vmatpush1.bf16.msra.mxu0 0
      %5529 = vmatprep.subr.bf16.mxu0 0
      %5530 = vmatpush1.bf16.msra.mxu0 0
      %5531 = vmatprep.subr.bf16.mxu0 0
      %5532 = vmatpush1.bf16.msra.mxu0 0
      %5533 = vmatprep.subr.bf16.mxu0 0
      %5534 = vmatpush1.bf16.msra.mxu0 0
      %5535 = vmatprep.subr.bf16.mxu0 0
      %5536 = vmatpush1.bf16.msra.mxu0 0
      %5537 = vmatprep.subr.bf16.mxu0 0
      %5538 = vmatpush1.bf16.msra.mxu0 0
      %5539 = vmatprep.subr.bf16.mxu0 0
      %5540 = vmatpush1.bf16.msra.mxu0 0
      %5541 = vmatprep.subr.bf16.mxu0 0
      %5542 = vmatpush1.bf16.msra.mxu0 0
      %5543 = vmatprep.subr.bf16.mxu0 0
      %5544 = vmatpush1.bf16.msra.mxu0 0
      %5545 = vmatprep.subr.bf16.mxu0 0
      %5546 = vmatpush1.bf16.msra.mxu0 0
      %5547 = vmatprep.subr.bf16.mxu0 0
      %5548 = vmatpush1.bf16.msra.mxu0 0
      %5549 = vmatprep.subr.bf16.mxu0 0
      %5550 = vmatpush1.bf16.msra.mxu0 0
      %5551 = vmatprep.mubr.bf16.mxu0 0
      %5552 = vmatmul.mubr.bf16.gmra.mrb[0].mxu0 %v5514
      %v5553 = vpop.f32.mrb[0].mxu0
      %v5554 = vadd.f32 0.0, %v5553
      %v5555 = vpop.f32.mrb[0].mxu0
      %v5556 = vpop.f32.mrb[0].mxu0
      %v5557 = vadd.f32 0.0, %v5556
      %v5558 = vpop.f32.mrb[0].mxu0
      %5559 = vmatprep.mubr.bf16.mxu0 0
      %5560 = vmatmul.mubr.bf16.gmra.mrb[0].mxu0 %v5517
      %v5561 = vpop.f32.mrb[0].mxu0
      %v5562 = vadd.f32 0.0, %v5561
      %v5563 = vpop.f32.mrb[0].mxu0
      %v5564 = vpop.f32.mrb[0].mxu0
      %v5565 = vpop.f32.mrb[0].mxu0
      %5566 = vdwg.mxu0
      %v5567 = vadd.f32 %v5475, %v5554
      %v5568 = vadd.f32 %v5476, %v5557
      %v5569 = vadd.f32 %v5477, %v5562
      %v5570 = vld [vmem:[%s6] sm:$0x1]
      %v5572 = vlaneseq
      %v5573 = vshrl.u32 %v5572, 7
      %v5574 = vsub.s32 0, %v5573
      %v5575 = vrot.slane %v5570, %v5574
      %v5577 = vadd.f32 %v5567, %v5575
      %v5578 = vadd.f32 %v5568, %v5575
      %v5579 = vadd.f32 %v5569, %v5575
      %v5580 = vmax.f32 %v5577, 0.0
      %v5581 = vmax.f32 %v5578, 0.0
      %v5582 = vmax.f32 %v5579, 0.0
      %v5585 = vrot.slane %v5580, 1
      %v5586 = vrot.slane %v5581, 1
      %v5587 = vsel %vm759, %v5585, %v5586
      %v5590 = vmax.f32 %v5580, %v5587
      %v5591 = vmax.f32 %v5581, %v5586
      %v5593 = vrot.slane %v5582, 1
      %v5594 = vsel %vm759, %v5586, %v5593
      %v5597 = vmax.f32 %v5581, %v5594
      %v5598 = vmax.f32 %v5582, %v5593
      %v5602 = vrot.slane %v5590, 6
      %v5603 = vrot.slane %v5597, 6
      %v5604 = vsel %vm2345, %v5602, %v5603
      %v5605 = vrot.slane %v5598, 6
      %v5606 = vsel %vm2345, %v5603, %v5605
      %v5609 = vmax.f32 %v5590, %v5604
      %v5610 = vmax.f32 %v5591, %v5606
      %v5611 = vld [vmem:[%s11] sm:$0xf]
      %v5612 = vld [vmem:[%s11 + $0x4] sm:$0xf]
      %v5613 = vld [vmem:[%s11 + $0x8] sm:$0x3]
      %v5614 = vpack.c.bf16 %v5610, %v5609
      %v5618 = vunpack.c.l.b16 %v5611
      %v5619 = vunpack.c.l.b16 %v5612
      %v5620 = vunpack.c.l.b16 %v5613
      %v5621 = vpack.c.b16 %v5619, %v5618
      %v5622 = vpack.c.b16 %v5620, %v5620
      %vm5623 = vcmask 121856
      %v5625 = vsel %vm5623, %v5621, 0
      %v5628 = vsel %vm5623, %v5622, 0
      %vm5630 = vcmask 1047552
      %v5631 = vsel %vm759, 4294967295, 65535
      %v5632 = vsel %vm5630, %v5631, 0
      %v5634 = vand.u32 %v5614, %v5632
      %5636 = vmatprep.subr.bf16.mxu0 0
      %5637 = vmatpush1.bf16.msra.mxu0 %v5634
      %5638 = vmatprep.subr.bf16.mxu0 0
      %5639 = vmatpush1.bf16.msra.mxu0 0
      %5640 = vmatprep.subr.bf16.mxu0 0
      %5641 = vmatpush1.bf16.msra.mxu0 0
      %5642 = vmatprep.subr.bf16.mxu0 0
      %5643 = vmatpush1.bf16.msra.mxu0 0
      %5644 = vmatprep.subr.bf16.mxu0 0
      %5645 = vmatpush1.bf16.msra.mxu0 0
      %5646 = vmatprep.subr.bf16.mxu0 0
      %5647 = vmatpush1.bf16.msra.mxu0 0
      %5648 = vmatprep.subr.bf16.mxu0 0
      %5649 = vmatpush1.bf16.msra.mxu0 0
      %5650 = vmatprep.subr.bf16.mxu0 0
      %5651 = vmatpush1.bf16.msra.mxu0 0
      %5652 = vmatprep.subr.bf16.mxu0 0
      %5653 = vmatpush1.bf16.msra.mxu0 0
      %5654 = vmatprep.subr.bf16.mxu0 0
      %5655 = vmatpush1.bf16.msra.mxu0 0
      %5656 = vmatprep.subr.bf16.mxu0 0
      %5657 = vmatpush1.bf16.msra.mxu0 0
      %5658 = vmatprep.subr.bf16.mxu0 0
      %5659 = vmatpush1.bf16.msra.mxu0 0
      %5660 = vmatprep.subr.bf16.mxu0 0
      %5661 = vmatpush1.bf16.msra.mxu0 0
      %5662 = vmatprep.subr.bf16.mxu0 0
      %5663 = vmatpush1.bf16.msra.mxu0 0
      %5664 = vmatprep.subr.bf16.mxu0 0
      %5665 = vmatpush1.bf16.msra.mxu0 0
      %5666 = vmatprep.subr.bf16.mxu0 0
      %5667 = vmatpush1.bf16.msra.mxu0 0
      %5668 = vmatprep.mubr.bf16.mxu0 0
      %5669 = vmatmul.mubr.bf16.gmra.mrb[0].mxu0 %v5625
      %v5670 = vpop.f32.mrb[0].mxu0
      %v5671 = vadd.f32 0.0, %v5670
      %v5672 = vpop.f32.mrb[0].mxu0
      %v5673 = vpop.f32.mrb[0].mxu0
      %v5674 = vadd.f32 0.0, %v5673
      %v5675 = vpop.f32.mrb[0].mxu0
      %5676 = vmatprep.mubr.bf16.mxu0 0
      %5677 = vmatmul.mubr.bf16.gmra.mrb[0].mxu0 %v5628
      %v5678 = vpop.f32.mrb[0].mxu0
      %v5679 = vadd.f32 0.0, %v5678
      %v5680 = vpop.f32.mrb[0].mxu0
      %v5681 = vpop.f32.mrb[0].mxu0
      %v5682 = vpop.f32.mrb[0].mxu0
      %5683 = vdwg.mxu0
      %v5684 = vpack.c.bf16 %v5671, %v5671
      %v5685 = vld [vmem:[%s7] sm:$0xff]
      %v5686 = vld [vmem:[%s7 + $0x8] sm:$0xff]
      %v5687 = vld [vmem:[%s7 + $0x10] sm:$0xff]
      %v5688 = vld [vmem:[%s7 + $0x18] sm:$0xff]
      %v5689 = vld [vmem:[%s7 + $0x20] sm:$0xff]
      %v5690 = vld [vmem:[%s7 + $0x28] sm:$0xff]
      %v5691 = vld [vmem:[%s7 + $0x30] sm:$0xff]
      %v5692 = vld [vmem:[%s7 + $0x38] sm:$0xff]
      %v5693 = vld [vmem:[%s7 + $0x40] sm:$0xff]
      %v5694 = vld [vmem:[%s7 + $0x48] sm:$0xff]
      %v5695 = vld [vmem:[%s7 + $0x50] sm:$0xff]
      %v5696 = vld [vmem:[%s7 + $0x58] sm:$0xff]
      %v5697 = vld [vmem:[%s7 + $0x60] sm:$0xff]
      %v5698 = vld [vmem:[%s7 + $0x68] sm:$0xff]
      %v5699 = vld [vmem:[%s7 + $0x70] sm:$0xff]
      %v5700 = vld [vmem:[%s7 + $0x78] sm:$0xff]
      %v5701 = vpack.c.bf16 %v5674, %v5671
      %v5702 = vld [vmem:[%s7 + $0x80] sm:$0xff]
      %v5703 = vld [vmem:[%s7 + $0x88] sm:$0xff]
      %v5704 = vld [vmem:[%s7 + $0x90] sm:$0xff]
      %v5705 = vld [vmem:[%s7 + $0x98] sm:$0xff]
      %v5706 = vld [vmem:[%s7 + $0xa0] sm:$0xff]
      %v5707 = vld [vmem:[%s7 + $0xa8] sm:$0xff]
      %v5708 = vld [vmem:[%s7 + $0xb0] sm:$0xff]
      %v5709 = vld [vmem:[%s7 + $0xb8] sm:$0xff]
      %v5710 = vld [vmem:[%s7 + $0xc0] sm:$0xff]
      %v5711 = vld [vmem:[%s7 + $0xc8] sm:$0xff]
      %v5712 = vld [vmem:[%s7 + $0xd0] sm:$0xff]
      %v5713 = vld [vmem:[%s7 + $0xd8] sm:$0xff]
      %v5714 = vld [vmem:[%s7 + $0xe0] sm:$0xff]
      %v5715 = vld [vmem:[%s7 + $0xe8] sm:$0xff]
      %v5716 = vld [vmem:[%s7 + $0xf0] sm:$0xff]
      %v5717 = vld [vmem:[%s7 + $0xf8] sm:$0xff]
      %v5719 = vshrl.u32 %v5701, 16
      %v5721 = vshll.u32 %v5701, 16
      %v5723 = vrot.slane %v5721, 1
      %v5724 = vor.u32 %v5719, %v5723
      %v5742 = vunpack.c.l.b16 %v5702
      %v5743 = vunpack.c.h.b16 %v5702
      %v5744 = vunpack.c.l.b16 %v5703
      %v5745 = vunpack.c.h.b16 %v5703
      %v5746 = vunpack.c.l.b16 %v5704
      %v5747 = vunpack.c.h.b16 %v5704
      %v5748 = vunpack.c.l.b16 %v5705
      %v5749 = vunpack.c.h.b16 %v5705
      %v5750 = vunpack.c.l.b16 %v5706
      %v5751 = vunpack.c.h.b16 %v5706
      %v5752 = vunpack.c.l.b16 %v5707
      %v5753 = vunpack.c.h.b16 %v5707
      %v5754 = vunpack.c.l.b16 %v5708
      %v5755 = vunpack.c.h.b16 %v5708
      %v5756 = vunpack.c.l.b16 %v5709
      %v5757 = vunpack.c.h.b16 %v5709
      %v5758 = vunpack.c.l.b16 %v5710
      %v5759 = vunpack.c.h.b16 %v5710
      %v5760 = vunpack.c.l.b16 %v5711
      %v5761 = vunpack.c.h.b16 %v5711
      %v5762 = vunpack.c.l.b16 %v5712
      %v5763 = vunpack.c.h.b16 %v5712
      %v5764 = vunpack.c.l.b16 %v5713
      %v5765 = vunpack.c.h.b16 %v5713
      %v5766 = vunpack.c.l.b16 %v5714
      %v5767 = vunpack.c.h.b16 %v5714
      %v5768 = vunpack.c.l.b16 %v5715
      %v5769 = vunpack.c.h.b16 %v5715
      %v5770 = vunpack.c.l.b16 %v5716
      %v5771 = vunpack.c.h.b16 %v5716
      %v5772 = vunpack.c.l.b16 %v5717
      %v5773 = vunpack.c.h.b16 %v5717
      %v5774 = vpack.c.b16 %v5744, %v5742
      %v5775 = vpack.c.b16 %v5745, %v5743
      %v5776 = vpack.c.b16 %v5748, %v5746
      %v5777 = vpack.c.b16 %v5749, %v5747
      %v5778 = vpack.c.b16 %v5752, %v5750
      %v5779 = vpack.c.b16 %v5753, %v5751
      %v5780 = vpack.c.b16 %v5756, %v5754
      %v5781 = vpack.c.b16 %v5757, %v5755
      %v5782 = vpack.c.b16 %v5760, %v5758
      %v5783 = vpack.c.b16 %v5761, %v5759
      %v5784 = vpack.c.b16 %v5764, %v5762
      %v5785 = vpack.c.b16 %v5765, %v5763
      %v5786 = vpack.c.b16 %v5768, %v5766
      %v5787 = vpack.c.b16 %v5769, %v5767
      %v5788 = vpack.c.b16 %v5772, %v5770
      %v5789 = vpack.c.b16 %v5773, %v5771
      %5806 = vmatprep.subr.bf16.mxu0 %v5775
      %5807 = vmatpush1.bf16.msra.mxu0 %v5774
      %5808 = vmatprep.subr.bf16.mxu0 %v5777
      %5809 = vmatpush1.bf16.msra.mxu0 %v5776
      %5810 = vmatprep.subr.bf16.mxu0 %v5779
      %5811 = vmatpush1.bf16.msra.mxu0 %v5778
      %5812 = vmatprep.subr.bf16.mxu0 %v5781
      %5813 = vmatpush1.bf16.msra.mxu0 %v5780
      %5814 = vmatprep.subr.bf16.mxu0 %v5783
      %5815 = vmatpush1.bf16.msra.mxu0 %v5782
      %5816 = vmatprep.subr.bf16.mxu0 %v5785
      %5817 = vmatpush1.bf16.msra.mxu0 %v5784
      %5818 = vmatprep.subr.bf16.mxu0 %v5787
      %5819 = vmatpush1.bf16.msra.mxu0 %v5786
      %5820 = vmatprep.subr.bf16.mxu0 %v5789
      %5821 = vmatpush1.bf16.msra.mxu0 %v5788
      %5822 = vmatprep.subr.bf16.mxu0 0
      %5823 = vmatpush1.bf16.msra.mxu0 0
      %5824 = vmatprep.subr.bf16.mxu0 0
      %5825 = vmatpush1.bf16.msra.mxu0 0
      %5826 = vmatprep.subr.bf16.mxu0 0
      %5827 = vmatpush1.bf16.msra.mxu0 0
      %5828 = vmatprep.subr.bf16.mxu0 0
      %5829 = vmatpush1.bf16.msra.mxu0 0
      %5830 = vmatprep.subr.bf16.mxu0 0
      %5831 = vmatpush1.bf16.msra.mxu0 0
      %5832 = vmatprep.subr.bf16.mxu0 0
      %5833 = vmatpush1.bf16.msra.mxu0 0
      %5834 = vmatprep.subr.bf16.mxu0 0
      %5835 = vmatpush1.bf16.msra.mxu0 0
      %5836 = vmatprep.subr.bf16.mxu0 0
      %5837 = vmatpush1.bf16.msra.mxu0 0
      %5838 = vmatprep.mubr.bf16.mxu0 0
      %5839 = vmatmul.mubr.bf16.gmra.mrb[0].mxu0 %v5724
      %v5840 = vpop.f32.mrb[0].mxu0
      %v5841 = vadd.f32 0.0, %v5840
      %v5842 = vpop.f32.mrb[0].mxu0
      %v5843 = vadd.f32 0.0, %v5842
      %v5844 = vpop.f32.mrb[0].mxu0
      %v5845 = vpop.f32.mrb[0].mxu0
      %5846 = vdwg.mxu0
      %v5863 = vunpack.c.l.b16 %v5685
      %v5864 = vunpack.c.h.b16 %v5685
      %v5865 = vunpack.c.l.b16 %v5686
      %v5866 = vunpack.c.h.b16 %v5686
      %v5867 = vunpack.c.l.b16 %v5687
      %v5868 = vunpack.c.h.b16 %v5687
      %v5869 = vunpack.c.l.b16 %v5688
      %v5870 = vunpack.c.h.b16 %v5688
      %v5871 = vunpack.c.l.b16 %v5689
      %v5872 = vunpack.c.h.b16 %v5689
      %v5873 = vunpack.c.l.b16 %v5690
      %v5874 = vunpack.c.h.b16 %v5690
      %v5875 = vunpack.c.l.b16 %v5691
      %v5876 = vunpack.c.h.b16 %v5691
      %v5877 = vunpack.c.l.b16 %v5692
      %v5878 = vunpack.c.h.b16 %v5692
      %v5879 = vunpack.c.l.b16 %v5693
      %v5880 = vunpack.c.h.b16 %v5693
      %v5881 = vunpack.c.l.b16 %v5694
      %v5882 = vunpack.c.h.b16 %v5694
      %v5883 = vunpack.c.l.b16 %v5695
      %v5884 = vunpack.c.h.b16 %v5695
      %v5885 = vunpack.c.l.b16 %v5696
      %v5886 = vunpack.c.h.b16 %v5696
      %v5887 = vunpack.c.l.b16 %v5697
      %v5888 = vunpack.c.h.b16 %v5697
      %v5889 = vunpack.c.l.b16 %v5698
      %v5890 = vunpack.c.h.b16 %v5698
      %v5891 = vunpack.c.l.b16 %v5699
      %v5892 = vunpack.c.h.b16 %v5699
      %v5893 = vunpack.c.l.b16 %v5700
      %v5894 = vunpack.c.h.b16 %v5700
      %v5895 = vpack.c.b16 %v5865, %v5863
      %v5896 = vpack.c.b16 %v5866, %v5864
      %v5897 = vpack.c.b16 %v5869, %v5867
      %v5898 = vpack.c.b16 %v5870, %v5868
      %v5899 = vpack.c.b16 %v5873, %v5871
      %v5900 = vpack.c.b16 %v5874, %v5872
      %v5901 = vpack.c.b16 %v5877, %v5875
      %v5902 = vpack.c.b16 %v5878, %v5876
      %v5903 = vpack.c.b16 %v5881, %v5879
      %v5904 = vpack.c.b16 %v5882, %v5880
      %v5905 = vpack.c.b16 %v5885, %v5883
      %v5906 = vpack.c.b16 %v5886, %v5884
      %v5907 = vpack.c.b16 %v5889, %v5887
      %v5908 = vpack.c.b16 %v5890, %v5888
      %v5909 = vpack.c.b16 %v5893, %v5891
      %v5910 = vpack.c.b16 %v5894, %v5892
      %5927 = vmatprep.subr.bf16.mxu0 %v5896
      %5928 = vmatpush1.bf16.msra.mxu0 %v5895
      %5929 = vmatprep.subr.bf16.mxu0 %v5898
      %5930 = vmatpush1.bf16.msra.mxu0 %v5897
      %5931 = vmatprep.subr.bf16.mxu0 %v5900
      %5932 = vmatpush1.bf16.msra.mxu0 %v5899
      %5933 = vmatprep.subr.bf16.mxu0 %v5902
      %5934 = vmatpush1.bf16.msra.mxu0 %v5901
      %5935 = vmatprep.subr.bf16.mxu0 %v5904
      %5936 = vmatpush1.bf16.msra.mxu0 %v5903
      %5937 = vmatprep.subr.bf16.mxu0 %v5906
      %5938 = vmatpush1.bf16.msra.mxu0 %v5905
      %5939 = vmatprep.subr.bf16.mxu0 %v5908
      %5940 = vmatpush1.bf16.msra.mxu0 %v5907
      %5941 = vmatprep.subr.bf16.mxu0 %v5910
      %5942 = vmatpush1.bf16.msra.mxu0 %v5909
      %5943 = vmatprep.subr.bf16.mxu0 0
      %5944 = vmatpush1.bf16.msra.mxu0 0
      %5945 = vmatprep.subr.bf16.mxu0 0
      %5946 = vmatpush1.bf16.msra.mxu0 0
      %5947 = vmatprep.subr.bf16.mxu0 0
      %5948 = vmatpush1.bf16.msra.mxu0 0
      %5949 = vmatprep.subr.bf16.mxu0 0
      %5950 = vmatpush1.bf16.msra.mxu0 0
      %5951 = vmatprep.subr.bf16.mxu0 0
      %5952 = vmatpush1.bf16.msra.mxu0 0
      %5953 = vmatprep.subr.bf16.mxu0 0
      %5954 = vmatpush1.bf16.msra.mxu0 0
      %5955 = vmatprep.subr.bf16.mxu0 0
      %5956 = vmatpush1.bf16.msra.mxu0 0
      %5957 = vmatprep.subr.bf16.mxu0 0
      %5958 = vmatpush1.bf16.msra.mxu0 0
      %5959 = vmatprep.mubr.bf16.mxu0 0
      %5960 = vmatmul.mubr.bf16.gmra.mrb[0].mxu0 %v5684
      %v5961 = vpop.f32.mrb[0].mxu0
      %v5962 = vadd.f32 %v5841, %v5961
      %v5963 = vpop.f32.mrb[0].mxu0
      %v5964 = vadd.f32 %v5843, %v5963
      %v5965 = vpop.f32.mrb[0].mxu0
      %v5966 = vpop.f32.mrb[0].mxu0
      %5967 = vdwg.mxu0
      %v5968 = vld [vmem:[%s7 + $0x100] sm:$0xff]
      %v5969 = vld [vmem:[%s7 + $0x108] sm:$0xff]
      %v5970 = vld [vmem:[%s7 + $0x110] sm:$0xff]
      %v5971 = vld [vmem:[%s7 + $0x118] sm:$0xff]
      %v5972 = vld [vmem:[%s7 + $0x120] sm:$0xff]
      %v5973 = vld [vmem:[%s7 + $0x128] sm:$0xff]
      %v5974 = vld [vmem:[%s7 + $0x130] sm:$0xff]
      %v5975 = vld [vmem:[%s7 + $0x138] sm:$0xff]
      %v5976 = vld [vmem:[%s7 + $0x140] sm:$0xff]
      %v5977 = vld [vmem:[%s7 + $0x148] sm:$0xff]
      %v5978 = vld [vmem:[%s7 + $0x150] sm:$0xff]
      %v5979 = vld [vmem:[%s7 + $0x158] sm:$0xff]
      %v5980 = vld [vmem:[%s7 + $0x160] sm:$0xff]
      %v5981 = vld [vmem:[%s7 + $0x168] sm:$0xff]
      %v5982 = vld [vmem:[%s7 + $0x170] sm:$0xff]
      %v5983 = vld [vmem:[%s7 + $0x178] sm:$0xff]
      %v5985 = vrot.slane %v5701, 1
      %v6003 = vunpack.c.l.b16 %v5968
      %v6004 = vunpack.c.h.b16 %v5968
      %v6005 = vunpack.c.l.b16 %v5969
      %v6006 = vunpack.c.h.b16 %v5969
      %v6007 = vunpack.c.l.b16 %v5970
      %v6008 = vunpack.c.h.b16 %v5970
      %v6009 = vunpack.c.l.b16 %v5971
      %v6010 = vunpack.c.h.b16 %v5971
      %v6011 = vunpack.c.l.b16 %v5972
      %v6012 = vunpack.c.h.b16 %v5972
      %v6013 = vunpack.c.l.b16 %v5973
      %v6014 = vunpack.c.h.b16 %v5973
      %v6015 = vunpack.c.l.b16 %v5974
      %v6016 = vunpack.c.h.b16 %v5974
      %v6017 = vunpack.c.l.b16 %v5975
      %v6018 = vunpack.c.h.b16 %v5975
      %v6019 = vunpack.c.l.b16 %v5976
      %v6020 = vunpack.c.h.b16 %v5976
      %v6021 = vunpack.c.l.b16 %v5977
      %v6022 = vunpack.c.h.b16 %v5977
      %v6023 = vunpack.c.l.b16 %v5978
      %v6024 = vunpack.c.h.b16 %v5978
      %v6025 = vunpack.c.l.b16 %v5979
      %v6026 = vunpack.c.h.b16 %v5979
      %v6027 = vunpack.c.l.b16 %v5980
      %v6028 = vunpack.c.h.b16 %v5980
      %v6029 = vunpack.c.l.b16 %v5981
      %v6030 = vunpack.c.h.b16 %v5981
      %v6031 = vunpack.c.l.b16 %v5982
      %v6032 = vunpack.c.h.b16 %v5982
      %v6033 = vunpack.c.l.b16 %v5983
      %v6034 = vunpack.c.h.b16 %v5983
      %v6035 = vpack.c.b16 %v6005, %v6003
      %v6036 = vpack.c.b16 %v6006, %v6004
      %v6037 = vpack.c.b16 %v6009, %v6007
      %v6038 = vpack.c.b16 %v6010, %v6008
      %v6039 = vpack.c.b16 %v6013, %v6011
      %v6040 = vpack.c.b16 %v6014, %v6012
      %v6041 = vpack.c.b16 %v6017, %v6015
      %v6042 = vpack.c.b16 %v6018, %v6016
      %v6043 = vpack.c.b16 %v6021, %v6019
      %v6044 = vpack.c.b16 %v6022, %v6020
      %v6045 = vpack.c.b16 %v6025, %v6023
      %v6046 = vpack.c.b16 %v6026, %v6024
      %v6047 = vpack.c.b16 %v6029, %v6027
      %v6048 = vpack.c.b16 %v6030, %v6028
      %v6049 = vpack.c.b16 %v6033, %v6031
      %v6050 = vpack.c.b16 %v6034, %v6032
      %6067 = vmatprep.subr.bf16.mxu0 %v6036
      %6068 = vmatpush1.bf16.msra.mxu0 %v6035
      %6069 = vmatprep.subr.bf16.mxu0 %v6038
      %6070 = vmatpush1.bf16.msra.mxu0 %v6037
      %6071 = vmatprep.subr.bf16.mxu0 %v6040
      %6072 = vmatpush1.bf16.msra.mxu0 %v6039
      %6073 = vmatprep.subr.bf16.mxu0 %v6042
      %6074 = vmatpush1.bf16.msra.mxu0 %v6041
      %6075 = vmatprep.subr.bf16.mxu0 %v6044
      %6076 = vmatpush1.bf16.msra.mxu0 %v6043
      %6077 = vmatprep.subr.bf16.mxu0 %v6046
      %6078 = vmatpush1.bf16.msra.mxu0 %v6045
      %6079 = vmatprep.subr.bf16.mxu0 %v6048
      %6080 = vmatpush1.bf16.msra.mxu0 %v6047
      %6081 = vmatprep.subr.bf16.mxu0 %v6050
      %6082 = vmatpush1.bf16.msra.mxu0 %v6049
      %6083 = vmatprep.subr.bf16.mxu0 0
      %6084 = vmatpush1.bf16.msra.mxu0 0
      %6085 = vmatprep.subr.bf16.mxu0 0
      %6086 = vmatpush1.bf16.msra.mxu0 0
      %6087 = vmatprep.subr.bf16.mxu0 0
      %6088 = vmatpush1.bf16.msra.mxu0 0
      %6089 = vmatprep.subr.bf16.mxu0 0
      %6090 = vmatpush1.bf16.msra.mxu0 0
      %6091 = vmatprep.subr.bf16.mxu0 0
      %6092 = vmatpush1.bf16.msra.mxu0 0
      %6093 = vmatprep.subr.bf16.mxu0 0
      %6094 = vmatpush1.bf16.msra.mxu0 0
      %6095 = vmatprep.subr.bf16.mxu0 0
      %6096 = vmatpush1.bf16.msra.mxu0 0
      %6097 = vmatprep.subr.bf16.mxu0 0
      %6098 = vmatpush1.bf16.msra.mxu0 0
      %6099 = vmatprep.mubr.bf16.mxu0 0
      %6100 = vmatmul.mubr.bf16.gmra.mrb[0].mxu0 %v5985
      %v6101 = vpop.f32.mrb[0].mxu0
      %v6102 = vadd.f32 0.0, %v6101
      %v6103 = vpop.f32.mrb[0].mxu0
      %v6104 = vadd.f32 0.0, %v6103
      %v6105 = vpop.f32.mrb[0].mxu0
      %v6106 = vpop.f32.mrb[0].mxu0
      %6107 = vdwg.mxu0
      %v6108 = vadd.f32 %v5962, %v6102
      %v6109 = vadd.f32 %v5964, %v6104
      %v6110 = vld [vmem:[%s7 + $0x180] sm:$0xff]
      %v6111 = vld [vmem:[%s7 + $0x188] sm:$0xff]
      %v6112 = vld [vmem:[%s7 + $0x190] sm:$0xff]
      %v6113 = vld [vmem:[%s7 + $0x198] sm:$0xff]
      %v6114 = vld [vmem:[%s7 + $0x1a0] sm:$0xff]
      %v6115 = vld [vmem:[%s7 + $0x1a8] sm:$0xff]
      %v6116 = vld [vmem:[%s7 + $0x1b0] sm:$0xff]
      %v6117 = vld [vmem:[%s7 + $0x1b8] sm:$0xff]
      %v6118 = vld [vmem:[%s7 + $0x1c0] sm:$0xff]
      %v6119 = vld [vmem:[%s7 + $0x1c8] sm:$0xff]
      %v6120 = vld [vmem:[%s7 + $0x1d0] sm:$0xff]
      %v6121 = vld [vmem:[%s7 + $0x1d8] sm:$0xff]
      %v6122 = vld [vmem:[%s7 + $0x1e0] sm:$0xff]
      %v6123 = vld [vmem:[%s7 + $0x1e8] sm:$0xff]
      %v6124 = vld [vmem:[%s7 + $0x1f0] sm:$0xff]
      %v6125 = vld [vmem:[%s7 + $0x1f8] sm:$0xff]
      %v6126 = vrot.slane %v5701, 2
      %v6144 = vunpack.c.l.b16 %v6110
      %v6145 = vunpack.c.h.b16 %v6110
      %v6146 = vunpack.c.l.b16 %v6111
      %v6147 = vunpack.c.h.b16 %v6111
      %v6148 = vunpack.c.l.b16 %v6112
      %v6149 = vunpack.c.h.b16 %v6112
      %v6150 = vunpack.c.l.b16 %v6113
      %v6151 = vunpack.c.h.b16 %v6113
      %v6152 = vunpack.c.l.b16 %v6114
      %v6153 = vunpack.c.h.b16 %v6114
      %v6154 = vunpack.c.l.b16 %v6115
      %v6155 = vunpack.c.h.b16 %v6115
      %v6156 = vunpack.c.l.b16 %v6116
      %v6157 = vunpack.c.h.b16 %v6116
      %v6158 = vunpack.c.l.b16 %v6117
      %v6159 = vunpack.c.h.b16 %v6117
      %v6160 = vunpack.c.l.b16 %v6118
      %v6161 = vunpack.c.h.b16 %v6118
      %v6162 = vunpack.c.l.b16 %v6119
      %v6163 = vunpack.c.h.b16 %v6119
      %v6164 = vunpack.c.l.b16 %v6120
      %v6165 = vunpack.c.h.b16 %v6120
      %v6166 = vunpack.c.l.b16 %v6121
      %v6167 = vunpack.c.h.b16 %v6121
      %v6168 = vunpack.c.l.b16 %v6122
      %v6169 = vunpack.c.h.b16 %v6122
      %v6170 = vunpack.c.l.b16 %v6123
      %v6171 = vunpack.c.h.b16 %v6123
      %v6172 = vunpack.c.l.b16 %v6124
      %v6173 = vunpack.c.h.b16 %v6124
      %v6174 = vunpack.c.l.b16 %v6125
      %v6175 = vunpack.c.h.b16 %v6125
      %v6176 = vpack.c.b16 %v6146, %v6144
      %v6177 = vpack.c.b16 %v6147, %v6145
      %v6178 = vpack.c.b16 %v6150, %v6148
      %v6179 = vpack.c.b16 %v6151, %v6149
      %v6180 = vpack.c.b16 %v6154, %v6152
      %v6181 = vpack.c.b16 %v6155, %v6153
      %v6182 = vpack.c.b16 %v6158, %v6156
      %v6183 = vpack.c.b16 %v6159, %v6157
      %v6184 = vpack.c.b16 %v6162, %v6160
      %v6185 = vpack.c.b16 %v6163, %v6161
      %v6186 = vpack.c.b16 %v6166, %v6164
      %v6187 = vpack.c.b16 %v6167, %v6165
      %v6188 = vpack.c.b16 %v6170, %v6168
      %v6189 = vpack.c.b16 %v6171, %v6169
      %v6190 = vpack.c.b16 %v6174, %v6172
      %v6191 = vpack.c.b16 %v6175, %v6173
      %6208 = vmatprep.subr.bf16.mxu0 %v6177
      %6209 = vmatpush1.bf16.msra.mxu0 %v6176
      %6210 = vmatprep.subr.bf16.mxu0 %v6179
      %6211 = vmatpush1.bf16.msra.mxu0 %v6178
      %6212 = vmatprep.subr.bf16.mxu0 %v6181
      %6213 = vmatpush1.bf16.msra.mxu0 %v6180
      %6214 = vmatprep.subr.bf16.mxu0 %v6183
      %6215 = vmatpush1.bf16.msra.mxu0 %v6182
      %6216 = vmatprep.subr.bf16.mxu0 %v6185
      %6217 = vmatpush1.bf16.msra.mxu0 %v6184
      %6218 = vmatprep.subr.bf16.mxu0 %v6187
      %6219 = vmatpush1.bf16.msra.mxu0 %v6186
      %6220 = vmatprep.subr.bf16.mxu0 %v6189
      %6221 = vmatpush1.bf16.msra.mxu0 %v6188
      %6222 = vmatprep.subr.bf16.mxu0 %v6191
      %6223 = vmatpush1.bf16.msra.mxu0 %v6190
      %6224 = vmatprep.subr.bf16.mxu0 0
      %6225 = vmatpush1.bf16.msra.mxu0 0
      %6226 = vmatprep.subr.bf16.mxu0 0
      %6227 = vmatpush1.bf16.msra.mxu0 0
      %6228 = vmatprep.subr.bf16.mxu0 0
      %6229 = vmatpush1.bf16.msra.mxu0 0
      %6230 = vmatprep.subr.bf16.mxu0 0
      %6231 = vmatpush1.bf16.msra.mxu0 0
      %6232 = vmatprep.subr.bf16.mxu0 0
      %6233 = vmatpush1.bf16.msra.mxu0 0
      %6234 = vmatprep.subr.bf16.mxu0 0
      %6235 = vmatpush1.bf16.msra.mxu0 0
      %6236 = vmatprep.subr.bf16.mxu0 0
      %6237 = vmatpush1.bf16.msra.mxu0 0
      %6238 = vmatprep.subr.bf16.mxu0 0
      %6239 = vmatpush1.bf16.msra.mxu0 0
      %6240 = vmatprep.mubr.bf16.mxu0 0
      %6241 = vmatmul.mubr.bf16.gmra.mrb[0].mxu0 %v6126
      %v6242 = vpop.f32.mrb[0].mxu0
      %v6243 = vadd.f32 0.0, %v6242
      %v6244 = vpop.f32.mrb[0].mxu0
      %v6245 = vadd.f32 0.0, %v6244
      %v6246 = vpop.f32.mrb[0].mxu0
      %v6247 = vpop.f32.mrb[0].mxu0
      %6248 = vdwg.mxu0
      %v6249 = vadd.f32 %v6108, %v6243
      %v6250 = vadd.f32 %v6109, %v6245
      %v6251 = vld [vmem:[%s7 + $0x200] sm:$0xff]
      %v6252 = vld [vmem:[%s7 + $0x208] sm:$0xff]
      %v6253 = vld [vmem:[%s7 + $0x210] sm:$0xff]
      %v6254 = vld [vmem:[%s7 + $0x218] sm:$0xff]
      %v6255 = vld [vmem:[%s7 + $0x220] sm:$0xff]
      %v6256 = vld [vmem:[%s7 + $0x228] sm:$0xff]
      %v6257 = vld [vmem:[%s7 + $0x230] sm:$0xff]
      %v6258 = vld [vmem:[%s7 + $0x238] sm:$0xff]
      %v6259 = vld [vmem:[%s7 + $0x240] sm:$0xff]
      %v6260 = vld [vmem:[%s7 + $0x248] sm:$0xff]
      %v6261 = vld [vmem:[%s7 + $0x250] sm:$0xff]
      %v6262 = vld [vmem:[%s7 + $0x258] sm:$0xff]
      %v6263 = vld [vmem:[%s7 + $0x260] sm:$0xff]
      %v6264 = vld [vmem:[%s7 + $0x268] sm:$0xff]
      %v6265 = vld [vmem:[%s7 + $0x270] sm:$0xff]
      %v6266 = vld [vmem:[%s7 + $0x278] sm:$0xff]
      %v6267 = vrot.slane %v5719, 2
      %v6268 = vrot.slane %v5721, 3
      %v6269 = vor.u32 %v6267, %v6268
      %v6287 = vunpack.c.l.b16 %v6251
      %v6288 = vunpack.c.h.b16 %v6251
      %v6289 = vunpack.c.l.b16 %v6252
      %v6290 = vunpack.c.h.b16 %v6252
      %v6291 = vunpack.c.l.b16 %v6253
      %v6292 = vunpack.c.h.b16 %v6253
      %v6293 = vunpack.c.l.b16 %v6254
      %v6294 = vunpack.c.h.b16 %v6254
      %v6295 = vunpack.c.l.b16 %v6255
      %v6296 = vunpack.c.h.b16 %v6255
      %v6297 = vunpack.c.l.b16 %v6256
      %v6298 = vunpack.c.h.b16 %v6256
      %v6299 = vunpack.c.l.b16 %v6257
      %v6300 = vunpack.c.h.b16 %v6257
      %v6301 = vunpack.c.l.b16 %v6258
      %v6302 = vunpack.c.h.b16 %v6258
      %v6303 = vunpack.c.l.b16 %v6259
      %v6304 = vunpack.c.h.b16 %v6259
      %v6305 = vunpack.c.l.b16 %v6260
      %v6306 = vunpack.c.h.b16 %v6260
      %v6307 = vunpack.c.l.b16 %v6261
      %v6308 = vunpack.c.h.b16 %v6261
      %v6309 = vunpack.c.l.b16 %v6262
      %v6310 = vunpack.c.h.b16 %v6262
      %v6311 = vunpack.c.l.b16 %v6263
      %v6312 = vunpack.c.h.b16 %v6263
      %v6313 = vunpack.c.l.b16 %v6264
      %v6314 = vunpack.c.h.b16 %v6264
      %v6315 = vunpack.c.l.b16 %v6265
      %v6316 = vunpack.c.h.b16 %v6265
      %v6317 = vunpack.c.l.b16 %v6266
      %v6318 = vunpack.c.h.b16 %v6266
      %v6319 = vpack.c.b16 %v6289, %v6287
      %v6320 = vpack.c.b16 %v6290, %v6288
      %v6321 = vpack.c.b16 %v6293, %v6291
      %v6322 = vpack.c.b16 %v6294, %v6292
      %v6323 = vpack.c.b16 %v6297, %v6295
      %v6324 = vpack.c.b16 %v6298, %v6296
      %v6325 = vpack.c.b16 %v6301, %v6299
      %v6326 = vpack.c.b16 %v6302, %v6300
      %v6327 = vpack.c.b16 %v6305, %v6303
      %v6328 = vpack.c.b16 %v6306, %v6304
      %v6329 = vpack.c.b16 %v6309, %v6307
      %v6330 = vpack.c.b16 %v6310, %v6308
      %v6331 = vpack.c.b16 %v6313, %v6311
      %v6332 = vpack.c.b16 %v6314, %v6312
      %v6333 = vpack.c.b16 %v6317, %v6315
      %v6334 = vpack.c.b16 %v6318, %v6316
      %6351 = vmatprep.subr.bf16.mxu0 %v6320
      %6352 = vmatpush1.bf16.msra.mxu0 %v6319
      %6353 = vmatprep.subr.bf16.mxu0 %v6322
      %6354 = vmatpush1.bf16.msra.mxu0 %v6321
      %6355 = vmatprep.subr.bf16.mxu0 %v6324
      %6356 = vmatpush1.bf16.msra.mxu0 %v6323
      %6357 = vmatprep.subr.bf16.mxu0 %v6326
      %6358 = vmatpush1.bf16.msra.mxu0 %v6325
      %6359 = vmatprep.subr.bf16.mxu0 %v6328
      %6360 = vmatpush1.bf16.msra.mxu0 %v6327
      %6361 = vmatprep.subr.bf16.mxu0 %v6330
      %6362 = vmatpush1.bf16.msra.mxu0 %v6329
      %6363 = vmatprep.subr.bf16.mxu0 %v6332
      %6364 = vmatpush1.bf16.msra.mxu0 %v6331
      %6365 = vmatprep.subr.bf16.mxu0 %v6334
      %6366 = vmatpush1.bf16.msra.mxu0 %v6333
      %6367 = vmatprep.subr.bf16.mxu0 0
      %6368 = vmatpush1.bf16.msra.mxu0 0
      %6369 = vmatprep.subr.bf16.mxu0 0
      %6370 = vmatpush1.bf16.msra.mxu0 0
      %6371 = vmatprep.subr.bf16.mxu0 0
      %6372 = vmatpush1.bf16.msra.mxu0 0
      %6373 = vmatprep.subr.bf16.mxu0 0
      %6374 = vmatpush1.bf16.msra.mxu0 0
      %6375 = vmatprep.subr.bf16.mxu0 0
      %6376 = vmatpush1.bf16.msra.mxu0 0
      %6377 = vmatprep.subr.bf16.mxu0 0
      %6378 = vmatpush1.bf16.msra.mxu0 0
      %6379 = vmatprep.subr.bf16.mxu0 0
      %6380 = vmatpush1.bf16.msra.mxu0 0
      %6381 = vmatprep.subr.bf16.mxu0 0
      %6382 = vmatpush1.bf16.msra.mxu0 0
      %6383 = vmatprep.mubr.bf16.mxu0 0
      %6384 = vmatmul.mubr.bf16.gmra.mrb[0].mxu0 %v6269
      %v6385 = vpop.f32.mrb[0].mxu0
      %v6386 = vadd.f32 0.0, %v6385
      %v6387 = vpop.f32.mrb[0].mxu0
      %v6388 = vadd.f32 0.0, %v6387
      %v6389 = vpop.f32.mrb[0].mxu0
      %v6390 = vpop.f32.mrb[0].mxu0
      %6391 = vdwg.mxu0
      %v6392 = vadd.f32 %v6249, %v6386
      %v6393 = vadd.f32 %v6250, %v6388
      %v6394 = vld [vmem:[%s7 + $0x280] sm:$0xff]
      %v6395 = vld [vmem:[%s7 + $0x288] sm:$0xff]
      %v6396 = vld [vmem:[%s7 + $0x290] sm:$0xff]
      %v6397 = vld [vmem:[%s7 + $0x298] sm:$0xff]
      %v6398 = vld [vmem:[%s7 + $0x2a0] sm:$0xff]
      %v6399 = vld [vmem:[%s7 + $0x2a8] sm:$0xff]
      %v6400 = vld [vmem:[%s7 + $0x2b0] sm:$0xff]
      %v6401 = vld [vmem:[%s7 + $0x2b8] sm:$0xff]
      %v6402 = vld [vmem:[%s7 + $0x2c0] sm:$0xff]
      %v6403 = vld [vmem:[%s7 + $0x2c8] sm:$0xff]
      %v6404 = vld [vmem:[%s7 + $0x2d0] sm:$0xff]
      %v6405 = vld [vmem:[%s7 + $0x2d8] sm:$0xff]
      %v6406 = vld [vmem:[%s7 + $0x2e0] sm:$0xff]
      %v6407 = vld [vmem:[%s7 + $0x2e8] sm:$0xff]
      %v6408 = vld [vmem:[%s7 + $0x2f0] sm:$0xff]
      %v6409 = vld [vmem:[%s7 + $0x2f8] sm:$0xff]
      %v6410 = vrot.slane %v5701, 3
      %v6428 = vunpack.c.l.b16 %v6394
      %v6429 = vunpack.c.h.b16 %v6394
      %v6430 = vunpack.c.l.b16 %v6395
      %v6431 = vunpack.c.h.b16 %v6395
      %v6432 = vunpack.c.l.b16 %v6396
      %v6433 = vunpack.c.h.b16 %v6396
      %v6434 = vunpack.c.l.b16 %v6397
      %v6435 = vunpack.c.h.b16 %v6397
      %v6436 = vunpack.c.l.b16 %v6398
      %v6437 = vunpack.c.h.b16 %v6398
      %v6438 = vunpack.c.l.b16 %v6399
      %v6439 = vunpack.c.h.b16 %v6399
      %v6440 = vunpack.c.l.b16 %v6400
      %v6441 = vunpack.c.h.b16 %v6400
      %v6442 = vunpack.c.l.b16 %v6401
      %v6443 = vunpack.c.h.b16 %v6401
      %v6444 = vunpack.c.l.b16 %v6402
      %v6445 = vunpack.c.h.b16 %v6402
      %v6446 = vunpack.c.l.b16 %v6403
      %v6447 = vunpack.c.h.b16 %v6403
      %v6448 = vunpack.c.l.b16 %v6404
      %v6449 = vunpack.c.h.b16 %v6404
      %v6450 = vunpack.c.l.b16 %v6405
      %v6451 = vunpack.c.h.b16 %v6405
      %v6452 = vunpack.c.l.b16 %v6406
      %v6453 = vunpack.c.h.b16 %v6406
      %v6454 = vunpack.c.l.b16 %v6407
      %v6455 = vunpack.c.h.b16 %v6407
      %v6456 = vunpack.c.l.b16 %v6408
      %v6457 = vunpack.c.h.b16 %v6408
      %v6458 = vunpack.c.l.b16 %v6409
      %v6459 = vunpack.c.h.b16 %v6409
      %v6460 = vpack.c.b16 %v6430, %v6428
      %v6461 = vpack.c.b16 %v6431, %v6429
      %v6462 = vpack.c.b16 %v6434, %v6432
      %v6463 = vpack.c.b16 %v6435, %v6433
      %v6464 = vpack.c.b16 %v6438, %v6436
      %v6465 = vpack.c.b16 %v6439, %v6437
      %v6466 = vpack.c.b16 %v6442, %v6440
      %v6467 = vpack.c.b16 %v6443, %v6441
      %v6468 = vpack.c.b16 %v6446, %v6444
      %v6469 = vpack.c.b16 %v6447, %v6445
      %v6470 = vpack.c.b16 %v6450, %v6448
      %v6471 = vpack.c.b16 %v6451, %v6449
      %v6472 = vpack.c.b16 %v6454, %v6452
      %v6473 = vpack.c.b16 %v6455, %v6453
      %v6474 = vpack.c.b16 %v6458, %v6456
      %v6475 = vpack.c.b16 %v6459, %v6457
      %6492 = vmatprep.subr.bf16.mxu0 %v6461
      %6493 = vmatpush1.bf16.msra.mxu0 %v6460
      %6494 = vmatprep.subr.bf16.mxu0 %v6463
      %6495 = vmatpush1.bf16.msra.mxu0 %v6462
      %6496 = vmatprep.subr.bf16.mxu0 %v6465
      %6497 = vmatpush1.bf16.msra.mxu0 %v6464
      %6498 = vmatprep.subr.bf16.mxu0 %v6467
      %6499 = vmatpush1.bf16.msra.mxu0 %v6466
      %6500 = vmatprep.subr.bf16.mxu0 %v6469
      %6501 = vmatpush1.bf16.msra.mxu0 %v6468
      %6502 = vmatprep.subr.bf16.mxu0 %v6471
      %6503 = vmatpush1.bf16.msra.mxu0 %v6470
      %6504 = vmatprep.subr.bf16.mxu0 %v6473
      %6505 = vmatpush1.bf16.msra.mxu0 %v6472
      %6506 = vmatprep.subr.bf16.mxu0 %v6475
      %6507 = vmatpush1.bf16.msra.mxu0 %v6474
      %6508 = vmatprep.subr.bf16.mxu0 0
      %6509 = vmatpush1.bf16.msra.mxu0 0
      %6510 = vmatprep.subr.bf16.mxu0 0
      %6511 = vmatpush1.bf16.msra.mxu0 0
      %6512 = vmatprep.subr.bf16.mxu0 0
      %6513 = vmatpush1.bf16.msra.mxu0 0
      %6514 = vmatprep.subr.bf16.mxu0 0
      %6515 = vmatpush1.bf16.msra.mxu0 0
      %6516 = vmatprep.subr.bf16.mxu0 0
      %6517 = vmatpush1.bf16.msra.mxu0 0
      %6518 = vmatprep.subr.bf16.mxu0 0
      %6519 = vmatpush1.bf16.msra.mxu0 0
      %6520 = vmatprep.subr.bf16.mxu0 0
      %6521 = vmatpush1.bf16.msra.mxu0 0
      %6522 = vmatprep.subr.bf16.mxu0 0
      %6523 = vmatpush1.bf16.msra.mxu0 0
      %6524 = vmatprep.mubr.bf16.mxu0 0
      %6525 = vmatmul.mubr.bf16.gmra.mrb[0].mxu0 %v6410
      %v6526 = vpop.f32.mrb[0].mxu0
      %v6527 = vadd.f32 0.0, %v6526
      %v6528 = vpop.f32.mrb[0].mxu0
      %v6529 = vadd.f32 0.0, %v6528
      %v6530 = vpop.f32.mrb[0].mxu0
      %v6531 = vpop.f32.mrb[0].mxu0
      %6532 = vdwg.mxu0
      %v6533 = vadd.f32 %v6392, %v6527
      %v6534 = vadd.f32 %v6393, %v6529
      %v6535 = vpack.c.bf16 %v5674, %v5674
      %v6536 = vld [vmem:[%s7 + $0x300] sm:$0xff]
      %v6537 = vld [vmem:[%s7 + $0x308] sm:$0xff]
      %v6538 = vld [vmem:[%s7 + $0x310] sm:$0xff]
      %v6539 = vld [vmem:[%s7 + $0x318] sm:$0xff]
      %v6540 = vld [vmem:[%s7 + $0x320] sm:$0xff]
      %v6541 = vld [vmem:[%s7 + $0x328] sm:$0xff]
      %v6542 = vld [vmem:[%s7 + $0x330] sm:$0xff]
      %v6543 = vld [vmem:[%s7 + $0x338] sm:$0xff]
      %v6544 = vld [vmem:[%s7 + $0x340] sm:$0xff]
      %v6545 = vld [vmem:[%s7 + $0x348] sm:$0xff]
      %v6546 = vld [vmem:[%s7 + $0x350] sm:$0xff]
      %v6547 = vld [vmem:[%s7 + $0x358] sm:$0xff]
      %v6548 = vld [vmem:[%s7 + $0x360] sm:$0xff]
      %v6549 = vld [vmem:[%s7 + $0x368] sm:$0xff]
      %v6550 = vld [vmem:[%s7 + $0x370] sm:$0xff]
      %v6551 = vld [vmem:[%s7 + $0x378] sm:$0xff]
      %v6568 = vunpack.c.l.b16 %v6536
      %v6569 = vunpack.c.h.b16 %v6536
      %v6570 = vunpack.c.l.b16 %v6537
      %v6571 = vunpack.c.h.b16 %v6537
      %v6572 = vunpack.c.l.b16 %v6538
      %v6573 = vunpack.c.h.b16 %v6538
      %v6574 = vunpack.c.l.b16 %v6539
      %v6575 = vunpack.c.h.b16 %v6539
      %v6576 = vunpack.c.l.b16 %v6540
      %v6577 = vunpack.c.h.b16 %v6540
      %v6578 = vunpack.c.l.b16 %v6541
      %v6579 = vunpack.c.h.b16 %v6541
      %v6580 = vunpack.c.l.b16 %v6542
      %v6581 = vunpack.c.h.b16 %v6542
      %v6582 = vunpack.c.l.b16 %v6543
      %v6583 = vunpack.c.h.b16 %v6543
      %v6584 = vunpack.c.l.b16 %v6544
      %v6585 = vunpack.c.h.b16 %v6544
      %v6586 = vunpack.c.l.b16 %v6545
      %v6587 = vunpack.c.h.b16 %v6545
      %v6588 = vunpack.c.l.b16 %v6546
      %v6589 = vunpack.c.h.b16 %v6546
      %v6590 = vunpack.c.l.b16 %v6547
      %v6591 = vunpack.c.h.b16 %v6547
      %v6592 = vunpack.c.l.b16 %v6548
      %v6593 = vunpack.c.h.b16 %v6548
      %v6594 = vunpack.c.l.b16 %v6549
      %v6595 = vunpack.c.h.b16 %v6549
      %v6596 = vunpack.c.l.b16 %v6550
      %v6597 = vunpack.c.h.b16 %v6550
      %v6598 = vunpack.c.l.b16 %v6551
      %v6599 = vunpack.c.h.b16 %v6551
      %v6600 = vpack.c.b16 %v6570, %v6568
      %v6601 = vpack.c.b16 %v6571, %v6569
      %v6602 = vpack.c.b16 %v6574, %v6572
      %v6603 = vpack.c.b16 %v6575, %v6573
      %v6604 = vpack.c.b16 %v6578, %v6576
      %v6605 = vpack.c.b16 %v6579, %v6577
      %v6606 = vpack.c.b16 %v6582, %v6580
      %v6607 = vpack.c.b16 %v6583, %v6581
      %v6608 = vpack.c.b16 %v6586, %v6584
      %v6609 = vpack.c.b16 %v6587, %v6585
      %v6610 = vpack.c.b16 %v6590, %v6588
      %v6611 = vpack.c.b16 %v6591, %v6589
      %v6612 = vpack.c.b16 %v6594, %v6592
      %v6613 = vpack.c.b16 %v6595, %v6593
      %v6614 = vpack.c.b16 %v6598, %v6596
      %v6615 = vpack.c.b16 %v6599, %v6597
      %6632 = vmatprep.subr.bf16.mxu0 %v6601
      %6633 = vmatpush1.bf16.msra.mxu0 %v6600
      %6634 = vmatprep.subr.bf16.mxu0 %v6603
      %6635 = vmatpush1.bf16.msra.mxu0 %v6602
      %6636 = vmatprep.subr.bf16.mxu0 %v6605
      %6637 = vmatpush1.bf16.msra.mxu0 %v6604
      %6638 = vmatprep.subr.bf16.mxu0 %v6607
      %6639 = vmatpush1.bf16.msra.mxu0 %v6606
      %6640 = vmatprep.subr.bf16.mxu0 %v6609
      %6641 = vmatpush1.bf16.msra.mxu0 %v6608
      %6642 = vmatprep.subr.bf16.mxu0 %v6611
      %6643 = vmatpush1.bf16.msra.mxu0 %v6610
      %6644 = vmatprep.subr.bf16.mxu0 %v6613
      %6645 = vmatpush1.bf16.msra.mxu0 %v6612
      %6646 = vmatprep.subr.bf16.mxu0 %v6615
      %6647 = vmatpush1.bf16.msra.mxu0 %v6614
      %6648 = vmatprep.subr.bf16.mxu0 0
      %6649 = vmatpush1.bf16.msra.mxu0 0
      %6650 = vmatprep.subr.bf16.mxu0 0
      %6651 = vmatpush1.bf16.msra.mxu0 0
      %6652 = vmatprep.subr.bf16.mxu0 0
      %6653 = vmatpush1.bf16.msra.mxu0 0
      %6654 = vmatprep.subr.bf16.mxu0 0
      %6655 = vmatpush1.bf16.msra.mxu0 0
      %6656 = vmatprep.subr.bf16.mxu0 0
      %6657 = vmatpush1.bf16.msra.mxu0 0
      %6658 = vmatprep.subr.bf16.mxu0 0
      %6659 = vmatpush1.bf16.msra.mxu0 0
      %6660 = vmatprep.subr.bf16.mxu0 0
      %6661 = vmatpush1.bf16.msra.mxu0 0
      %6662 = vmatprep.subr.bf16.mxu0 0
      %6663 = vmatpush1.bf16.msra.mxu0 0
      %6664 = vmatprep.mubr.bf16.mxu0 0
      %6665 = vmatmul.mubr.bf16.gmra.mrb[0].mxu0 %v6535
      %v6666 = vpop.f32.mrb[0].mxu0
      %v6667 = vadd.f32 0.0, %v6666
      %v6668 = vpop.f32.mrb[0].mxu0
      %v6669 = vadd.f32 0.0, %v6668
      %v6670 = vpop.f32.mrb[0].mxu0
      %v6671 = vpop.f32.mrb[0].mxu0
      %6672 = vdwg.mxu0
      %v6673 = vadd.f32 %v6533, %v6667
      %v6674 = vadd.f32 %v6534, %v6669
      %v6675 = vpack.c.bf16 %v5679, %v5674
      %v6676 = vld [vmem:[%s7 + $0x380] sm:$0xff]
      %v6677 = vld [vmem:[%s7 + $0x388] sm:$0xff]
      %v6678 = vld [vmem:[%s7 + $0x390] sm:$0xff]
      %v6679 = vld [vmem:[%s7 + $0x398] sm:$0xff]
      %v6680 = vld [vmem:[%s7 + $0x3a0] sm:$0xff]
      %v6681 = vld [vmem:[%s7 + $0x3a8] sm:$0xff]
      %v6682 = vld [vmem:[%s7 + $0x3b0] sm:$0xff]
      %v6683 = vld [vmem:[%s7 + $0x3b8] sm:$0xff]
      %v6684 = vld [vmem:[%s7 + $0x3c0] sm:$0xff]
      %v6685 = vld [vmem:[%s7 + $0x3c8] sm:$0xff]
      %v6686 = vld [vmem:[%s7 + $0x3d0] sm:$0xff]
      %v6687 = vld [vmem:[%s7 + $0x3d8] sm:$0xff]
      %v6688 = vld [vmem:[%s7 + $0x3e0] sm:$0xff]
      %v6689 = vld [vmem:[%s7 + $0x3e8] sm:$0xff]
      %v6690 = vld [vmem:[%s7 + $0x3f0] sm:$0xff]
      %v6691 = vld [vmem:[%s7 + $0x3f8] sm:$0xff]
      %v6693 = vshrl.u32 %v6675, 16
      %v6695 = vshll.u32 %v6675, 16
      %v6697 = vrot.slane %v6695, 1
      %v6698 = vor.u32 %v6693, %v6697
      %v6716 = vunpack.c.l.b16 %v6676
      %v6717 = vunpack.c.h.b16 %v6676
      %v6718 = vunpack.c.l.b16 %v6677
      %v6719 = vunpack.c.h.b16 %v6677
      %v6720 = vunpack.c.l.b16 %v6678
      %v6721 = vunpack.c.h.b16 %v6678
      %v6722 = vunpack.c.l.b16 %v6679
      %v6723 = vunpack.c.h.b16 %v6679
      %v6724 = vunpack.c.l.b16 %v6680
      %v6725 = vunpack.c.h.b16 %v6680
      %v6726 = vunpack.c.l.b16 %v6681
      %v6727 = vunpack.c.h.b16 %v6681
      %v6728 = vunpack.c.l.b16 %v6682
      %v6729 = vunpack.c.h.b16 %v6682
      %v6730 = vunpack.c.l.b16 %v6683
      %v6731 = vunpack.c.h.b16 %v6683
      %v6732 = vunpack.c.l.b16 %v6684
      %v6733 = vunpack.c.h.b16 %v6684
      %v6734 = vunpack.c.l.b16 %v6685
      %v6735 = vunpack.c.h.b16 %v6685
      %v6736 = vunpack.c.l.b16 %v6686
      %v6737 = vunpack.c.h.b16 %v6686
      %v6738 = vunpack.c.l.b16 %v6687
      %v6739 = vunpack.c.h.b16 %v6687
      %v6740 = vunpack.c.l.b16 %v6688
      %v6741 = vunpack.c.h.b16 %v6688
      %v6742 = vunpack.c.l.b16 %v6689
      %v6743 = vunpack.c.h.b16 %v6689
      %v6744 = vunpack.c.l.b16 %v6690
      %v6745 = vunpack.c.h.b16 %v6690
      %v6746 = vunpack.c.l.b16 %v6691
      %v6747 = vunpack.c.h.b16 %v6691
      %v6748 = vpack.c.b16 %v6718, %v6716
      %v6749 = vpack.c.b16 %v6719, %v6717
      %v6750 = vpack.c.b16 %v6722, %v6720
      %v6751 = vpack.c.b16 %v6723, %v6721
      %v6752 = vpack.c.b16 %v6726, %v6724
      %v6753 = vpack.c.b16 %v6727, %v6725
      %v6754 = vpack.c.b16 %v6730, %v6728
      %v6755 = vpack.c.b16 %v6731, %v6729
      %v6756 = vpack.c.b16 %v6734, %v6732
      %v6757 = vpack.c.b16 %v6735, %v6733
      %v6758 = vpack.c.b16 %v6738, %v6736
      %v6759 = vpack.c.b16 %v6739, %v6737
      %v6760 = vpack.c.b16 %v6742, %v6740
      %v6761 = vpack.c.b16 %v6743, %v6741
      %v6762 = vpack.c.b16 %v6746, %v6744
      %v6763 = vpack.c.b16 %v6747, %v6745
      %6780 = vmatprep.subr.bf16.mxu0 %v6749
      %6781 = vmatpush1.bf16.msra.mxu0 %v6748
      %6782 = vmatprep.subr.bf16.mxu0 %v6751
      %6783 = vmatpush1.bf16.msra.mxu0 %v6750
      %6784 = vmatprep.subr.bf16.mxu0 %v6753
      %6785 = vmatpush1.bf16.msra.mxu0 %v6752
      %6786 = vmatprep.subr.bf16.mxu0 %v6755
      %6787 = vmatpush1.bf16.msra.mxu0 %v6754
      %6788 = vmatprep.subr.bf16.mxu0 %v6757
      %6789 = vmatpush1.bf16.msra.mxu0 %v6756
      %6790 = vmatprep.subr.bf16.mxu0 %v6759
      %6791 = vmatpush1.bf16.msra.mxu0 %v6758
      %6792 = vmatprep.subr.bf16.mxu0 %v6761
      %6793 = vmatpush1.bf16.msra.mxu0 %v6760
      %6794 = vmatprep.subr.bf16.mxu0 %v6763
      %6795 = vmatpush1.bf16.msra.mxu0 %v6762
      %6796 = vmatprep.subr.bf16.mxu0 0
      %6797 = vmatpush1.bf16.msra.mxu0 0
      %6798 = vmatprep.subr.bf16.mxu0 0
      %6799 = vmatpush1.bf16.msra.mxu0 0
      %6800 = vmatprep.subr.bf16.mxu0 0
      %6801 = vmatpush1.bf16.msra.mxu0 0
      %6802 = vmatprep.subr.bf16.mxu0 0
      %6803 = vmatpush1.bf16.msra.mxu0 0
      %6804 = vmatprep.subr.bf16.mxu0 0
      %6805 = vmatpush1.bf16.msra.mxu0 0
      %6806 = vmatprep.subr.bf16.mxu0 0
      %6807 = vmatpush1.bf16.msra.mxu0 0
      %6808 = vmatprep.subr.bf16.mxu0 0
      %6809 = vmatpush1.bf16.msra.mxu0 0
      %6810 = vmatprep.subr.bf16.mxu0 0
      %6811 = vmatpush1.bf16.msra.mxu0 0
      %6812 = vmatprep.mubr.bf16.mxu0 0
      %6813 = vmatmul.mubr.bf16.gmra.mrb[0].mxu0 %v6698
      %v6814 = vpop.f32.mrb[0].mxu0
      %v6815 = vadd.f32 0.0, %v6814
      %v6816 = vpop.f32.mrb[0].mxu0
      %v6817 = vadd.f32 0.0, %v6816
      %v6818 = vpop.f32.mrb[0].mxu0
      %v6819 = vpop.f32.mrb[0].mxu0
      %6820 = vdwg.mxu0
      %v6821 = vadd.f32 %v6673, %v6815
      %v6822 = vadd.f32 %v6674, %v6817
      %v6823 = vld [vmem:[%s7 + $0x400] sm:$0xff]
      %v6824 = vld [vmem:[%s7 + $0x408] sm:$0xff]
      %v6825 = vld [vmem:[%s7 + $0x410] sm:$0xff]
      %v6826 = vld [vmem:[%s7 + $0x418] sm:$0xff]
      %v6827 = vld [vmem:[%s7 + $0x420] sm:$0xff]
      %v6828 = vld [vmem:[%s7 + $0x428] sm:$0xff]
      %v6829 = vld [vmem:[%s7 + $0x430] sm:$0xff]
      %v6830 = vld [vmem:[%s7 + $0x438] sm:$0xff]
      %v6831 = vld [vmem:[%s7 + $0x440] sm:$0xff]
      %v6832 = vld [vmem:[%s7 + $0x448] sm:$0xff]
      %v6833 = vld [vmem:[%s7 + $0x450] sm:$0xff]
      %v6834 = vld [vmem:[%s7 + $0x458] sm:$0xff]
      %v6835 = vld [vmem:[%s7 + $0x460] sm:$0xff]
      %v6836 = vld [vmem:[%s7 + $0x468] sm:$0xff]
      %v6837 = vld [vmem:[%s7 + $0x470] sm:$0xff]
      %v6838 = vld [vmem:[%s7 + $0x478] sm:$0xff]
      %v6840 = vrot.slane %v6675, 1
      %v6858 = vunpack.c.l.b16 %v6823
      %v6859 = vunpack.c.h.b16 %v6823
      %v6860 = vunpack.c.l.b16 %v6824
      %v6861 = vunpack.c.h.b16 %v6824
      %v6862 = vunpack.c.l.b16 %v6825
      %v6863 = vunpack.c.h.b16 %v6825
      %v6864 = vunpack.c.l.b16 %v6826
      %v6865 = vunpack.c.h.b16 %v6826
      %v6866 = vunpack.c.l.b16 %v6827
      %v6867 = vunpack.c.h.b16 %v6827
      %v6868 = vunpack.c.l.b16 %v6828
      %v6869 = vunpack.c.h.b16 %v6828
      %v6870 = vunpack.c.l.b16 %v6829
      %v6871 = vunpack.c.h.b16 %v6829
      %v6872 = vunpack.c.l.b16 %v6830
      %v6873 = vunpack.c.h.b16 %v6830
      %v6874 = vunpack.c.l.b16 %v6831
      %v6875 = vunpack.c.h.b16 %v6831
      %v6876 = vunpack.c.l.b16 %v6832
      %v6877 = vunpack.c.h.b16 %v6832
      %v6878 = vunpack.c.l.b16 %v6833
      %v6879 = vunpack.c.h.b16 %v6833
      %v6880 = vunpack.c.l.b16 %v6834
      %v6881 = vunpack.c.h.b16 %v6834
      %v6882 = vunpack.c.l.b16 %v6835
      %v6883 = vunpack.c.h.b16 %v6835
      %v6884 = vunpack.c.l.b16 %v6836
      %v6885 = vunpack.c.h.b16 %v6836
      %v6886 = vunpack.c.l.b16 %v6837
      %v6887 = vunpack.c.h.b16 %v6837
      %v6888 = vunpack.c.l.b16 %v6838
      %v6889 = vunpack.c.h.b16 %v6838
      %v6890 = vpack.c.b16 %v6860, %v6858
      %v6891 = vpack.c.b16 %v6861, %v6859
      %v6892 = vpack.c.b16 %v6864, %v6862
      %v6893 = vpack.c.b16 %v6865, %v6863
      %v6894 = vpack.c.b16 %v6868, %v6866
      %v6895 = vpack.c.b16 %v6869, %v6867
      %v6896 = vpack.c.b16 %v6872, %v6870
      %v6897 = vpack.c.b16 %v6873, %v6871
      %v6898 = vpack.c.b16 %v6876, %v6874
      %v6899 = vpack.c.b16 %v6877, %v6875
      %v6900 = vpack.c.b16 %v6880, %v6878
      %v6901 = vpack.c.b16 %v6881, %v6879
      %v6902 = vpack.c.b16 %v6884, %v6882
      %v6903 = vpack.c.b16 %v6885, %v6883
      %v6904 = vpack.c.b16 %v6888, %v6886
      %v6905 = vpack.c.b16 %v6889, %v6887
      %6922 = vmatprep.subr.bf16.mxu0 %v6891
      %6923 = vmatpush1.bf16.msra.mxu0 %v6890
      %6924 = vmatprep.subr.bf16.mxu0 %v6893
      %6925 = vmatpush1.bf16.msra.mxu0 %v6892
      %6926 = vmatprep.subr.bf16.mxu0 %v6895
      %6927 = vmatpush1.bf16.msra.mxu0 %v6894
      %6928 = vmatprep.subr.bf16.mxu0 %v6897
      %6929 = vmatpush1.bf16.msra.mxu0 %v6896
      %6930 = vmatprep.subr.bf16.mxu0 %v6899
      %6931 = vmatpush1.bf16.msra.mxu0 %v6898
      %6932 = vmatprep.subr.bf16.mxu0 %v6901
      %6933 = vmatpush1.bf16.msra.mxu0 %v6900
      %6934 = vmatprep.subr.bf16.mxu0 %v6903
      %6935 = vmatpush1.bf16.msra.mxu0 %v6902
      %6936 = vmatprep.subr.bf16.mxu0 %v6905
      %6937 = vmatpush1.bf16.msra.mxu0 %v6904
      %6938 = vmatprep.subr.bf16.mxu0 0
      %6939 = vmatpush1.bf16.msra.mxu0 0
      %6940 = vmatprep.subr.bf16.mxu0 0
      %6941 = vmatpush1.bf16.msra.mxu0 0
      %6942 = vmatprep.subr.bf16.mxu0 0
      %6943 = vmatpush1.bf16.msra.mxu0 0
      %6944 = vmatprep.subr.bf16.mxu0 0
      %6945 = vmatpush1.bf16.msra.mxu0 0
      %6946 = vmatprep.subr.bf16.mxu0 0
      %6947 = vmatpush1.bf16.msra.mxu0 0
      %6948 = vmatprep.subr.bf16.mxu0 0
      %6949 = vmatpush1.bf16.msra.mxu0 0
      %6950 = vmatprep.subr.bf16.mxu0 0
      %6951 = vmatpush1.bf16.msra.mxu0 0
      %6952 = vmatprep.subr.bf16.mxu0 0
      %6953 = vmatpush1.bf16.msra.mxu0 0
      %6954 = vmatprep.mubr.bf16.mxu0 0
      %6955 = vmatmul.mubr.bf16.gmra.mrb[0].mxu0 %v6840
      %v6956 = vpop.f32.mrb[0].mxu0
      %v6957 = vadd.f32 0.0, %v6956
      %v6958 = vpop.f32.mrb[0].mxu0
      %v6959 = vadd.f32 0.0, %v6958
      %v6960 = vpop.f32.mrb[0].mxu0
      %v6961 = vpop.f32.mrb[0].mxu0
      %6962 = vdwg.mxu0
      %v6963 = vadd.f32 %v6821, %v6957
      %v6964 = vadd.f32 %v6822, %v6959
      %v6965 = vld [vmem:[%s8] sm:$0x3]
      %v6967 = vlaneseq
      %v6968 = vshrl.u32 %v6967, 7
      %v6969 = vsub.s32 0, %v6968
      %v6970 = vrot.slane %v6965, %v6969
      %v6971 = vlaneseq
      %v6972 = vshrl.u32 %v6971, 7
      %v6973 = vsub.s32 1, %v6972
      %v6974 = vrot.slane %v6965, %v6973
      %v6977 = vadd.f32 %v6963, %v6970
      %v6978 = vadd.f32 %v6964, %v6974
      %v6979 = vmax.f32 %v6977, 0.0
      %v6980 = vmax.f32 %v6978, 0.0
      %v6983 = vrot.slane %v6979, 1
      %v6984 = vrot.slane %v6980, 1
      %v6987 = vadd.f32 %v6979, %v6983
      %v6988 = vadd.f32 %v6980, %v6984
      %v6989 = vrot.slane %v6979, 4
      %v6990 = vrot.slane %v6980, 4
      %v6993 = vadd.f32 %v6987, %v6989
      %v6994 = vadd.f32 %v6988, %v6990
      %v6995 = vrot.slane %v6979, 5
      %v6996 = vrot.slane %v6980, 5
      %v6999 = vadd.f32 %v6993, %v6995
      %v7000 = vadd.f32 %v6994, %v6996
      %v7001 = vmul.f32 %v6999, 0.25
      %v7002 = vmul.f32 %v7000, 0.25
      %v7005 = vcombine.low %v7001, %v7002
      %v7007 = vunpack.c.l.s4 1966171168
      %v7008 = vunpack.c.0.s8 %v7007
      %v7009 = vlaneseq
      %v7010 = vshrl.u32 %v7009, 7
      %v7011 = vsub.s32 %v7008, %v7010
      %v7012 = vrot.slane %v7005, %v7011
      %v7014 = vunpack.c.l.s4 1966171168
      %v7015 = vunpack.c.0.s8 %v7014
      %v7016 = vlaneseq
      %v7017 = vshrl.u32 %v7016, 7
      %v7018 = vsub.s32 %v7015, %v7017
      %v7019 = vrot.slane %v7012, %v7018
      %v7021 = vlaneseq
      %vm7022 = vcmp.ge.s32.totalorder %v7021, 0
      %vm7023 = vcmp.lt.s32.totalorder %v7021, 256
      %vm7024 = vmand %vm7022, %vm7023
      %7025 = vst.msk [vmem:[%s411] sm:$0x3] %vm7024, %v7019
      %p7026 = scmp.lt.s32.totalorder %s23, 3
      %s7027 = scalar_select %p7026, %s23, 3
      %s7028 = smul.addr %s7027, 2
      %s7029 = scalar_lea.vmem %s12, %s7028
      // Predicated region
      $region69: #{siamese_forward.2} parent=67 // pred_check
        %p7030 = pneg %p298
      $region70: #{siamese_forward.2} parent=67 // pred_check_branch
        %7032 = sbr.rel (%p7030) target = $region72
      $region71: #{siamese_forward.2} parent=67 // pred_region
        _
      $region72: #{siamese_forward.2} parent=67 // pred_fallthru
        _
    $region68: #{siamese_forward.2} parent=5 // pred_fallthru
      _
    %p7033 = scmp.le.s32.totalorder 2, %s18
    // Predicated region
    $region73: #{siamese_forward.2} parent=5 // pred_check
      %p7034 = pneg %p7033
    $region74: #{siamese_forward.2} parent=5 // pred_check_branch
      %7036 = sbr.rel (%p7034) target = $region76
    $region75: #{siamese_forward.2} parent=5 // pred_region
      %s7037 = ssub.s32 %s18, 2
      // Predicated region
      $region77: #{siamese_forward.2} parent=75 // pred_check
        %p7038 = pneg %p304
      $region78: #{siamese_forward.2} parent=75 // pred_check_branch
        %7040 = sbr.rel (%p7038) target = $region80
      $region79: #{siamese_forward.2} parent=75 // pred_region
        %p7041 = scmp.lt.s32.totalorder %s24, 3
        %s7042 = scalar_select %p7041, %s24, 3
        %s7043 = smul.addr %s7042, 2
        %s7044 = scalar_lea.vmem %s12, %s7043
      $region80: #{siamese_forward.2} parent=75 // pred_fallthru
        _
    $region76: #{siamese_forward.2} parent=5 // pred_fallthru
      _
  $region6: #{siamese_forward.2} parent=0 // loop_footer
    %s22 = sadd.s32 1, %s18
  $region7: #{siamese_forward.2} parent=0 // loop_footer_branch
    %17 = sbr.rel target = $region3
  $region8: #{siamese_forward.2} parent=0 // loop_exit
    _

</llo_original>
